<compile_context>
chip_gen: v6e
topology: v6e:2x2x1
jax: 0.10.0
libtpu: 0.0.40
codegen_flags: <defaults>
</compile_context>

<pallas_src>
import functools
import numpy as np
import jax
import jax.numpy as jnp
from jax import lax
from jax.experimental import pallas as pl
from jax.experimental.pallas import tpu as pltpu

EPS = 1e-5            # torch.nn.GroupNorm default eps
RTOL = ATOL = 1e-3    # as in the module's odeint call
T1 = 1.0
H0, H_MIN = 0.05, 1e-5

_VMEM = pl.BlockSpec(memory_space=pltpu.MemorySpace.VMEM)


# ----------------------------------------------------------------------------
# In-kernel building blocks (traced inside the Pallas kernels, all on jnp values)
# ----------------------------------------------------------------------------
def _gn(x, gamma, beta, relu):
    # x: (N*C, H*W).  GroupNorm(min(32, C), C) with C <= 32 has one channel per
    # group -> per-row normalization over the lane (pixel) axis.
    # TODO(synk): group size > 1 (C > 32) would need within-group row reductions.
    mean = jnp.mean(x, axis=1, keepdims=True)
    xc = x - mean
    var = jnp.mean(xc * xc, axis=1, keepdims=True)        # biased, like torch
    y = xc * lax.rsqrt(var + EPS) * gamma + beta
    return jnp.maximum(y, 0.0) if relu else y


def _lane_shift(x, off):
    # result[:, p] = x[:, (p + off) % HW]; wrapped entries are zeroed by the caller's mask.
    hw = x.shape[1]
    k = off % hw
    if k == 0:
        return x
    return jnp.concatenate([x[:, k:], x[:, :k]], axis=1)


def _conv3x3_t(x, t, masks, w_x, w_t, bias, *, n, c, w):
    # ConcatConv2d(t): prepend constant-t channel, Conv2d(C+1 -> C, 3, stride 1, pad 1).
    # x: (N*C, HW)  masks: (9, HW)  w_x: (C, 9C)  w_t: (C, 9)  bias: (C, 1)  t: (1, 1)
    shifted = []
    for kh in range(3):
        for kw in range(3):
            off = (kh - 1) * w + (kw - 1)
            m = masks[kh * 3 + kw: kh * 3 + kw + 1, :]     # (1, HW) border mask
            shifted.append(m * _lane_shift(x, off))        # (N*C, HW)
    # Constant-t channel folded into a spatially varying bias (exact: the t plane
    # is zero-padded at the border, which `masks` encodes).
    tb = t * jnp.dot(w_t, masks, preferred_element_type=jnp.float32) + bias   # (C, HW)
    outs = []
    for i in range(n):                                     # N tiny per-sample dots
        p = jnp.concatenate([s[i * c:(i + 1) * c, :] for s in shifted], axis=0)  # (9C, HW)
        outs.append(jnp.dot(w_x, p, preferred_element_type=jnp.float32) + tb)
    return jnp.concatenate(outs, axis=0)                   # (N*C, HW), lane-dense


def _odefunc_body(t, y, masks, prm, *, n, c, w):
    g1, b1, wx1, wt1, cb1, g2, b2, wx2, wt2, cb2, g3, b3 = prm
    h = _gn(y, g1, b1, relu=True)
    h = _conv3x3_t(h, t, masks, wx1, wt1, cb1, n=n, c=c, w=w)
    h = _gn(h, g2, b2, relu=True)
    h = _conv3x3_t(h, t, masks, wx2, wt2, cb2, n=n, c=c, w=w)
    return _gn(h, g3, b3, relu=False)


def _load(refs):
    return tuple(r[...] for r in refs)


# ----------------------------------------------------------------------------
# Pallas kernels
# ----------------------------------------------------------------------------
def _odefunc_kernel(t_ref, y_ref, masks_ref, *rest, n, c, w):
    # Fused vector-field evaluation (used for the initial k1 and the sanity check).
    prm_refs, o_ref = rest[:12], rest[12]
    o_ref[...] = _odefunc_body(t_ref[...], y_ref[...], masks_ref[...],
                               _load(prm_refs), n=n, c=c, w=w)


def _dopri5_step_kernel(t_ref, h_ref, y_ref, k1_ref, masks_ref, *rest, n, c, w):
    # One full adaptive dopri5 step (6 f-evals, FSAL, error estimate, controller).
    prm = _load(rest[:12])
    y_out_ref, k1_out_ref, t_out_ref, h_out_ref = rest[12:]

    t = t_ref[...]                                  # (1, 1)
    h = jnp.minimum(h_ref[...], T1 - t)             # clamp last step to land on t1
    y = y_ref[...]
    k1 = k1_ref[...]                                # FSAL: f(t, y) carried in
    masks = masks_ref[...]

    f = lambda tt, yy: _odefunc_body(tt, yy, masks, prm, n=n, c=c, w=w)

    k2 = f(t + h * (1.0 / 5.0), y + h * ((1.0 / 5.0) * k1))
    k3 = f(t + h * (3.0 / 10.0), y + h * (3.0 / 40.0 * k1 + 9.0 / 40.0 * k2))
    k4 = f(t + h * (4.0 / 5.0),
           y + h * (44.0 / 45.0 * k1 - 56.0 / 15.0 * k2 + 32.0 / 9.0 * k3))
    k5 = f(t + h * (8.0 / 9.0),
           y + h * (19372.0 / 6561.0 * k1 - 25360.0 / 2187.0 * k2
                    + 64448.0 / 6561.0 * k3 - 212.0 / 729.0 * k4))
    k6 = f(t + h,
           y + h * (9017.0 / 3168.0 * k1 - 355.0 / 33.0 * k2
                    + 46732.0 / 5247.0 * k3 + 49.0 / 176.0 * k4
                    - 5103.0 / 18656.0 * k5))
    y_new = y + h * (35.0 / 384.0 * k1 + 500.0 / 1113.0 * k3
                     + 125.0 / 192.0 * k4 - 2187.0 / 6784.0 * k5
                     + 11.0 / 84.0 * k6)
    k7 = f(t + h, y_new)                            # FSAL stage

    err = h * ((35.0 / 384.0 - 5179.0 / 57600.0) * k1
               + (500.0 / 1113.0 - 7571.0 / 16695.0) * k3
               + (125.0 / 192.0 - 393.0 / 640.0) * k4
               + (-2187.0 / 6784.0 + 92097.0 / 339200.0) * k5
               + (11.0 / 84.0 - 187.0 / 2100.0) * k6
               + (-1.0 / 40.0) * k7)

    scale = ATOL + RTOL * jnp.maximum(jnp.abs(y), jnp.abs(y_new))
    r2 = (err / scale) ** 2
    err_norm = jnp.sqrt(jnp.mean(jnp.mean(r2, axis=1, keepdims=True),
                                 axis=0, keepdims=True))          # (1, 1)

    # Step-size controller fused into the kernel.
    accept = (err_norm <= 1.0).astype(jnp.float32)                # (1, 1)
    factor = jnp.clip(
        0.9 * jnp.exp(-0.2 * jnp.log(jnp.maximum(err_norm, 1e-8))), 0.2, 10.0)
    y_out_ref[...] = accept * y_new + (1.0 - accept) * y
    k1_out_ref[...] = accept * k7 + (1.0 - accept) * k1           # FSAL carry
    t_out_ref[...] = t + accept * h
    h_out_ref[...] = jnp.maximum(h * factor, H_MIN)


# ----------------------------------------------------------------------------
# Wrappers / parameter preparation
# ----------------------------------------------------------------------------
def _make_masks(h, w):
    # masks[kh*3+kw, p] = 1 iff source pixel (p//w + kh-1, p%w + kw-1) is in-bounds.
    yy, xx = np.divmod(np.arange(h * w), w)
    m = np.zeros((9, h * w), np.float32)
    for kh in range(3):
        for kw in range(3):
            ok = ((yy + kh - 1 >= 0) & (yy + kh - 1 < h)
                  & (xx + kw - 1 >= 0) & (xx + kw - 1 < w))
            m[kh * 3 + kw] = ok.astype(np.float32)
    return jnp.asarray(m)


def _prep_params(params, n, c):
    def col(v):                                   # per-channel -> per-(n,c) row
        return jnp.tile(v.astype(jnp.float32), n).reshape(n * c, 1)

    def wsplit(w_hwio):                           # (3, 3, C+1, C), channel 0 = t
        w_hwio = w_hwio.astype(jnp.float32)
        w_x = jnp.transpose(w_hwio[:, :, 1:, :].reshape(9 * c, c))   # (C, 9C)
        w_t = jnp.transpose(w_hwio[:, :, 0, :].reshape(9, c))        # (C, 9)
        return w_x, w_t

    wx1, wt1 = wsplit(params["w1"])
    wx2, wt2 = wsplit(params["w2"])
    return (col(params["g1"]), col(params["b1"]),
            wx1, wt1, params["cb1"].astype(jnp.float32).reshape(c, 1),
            col(params["g2"]), col(params["b2"]),
            wx2, wt2, params["cb2"].astype(jnp.float32).reshape(c, 1),
            col(params["g3"]), col(params["b3"]))


def _make_odefunc_call(n, c, h, w):
    kernel = functools.partial(_odefunc_kernel, n=n, c=c, w=w)
    return pl.pallas_call(
        kernel,
        out_shape=jax.ShapeDtypeStruct((n * c, h * w), jnp.float32),
        in_specs=[_VMEM] * 15,
        out_specs=_VMEM,
    )


def _make_step_call(n, c, h, w):
    kernel = functools.partial(_dopri5_step_kernel, n=n, c=c, w=w)
    nc, hw = n * c, h * w
    return pl.pallas_call(
        kernel,
        out_shape=(jax.ShapeDtypeStruct((nc, hw), jnp.float32),   # y_next
                   jax.ShapeDtypeStruct((nc, hw), jnp.float32),   # k1_next (FSAL)
                   jax.ShapeDtypeStruct((1, 1), jnp.float32),     # t_next
                   jax.ShapeDtypeStruct((1, 1), jnp.float32)),    # h_next
        in_specs=[_VMEM] * 17,
        out_specs=(_VMEM, _VMEM, _VMEM, _VMEM),
    )


@jax.jit
def ode_block_forward(x_nchw, params):
    """ODEBlock.forward: integrate odefunc from t=0 to t=1, return y(1) (NCHW).

    TODO(synk): the extra `iiop` diagnostic of the custom odeint has no
    JAX/Pallas equivalent; only out[1] (the state at t=1) is reproduced.
    TODO(synk): fixed initial step h0=0.05 and the 1e-5 step floor differ from
    torchdiffeq's adaptive initial-step selection (within rtol/atol).
    TODO(synk): if batch N grows, add a batch grid axis with
    dimension_semantics=("parallel",) so v7x's second TensorCore is used.
    """
    n, c, hh, ww = x_nchw.shape
    x2d = x_nchw.astype(jnp.float32).reshape(n * c, hh * ww)   # NCHW -> (N*C, H*W)
    masks = _make_masks(hh, ww)
    prm = _prep_params(params, n, c)

    odefunc_call = _make_odefunc_call(n, c, hh, ww)
    step_call = _make_step_call(n, c, hh, ww)

    t0 = jnp.zeros((1, 1), jnp.float32)
    h0 = jnp.full((1, 1), H0, jnp.float32)
    k1_0 = odefunc_call(t0, x2d, masks, *prm)                  # initial f(t0, y0)

    def cond(state):
        t, _, _, _ = state
        return t[0, 0] < T1 - 1e-6

    def body(state):
        t, y, k1, h = state
        y_n, k1_n, t_n, h_n = step_call(t, h, y, k1, masks, *prm)
        return t_n, y_n, k1_n, h_n

    _, y_final, _, _ = lax.while_loop(cond, body, (t0, x2d, k1_0, h0))
    return y_final.reshape(n, c, hh, ww)


# ----------------------------------------------------------------------------
# Pure-JAX reference for the vector field (correctness check only)
# ----------------------------------------------------------------------------
def _gn_ref(x, gamma, beta, relu):
    mean = jnp.mean(x, axis=(1, 2), keepdims=True)
    var = jnp.var(x, axis=(1, 2), keepdims=True)
    y = (x - mean) / jnp.sqrt(var + EPS) * gamma + beta
    return jnp.maximum(y, 0.0) if relu else y


def _conv_ref(t, x, w_hwio, bias):
    n, h, w, c = x.shape
    tt = jnp.full((n, h, w, 1), t, dtype=x.dtype)
    ttx = jnp.concatenate([tt, x], axis=-1)
    out = lax.conv_general_dilated(ttx, w_hwio, (1, 1), "SAME",
                                   dimension_numbers=("NHWC", "HWIO", "NHWC"))
    return out + bias


def odefunc_ref(t, x, p):
    h = _gn_ref(x, p["g1"], p["b1"], True)
    h = _conv_ref(t, h, p["w1"], p["cb1"])
    h = _gn_ref(h, p["g2"], p["b2"], True)
    h = _conv_ref(t, h, p["w2"], p["cb2"])
    return _gn_ref(h, p["g3"], p["b3"], False)


# ----------------------------------------------------------------------------
if __name__ == "__main__":
    N, C, H, W = 2, 4, 16, 16
    key = jax.random.PRNGKey(0)
    kx, kw1, kb1, kw2, kb2 = jax.random.split(key, 5)

    x = jax.random.normal(kx, (N, C, H, W), jnp.float32)

    # Deterministic synthetic parameters (HWIO conv weights, per-channel GN affine).
    params = {
        "w1": 0.1 * jax.random.normal(kw1, (3, 3, C + 1, C), jnp.float32),
        "cb1": 0.05 * jax.random.normal(kb1, (C,), jnp.float32),
        "w2": 0.1 * jax.random.normal(kw2, (3, 3, C + 1, C), jnp.float32),
        "cb2": 0.05 * jax.random.normal(kb2, (C,), jnp.float32),
        "g1": jnp.ones((C,), jnp.float32), "b1": jnp.zeros((C,), jnp.float32),
        "g2": jnp.ones((C,), jnp.float32), "b2": jnp.zeros((C,), jnp.float32),
        "g3": jnp.ones((C,), jnp.float32), "b3": jnp.zeros((C,), jnp.float32),
    }

    out = ode_block_forward(x, params)
    out = jax.block_until_ready(out)
    assert out.shape == (N, C, H, W) and out.dtype == jnp.float32

    # Sanity-check the fused Pallas vector field against a pure-JAX reference.
    masks = _make_masks(H, W)
    prm = _prep_params(params, N, C)
    f_pallas = _make_odefunc_call(N, C, H, W)
    t_test = jnp.full((1, 1), 0.5, jnp.float32)
    got = f_pallas(t_test, x.reshape(N * C, H * W), masks, *prm).reshape(N, C, H, W)
    x_nhwc = jnp.transpose(x, (0, 2, 3, 1))
    want = jnp.transpose(odefunc_ref(jnp.float32(0.5), x_nhwc, params), (0, 3, 1, 2))
    got, want = jax.block_until_ready((got, want))
    np.testing.assert_allclose(np.asarray(got), np.asarray(want),
                               rtol=2e-4, atol=2e-4)

    print("KERNEL_OK")
</pallas_src>

<mosaic_0001>
module attributes {stable_mosaic.version = 11 : i64} {
  func.func @_odefunc_kernel(%arg0: memref<1x1xf32, #tpu.memory_space<vmem>>, %arg1: memref<8x256xf32, #tpu.memory_space<vmem>>, %arg2: memref<9x256xf32, #tpu.memory_space<vmem>>, %arg3: memref<8x1xf32, #tpu.memory_space<vmem>>, %arg4: memref<8x1xf32, #tpu.memory_space<vmem>>, %arg5: memref<4x36xf32, #tpu.memory_space<vmem>>, %arg6: memref<4x9xf32, #tpu.memory_space<vmem>>, %arg7: memref<4x1xf32, #tpu.memory_space<vmem>>, %arg8: memref<8x1xf32, #tpu.memory_space<vmem>>, %arg9: memref<8x1xf32, #tpu.memory_space<vmem>>, %arg10: memref<4x36xf32, #tpu.memory_space<vmem>>, %arg11: memref<4x9xf32, #tpu.memory_space<vmem>>, %arg12: memref<4x1xf32, #tpu.memory_space<vmem>>, %arg13: memref<8x1xf32, #tpu.memory_space<vmem>>, %arg14: memref<8x1xf32, #tpu.memory_space<vmem>>, %arg15: memref<8x256xf32, #tpu.memory_space<vmem>>) attributes {dimension_semantics = [], scalar_prefetch = 0 : i64, scratch_operands = 0 : i64, tpu.core_type = #tpu.core_type<tc>} {
    %c0 = arith.constant 0 : index
    %c0_0 = arith.constant 0 : index
    %0 = vector.load %arg0[%c0, %c0_0] : memref<1x1xf32, #tpu.memory_space<vmem>>, vector<1x1xf32>
    %c0_1 = arith.constant 0 : index
    %c0_2 = arith.constant 0 : index
    %1 = vector.load %arg1[%c0_1, %c0_2] : memref<8x256xf32, #tpu.memory_space<vmem>>, vector<8x256xf32>
    %c0_3 = arith.constant 0 : index
    %c0_4 = arith.constant 0 : index
    %2 = vector.load %arg2[%c0_3, %c0_4] : memref<9x256xf32, #tpu.memory_space<vmem>>, vector<9x256xf32>
    %c0_5 = arith.constant 0 : index
    %c0_6 = arith.constant 0 : index
    %3 = vector.load %arg3[%c0_5, %c0_6] : memref<8x1xf32, #tpu.memory_space<vmem>>, vector<8x1xf32>
    %c0_7 = arith.constant 0 : index
    %c0_8 = arith.constant 0 : index
    %4 = vector.load %arg4[%c0_7, %c0_8] : memref<8x1xf32, #tpu.memory_space<vmem>>, vector<8x1xf32>
    %c0_9 = arith.constant 0 : index
    %c0_10 = arith.constant 0 : index
    %5 = vector.load %arg5[%c0_9, %c0_10] : memref<4x36xf32, #tpu.memory_space<vmem>>, vector<4x36xf32>
    %c0_11 = arith.constant 0 : index
    %c0_12 = arith.constant 0 : index
    %6 = vector.load %arg6[%c0_11, %c0_12] : memref<4x9xf32, #tpu.memory_space<vmem>>, vector<4x9xf32>
    %c0_13 = arith.constant 0 : index
    %c0_14 = arith.constant 0 : index
    %7 = vector.load %arg7[%c0_13, %c0_14] : memref<4x1xf32, #tpu.memory_space<vmem>>, vector<4x1xf32>
    %c0_15 = arith.constant 0 : index
    %c0_16 = arith.constant 0 : index
    %8 = vector.load %arg8[%c0_15, %c0_16] : memref<8x1xf32, #tpu.memory_space<vmem>>, vector<8x1xf32>
    %c0_17 = arith.constant 0 : index
    %c0_18 = arith.constant 0 : index
    %9 = vector.load %arg9[%c0_17, %c0_18] : memref<8x1xf32, #tpu.memory_space<vmem>>, vector<8x1xf32>
    %c0_19 = arith.constant 0 : index
    %c0_20 = arith.constant 0 : index
    %10 = vector.load %arg10[%c0_19, %c0_20] : memref<4x36xf32, #tpu.memory_space<vmem>>, vector<4x36xf32>
    %c0_21 = arith.constant 0 : index
    %c0_22 = arith.constant 0 : index
    %11 = vector.load %arg11[%c0_21, %c0_22] : memref<4x9xf32, #tpu.memory_space<vmem>>, vector<4x9xf32>
    %c0_23 = arith.constant 0 : index
    %c0_24 = arith.constant 0 : index
    %12 = vector.load %arg12[%c0_23, %c0_24] : memref<4x1xf32, #tpu.memory_space<vmem>>, vector<4x1xf32>
    %c0_25 = arith.constant 0 : index
    %c0_26 = arith.constant 0 : index
    %13 = vector.load %arg13[%c0_25, %c0_26] : memref<8x1xf32, #tpu.memory_space<vmem>>, vector<8x1xf32>
    %c0_27 = arith.constant 0 : index
    %c0_28 = arith.constant 0 : index
    %14 = vector.load %arg14[%c0_27, %c0_28] : memref<8x1xf32, #tpu.memory_space<vmem>>, vector<8x1xf32>
    %cst = arith.constant dense<0.000000e+00> : vector<8xf32>
    %15 = vector.multi_reduction <add>, %1, %cst [1] : vector<8x256xf32> to vector<8xf32>
    %16 = vector.shape_cast %15 : vector<8xf32> to vector<8x1xf32>
    %cst_29 = arith.constant 2.560000e+02 : f32
    %17 = vector.broadcast %cst_29 : f32 to vector<8x1xf32>
    %18 = arith.divf %16, %17 : vector<8x1xf32>
    %19 = vector.broadcast %18 : vector<8x1xf32> to vector<8x256xf32>
    %20 = arith.subf %1, %19 : vector<8x256xf32>
    %21 = arith.mulf %20, %20 : vector<8x256xf32>
    %cst_30 = arith.constant dense<0.000000e+00> : vector<8xf32>
    %22 = vector.multi_reduction <add>, %21, %cst_30 [1] : vector<8x256xf32> to vector<8xf32>
    %23 = vector.shape_cast %22 : vector<8xf32> to vector<8x1xf32>
    %cst_31 = arith.constant 2.560000e+02 : f32
    %24 = vector.broadcast %cst_31 : f32 to vector<8x1xf32>
    %25 = arith.divf %23, %24 : vector<8x1xf32>
    %cst_32 = arith.constant 9.99999974E-6 : f32
    %26 = vector.broadcast %cst_32 : f32 to vector<8x1xf32>
    %27 = arith.addf %25, %26 : vector<8x1xf32>
    %28 = math.rsqrt %27 : vector<8x1xf32>
    %29 = vector.broadcast %28 : vector<8x1xf32> to vector<8x256xf32>
    %30 = arith.mulf %20, %29 : vector<8x256xf32>
    %31 = vector.broadcast %3 : vector<8x1xf32> to vector<8x256xf32>
    %32 = arith.mulf %30, %31 : vector<8x256xf32>
    %33 = vector.broadcast %4 : vector<8x1xf32> to vector<8x256xf32>
    %34 = arith.addf %32, %33 : vector<8x256xf32>
    %cst_33 = arith.constant 0.000000e+00 : f32
    %35 = vector.broadcast %cst_33 : f32 to vector<8x256xf32>
    %36 = arith.maximumf %34, %35 : vector<8x256xf32>
    %37 = vector.extract_strided_slice %2 {offsets = [0, 0], sizes = [1, 256], strides = [1, 1]} : vector<9x256xf32> to vector<1x256xf32>
    %38 = vector.extract_strided_slice %36 {offsets = [0, 239], sizes = [8, 17], strides = [1, 1]} : vector<8x256xf32> to vector<8x17xf32>
    %39 = vector.extract_strided_slice %36 {offsets = [0, 0], sizes = [8, 239], strides = [1, 1]} : vector<8x256xf32> to vector<8x239xf32>
    %40 = tpu.concatenate %38, %39 in 1 : vector<8x17xf32>, vector<8x239xf32> -> vector<8x256xf32>
    %41 = vector.broadcast %37 : vector<1x256xf32> to vector<8x256xf32>
    %42 = arith.mulf %41, %40 : vector<8x256xf32>
    %43 = vector.extract_strided_slice %2 {offsets = [1, 0], sizes = [1, 256], strides = [1, 1]} : vector<9x256xf32> to vector<1x256xf32>
    %44 = vector.extract_strided_slice %36 {offsets = [0, 240], sizes = [8, 16], strides = [1, 1]} : vector<8x256xf32> to vector<8x16xf32>
    %45 = vector.extract_strided_slice %36 {offsets = [0, 0], sizes = [8, 240], strides = [1, 1]} : vector<8x256xf32> to vector<8x240xf32>
    %46 = tpu.concatenate %44, %45 in 1 : vector<8x16xf32>, vector<8x240xf32> -> vector<8x256xf32>
    %47 = vector.broadcast %43 : vector<1x256xf32> to vector<8x256xf32>
    %48 = arith.mulf %47, %46 : vector<8x256xf32>
    %49 = vector.extract_strided_slice %2 {offsets = [2, 0], sizes = [1, 256], strides = [1, 1]} : vector<9x256xf32> to vector<1x256xf32>
    %50 = vector.extract_strided_slice %36 {offsets = [0, 241], sizes = [8, 15], strides = [1, 1]} : vector<8x256xf32> to vector<8x15xf32>
    %51 = vector.extract_strided_slice %36 {offsets = [0, 0], sizes = [8, 241], strides = [1, 1]} : vector<8x256xf32> to vector<8x241xf32>
    %52 = tpu.concatenate %50, %51 in 1 : vector<8x15xf32>, vector<8x241xf32> -> vector<8x256xf32>
    %53 = vector.broadcast %49 : vector<1x256xf32> to vector<8x256xf32>
    %54 = arith.mulf %53, %52 : vector<8x256xf32>
    %55 = vector.extract_strided_slice %2 {offsets = [3, 0], sizes = [1, 256], strides = [1, 1]} : vector<9x256xf32> to vector<1x256xf32>
    %56 = vector.extract_strided_slice %36 {offsets = [0, 255], sizes = [8, 1], strides = [1, 1]} : vector<8x256xf32> to vector<8x1xf32>
    %57 = vector.extract_strided_slice %36 {offsets = [0, 0], sizes = [8, 255], strides = [1, 1]} : vector<8x256xf32> to vector<8x255xf32>
    %58 = tpu.concatenate %56, %57 in 1 : vector<8x1xf32>, vector<8x255xf32> -> vector<8x256xf32>
    %59 = vector.broadcast %55 : vector<1x256xf32> to vector<8x256xf32>
    %60 = arith.mulf %59, %58 : vector<8x256xf32>
    %61 = vector.extract_strided_slice %2 {offsets = [4, 0], sizes = [1, 256], strides = [1, 1]} : vector<9x256xf32> to vector<1x256xf32>
    %62 = vector.broadcast %61 : vector<1x256xf32> to vector<8x256xf32>
    %63 = arith.mulf %62, %36 : vector<8x256xf32>
    %64 = vector.extract_strided_slice %2 {offsets = [5, 0], sizes = [1, 256], strides = [1, 1]} : vector<9x256xf32> to vector<1x256xf32>
    %65 = vector.extract_strided_slice %36 {offsets = [0, 1], sizes = [8, 255], strides = [1, 1]} : vector<8x256xf32> to vector<8x255xf32>
    %66 = vector.extract_strided_slice %36 {offsets = [0, 0], sizes = [8, 1], strides = [1, 1]} : vector<8x256xf32> to vector<8x1xf32>
    %67 = tpu.concatenate %65, %66 in 1 : vector<8x255xf32>, vector<8x1xf32> -> vector<8x256xf32>
    %68 = vector.broadcast %64 : vector<1x256xf32> to vector<8x256xf32>
    %69 = arith.mulf %68, %67 : vector<8x256xf32>
    %70 = vector.extract_strided_slice %2 {offsets = [6, 0], sizes = [1, 256], strides = [1, 1]} : vector<9x256xf32> to vector<1x256xf32>
    %71 = vector.extract_strided_slice %36 {offsets = [0, 15], sizes = [8, 241], strides = [1, 1]} : vector<8x256xf32> to vector<8x241xf32>
    %72 = vector.extract_strided_slice %36 {offsets = [0, 0], sizes = [8, 15], strides = [1, 1]} : vector<8x256xf32> to vector<8x15xf32>
    %73 = tpu.concatenate %71, %72 in 1 : vector<8x241xf32>, vector<8x15xf32> -> vector<8x256xf32>
    %74 = vector.broadcast %70 : vector<1x256xf32> to vector<8x256xf32>
    %75 = arith.mulf %74, %73 : vector<8x256xf32>
    %76 = vector.extract_strided_slice %2 {offsets = [7, 0], sizes = [1, 256], strides = [1, 1]} : vector<9x256xf32> to vector<1x256xf32>
    %77 = vector.extract_strided_slice %36 {offsets = [0, 16], sizes = [8, 240], strides = [1, 1]} : vector<8x256xf32> to vector<8x240xf32>
    %78 = vector.extract_strided_slice %36 {offsets = [0, 0], sizes = [8, 16], strides = [1, 1]} : vector<8x256xf32> to vector<8x16xf32>
    %79 = tpu.concatenate %77, %78 in 1 : vector<8x240xf32>, vector<8x16xf32> -> vector<8x256xf32>
    %80 = vector.broadcast %76 : vector<1x256xf32> to vector<8x256xf32>
    %81 = arith.mulf %80, %79 : vector<8x256xf32>
    %82 = vector.extract_strided_slice %2 {offsets = [8, 0], sizes = [1, 256], strides = [1, 1]} : vector<9x256xf32> to vector<1x256xf32>
    %83 = vector.extract_strided_slice %36 {offsets = [0, 17], sizes = [8, 239], strides = [1, 1]} : vector<8x256xf32> to vector<8x239xf32>
    %84 = vector.extract_strided_slice %36 {offsets = [0, 0], sizes = [8, 17], strides = [1, 1]} : vector<8x256xf32> to vector<8x17xf32>
    %85 = tpu.concatenate %83, %84 in 1 : vector<8x239xf32>, vector<8x17xf32> -> vector<8x256xf32>
    %86 = vector.broadcast %82 : vector<1x256xf32> to vector<8x256xf32>
    %87 = arith.mulf %86, %85 : vector<8x256xf32>
    %cst_34 = arith.constant dense<0.000000e+00> : vector<4x256xf32>
    %88 = tpu.matmul %6, %2, %cst_34 {dimension_numbers = #tpu.dot_dimension_numbers<[1], [0], [0], [1], [0, 0, 1, 1], [], []>} : vector<4x9xf32>, vector<9x256xf32>, vector<4x256xf32> -> vector<4x256xf32>
    %89 = vector.broadcast %0 : vector<1x1xf32> to vector<4x256xf32>
    %90 = arith.mulf %89, %88 : vector<4x256xf32>
    %91 = vector.broadcast %7 : vector<4x1xf32> to vector<4x256xf32>
    %92 = arith.addf %90, %91 : vector<4x256xf32>
    %93 = vector.extract_strided_slice %42 {offsets = [0, 0], sizes = [4, 256], strides = [1, 1]} : vector<8x256xf32> to vector<4x256xf32>
    %94 = vector.extract_strided_slice %48 {offsets = [0, 0], sizes = [4, 256], strides = [1, 1]} : vector<8x256xf32> to vector<4x256xf32>
    %95 = vector.extract_strided_slice %54 {offsets = [0, 0], sizes = [4, 256], strides = [1, 1]} : vector<8x256xf32> to vector<4x256xf32>
    %96 = vector.extract_strided_slice %60 {offsets = [0, 0], sizes = [4, 256], strides = [1, 1]} : vector<8x256xf32> to vector<4x256xf32>
    %97 = vector.extract_strided_slice %63 {offsets = [0, 0], sizes = [4, 256], strides = [1, 1]} : vector<8x256xf32> to vector<4x256xf32>
    %98 = vector.extract_strided_slice %69 {offsets = [0, 0], sizes = [4, 256], strides = [1, 1]} : vector<8x256xf32> to vector<4x256xf32>
    %99 = vector.extract_strided_slice %75 {offsets = [0, 0], sizes = [4, 256], strides = [1, 1]} : vector<8x256xf32> to vector<4x256xf32>
    %100 = vector.extract_strided_slice %81 {offsets = [0, 0], sizes = [4, 256], strides = [1, 1]} : vector<8x256xf32> to vector<4x256xf32>
    %101 = vector.extract_strided_slice %87 {offsets = [0, 0], sizes = [4, 256], strides = [1, 1]} : vector<8x256xf32> to vector<4x256xf32>
    %102 = tpu.concatenate %93, %94, %95, %96, %97, %98, %99, %100, %101 in 0 : vector<4x256xf32>, vector<4x256xf32>, vector<4x256xf32>, vector<4x256xf32>, vector<4x256xf32>, vector<4x256xf32>, vector<4x256xf32>, vector<4x256xf32>, vector<4x256xf32> -> vector<36x256xf32>
    %cst_35 = arith.constant dense<0.000000e+00> : vector<4x256xf32>
    %103 = tpu.matmul %5, %102, %cst_35 {dimension_numbers = #tpu.dot_dimension_numbers<[1], [0], [0], [1], [0, 0, 1, 1], [], []>} : vector<4x36xf32>, vector<36x256xf32>, vector<4x256xf32> -> vector<4x256xf32>
    %104 = arith.addf %103, %92 : vector<4x256xf32>
    %105 = vector.extract_strided_slice %42 {offsets = [4, 0], sizes = [4, 256], strides = [1, 1]} : vector<8x256xf32> to vector<4x256xf32>
    %106 = vector.extract_strided_slice %48 {offsets = [4, 0], sizes = [4, 256], strides = [1, 1]} : vector<8x256xf32> to vector<4x256xf32>
    %107 = vector.extract_strided_slice %54 {offsets = [4, 0], sizes = [4, 256], strides = [1, 1]} : vector<8x256xf32> to vector<4x256xf32>
    %108 = vector.extract_strided_slice %60 {offsets = [4, 0], sizes = [4, 256], strides = [1, 1]} : vector<8x256xf32> to vector<4x256xf32>
    %109 = vector.extract_strided_slice %63 {offsets = [4, 0], sizes = [4, 256], strides = [1, 1]} : vector<8x256xf32> to vector<4x256xf32>
    %110 = vector.extract_strided_slice %69 {offsets = [4, 0], sizes = [4, 256], strides = [1, 1]} : vector<8x256xf32> to vector<4x256xf32>
    %111 = vector.extract_strided_slice %75 {offsets = [4, 0], sizes = [4, 256], strides = [1, 1]} : vector<8x256xf32> to vector<4x256xf32>
    %112 = vector.extract_strided_slice %81 {offsets = [4, 0], sizes = [4, 256], strides = [1, 1]} : vector<8x256xf32> to vector<4x256xf32>
    %113 = vector.extract_strided_slice %87 {offsets = [4, 0], sizes = [4, 256], strides = [1, 1]} : vector<8x256xf32> to vector<4x256xf32>
    %114 = tpu.concatenate %105, %106, %107, %108, %109, %110, %111, %112, %113 in 0 : vector<4x256xf32>, vector<4x256xf32>, vector<4x256xf32>, vector<4x256xf32>, vector<4x256xf32>, vector<4x256xf32>, vector<4x256xf32>, vector<4x256xf32>, vector<4x256xf32> -> vector<36x256xf32>
    %cst_36 = arith.constant dense<0.000000e+00> : vector<4x256xf32>
    %115 = tpu.matmul %5, %114, %cst_36 {dimension_numbers = #tpu.dot_dimension_numbers<[1], [0], [0], [1], [0, 0, 1, 1], [], []>} : vector<4x36xf32>, vector<36x256xf32>, vector<4x256xf32> -> vector<4x256xf32>
    %116 = arith.addf %115, %92 : vector<4x256xf32>
    %117 = tpu.concatenate %104, %116 in 0 : vector<4x256xf32>, vector<4x256xf32> -> vector<8x256xf32>
    %cst_37 = arith.constant dense<0.000000e+00> : vector<8xf32>
    %118 = vector.multi_reduction <add>, %117, %cst_37 [1] : vector<8x256xf32> to vector<8xf32>
    %119 = vector.shape_cast %118 : vector<8xf32> to vector<8x1xf32>
    %cst_38 = arith.constant 2.560000e+02 : f32
    %120 = vector.broadcast %cst_38 : f32 to vector<8x1xf32>
    %121 = arith.divf %119, %120 : vector<8x1xf32>
    %122 = vector.broadcast %121 : vector<8x1xf32> to vector<8x256xf32>
    %123 = arith.subf %117, %122 : vector<8x256xf32>
    %124 = arith.mulf %123, %123 : vector<8x256xf32>
    %cst_39 = arith.constant dense<0.000000e+00> : vector<8xf32>
    %125 = vector.multi_reduction <add>, %124, %cst_39 [1] : vector<8x256xf32> to vector<8xf32>
    %126 = vector.shape_cast %125 : vector<8xf32> to vector<8x1xf32>
    %cst_40 = arith.constant 2.560000e+02 : f32
    %127 = vector.broadcast %cst_40 : f32 to vector<8x1xf32>
    %128 = arith.divf %126, %127 : vector<8x1xf32>
    %cst_41 = arith.constant 9.99999974E-6 : f32
    %129 = vector.broadcast %cst_41 : f32 to vector<8x1xf32>
    %130 = arith.addf %128, %129 : vector<8x1xf32>
    %131 = math.rsqrt %130 : vector<8x1xf32>
    %132 = vector.broadcast %131 : vector<8x1xf32> to vector<8x256xf32>
    %133 = arith.mulf %123, %132 : vector<8x256xf32>
    %134 = vector.broadcast %8 : vector<8x1xf32> to vector<8x256xf32>
    %135 = arith.mulf %133, %134 : vector<8x256xf32>
    %136 = vector.broadcast %9 : vector<8x1xf32> to vector<8x256xf32>
    %137 = arith.addf %135, %136 : vector<8x256xf32>
    %cst_42 = arith.constant 0.000000e+00 : f32
    %138 = vector.broadcast %cst_42 : f32 to vector<8x256xf32>
    %139 = arith.maximumf %137, %138 : vector<8x256xf32>
    %140 = vector.extract_strided_slice %2 {offsets = [0, 0], sizes = [1, 256], strides = [1, 1]} : vector<9x256xf32> to vector<1x256xf32>
    %141 = vector.extract_strided_slice %139 {offsets = [0, 239], sizes = [8, 17], strides = [1, 1]} : vector<8x256xf32> to vector<8x17xf32>
    %142 = vector.extract_strided_slice %139 {offsets = [0, 0], sizes = [8, 239], strides = [1, 1]} : vector<8x256xf32> to vector<8x239xf32>
    %143 = tpu.concatenate %141, %142 in 1 : vector<8x17xf32>, vector<8x239xf32> -> vector<8x256xf32>
    %144 = vector.broadcast %140 : vector<1x256xf32> to vector<8x256xf32>
    %145 = arith.mulf %144, %143 : vector<8x256xf32>
    %146 = vector.extract_strided_slice %2 {offsets = [1, 0], sizes = [1, 256], strides = [1, 1]} : vector<9x256xf32> to vector<1x256xf32>
    %147 = vector.extract_strided_slice %139 {offsets = [0, 240], sizes = [8, 16], strides = [1, 1]} : vector<8x256xf32> to vector<8x16xf32>
    %148 = vector.extract_strided_slice %139 {offsets = [0, 0], sizes = [8, 240], strides = [1, 1]} : vector<8x256xf32> to vector<8x240xf32>
    %149 = tpu.concatenate %147, %148 in 1 : vector<8x16xf32>, vector<8x240xf32> -> vector<8x256xf32>
    %150 = vector.broadcast %146 : vector<1x256xf32> to vector<8x256xf32>
    %151 = arith.mulf %150, %149 : vector<8x256xf32>
    %152 = vector.extract_strided_slice %2 {offsets = [2, 0], sizes = [1, 256], strides = [1, 1]} : vector<9x256xf32> to vector<1x256xf32>
    %153 = vector.extract_strided_slice %139 {offsets = [0, 241], sizes = [8, 15], strides = [1, 1]} : vector<8x256xf32> to vector<8x15xf32>
    %154 = vector.extract_strided_slice %139 {offsets = [0, 0], sizes = [8, 241], strides = [1, 1]} : vector<8x256xf32> to vector<8x241xf32>
    %155 = tpu.concatenate %153, %154 in 1 : vector<8x15xf32>, vector<8x241xf32> -> vector<8x256xf32>
    %156 = vector.broadcast %152 : vector<1x256xf32> to vector<8x256xf32>
    %157 = arith.mulf %156, %155 : vector<8x256xf32>
    %158 = vector.extract_strided_slice %2 {offsets = [3, 0], sizes = [1, 256], strides = [1, 1]} : vector<9x256xf32> to vector<1x256xf32>
    %159 = vector.extract_strided_slice %139 {offsets = [0, 255], sizes = [8, 1], strides = [1, 1]} : vector<8x256xf32> to vector<8x1xf32>
    %160 = vector.extract_strided_slice %139 {offsets = [0, 0], sizes = [8, 255], strides = [1, 1]} : vector<8x256xf32> to vector<8x255xf32>
    %161 = tpu.concatenate %159, %160 in 1 : vector<8x1xf32>, vector<8x255xf32> -> vector<8x256xf32>
    %162 = vector.broadcast %158 : vector<1x256xf32> to vector<8x256xf32>
    %163 = arith.mulf %162, %161 : vector<8x256xf32>
    %164 = vector.extract_strided_slice %2 {offsets = [4, 0], sizes = [1, 256], strides = [1, 1]} : vector<9x256xf32> to vector<1x256xf32>
    %165 = vector.broadcast %164 : vector<1x256xf32> to vector<8x256xf32>
    %166 = arith.mulf %165, %139 : vector<8x256xf32>
    %167 = vector.extract_strided_slice %2 {offsets = [5, 0], sizes = [1, 256], strides = [1, 1]} : vector<9x256xf32> to vector<1x256xf32>
    %168 = vector.extract_strided_slice %139 {offsets = [0, 1], sizes = [8, 255], strides = [1, 1]} : vector<8x256xf32> to vector<8x255xf32>
    %169 = vector.extract_strided_slice %139 {offsets = [0, 0], sizes = [8, 1], strides = [1, 1]} : vector<8x256xf32> to vector<8x1xf32>
    %170 = tpu.concatenate %168, %169 in 1 : vector<8x255xf32>, vector<8x1xf32> -> vector<8x256xf32>
    %171 = vector.broadcast %167 : vector<1x256xf32> to vector<8x256xf32>
    %172 = arith.mulf %171, %170 : vector<8x256xf32>
    %173 = vector.extract_strided_slice %2 {offsets = [6, 0], sizes = [1, 256], strides = [1, 1]} : vector<9x256xf32> to vector<1x256xf32>
    %174 = vector.extract_strided_slice %139 {offsets = [0, 15], sizes = [8, 241], strides = [1, 1]} : vector<8x256xf32> to vector<8x241xf32>
    %175 = vector.extract_strided_slice %139 {offsets = [0, 0], sizes = [8, 15], strides = [1, 1]} : vector<8x256xf32> to vector<8x15xf32>
    %176 = tpu.concatenate %174, %175 in 1 : vector<8x241xf32>, vector<8x15xf32> -> vector<8x256xf32>
    %177 = vector.broadcast %173 : vector<1x256xf32> to vector<8x256xf32>
    %178 = arith.mulf %177, %176 : vector<8x256xf32>
    %179 = vector.extract_strided_slice %2 {offsets = [7, 0], sizes = [1, 256], strides = [1, 1]} : vector<9x256xf32> to vector<1x256xf32>
    %180 = vector.extract_strided_slice %139 {offsets = [0, 16], sizes = [8, 240], strides = [1, 1]} : vector<8x256xf32> to vector<8x240xf32>
    %181 = vector.extract_strided_slice %139 {offsets = [0, 0], sizes = [8, 16], strides = [1, 1]} : vector<8x256xf32> to vector<8x16xf32>
    %182 = tpu.concatenate %180, %181 in 1 : vector<8x240xf32>, vector<8x16xf32> -> vector<8x256xf32>
    %183 = vector.broadcast %179 : vector<1x256xf32> to vector<8x256xf32>
    %184 = arith.mulf %183, %182 : vector<8x256xf32>
    %185 = vector.extract_strided_slice %2 {offsets = [8, 0], sizes = [1, 256], strides = [1, 1]} : vector<9x256xf32> to vector<1x256xf32>
    %186 = vector.extract_strided_slice %139 {offsets = [0, 17], sizes = [8, 239], strides = [1, 1]} : vector<8x256xf32> to vector<8x239xf32>
    %187 = vector.extract_strided_slice %139 {offsets = [0, 0], sizes = [8, 17], strides = [1, 1]} : vector<8x256xf32> to vector<8x17xf32>
    %188 = tpu.concatenate %186, %187 in 1 : vector<8x239xf32>, vector<8x17xf32> -> vector<8x256xf32>
    %189 = vector.broadcast %185 : vector<1x256xf32> to vector<8x256xf32>
    %190 = arith.mulf %189, %188 : vector<8x256xf32>
    %cst_43 = arith.constant dense<0.000000e+00> : vector<4x256xf32>
    %191 = tpu.matmul %11, %2, %cst_43 {dimension_numbers = #tpu.dot_dimension_numbers<[1], [0], [0], [1], [0, 0, 1, 1], [], []>} : vector<4x9xf32>, vector<9x256xf32>, vector<4x256xf32> -> vector<4x256xf32>
    %192 = vector.broadcast %0 : vector<1x1xf32> to vector<4x256xf32>
    %193 = arith.mulf %192, %191 : vector<4x256xf32>
    %194 = vector.broadcast %12 : vector<4x1xf32> to vector<4x256xf32>
    %195 = arith.addf %193, %194 : vector<4x256xf32>
    %196 = vector.extract_strided_slice %145 {offsets = [0, 0], sizes = [4, 256], strides = [1, 1]} : vector<8x256xf32> to vector<4x256xf32>
    %197 = vector.extract_strided_slice %151 {offsets = [0, 0], sizes = [4, 256], strides = [1, 1]} : vector<8x256xf32> to vector<4x256xf32>
    %198 = vector.extract_strided_slice %157 {offsets = [0, 0], sizes = [4, 256], strides = [1, 1]} : vector<8x256xf32> to vector<4x256xf32>
    %199 = vector.extract_strided_slice %163 {offsets = [0, 0], sizes = [4, 256], strides = [1, 1]} : vector<8x256xf32> to vector<4x256xf32>
    %200 = vector.extract_strided_slice %166 {offsets = [0, 0], sizes = [4, 256], strides = [1, 1]} : vector<8x256xf32> to vector<4x256xf32>
    %201 = vector.extract_strided_slice %172 {offsets = [0, 0], sizes = [4, 256], strides = [1, 1]} : vector<8x256xf32> to vector<4x256xf32>
    %202 = vector.extract_strided_slice %178 {offsets = [0, 0], sizes = [4, 256], strides = [1, 1]} : vector<8x256xf32> to vector<4x256xf32>
    %203 = vector.extract_strided_slice %184 {offsets = [0, 0], sizes = [4, 256], strides = [1, 1]} : vector<8x256xf32> to vector<4x256xf32>
    %204 = vector.extract_strided_slice %190 {offsets = [0, 0], sizes = [4, 256], strides = [1, 1]} : vector<8x256xf32> to vector<4x256xf32>
    %205 = tpu.concatenate %196, %197, %198, %199, %200, %201, %202, %203, %204 in 0 : vector<4x256xf32>, vector<4x256xf32>, vector<4x256xf32>, vector<4x256xf32>, vector<4x256xf32>, vector<4x256xf32>, vector<4x256xf32>, vector<4x256xf32>, vector<4x256xf32> -> vector<36x256xf32>
    %cst_44 = arith.constant dense<0.000000e+00> : vector<4x256xf32>
    %206 = tpu.matmul %10, %205, %cst_44 {dimension_numbers = #tpu.dot_dimension_numbers<[1], [0], [0], [1], [0, 0, 1, 1], [], []>} : vector<4x36xf32>, vector<36x256xf32>, vector<4x256xf32> -> vector<4x256xf32>
    %207 = arith.addf %206, %195 : vector<4x256xf32>
    %208 = vector.extract_strided_slice %145 {offsets = [4, 0], sizes = [4, 256], strides = [1, 1]} : vector<8x256xf32> to vector<4x256xf32>
    %209 = vector.extract_strided_slice %151 {offsets = [4, 0], sizes = [4, 256], strides = [1, 1]} : vector<8x256xf32> to vector<4x256xf32>
    %210 = vector.extract_strided_slice %157 {offsets = [4, 0], sizes = [4, 256], strides = [1, 1]} : vector<8x256xf32> to vector<4x256xf32>
    %211 = vector.extract_strided_slice %163 {offsets = [4, 0], sizes = [4, 256], strides = [1, 1]} : vector<8x256xf32> to vector<4x256xf32>
    %212 = vector.extract_strided_slice %166 {offsets = [4, 0], sizes = [4, 256], strides = [1, 1]} : vector<8x256xf32> to vector<4x256xf32>
    %213 = vector.extract_strided_slice %172 {offsets = [4, 0], sizes = [4, 256], strides = [1, 1]} : vector<8x256xf32> to vector<4x256xf32>
    %214 = vector.extract_strided_slice %178 {offsets = [4, 0], sizes = [4, 256], strides = [1, 1]} : vector<8x256xf32> to vector<4x256xf32>
    %215 = vector.extract_strided_slice %184 {offsets = [4, 0], sizes = [4, 256], strides = [1, 1]} : vector<8x256xf32> to vector<4x256xf32>
    %216 = vector.extract_strided_slice %190 {offsets = [4, 0], sizes = [4, 256], strides = [1, 1]} : vector<8x256xf32> to vector<4x256xf32>
    %217 = tpu.concatenate %208, %209, %210, %211, %212, %213, %214, %215, %216 in 0 : vector<4x256xf32>, vector<4x256xf32>, vector<4x256xf32>, vector<4x256xf32>, vector<4x256xf32>, vector<4x256xf32>, vector<4x256xf32>, vector<4x256xf32>, vector<4x256xf32> -> vector<36x256xf32>
    %cst_45 = arith.constant dense<0.000000e+00> : vector<4x256xf32>
    %218 = tpu.matmul %10, %217, %cst_45 {dimension_numbers = #tpu.dot_dimension_numbers<[1], [0], [0], [1], [0, 0, 1, 1], [], []>} : vector<4x36xf32>, vector<36x256xf32>, vector<4x256xf32> -> vector<4x256xf32>
    %219 = arith.addf %218, %195 : vector<4x256xf32>
    %220 = tpu.concatenate %207, %219 in 0 : vector<4x256xf32>, vector<4x256xf32> -> vector<8x256xf32>
    %cst_46 = arith.constant dense<0.000000e+00> : vector<8xf32>
    %221 = vector.multi_reduction <add>, %220, %cst_46 [1] : vector<8x256xf32> to vector<8xf32>
    %222 = vector.shape_cast %221 : vector<8xf32> to vector<8x1xf32>
    %cst_47 = arith.constant 2.560000e+02 : f32
    %223 = vector.broadcast %cst_47 : f32 to vector<8x1xf32>
    %224 = arith.divf %222, %223 : vector<8x1xf32>
    %225 = vector.broadcast %224 : vector<8x1xf32> to vector<8x256xf32>
    %226 = arith.subf %220, %225 : vector<8x256xf32>
    %227 = arith.mulf %226, %226 : vector<8x256xf32>
    %cst_48 = arith.constant dense<0.000000e+00> : vector<8xf32>
    %228 = vector.multi_reduction <add>, %227, %cst_48 [1] : vector<8x256xf32> to vector<8xf32>
    %229 = vector.shape_cast %228 : vector<8xf32> to vector<8x1xf32>
    %cst_49 = arith.constant 2.560000e+02 : f32
    %230 = vector.broadcast %cst_49 : f32 to vector<8x1xf32>
    %231 = arith.divf %229, %230 : vector<8x1xf32>
    %cst_50 = arith.constant 9.99999974E-6 : f32
    %232 = vector.broadcast %cst_50 : f32 to vector<8x1xf32>
    %233 = arith.addf %231, %232 : vector<8x1xf32>
    %234 = math.rsqrt %233 : vector<8x1xf32>
    %235 = vector.broadcast %234 : vector<8x1xf32> to vector<8x256xf32>
    %236 = arith.mulf %226, %235 : vector<8x256xf32>
    %237 = vector.broadcast %13 : vector<8x1xf32> to vector<8x256xf32>
    %238 = arith.mulf %236, %237 : vector<8x256xf32>
    %239 = vector.broadcast %14 : vector<8x1xf32> to vector<8x256xf32>
    %240 = arith.addf %238, %239 : vector<8x256xf32>
    %c0_51 = arith.constant 0 : index
    %c0_52 = arith.constant 0 : index
    %241 = vector.load %arg15[%c0_51, %c0_52] : memref<8x256xf32, #tpu.memory_space<vmem>>, vector<8x256xf32>
    tpu.vector_store %arg15[%c0_51, %c0_52], %240 {strides = array<i32>} : memref<8x256xf32, #tpu.memory_space<vmem>>, vector<8x256xf32>,
    return
  }
}

module attributes {stable_mosaic.version = 11 : i64} {
  func.func @_dopri5_step_kernel(%arg0: memref<1x1xf32, #tpu.memory_space<vmem>>, %arg1: memref<1x1xf32, #tpu.memory_space<vmem>>, %arg2: memref<8x256xf32, #tpu.memory_space<vmem>>, %arg3: memref<8x256xf32, #tpu.memory_space<vmem>>, %arg4: memref<9x256xf32, #tpu.memory_space<vmem>>, %arg5: memref<8x1xf32, #tpu.memory_space<vmem>>, %arg6: memref<8x1xf32, #tpu.memory_space<vmem>>, %arg7: memref<4x36xf32, #tpu.memory_space<vmem>>, %arg8: memref<4x9xf32, #tpu.memory_space<vmem>>, %arg9: memref<4x1xf32, #tpu.memory_space<vmem>>, %arg10: memref<8x1xf32, #tpu.memory_space<vmem>>, %arg11: memref<8x1xf32, #tpu.memory_space<vmem>>, %arg12: memref<4x36xf32, #tpu.memory_space<vmem>>, %arg13: memref<4x9xf32, #tpu.memory_space<vmem>>, %arg14: memref<4x1xf32, #tpu.memory_space<vmem>>, %arg15: memref<8x1xf32, #tpu.memory_space<vmem>>, %arg16: memref<8x1xf32, #tpu.memory_space<vmem>>, %arg17: memref<8x256xf32, #tpu.memory_space<vmem>>, %arg18: memref<8x256xf32, #tpu.memory_space<vmem>>, %arg19: memref<1x1xf32, #tpu.memory_space<vmem>>, %arg20: memref<1x1xf32, #tpu.memory_space<vmem>>) attributes {dimension_semantics = [], scalar_prefetch = 0 : i64, scratch_operands = 0 : i64, tpu.core_type = #tpu.core_type<tc>} {
    %c0 = arith.constant 0 : index
    %c0_0 = arith.constant 0 : index
    %0 = vector.load %arg5[%c0, %c0_0] : memref<8x1xf32, #tpu.memory_space<vmem>>, vector<8x1xf32>
    %c0_1 = arith.constant 0 : index
    %c0_2 = arith.constant 0 : index
    %1 = vector.load %arg6[%c0_1, %c0_2] : memref<8x1xf32, #tpu.memory_space<vmem>>, vector<8x1xf32>
    %c0_3 = arith.constant 0 : index
    %c0_4 = arith.constant 0 : index
    %2 = vector.load %arg7[%c0_3, %c0_4] : memref<4x36xf32, #tpu.memory_space<vmem>>, vector<4x36xf32>
    %c0_5 = arith.constant 0 : index
    %c0_6 = arith.constant 0 : index
    %3 = vector.load %arg8[%c0_5, %c0_6] : memref<4x9xf32, #tpu.memory_space<vmem>>, vector<4x9xf32>
    %c0_7 = arith.constant 0 : index
    %c0_8 = arith.constant 0 : index
    %4 = vector.load %arg9[%c0_7, %c0_8] : memref<4x1xf32, #tpu.memory_space<vmem>>, vector<4x1xf32>
    %c0_9 = arith.constant 0 : index
    %c0_10 = arith.constant 0 : index
    %5 = vector.load %arg10[%c0_9, %c0_10] : memref<8x1xf32, #tpu.memory_space<vmem>>, vector<8x1xf32>
    %c0_11 = arith.constant 0 : index
    %c0_12 = arith.constant 0 : index
    %6 = vector.load %arg11[%c0_11, %c0_12] : memref<8x1xf32, #tpu.memory_space<vmem>>, vector<8x1xf32>
    %c0_13 = arith.constant 0 : index
    %c0_14 = arith.constant 0 : index
    %7 = vector.load %arg12[%c0_13, %c0_14] : memref<4x36xf32, #tpu.memory_space<vmem>>, vector<4x36xf32>
    %c0_15 = arith.constant 0 : index
    %c0_16 = arith.constant 0 : index
    %8 = vector.load %arg13[%c0_15, %c0_16] : memref<4x9xf32, #tpu.memory_space<vmem>>, vector<4x9xf32>
    %c0_17 = arith.constant 0 : index
    %c0_18 = arith.constant 0 : index
    %9 = vector.load %arg14[%c0_17, %c0_18] : memref<4x1xf32, #tpu.memory_space<vmem>>, vector<4x1xf32>
    %c0_19 = arith.constant 0 : index
    %c0_20 = arith.constant 0 : index
    %10 = vector.load %arg15[%c0_19, %c0_20] : memref<8x1xf32, #tpu.memory_space<vmem>>, vector<8x1xf32>
    %c0_21 = arith.constant 0 : index
    %c0_22 = arith.constant 0 : index
    %11 = vector.load %arg16[%c0_21, %c0_22] : memref<8x1xf32, #tpu.memory_space<vmem>>, vector<8x1xf32>
    %c0_23 = arith.constant 0 : index
    %c0_24 = arith.constant 0 : index
    %12 = vector.load %arg0[%c0_23, %c0_24] : memref<1x1xf32, #tpu.memory_space<vmem>>, vector<1x1xf32>
    %c0_25 = arith.constant 0 : index
    %c0_26 = arith.constant 0 : index
    %13 = vector.load %arg1[%c0_25, %c0_26] : memref<1x1xf32, #tpu.memory_space<vmem>>, vector<1x1xf32>
    %cst = arith.constant 1.000000e+00 : f32
    %14 = vector.broadcast %cst : f32 to vector<1x1xf32>
    %15 = arith.subf %14, %12 : vector<1x1xf32>
    %16 = arith.minimumf %13, %15 : vector<1x1xf32>
    %c0_27 = arith.constant 0 : index
    %c0_28 = arith.constant 0 : index
    %17 = vector.load %arg2[%c0_27, %c0_28] : memref<8x256xf32, #tpu.memory_space<vmem>>, vector<8x256xf32>
    %c0_29 = arith.constant 0 : index
    %c0_30 = arith.constant 0 : index
    %18 = vector.load %arg3[%c0_29, %c0_30] : memref<8x256xf32, #tpu.memory_space<vmem>>, vector<8x256xf32>
    %c0_31 = arith.constant 0 : index
    %c0_32 = arith.constant 0 : index
    %19 = vector.load %arg4[%c0_31, %c0_32] : memref<9x256xf32, #tpu.memory_space<vmem>>, vector<9x256xf32>
    %cst_33 = arith.constant 2.000000e-01 : f32
    %20 = vector.broadcast %cst_33 : f32 to vector<1x1xf32>
    %21 = arith.mulf %16, %20 : vector<1x1xf32>
    %22 = arith.addf %12, %21 : vector<1x1xf32>
    %cst_34 = arith.constant 2.000000e-01 : f32
    %23 = vector.broadcast %cst_34 : f32 to vector<8x256xf32>
    %24 = arith.mulf %23, %18 : vector<8x256xf32>
    %25 = vector.broadcast %16 : vector<1x1xf32> to vector<8x256xf32>
    %26 = arith.mulf %25, %24 : vector<8x256xf32>
    %27 = arith.addf %17, %26 : vector<8x256xf32>
    %cst_35 = arith.constant dense<0.000000e+00> : vector<8xf32>
    %28 = vector.multi_reduction <add>, %27, %cst_35 [1] : vector<8x256xf32> to vector<8xf32>
    %29 = vector.shape_cast %28 : vector<8xf32> to vector<8x1xf32>
    %cst_36 = arith.constant 2.560000e+02 : f32
    %30 = vector.broadcast %cst_36 : f32 to vector<8x1xf32>
    %31 = arith.divf %29, %30 : vector<8x1xf32>
    %32 = vector.broadcast %31 : vector<8x1xf32> to vector<8x256xf32>
    %33 = arith.subf %27, %32 : vector<8x256xf32>
    %34 = arith.mulf %33, %33 : vector<8x256xf32>
    %cst_37 = arith.constant dense<0.000000e+00> : vector<8xf32>
    %35 = vector.multi_reduction <add>, %34, %cst_37 [1] : vector<8x256xf32> to vector<8xf32>
    %36 = vector.shape_cast %35 : vector<8xf32> to vector<8x1xf32>
    %cst_38 = arith.constant 2.560000e+02 : f32
    %37 = vector.broadcast %cst_38 : f32 to vector<8x1xf32>
    %38 = arith.divf %36, %37 : vector<8x1xf32>
    %cst_39 = arith.constant 9.99999974E-6 : f32
    %39 = vector.broadcast %cst_39 : f32 to vector<8x1xf32>
    %40 = arith.addf %38, %39 : vector<8x1xf32>
    %41 = math.rsqrt %40 : vector<8x1xf32>
    %42 = vector.broadcast %41 : vector<8x1xf32> to vector<8x256xf32>
    %43 = arith.mulf %33, %42 : vector<8x256xf32>
    %44 = vector.broadcast %0 : vector<8x1xf32> to vector<8x256xf32>
    %45 = arith.mulf %43, %44 : vector<8x256xf32>
    %46 = vector.broadcast %1 : vector<8x1xf32> to vector<8x256xf32>
    %47 = arith.addf %45, %46 : vector<8x256xf32>
    %cst_40 = arith.constant 0.000000e+00 : f32
    %48 = vector.broadcast %cst_40 : f32 to vector<8x256xf32>
    %49 = arith.maximumf %47, %48 : vector<8x256xf32>
    %50 = vector.extract_strided_slice %19 {offsets = [0, 0], sizes = [1, 256], strides = [1, 1]} : vector<9x256xf32> to vector<1x256xf32>
    %51 = vector.extract_strided_slice %49 {offsets = [0, 239], sizes = [8, 17], strides = [1, 1]} : vector<8x256xf32> to vector<8x17xf32>
    %52 = vector.extract_strided_slice %49 {offsets = [0, 0], sizes = [8, 239], strides = [1, 1]} : vector<8x256xf32> to vector<8x239xf32>
    %53 = tpu.concatenate %51, %52 in 1 : vector<8x17xf32>, vector<8x239xf32> -> vector<8x256xf32>
    %54 = vector.broadcast %50 : vector<1x256xf32> to vector<8x256xf32>
    %55 = arith.mulf %54, %53 : vector<8x256xf32>
    %56 = vector.extract_strided_slice %19 {offsets = [1, 0], sizes = [1, 256], strides = [1, 1]} : vector<9x256xf32> to vector<1x256xf32>
    %57 = vector.extract_strided_slice %49 {offsets = [0, 240], sizes = [8, 16], strides = [1, 1]} : vector<8x256xf32> to vector<8x16xf32>
    %58 = vector.extract_strided_slice %49 {offsets = [0, 0], sizes = [8, 240], strides = [1, 1]} : vector<8x256xf32> to vector<8x240xf32>
    %59 = tpu.concatenate %57, %58 in 1 : vector<8x16xf32>, vector<8x240xf32> -> vector<8x256xf32>
    %60 = vector.broadcast %56 : vector<1x256xf32> to vector<8x256xf32>
    %61 = arith.mulf %60, %59 : vector<8x256xf32>
    %62 = vector.extract_strided_slice %19 {offsets = [2, 0], sizes = [1, 256], strides = [1, 1]} : vector<9x256xf32> to vector<1x256xf32>
    %63 = vector.extract_strided_slice %49 {offsets = [0, 241], sizes = [8, 15], strides = [1, 1]} : vector<8x256xf32> to vector<8x15xf32>
    %64 = vector.extract_strided_slice %49 {offsets = [0, 0], sizes = [8, 241], strides = [1, 1]} : vector<8x256xf32> to vector<8x241xf32>
    %65 = tpu.concatenate %63, %64 in 1 : vector<8x15xf32>, vector<8x241xf32> -> vector<8x256xf32>
    %66 = vector.broadcast %62 : vector<1x256xf32> to vector<8x256xf32>
    %67 = arith.mulf %66, %65 : vector<8x256xf32>
    %68 = vector.extract_strided_slice %19 {offsets = [3, 0], sizes = [1, 256], strides = [1, 1]} : vector<9x256xf32> to vector<1x256xf32>
    %69 = vector.extract_strided_slice %49 {offsets = [0, 255], sizes = [8, 1], strides = [1, 1]} : vector<8x256xf32> to vector<8x1xf32>
    %70 = vector.extract_strided_slice %49 {offsets = [0, 0], sizes = [8, 255], strides = [1, 1]} : vector<8x256xf32> to vector<8x255xf32>
    %71 = tpu.concatenate %69, %70 in 1 : vector<8x1xf32>, vector<8x255xf32> -> vector<8x256xf32>
    %72 = vector.broadcast %68 : vector<1x256xf32> to vector<8x256xf32>
    %73 = arith.mulf %72, %71 : vector<8x256xf32>
    %74 = vector.extract_strided_slice %19 {offsets = [4, 0], sizes = [1, 256], strides = [1, 1]} : vector<9x256xf32> to vector<1x256xf32>
    %75 = vector.broadcast %74 : vector<1x256xf32> to vector<8x256xf32>
    %76 = arith.mulf %75, %49 : vector<8x256xf32>
    %77 = vector.extract_strided_slice %19 {offsets = [5, 0], sizes = [1, 256], strides = [1, 1]} : vector<9x256xf32> to vector<1x256xf32>
    %78 = vector.extract_strided_slice %49 {offsets = [0, 1], sizes = [8, 255], strides = [1, 1]} : vector<8x256xf32> to vector<8x255xf32>
    %79 = vector.extract_strided_slice %49 {offsets = [0, 0], sizes = [8, 1], strides = [1, 1]} : vector<8x256xf32> to vector<8x1xf32>
    %80 = tpu.concatenate %78, %79 in 1 : vector<8x255xf32>, vector<8x1xf32> -> vector<8x256xf32>
    %81 = vector.broadcast %77 : vector<1x256xf32> to vector<8x256xf32>
    %82 = arith.mulf %81, %80 : vector<8x256xf32>
    %83 = vector.extract_strided_slice %19 {offsets = [6, 0], sizes = [1, 256], strides = [1, 1]} : vector<9x256xf32> to vector<1x256xf32>
    %84 = vector.extract_strided_slice %49 {offsets = [0, 15], sizes = [8, 241], strides = [1, 1]} : vector<8x256xf32> to vector<8x241xf32>
    %85 = vector.extract_strided_slice %49 {offsets = [0, 0], sizes = [8, 15], strides = [1, 1]} : vector<8x256xf32> to vector<8x15xf32>
    %86 = tpu.concatenate %84, %85 in 1 : vector<8x241xf32>, vector<8x15xf32> -> vector<8x256xf32>
    %87 = vector.broadcast %83 : vector<1x256xf32> to vector<8x256xf32>
    %88 = arith.mulf %87, %86 : vector<8x256xf32>
    %89 = vector.extract_strided_slice %19 {offsets = [7, 0], sizes = [1, 256], strides = [1, 1]} : vector<9x256xf32> to vector<1x256xf32>
    %90 = vector.extract_strided_slice %49 {offsets = [0, 16], sizes = [8, 240], strides = [1, 1]} : vector<8x256xf32> to vector<8x240xf32>
    %91 = vector.extract_strided_slice %49 {offsets = [0, 0], sizes = [8, 16], strides = [1, 1]} : vector<8x256xf32> to vector<8x16xf32>
    %92 = tpu.concatenate %90, %91 in 1 : vector<8x240xf32>, vector<8x16xf32> -> vector<8x256xf32>
    %93 = vector.broadcast %89 : vector<1x256xf32> to vector<8x256xf32>
    %94 = arith.mulf %93, %92 : vector<8x256xf32>
    %95 = vector.extract_strided_slice %19 {offsets = [8, 0], sizes = [1, 256], strides = [1, 1]} : vector<9x256xf32> to vector<1x256xf32>
    %96 = vector.extract_strided_slice %49 {offsets = [0, 17], sizes = [8, 239], strides = [1, 1]} : vector<8x256xf32> to vector<8x239xf32>
    %97 = vector.extract_strided_slice %49 {offsets = [0, 0], sizes = [8, 17], strides = [1, 1]} : vector<8x256xf32> to vector<8x17xf32>
    %98 = tpu.concatenate %96, %97 in 1 : vector<8x239xf32>, vector<8x17xf32> -> vector<8x256xf32>
    %99 = vector.broadcast %95 : vector<1x256xf32> to vector<8x256xf32>
    %100 = arith.mulf %99, %98 : vector<8x256xf32>
    %cst_41 = arith.constant dense<0.000000e+00> : vector<4x256xf32>
    %101 = tpu.matmul %3, %19, %cst_41 {dimension_numbers = #tpu.dot_dimension_numbers<[1], [0], [0], [1], [0, 0, 1, 1], [], []>} : vector<4x9xf32>, vector<9x256xf32>, vector<4x256xf32> -> vector<4x256xf32>
    %102 = vector.broadcast %22 : vector<1x1xf32> to vector<4x256xf32>
    %103 = arith.mulf %102, %101 : vector<4x256xf32>
    %104 = vector.broadcast %4 : vector<4x1xf32> to vector<4x256xf32>
    %105 = arith.addf %103, %104 : vector<4x256xf32>
    %106 = vector.extract_strided_slice %55 {offsets = [0, 0], sizes = [4, 256], strides = [1, 1]} : vector<8x256xf32> to vector<4x256xf32>
    %107 = vector.extract_strided_slice %61 {offsets = [0, 0], sizes = [4, 256], strides = [1, 1]} : vector<8x256xf32> to vector<4x256xf32>
    %108 = vector.extract_strided_slice %67 {offsets = [0, 0], sizes = [4, 256], strides = [1, 1]} : vector<8x256xf32> to vector<4x256xf32>
    %109 = vector.extract_strided_slice %73 {offsets = [0, 0], sizes = [4, 256], strides = [1, 1]} : vector<8x256xf32> to vector<4x256xf32>
    %110 = vector.extract_strided_slice %76 {offsets = [0, 0], sizes = [4, 256], strides = [1, 1]} : vector<8x256xf32> to vector<4x256xf32>
    %111 = vector.extract_strided_slice %82 {offsets = [0, 0], sizes = [4, 256], strides = [1, 1]} : vector<8x256xf32> to vector<4x256xf32>
    %112 = vector.extract_strided_slice %88 {offsets = [0, 0], sizes = [4, 256], strides = [1, 1]} : vector<8x256xf32> to vector<4x256xf32>
    %113 = vector.extract_strided_slice %94 {offsets = [0, 0], sizes = [4, 256], strides = [1, 1]} : vector<8x256xf32> to vector<4x256xf32>
    %114 = vector.extract_strided_slice %100 {offsets = [0, 0], sizes = [4, 256], strides = [1, 1]} : vector<8x256xf32> to vector<4x256xf32>
    %115 = tpu.concatenate %106, %107, %108, %109, %110, %111, %112, %113, %114 in 0 : vector<4x256xf32>, vector<4x256xf32>, vector<4x256xf32>, vector<4x256xf32>, vector<4x256xf32>, vector<4x256xf32>, vector<4x256xf32>, vector<4x256xf32>, vector<4x256xf32> -> vector<36x256xf32>
    %cst_42 = arith.constant dense<0.000000e+00> : vector<4x256xf32>
    %116 = tpu.matmul %2, %115, %cst_42 {dimension_numbers = #tpu.dot_dimension_numbers<[1], [0], [0], [1], [0, 0, 1, 1], [], []>} : vector<4x36xf32>, vector<36x256xf32>, vector<4x256xf32> -> vector<4x256xf32>
    %117 = arith.addf %116, %105 : vector<4x256xf32>
    %118 = vector.extract_strided_slice %55 {offsets = [4, 0], sizes = [4, 256], strides = [1, 1]} : vector<8x256xf32> to vector<4x256xf32>
    %119 = vector.extract_strided_slice %61 {offsets = [4, 0], sizes = [4, 256], strides = [1, 1]} : vector<8x256xf32> to vector<4x256xf32>
    %120 = vector.extract_strided_slice %67 {offsets = [4, 0], sizes = [4, 256], strides = [1, 1]} : vector<8x256xf32> to vector<4x256xf32>
    %121 = vector.extract_strided_slice %73 {offsets = [4, 0], sizes = [4, 256], strides = [1, 1]} : vector<8x256xf32> to vector<4x256xf32>
    %122 = vector.extract_strided_slice %76 {offsets = [4, 0], sizes = [4, 256], strides = [1, 1]} : vector<8x256xf32> to vector<4x256xf32>
    %123 = vector.extract_strided_slice %82 {offsets = [4, 0], sizes = [4, 256], strides = [1, 1]} : vector<8x256xf32> to vector<4x256xf32>
    %124 = vector.extract_strided_slice %88 {offsets = [4, 0], sizes = [4, 256], strides = [1, 1]} : vector<8x256xf32> to vector<4x256xf32>
    %125 = vector.extract_strided_slice %94 {offsets = [4, 0], sizes = [4, 256], strides = [1, 1]} : vector<8x256xf32> to vector<4x256xf32>
    %126 = vector.extract_strided_slice %100 {offsets = [4, 0], sizes = [4, 256], strides = [1, 1]} : vector<8x256xf32> to vector<4x256xf32>
    %127 = tpu.concatenate %118, %119, %120, %121, %122, %123, %124, %125, %126 in 0 : vector<4x256xf32>, vector<4x256xf32>, vector<4x256xf32>, vector<4x256xf32>, vector<4x256xf32>, vector<4x256xf32>, vector<4x256xf32>, vector<4x256xf32>, vector<4x256xf32> -> vector<36x256xf32>
    %cst_43 = arith.constant dense<0.000000e+00> : vector<4x256xf32>
    %128 = tpu.matmul %2, %127, %cst_43 {dimension_numbers = #tpu.dot_dimension_numbers<[1], [0], [0], [1], [0, 0, 1, 1], [], []>} : vector<4x36xf32>, vector<36x256xf32>, vector<4x256xf32> -> vector<4x256xf32>
    %129 = arith.addf %128, %105 : vector<4x256xf32>
    %130 = tpu.concatenate %117, %129 in 0 : vector<4x256xf32>, vector<4x256xf32> -> vector<8x256xf32>
    %cst_44 = arith.constant dense<0.000000e+00> : vector<8xf32>
    %131 = vector.multi_reduction <add>, %130, %cst_44 [1] : vector<8x256xf32> to vector<8xf32>
    %132 = vector.shape_cast %131 : vector<8xf32> to vector<8x1xf32>
    %cst_45 = arith.constant 2.560000e+02 : f32
    %133 = vector.broadcast %cst_45 : f32 to vector<8x1xf32>
    %134 = arith.divf %132, %133 : vector<8x1xf32>
    %135 = vector.broadcast %134 : vector<8x1xf32> to vector<8x256xf32>
    %136 = arith.subf %130, %135 : vector<8x256xf32>
    %137 = arith.mulf %136, %136 : vector<8x256xf32>
    %cst_46 = arith.constant dense<0.000000e+00> : vector<8xf32>
    %138 = vector.multi_reduction <add>, %137, %cst_46 [1] : vector<8x256xf32> to vector<8xf32>
    %139 = vector.shape_cast %138 : vector<8xf32> to vector<8x1xf32>
    %cst_47 = arith.constant 2.560000e+02 : f32
    %140 = vector.broadcast %cst_47 : f32 to vector<8x1xf32>
    %141 = arith.divf %139, %140 : vector<8x1xf32>
    %cst_48 = arith.constant 9.99999974E-6 : f32
    %142 = vector.broadcast %cst_48 : f32 to vector<8x1xf32>
    %143 = arith.addf %141, %142 : vector<8x1xf32>
    %144 = math.rsqrt %143 : vector<8x1xf32>
    %145 = vector.broadcast %144 : vector<8x1xf32> to vector<8x256xf32>
    %146 = arith.mulf %136, %145 : vector<8x256xf32>
    %147 = vector.broadcast %5 : vector<8x1xf32> to vector<8x256xf32>
    %148 = arith.mulf %146, %147 : vector<8x256xf32>
    %149 = vector.broadcast %6 : vector<8x1xf32> to vector<8x256xf32>
    %150 = arith.addf %148, %149 : vector<8x256xf32>
    %cst_49 = arith.constant 0.000000e+00 : f32
    %151 = vector.broadcast %cst_49 : f32 to vector<8x256xf32>
    %152 = arith.maximumf %150, %151 : vector<8x256xf32>
    %153 = vector.extract_strided_slice %19 {offsets = [0, 0], sizes = [1, 256], strides = [1, 1]} : vector<9x256xf32> to vector<1x256xf32>
    %154 = vector.extract_strided_slice %152 {offsets = [0, 239], sizes = [8, 17], strides = [1, 1]} : vector<8x256xf32> to vector<8x17xf32>
    %155 = vector.extract_strided_slice %152 {offsets = [0, 0], sizes = [8, 239], strides = [1, 1]} : vector<8x256xf32> to vector<8x239xf32>
    %156 = tpu.concatenate %154, %155 in 1 : vector<8x17xf32>, vector<8x239xf32> -> vector<8x256xf32>
    %157 = vector.broadcast %153 : vector<1x256xf32> to vector<8x256xf32>
    %158 = arith.mulf %157, %156 : vector<8x256xf32>
    %159 = vector.extract_strided_slice %19 {offsets = [1, 0], sizes = [1, 256], strides = [1, 1]} : vector<9x256xf32> to vector<1x256xf32>
    %160 = vector.extract_strided_slice %152 {offsets = [0, 240], sizes = [8, 16], strides = [1, 1]} : vector<8x256xf32> to vector<8x16xf32>
    %161 = vector.extract_strided_slice %152 {offsets = [0, 0], sizes = [8, 240], strides = [1, 1]} : vector<8x256xf32> to vector<8x240xf32>
    %162 = tpu.concatenate %160, %161 in 1 : vector<8x16xf32>, vector<8x240xf32> -> vector<8x256xf32>
    %163 = vector.broadcast %159 : vector<1x256xf32> to vector<8x256xf32>
    %164 = arith.mulf %163, %162 : vector<8x256xf32>
    %165 = vector.extract_strided_slice %19 {offsets = [2, 0], sizes = [1, 256], strides = [1, 1]} : vector<9x256xf32> to vector<1x256xf32>
    %166 = vector.extract_strided_slice %152 {offsets = [0, 241], sizes = [8, 15], strides = [1, 1]} : vector<8x256xf32> to vector<8x15xf32>
    %167 = vector.extract_strided_slice %152 {offsets = [0, 0], sizes = [8, 241], strides = [1, 1]} : vector<8x256xf32> to vector<8x241xf32>
    %168 = tpu.concatenate %166, %167 in 1 : vector<8x15xf32>, vector<8x241xf32> -> vector<8x256xf32>
    %169 = vector.broadcast %165 : vector<1x256xf32> to vector<8x256xf32>
    %170 = arith.mulf %169, %168 : vector<8x256xf32>
    %171 = vector.extract_strided_slice %19 {offsets = [3, 0], sizes = [1, 256], strides = [1, 1]} : vector<9x256xf32> to vector<1x256xf32>
    %172 = vector.extract_strided_slice %152 {offsets = [0, 255], sizes = [8, 1], strides = [1, 1]} : vector<8x256xf32> to vector<8x1xf32>
    %173 = vector.extract_strided_slice %152 {offsets = [0, 0], sizes = [8, 255], strides = [1, 1]} : vector<8x256xf32> to vector<8x255xf32>
    %174 = tpu.concatenate %172, %173 in 1 : vector<8x1xf32>, vector<8x255xf32> -> vector<8x256xf32>
    %175 = vector.broadcast %171 : vector<1x256xf32> to vector<8x256xf32>
    %176 = arith.mulf %175, %174 : vector<8x256xf32>
    %177 = vector.extract_strided_slice %19 {offsets = [4, 0], sizes = [1, 256], strides = [1, 1]} : vector<9x256xf32> to vector<1x256xf32>
    %178 = vector.broadcast %177 : vector<1x256xf32> to vector<8x256xf32>
    %179 = arith.mulf %178, %152 : vector<8x256xf32>
    %180 = vector.extract_strided_slice %19 {offsets = [5, 0], sizes = [1, 256], strides = [1, 1]} : vector<9x256xf32> to vector<1x256xf32>
    %181 = vector.extract_strided_slice %152 {offsets = [0, 1], sizes = [8, 255], strides = [1, 1]} : vector<8x256xf32> to vector<8x255xf32>
    %182 = vector.extract_strided_slice %152 {offsets = [0, 0], sizes = [8, 1], strides = [1, 1]} : vector<8x256xf32> to vector<8x1xf32>
    %183 = tpu.concatenate %181, %182 in 1 : vector<8x255xf32>, vector<8x1xf32> -> vector<8x256xf32>
    %184 = vector.broadcast %180 : vector<1x256xf32> to vector<8x256xf32>
    %185 = arith.mulf %184, %183 : vector<8x256xf32>
    %186 = vector.extract_strided_slice %19 {offsets = [6, 0], sizes = [1, 256], strides = [1, 1]} : vector<9x256xf32> to vector<1x256xf32>
    %187 = vector.extract_strided_slice %152 {offsets = [0, 15], sizes = [8, 241], strides = [1, 1]} : vector<8x256xf32> to vector<8x241xf32>
    %188 = vector.extract_strided_slice %152 {offsets = [0, 0], sizes = [8, 15], strides = [1, 1]} : vector<8x256xf32> to vector<8x15xf32>
    %189 = tpu.concatenate %187, %188 in 1 : vector<8x241xf32>, vector<8x15xf32> -> vector<8x256xf32>
    %190 = vector.broadcast %186 : vector<1x256xf32> to vector<8x256xf32>
    %191 = arith.mulf %190, %189 : vector<8x256xf32>
    %192 = vector.extract_strided_slice %19 {offsets = [7, 0], sizes = [1, 256], strides = [1, 1]} : vector<9x256xf32> to vector<1x256xf32>
    %193 = vector.extract_strided_slice %152 {offsets = [0, 16], sizes = [8, 240], strides = [1, 1]} : vector<8x256xf32> to vector<8x240xf32>
    %194 = vector.extract_strided_slice %152 {offsets = [0, 0], sizes = [8, 16], strides = [1, 1]} : vector<8x256xf32> to vector<8x16xf32>
    %195 = tpu.concatenate %193, %194 in 1 : vector<8x240xf32>, vector<8x16xf32> -> vector<8x256xf32>
    %196 = vector.broadcast %192 : vector<1x256xf32> to vector<8x256xf32>
    %197 = arith.mulf %196, %195 : vector<8x256xf32>
    %198 = vector.extract_strided_slice %19 {offsets = [8, 0], sizes = [1, 256], strides = [1, 1]} : vector<9x256xf32> to vector<1x256xf32>
    %199 = vector.extract_strided_slice %152 {offsets = [0, 17], sizes = [8, 239], strides = [1, 1]} : vector<8x256xf32> to vector<8x239xf32>
    %200 = vector.extract_strided_slice %152 {offsets = [0, 0], sizes = [8, 17], strides = [1, 1]} : vector<8x256xf32> to vector<8x17xf32>
    %201 = tpu.concatenate %199, %200 in 1 : vector<8x239xf32>, vector<8x17xf32> -> vector<8x256xf32>
    %202 = vector.broadcast %198 : vector<1x256xf32> to vector<8x256xf32>
    %203 = arith.mulf %202, %201 : vector<8x256xf32>
    %cst_50 = arith.constant dense<0.000000e+00> : vector<4x256xf32>
    %204 = tpu.matmul %8, %19, %cst_50 {dimension_numbers = #tpu.dot_dimension_numbers<[1], [0], [0], [1], [0, 0, 1, 1], [], []>} : vector<4x9xf32>, vector<9x256xf32>, vector<4x256xf32> -> vector<4x256xf32>
    %205 = vector.broadcast %22 : vector<1x1xf32> to vector<4x256xf32>
    %206 = arith.mulf %205, %204 : vector<4x256xf32>
    %207 = vector.broadcast %9 : vector<4x1xf32> to vector<4x256xf32>
    %208 = arith.addf %206, %207 : vector<4x256xf32>
    %209 = vector.extract_strided_slice %158 {offsets = [0, 0], sizes = [4, 256], strides = [1, 1]} : vector<8x256xf32> to vector<4x256xf32>
    %210 = vector.extract_strided_slice %164 {offsets = [0, 0], sizes = [4, 256], strides = [1, 1]} : vector<8x256xf32> to vector<4x256xf32>
    %211 = vector.extract_strided_slice %170 {offsets = [0, 0], sizes = [4, 256], strides = [1, 1]} : vector<8x256xf32> to vector<4x256xf32>
    %212 = vector.extract_strided_slice %176 {offsets = [0, 0], sizes = [4, 256], strides = [1, 1]} : vector<8x256xf32> to vector<4x256xf32>
    %213 = vector.extract_strided_slice %179 {offsets = [0, 0], sizes = [4, 256], strides = [1, 1]} : vector<8x256xf32> to vector<4x256xf32>
    %214 = vector.extract_strided_slice %185 {offsets = [0, 0], sizes = [4, 256], strides = [1, 1]} : vector<8x256xf32> to vector<4x256xf32>
    %215 = vector.extract_strided_slice %191 {offsets = [0, 0], sizes = [4, 256], strides = [1, 1]} : vector<8x256xf32> to vector<4x256xf32>
    %216 = vector.extract_strided_slice %197 {offsets = [0, 0], sizes = [4, 256], strides = [1, 1]} : vector<8x256xf32> to vector<4x256xf32>
    %217 = vector.extract_strided_slice %203 {offsets = [0, 0], sizes = [4, 256], strides = [1, 1]} : vector<8x256xf32> to vector<4x256xf32>
    %218 = tpu.concatenate %209, %210, %211, %212, %213, %214, %215, %216, %217 in 0 : vector<4x256xf32>, vector<4x256xf32>, vector<4x256xf32>, vector<4x256xf32>, vector<4x256xf32>, vector<4x256xf32>, vector<4x256xf32>, vector<4x256xf32>, vector<4x256xf32> -> vector<36x256xf32>
    %cst_51 = arith.constant dense<0.000000e+00> : vector<4x256xf32>
    %219 = tpu.matmul %7, %218, %cst_51 {dimension_numbers = #tpu.dot_dimension_numbers<[1], [0], [0], [1], [0, 0, 1, 1], [], []>} : vector<4x36xf32>, vector<36x256xf32>, vector<4x256xf32> -> vector<4x256xf32>
    %220 = arith.addf %219, %208 : vector<4x256xf32>
    %221 = vector.extract_strided_slice %158 {offsets = [4, 0], sizes = [4, 256], strides = [1, 1]} : vector<8x256xf32> to vector<4x256xf32>
    %222 = vector.extract_strided_slice %164 {offsets = [4, 0], sizes = [4, 256], strides = [1, 1]} : vector<8x256xf32> to vector<4x256xf32>
    %223 = vector.extract_strided_slice %170 {offsets = [4, 0], sizes = [4, 256], strides = [1, 1]} : vector<8x256xf32> to vector<4x256xf32>
    %224 = vector.extract_strided_slice %176 {offsets = [4, 0], sizes = [4, 256], strides = [1, 1]} : vector<8x256xf32> to vector<4x256xf32>
    %225 = vector.extract_strided_slice %179 {offsets = [4, 0], sizes = [4, 256], strides = [1, 1]} : vector<8x256xf32> to vector<4x256xf32>
    %226 = vector.extract_strided_slice %185 {offsets = [4, 0], sizes = [4, 256], strides = [1, 1]} : vector<8x256xf32> to vector<4x256xf32>
    %227 = vector.extract_strided_slice %191 {offsets = [4, 0], sizes = [4, 256], strides = [1, 1]} : vector<8x256xf32> to vector<4x256xf32>
    %228 = vector.extract_strided_slice %197 {offsets = [4, 0], sizes = [4, 256], strides = [1, 1]} : vector<8x256xf32> to vector<4x256xf32>
    %229 = vector.extract_strided_slice %203 {offsets = [4, 0], sizes = [4, 256], strides = [1, 1]} : vector<8x256xf32> to vector<4x256xf32>
    %230 = tpu.concatenate %221, %222, %223, %224, %225, %226, %227, %228, %229 in 0 : vector<4x256xf32>, vector<4x256xf32>, vector<4x256xf32>, vector<4x256xf32>, vector<4x256xf32>, vector<4x256xf32>, vector<4x256xf32>, vector<4x256xf32>, vector<4x256xf32> -> vector<36x256xf32>
    %cst_52 = arith.constant dense<0.000000e+00> : vector<4x256xf32>
    %231 = tpu.matmul %7, %230, %cst_52 {dimension_numbers = #tpu.dot_dimension_numbers<[1], [0], [0], [1], [0, 0, 1, 1], [], []>} : vector<4x36xf32>, vector<36x256xf32>, vector<4x256xf32> -> vector<4x256xf32>
    %232 = arith.addf %231, %208 : vector<4x256xf32>
    %233 = tpu.concatenate %220, %232 in 0 : vector<4x256xf32>, vector<4x256xf32> -> vector<8x256xf32>
    %cst_53 = arith.constant dense<0.000000e+00> : vector<8xf32>
    %234 = vector.multi_reduction <add>, %233, %cst_53 [1] : vector<8x256xf32> to vector<8xf32>
    %235 = vector.shape_cast %234 : vector<8xf32> to vector<8x1xf32>
    %cst_54 = arith.constant 2.560000e+02 : f32
    %236 = vector.broadcast %cst_54 : f32 to vector<8x1xf32>
    %237 = arith.divf %235, %236 : vector<8x1xf32>
    %238 = vector.broadcast %237 : vector<8x1xf32> to vector<8x256xf32>
    %239 = arith.subf %233, %238 : vector<8x256xf32>
    %240 = arith.mulf %239, %239 : vector<8x256xf32>
    %cst_55 = arith.constant dense<0.000000e+00> : vector<8xf32>
    %241 = vector.multi_reduction <add>, %240, %cst_55 [1] : vector<8x256xf32> to vector<8xf32>
    %242 = vector.shape_cast %241 : vector<8xf32> to vector<8x1xf32>
    %cst_56 = arith.constant 2.560000e+02 : f32
    %243 = vector.broadcast %cst_56 : f32 to vector<8x1xf32>
    %244 = arith.divf %242, %243 : vector<8x1xf32>
    %cst_57 = arith.constant 9.99999974E-6 : f32
    %245 = vector.broadcast %cst_57 : f32 to vector<8x1xf32>
    %246 = arith.addf %244, %245 : vector<8x1xf32>
    %247 = math.rsqrt %246 : vector<8x1xf32>
    %248 = vector.broadcast %247 : vector<8x1xf32> to vector<8x256xf32>
    %249 = arith.mulf %239, %248 : vector<8x256xf32>
    %250 = vector.broadcast %10 : vector<8x1xf32> to vector<8x256xf32>
    %251 = arith.mulf %249, %250 : vector<8x256xf32>
    %252 = vector.broadcast %11 : vector<8x1xf32> to vector<8x256xf32>
    %253 = arith.addf %251, %252 : vector<8x256xf32>
    %cst_58 = arith.constant 3.000000e-01 : f32
    %254 = vector.broadcast %cst_58 : f32 to vector<1x1xf32>
    %255 = arith.mulf %16, %254 : vector<1x1xf32>
    %256 = arith.addf %12, %255 : vector<1x1xf32>
    %cst_59 = arith.constant 7.500000e-02 : f32
    %257 = vector.broadcast %cst_59 : f32 to vector<8x256xf32>
    %258 = arith.mulf %257, %18 : vector<8x256xf32>
    %cst_60 = arith.constant 2.250000e-01 : f32
    %259 = vector.broadcast %cst_60 : f32 to vector<8x256xf32>
    %260 = arith.mulf %259, %253 : vector<8x256xf32>
    %261 = arith.addf %258, %260 : vector<8x256xf32>
    %262 = vector.broadcast %16 : vector<1x1xf32> to vector<8x256xf32>
    %263 = arith.mulf %262, %261 : vector<8x256xf32>
    %264 = arith.addf %17, %263 : vector<8x256xf32>
    %cst_61 = arith.constant dense<0.000000e+00> : vector<8xf32>
    %265 = vector.multi_reduction <add>, %264, %cst_61 [1] : vector<8x256xf32> to vector<8xf32>
    %266 = vector.shape_cast %265 : vector<8xf32> to vector<8x1xf32>
    %cst_62 = arith.constant 2.560000e+02 : f32
    %267 = vector.broadcast %cst_62 : f32 to vector<8x1xf32>
    %268 = arith.divf %266, %267 : vector<8x1xf32>
    %269 = vector.broadcast %268 : vector<8x1xf32> to vector<8x256xf32>
    %270 = arith.subf %264, %269 : vector<8x256xf32>
    %271 = arith.mulf %270, %270 : vector<8x256xf32>
    %cst_63 = arith.constant dense<0.000000e+00> : vector<8xf32>
    %272 = vector.multi_reduction <add>, %271, %cst_63 [1] : vector<8x256xf32> to vector<8xf32>
    %273 = vector.shape_cast %272 : vector<8xf32> to vector<8x1xf32>
    %cst_64 = arith.constant 2.560000e+02 : f32
    %274 = vector.broadcast %cst_64 : f32 to vector<8x1xf32>
    %275 = arith.divf %273, %274 : vector<8x1xf32>
    %cst_65 = arith.constant 9.99999974E-6 : f32
    %276 = vector.broadcast %cst_65 : f32 to vector<8x1xf32>
    %277 = arith.addf %275, %276 : vector<8x1xf32>
    %278 = math.rsqrt %277 : vector<8x1xf32>
    %279 = vector.broadcast %278 : vector<8x1xf32> to vector<8x256xf32>
    %280 = arith.mulf %270, %279 : vector<8x256xf32>
    %281 = vector.broadcast %0 : vector<8x1xf32> to vector<8x256xf32>
    %282 = arith.mulf %280, %281 : vector<8x256xf32>
    %283 = vector.broadcast %1 : vector<8x1xf32> to vector<8x256xf32>
    %284 = arith.addf %282, %283 : vector<8x256xf32>
    %cst_66 = arith.constant 0.000000e+00 : f32
    %285 = vector.broadcast %cst_66 : f32 to vector<8x256xf32>
    %286 = arith.maximumf %284, %285 : vector<8x256xf32>
    %287 = vector.extract_strided_slice %19 {offsets = [0, 0], sizes = [1, 256], strides = [1, 1]} : vector<9x256xf32> to vector<1x256xf32>
    %288 = vector.extract_strided_slice %286 {offsets = [0, 239], sizes = [8, 17], strides = [1, 1]} : vector<8x256xf32> to vector<8x17xf32>
    %289 = vector.extract_strided_slice %286 {offsets = [0, 0], sizes = [8, 239], strides = [1, 1]} : vector<8x256xf32> to vector<8x239xf32>
    %290 = tpu.concatenate %288, %289 in 1 : vector<8x17xf32>, vector<8x239xf32> -> vector<8x256xf32>
    %291 = vector.broadcast %287 : vector<1x256xf32> to vector<8x256xf32>
    %292 = arith.mulf %291, %290 : vector<8x256xf32>
    %293 = vector.extract_strided_slice %19 {offsets = [1, 0], sizes = [1, 256], strides = [1, 1]} : vector<9x256xf32> to vector<1x256xf32>
    %294 = vector.extract_strided_slice %286 {offsets = [0, 240], sizes = [8, 16], strides = [1, 1]} : vector<8x256xf32> to vector<8x16xf32>
    %295 = vector.extract_strided_slice %286 {offsets = [0, 0], sizes = [8, 240], strides = [1, 1]} : vector<8x256xf32> to vector<8x240xf32>
    %296 = tpu.concatenate %294, %295 in 1 : vector<8x16xf32>, vector<8x240xf32> -> vector<8x256xf32>
    %297 = vector.broadcast %293 : vector<1x256xf32> to vector<8x256xf32>
    %298 = arith.mulf %297, %296 : vector<8x256xf32>
    %299 = vector.extract_strided_slice %19 {offsets = [2, 0], sizes = [1, 256], strides = [1, 1]} : vector<9x256xf32> to vector<1x256xf32>
    %300 = vector.extract_strided_slice %286 {offsets = [0, 241], sizes = [8, 15], strides = [1, 1]} : vector<8x256xf32> to vector<8x15xf32>
    %301 = vector.extract_strided_slice %286 {offsets = [0, 0], sizes = [8, 241], strides = [1, 1]} : vector<8x256xf32> to vector<8x241xf32>
    %302 = tpu.concatenate %300, %301 in 1 : vector<8x15xf32>, vector<8x241xf32> -> vector<8x256xf32>
    %303 = vector.broadcast %299 : vector<1x256xf32> to vector<8x256xf32>
    %304 = arith.mulf %303, %302 : vector<8x256xf32>
    %305 = vector.extract_strided_slice %19 {offsets = [3, 0], sizes = [1, 256], strides = [1, 1]} : vector<9x256xf32> to vector<1x256xf32>
    %306 = vector.extract_strided_slice %286 {offsets = [0, 255], sizes = [8, 1], strides = [1, 1]} : vector<8x256xf32> to vector<8x1xf32>
    %307 = vector.extract_strided_slice %286 {offsets = [0, 0], sizes = [8, 255], strides = [1, 1]} : vector<8x256xf32> to vector<8x255xf32>
    %308 = tpu.concatenate %306, %307 in 1 : vector<8x1xf32>, vector<8x255xf32> -> vector<8x256xf32>
    %309 = vector.broadcast %305 : vector<1x256xf32> to vector<8x256xf32>
    %310 = arith.mulf %309, %308 : vector<8x256xf32>
    %311 = vector.extract_strided_slice %19 {offsets = [4, 0], sizes = [1, 256], strides = [1, 1]} : vector<9x256xf32> to vector<1x256xf32>
    %312 = vector.broadcast %311 : vector<1x256xf32> to vector<8x256xf32>
    %313 = arith.mulf %312, %286 : vector<8x256xf32>
    %314 = vector.extract_strided_slice %19 {offsets = [5, 0], sizes = [1, 256], strides = [1, 1]} : vector<9x256xf32> to vector<1x256xf32>
    %315 = vector.extract_strided_slice %286 {offsets = [0, 1], sizes = [8, 255], strides = [1, 1]} : vector<8x256xf32> to vector<8x255xf32>
    %316 = vector.extract_strided_slice %286 {offsets = [0, 0], sizes = [8, 1], strides = [1, 1]} : vector<8x256xf32> to vector<8x1xf32>
    %317 = tpu.concatenate %315, %316 in 1 : vector<8x255xf32>, vector<8x1xf32> -> vector<8x256xf32>
    %318 = vector.broadcast %314 : vector<1x256xf32> to vector<8x256xf32>
    %319 = arith.mulf %318, %317 : vector<8x256xf32>
    %320 = vector.extract_strided_slice %19 {offsets = [6, 0], sizes = [1, 256], strides = [1, 1]} : vector<9x256xf32> to vector<1x256xf32>
    %321 = vector.extract_strided_slice %286 {offsets = [0, 15], sizes = [8, 241], strides = [1, 1]} : vector<8x256xf32> to vector<8x241xf32>
    %322 = vector.extract_strided_slice %286 {offsets = [0, 0], sizes = [8, 15], strides = [1, 1]} : vector<8x256xf32> to vector<8x15xf32>
    %323 = tpu.concatenate %321, %322 in 1 : vector<8x241xf32>, vector<8x15xf32> -> vector<8x256xf32>
    %324 = vector.broadcast %320 : vector<1x256xf32> to vector<8x256xf32>
    %325 = arith.mulf %324, %323 : vector<8x256xf32>
    %326 = vector.extract_strided_slice %19 {offsets = [7, 0], sizes = [1, 256], strides = [1, 1]} : vector<9x256xf32> to vector<1x256xf32>
    %327 = vector.extract_strided_slice %286 {offsets = [0, 16], sizes = [8, 240], strides = [1, 1]} : vector<8x256xf32> to vector<8x240xf32>
    %328 = vector.extract_strided_slice %286 {offsets = [0, 0], sizes = [8, 16], strides = [1, 1]} : vector<8x256xf32> to vector<8x16xf32>
    %329 = tpu.concatenate %327, %328 in 1 : vector<8x240xf32>, vector<8x16xf32> -> vector<8x256xf32>
    %330 = vector.broadcast %326 : vector<1x256xf32> to vector<8x256xf32>
    %331 = arith.mulf %330, %329 : vector<8x256xf32>
    %332 = vector.extract_strided_slice %19 {offsets = [8, 0], sizes = [1, 256], strides = [1, 1]} : vector<9x256xf32> to vector<1x256xf32>
    %333 = vector.extract_strided_slice %286 {offsets = [0, 17], sizes = [8, 239], strides = [1, 1]} : vector<8x256xf32> to vector<8x239xf32>
    %334 = vector.extract_strided_slice %286 {offsets = [0, 0], sizes = [8, 17], strides = [1, 1]} : vector<8x256xf32> to vector<8x17xf32>
    %335 = tpu.concatenate %333, %334 in 1 : vector<8x239xf32>, vector<8x17xf32> -> vector<8x256xf32>
    %336 = vector.broadcast %332 : vector<1x256xf32> to vector<8x256xf32>
    %337 = arith.mulf %336, %335 : vector<8x256xf32>
    %cst_67 = arith.constant dense<0.000000e+00> : vector<4x256xf32>
    %338 = tpu.matmul %3, %19, %cst_67 {dimension_numbers = #tpu.dot_dimension_numbers<[1], [0], [0], [1], [0, 0, 1, 1], [], []>} : vector<4x9xf32>, vector<9x256xf32>, vector<4x256xf32> -> vector<4x256xf32>
    %339 = vector.broadcast %256 : vector<1x1xf32> to vector<4x256xf32>
    %340 = arith.mulf %339, %338 : vector<4x256xf32>
    %341 = vector.broadcast %4 : vector<4x1xf32> to vector<4x256xf32>
    %342 = arith.addf %340, %341 : vector<4x256xf32>
    %343 = vector.extract_strided_slice %292 {offsets = [0, 0], sizes = [4, 256], strides = [1, 1]} : vector<8x256xf32> to vector<4x256xf32>
    %344 = vector.extract_strided_slice %298 {offsets = [0, 0], sizes = [4, 256], strides = [1, 1]} : vector<8x256xf32> to vector<4x256xf32>
    %345 = vector.extract_strided_slice %304 {offsets = [0, 0], sizes = [4, 256], strides = [1, 1]} : vector<8x256xf32> to vector<4x256xf32>
    %346 = vector.extract_strided_slice %310 {offsets = [0, 0], sizes = [4, 256], strides = [1, 1]} : vector<8x256xf32> to vector<4x256xf32>
    %347 = vector.extract_strided_slice %313 {offsets = [0, 0], sizes = [4, 256], strides = [1, 1]} : vector<8x256xf32> to vector<4x256xf32>
    %348 = vector.extract_strided_slice %319 {offsets = [0, 0], sizes = [4, 256], strides = [1, 1]} : vector<8x256xf32> to vector<4x256xf32>
    %349 = vector.extract_strided_slice %325 {offsets = [0, 0], sizes = [4, 256], strides = [1, 1]} : vector<8x256xf32> to vector<4x256xf32>
    %350 = vector.extract_strided_slice %331 {offsets = [0, 0], sizes = [4, 256], strides = [1, 1]} : vector<8x256xf32> to vector<4x256xf32>
    %351 = vector.extract_strided_slice %337 {offsets = [0, 0], sizes = [4, 256], strides = [1, 1]} : vector<8x256xf32> to vector<4x256xf32>
    %352 = tpu.concatenate %343, %344, %345, %346, %347, %348, %349, %350, %351 in 0 : vector<4x256xf32>, vector<4x256xf32>, vector<4x256xf32>, vector<4x256xf32>, vector<4x256xf32>, vector<4x256xf32>, vector<4x256xf32>, vector<4x256xf32>, vector<4x256xf32> -> vector<36x256xf32>
    %cst_68 = arith.constant dense<0.000000e+00> : vector<4x256xf32>
    %353 = tpu.matmul %2, %352, %cst_68 {dimension_numbers = #tpu.dot_dimension_numbers<[1], [0], [0], [1], [0, 0, 1, 1], [], []>} : vector<4x36xf32>, vector<36x256xf32>, vector<4x256xf32> -> vector<4x256xf32>
    %354 = arith.addf %353, %342 : vector<4x256xf32>
    %355 = vector.extract_strided_slice %292 {offsets = [4, 0], sizes = [4, 256], strides = [1, 1]} : vector<8x256xf32> to vector<4x256xf32>
    %356 = vector.extract_strided_slice %298 {offsets = [4, 0], sizes = [4, 256], strides = [1, 1]} : vector<8x256xf32> to vector<4x256xf32>
    %357 = vector.extract_strided_slice %304 {offsets = [4, 0], sizes = [4, 256], strides = [1, 1]} : vector<8x256xf32> to vector<4x256xf32>
    %358 = vector.extract_strided_slice %310 {offsets = [4, 0], sizes = [4, 256], strides = [1, 1]} : vector<8x256xf32> to vector<4x256xf32>
    %359 = vector.extract_strided_slice %313 {offsets = [4, 0], sizes = [4, 256], strides = [1, 1]} : vector<8x256xf32> to vector<4x256xf32>
    %360 = vector.extract_strided_slice %319 {offsets = [4, 0], sizes = [4, 256], strides = [1, 1]} : vector<8x256xf32> to vector<4x256xf32>
    %361 = vector.extract_strided_slice %325 {offsets = [4, 0], sizes = [4, 256], strides = [1, 1]} : vector<8x256xf32> to vector<4x256xf32>
    %362 = vector.extract_strided_slice %331 {offsets = [4, 0], sizes = [4, 256], strides = [1, 1]} : vector<8x256xf32> to vector<4x256xf32>
    %363 = vector.extract_strided_slice %337 {offsets = [4, 0], sizes = [4, 256], strides = [1, 1]} : vector<8x256xf32> to vector<4x256xf32>
    %364 = tpu.concatenate %355, %356, %357, %358, %359, %360, %361, %362, %363 in 0 : vector<4x256xf32>, vector<4x256xf32>, vector<4x256xf32>, vector<4x256xf32>, vector<4x256xf32>, vector<4x256xf32>, vector<4x256xf32>, vector<4x256xf32>, vector<4x256xf32> -> vector<36x256xf32>
    %cst_69 = arith.constant dense<0.000000e+00> : vector<4x256xf32>
    %365 = tpu.matmul %2, %364, %cst_69 {dimension_numbers = #tpu.dot_dimension_numbers<[1], [0], [0], [1], [0, 0, 1, 1], [], []>} : vector<4x36xf32>, vector<36x256xf32>, vector<4x256xf32> -> vector<4x256xf32>
    %366 = arith.addf %365, %342 : vector<4x256xf32>
    %367 = tpu.concatenate %354, %366 in 0 : vector<4x256xf32>, vector<4x256xf32> -> vector<8x256xf32>
    %cst_70 = arith.constant dense<0.000000e+00> : vector<8xf32>
    %368 = vector.multi_reduction <add>, %367, %cst_70 [1] : vector<8x256xf32> to vector<8xf32>
    %369 = vector.shape_cast %368 : vector<8xf32> to vector<8x1xf32>
    %cst_71 = arith.constant 2.560000e+02 : f32
    %370 = vector.broadcast %cst_71 : f32 to vector<8x1xf32>
    %371 = arith.divf %369, %370 : vector<8x1xf32>
    %372 = vector.broadcast %371 : vector<8x1xf32> to vector<8x256xf32>
    %373 = arith.subf %367, %372 : vector<8x256xf32>
    %374 = arith.mulf %373, %373 : vector<8x256xf32>
    %cst_72 = arith.constant dense<0.000000e+00> : vector<8xf32>
    %375 = vector.multi_reduction <add>, %374, %cst_72 [1] : vector<8x256xf32> to vector<8xf32>
    %376 = vector.shape_cast %375 : vector<8xf32> to vector<8x1xf32>
    %cst_73 = arith.constant 2.560000e+02 : f32
    %377 = vector.broadcast %cst_73 : f32 to vector<8x1xf32>
    %378 = arith.divf %376, %377 : vector<8x1xf32>
    %cst_74 = arith.constant 9.99999974E-6 : f32
    %379 = vector.broadcast %cst_74 : f32 to vector<8x1xf32>
    %380 = arith.addf %378, %379 : vector<8x1xf32>
    %381 = math.rsqrt %380 : vector<8x1xf32>
    %382 = vector.broadcast %381 : vector<8x1xf32> to vector<8x256xf32>
    %383 = arith.mulf %373, %382 : vector<8x256xf32>
    %384 = vector.broadcast %5 : vector<8x1xf32> to vector<8x256xf32>
    %385 = arith.mulf %383, %384 : vector<8x256xf32>
    %386 = vector.broadcast %6 : vector<8x1xf32> to vector<8x256xf32>
    %387 = arith.addf %385, %386 : vector<8x256xf32>
    %cst_75 = arith.constant 0.000000e+00 : f32
    %388 = vector.broadcast %cst_75 : f32 to vector<8x256xf32>
    %389 = arith.maximumf %387, %388 : vector<8x256xf32>
    %390 = vector.extract_strided_slice %19 {offsets = [0, 0], sizes = [1, 256], strides = [1, 1]} : vector<9x256xf32> to vector<1x256xf32>
    %391 = vector.extract_strided_slice %389 {offsets = [0, 239], sizes = [8, 17], strides = [1, 1]} : vector<8x256xf32> to vector<8x17xf32>
    %392 = vector.extract_strided_slice %389 {offsets = [0, 0], sizes = [8, 239], strides = [1, 1]} : vector<8x256xf32> to vector<8x239xf32>
    %393 = tpu.concatenate %391, %392 in 1 : vector<8x17xf32>, vector<8x239xf32> -> vector<8x256xf32>
    %394 = vector.broadcast %390 : vector<1x256xf32> to vector<8x256xf32>
    %395 = arith.mulf %394, %393 : vector<8x256xf32>
    %396 = vector.extract_strided_slice %19 {offsets = [1, 0], sizes = [1, 256], strides = [1, 1]} : vector<9x256xf32> to vector<1x256xf32>
    %397 = vector.extract_strided_slice %389 {offsets = [0, 240], sizes = [8, 16], strides = [1, 1]} : vector<8x256xf32> to vector<8x16xf32>
    %398 = vector.extract_strided_slice %389 {offsets = [0, 0], sizes = [8, 240], strides = [1, 1]} : vector<8x256xf32> to vector<8x240xf32>
    %399 = tpu.concatenate %397, %398 in 1 : vector<8x16xf32>, vector<8x240xf32> -> vector<8x256xf32>
    %400 = vector.broadcast %396 : vector<1x256xf32> to vector<8x256xf32>
    %401 = arith.mulf %400, %399 : vector<8x256xf32>
    %402 = vector.extract_strided_slice %19 {offsets = [2, 0], sizes = [1, 256], strides = [1, 1]} : vector<9x256xf32> to vector<1x256xf32>
    %403 = vector.extract_strided_slice %389 {offsets = [0, 241], sizes = [8, 15], strides = [1, 1]} : vector<8x256xf32> to vector<8x15xf32>
    %404 = vector.extract_strided_slice %389 {offsets = [0, 0], sizes = [8, 241], strides = [1, 1]} : vector<8x256xf32> to vector<8x241xf32>
    %405 = tpu.concatenate %403, %404 in 1 : vector<8x15xf32>, vector<8x241xf32> -> vector<8x256xf32>
    %406 = vector.broadcast %402 : vector<1x256xf32> to vector<8x256xf32>
    %407 = arith.mulf %406, %405 : vector<8x256xf32>
    %408 = vector.extract_strided_slice %19 {offsets = [3, 0], sizes = [1, 256], strides = [1, 1]} : vector<9x256xf32> to vector<1x256xf32>
    %409 = vector.extract_strided_slice %389 {offsets = [0, 255], sizes = [8, 1], strides = [1, 1]} : vector<8x256xf32> to vector<8x1xf32>
    %410 = vector.extract_strided_slice %389 {offsets = [0, 0], sizes = [8, 255], strides = [1, 1]} : vector<8x256xf32> to vector<8x255xf32>
    %411 = tpu.concatenate %409, %410 in 1 : vector<8x1xf32>, vector<8x255xf32> -> vector<8x256xf32>
    %412 = vector.broadcast %408 : vector<1x256xf32> to vector<8x256xf32>
    %413 = arith.mulf %412, %411 : vector<8x256xf32>
    %414 = vector.extract_strided_slice %19 {offsets = [4, 0], sizes = [1, 256], strides = [1, 1]} : vector<9x256xf32> to vector<1x256xf32>
    %415 = vector.broadcast %414 : vector<1x256xf32> to vector<8x256xf32>
    %416 = arith.mulf %415, %389 : vector<8x256xf32>
    %417 = vector.extract_strided_slice %19 {offsets = [5, 0], sizes = [1, 256], strides = [1, 1]} : vector<9x256xf32> to vector<1x256xf32>
    %418 = vector.extract_strided_slice %389 {offsets = [0, 1], sizes = [8, 255], strides = [1, 1]} : vector<8x256xf32> to vector<8x255xf32>
    %419 = vector.extract_strided_slice %389 {offsets = [0, 0], sizes = [8, 1], strides = [1, 1]} : vector<8x256xf32> to vector<8x1xf32>
    %420 = tpu.concatenate %418, %419 in 1 : vector<8x255xf32>, vector<8x1xf32> -> vector<8x256xf32>
    %421 = vector.broadcast %417 : vector<1x256xf32> to vector<8x256xf32>
    %422 = arith.mulf %421, %420 : vector<8x256xf32>
    %423 = vector.extract_strided_slice %19 {offsets = [6, 0], sizes = [1, 256], strides = [1, 1]} : vector<9x256xf32> to vector<1x256xf32>
    %424 = vector.extract_strided_slice %389 {offsets = [0, 15], sizes = [8, 241], strides = [1, 1]} : vector<8x256xf32> to vector<8x241xf32>
    %425 = vector.extract_strided_slice %389 {offsets = [0, 0], sizes = [8, 15], strides = [1, 1]} : vector<8x256xf32> to vector<8x15xf32>
    %426 = tpu.concatenate %424, %425 in 1 : vector<8x241xf32>, vector<8x15xf32> -> vector<8x256xf32>
    %427 = vector.broadcast %423 : vector<1x256xf32> to vector<8x256xf32>
    %428 = arith.mulf %427, %426 : vector<8x256xf32>
    %429 = vector.extract_strided_slice %19 {offsets = [7, 0], sizes = [1, 256], strides = [1, 1]} : vector<9x256xf32> to vector<1x256xf32>
    %430 = vector.extract_strided_slice %389 {offsets = [0, 16], sizes = [8, 240], strides = [1, 1]} : vector<8x256xf32> to vector<8x240xf32>
    %431 = vector.extract_strided_slice %389 {offsets = [0, 0], sizes = [8, 16], strides = [1, 1]} : vector<8x256xf32> to vector<8x16xf32>
    %432 = tpu.concatenate %430, %431 in 1 : vector<8x240xf32>, vector<8x16xf32> -> vector<8x256xf32>
    %433 = vector.broadcast %429 : vector<1x256xf32> to vector<8x256xf32>
    %434 = arith.mulf %433, %432 : vector<8x256xf32>
    %435 = vector.extract_strided_slice %19 {offsets = [8, 0], sizes = [1, 256], strides = [1, 1]} : vector<9x256xf32> to vector<1x256xf32>
    %436 = vector.extract_strided_slice %389 {offsets = [0, 17], sizes = [8, 239], strides = [1, 1]} : vector<8x256xf32> to vector<8x239xf32>
    %437 = vector.extract_strided_slice %389 {offsets = [0, 0], sizes = [8, 17], strides = [1, 1]} : vector<8x256xf32> to vector<8x17xf32>
    %438 = tpu.concatenate %436, %437 in 1 : vector<8x239xf32>, vector<8x17xf32> -> vector<8x256xf32>
    %439 = vector.broadcast %435 : vector<1x256xf32> to vector<8x256xf32>
    %440 = arith.mulf %439, %438 : vector<8x256xf32>
    %cst_76 = arith.constant dense<0.000000e+00> : vector<4x256xf32>
    %441 = tpu.matmul %8, %19, %cst_76 {dimension_numbers = #tpu.dot_dimension_numbers<[1], [0], [0], [1], [0, 0, 1, 1], [], []>} : vector<4x9xf32>, vector<9x256xf32>, vector<4x256xf32> -> vector<4x256xf32>
    %442 = vector.broadcast %256 : vector<1x1xf32> to vector<4x256xf32>
    %443 = arith.mulf %442, %441 : vector<4x256xf32>
    %444 = vector.broadcast %9 : vector<4x1xf32> to vector<4x256xf32>
    %445 = arith.addf %443, %444 : vector<4x256xf32>
    %446 = vector.extract_strided_slice %395 {offsets = [0, 0], sizes = [4, 256], strides = [1, 1]} : vector<8x256xf32> to vector<4x256xf32>
    %447 = vector.extract_strided_slice %401 {offsets = [0, 0], sizes = [4, 256], strides = [1, 1]} : vector<8x256xf32> to vector<4x256xf32>
    %448 = vector.extract_strided_slice %407 {offsets = [0, 0], sizes = [4, 256], strides = [1, 1]} : vector<8x256xf32> to vector<4x256xf32>
    %449 = vector.extract_strided_slice %413 {offsets = [0, 0], sizes = [4, 256], strides = [1, 1]} : vector<8x256xf32> to vector<4x256xf32>
    %450 = vector.extract_strided_slice %416 {offsets = [0, 0], sizes = [4, 256], strides = [1, 1]} : vector<8x256xf32> to vector<4x256xf32>
    %451 = vector.extract_strided_slice %422 {offsets = [0, 0], sizes = [4, 256], strides = [1, 1]} : vector<8x256xf32> to vector<4x256xf32>
    %452 = vector.extract_strided_slice %428 {offsets = [0, 0], sizes = [4, 256], strides = [1, 1]} : vector<8x256xf32> to vector<4x256xf32>
    %453 = vector.extract_strided_slice %434 {offsets = [0, 0], sizes = [4, 256], strides = [1, 1]} : vector<8x256xf32> to vector<4x256xf32>
    %454 = vector.extract_strided_slice %440 {offsets = [0, 0], sizes = [4, 256], strides = [1, 1]} : vector<8x256xf32> to vector<4x256xf32>
    %455 = tpu.concatenate %446, %447, %448, %449, %450, %451, %452, %453, %454 in 0 : vector<4x256xf32>, vector<4x256xf32>, vector<4x256xf32>, vector<4x256xf32>, vector<4x256xf32>, vector<4x256xf32>, vector<4x256xf32>, vector<4x256xf32>, vector<4x256xf32> -> vector<36x256xf32>
    %cst_77 = arith.constant dense<0.000000e+00> : vector<4x256xf32>
    %456 = tpu.matmul %7, %455, %cst_77 {dimension_numbers = #tpu.dot_dimension_numbers<[1], [0], [0], [1], [0, 0, 1, 1], [], []>} : vector<4x36xf32>, vector<36x256xf32>, vector<4x256xf32> -> vector<4x256xf32>
    %457 = arith.addf %456, %445 : vector<4x256xf32>
    %458 = vector.extract_strided_slice %395 {offsets = [4, 0], sizes = [4, 256], strides = [1, 1]} : vector<8x256xf32> to vector<4x256xf32>
    %459 = vector.extract_strided_slice %401 {offsets = [4, 0], sizes = [4, 256], strides = [1, 1]} : vector<8x256xf32> to vector<4x256xf32>
    %460 = vector.extract_strided_slice %407 {offsets = [4, 0], sizes = [4, 256], strides = [1, 1]} : vector<8x256xf32> to vector<4x256xf32>
    %461 = vector.extract_strided_slice %413 {offsets = [4, 0], sizes = [4, 256], strides = [1, 1]} : vector<8x256xf32> to vector<4x256xf32>
    %462 = vector.extract_strided_slice %416 {offsets = [4, 0], sizes = [4, 256], strides = [1, 1]} : vector<8x256xf32> to vector<4x256xf32>
    %463 = vector.extract_strided_slice %422 {offsets = [4, 0], sizes = [4, 256], strides = [1, 1]} : vector<8x256xf32> to vector<4x256xf32>
    %464 = vector.extract_strided_slice %428 {offsets = [4, 0], sizes = [4, 256], strides = [1, 1]} : vector<8x256xf32> to vector<4x256xf32>
    %465 = vector.extract_strided_slice %434 {offsets = [4, 0], sizes = [4, 256], strides = [1, 1]} : vector<8x256xf32> to vector<4x256xf32>
    %466 = vector.extract_strided_slice %440 {offsets = [4, 0], sizes = [4, 256], strides = [1, 1]} : vector<8x256xf32> to vector<4x256xf32>
    %467 = tpu.concatenate %458, %459, %460, %461, %462, %463, %464, %465, %466 in 0 : vector<4x256xf32>, vector<4x256xf32>, vector<4x256xf32>, vector<4x256xf32>, vector<4x256xf32>, vector<4x256xf32>, vector<4x256xf32>, vector<4x256xf32>, vector<4x256xf32> -> vector<36x256xf32>
    %cst_78 = arith.constant dense<0.000000e+00> : vector<4x256xf32>
    %468 = tpu.matmul %7, %467, %cst_78 {dimension_numbers = #tpu.dot_dimension_numbers<[1], [0], [0], [1], [0, 0, 1, 1], [], []>} : vector<4x36xf32>, vector<36x256xf32>, vector<4x256xf32> -> vector<4x256xf32>
    %469 = arith.addf %468, %445 : vector<4x256xf32>
    %470 = tpu.concatenate %457, %469 in 0 : vector<4x256xf32>, vector<4x256xf32> -> vector<8x256xf32>
    %cst_79 = arith.constant dense<0.000000e+00> : vector<8xf32>
    %471 = vector.multi_reduction <add>, %470, %cst_79 [1] : vector<8x256xf32> to vector<8xf32>
    %472 = vector.shape_cast %471 : vector<8xf32> to vector<8x1xf32>
    %cst_80 = arith.constant 2.560000e+02 : f32
    %473 = vector.broadcast %cst_80 : f32 to vector<8x1xf32>
    %474 = arith.divf %472, %473 : vector<8x1xf32>
    %475 = vector.broadcast %474 : vector<8x1xf32> to vector<8x256xf32>
    %476 = arith.subf %470, %475 : vector<8x256xf32>
    %477 = arith.mulf %476, %476 : vector<8x256xf32>
    %cst_81 = arith.constant dense<0.000000e+00> : vector<8xf32>
    %478 = vector.multi_reduction <add>, %477, %cst_81 [1] : vector<8x256xf32> to vector<8xf32>
    %479 = vector.shape_cast %478 : vector<8xf32> to vector<8x1xf32>
    %cst_82 = arith.constant 2.560000e+02 : f32
    %480 = vector.broadcast %cst_82 : f32 to vector<8x1xf32>
    %481 = arith.divf %479, %480 : vector<8x1xf32>
    %cst_83 = arith.constant 9.99999974E-6 : f32
    %482 = vector.broadcast %cst_83 : f32 to vector<8x1xf32>
    %483 = arith.addf %481, %482 : vector<8x1xf32>
    %484 = math.rsqrt %483 : vector<8x1xf32>
    %485 = vector.broadcast %484 : vector<8x1xf32> to vector<8x256xf32>
    %486 = arith.mulf %476, %485 : vector<8x256xf32>
    %487 = vector.broadcast %10 : vector<8x1xf32> to vector<8x256xf32>
    %488 = arith.mulf %486, %487 : vector<8x256xf32>
    %489 = vector.broadcast %11 : vector<8x1xf32> to vector<8x256xf32>
    %490 = arith.addf %488, %489 : vector<8x256xf32>
    %cst_84 = arith.constant 8.000000e-01 : f32
    %491 = vector.broadcast %cst_84 : f32 to vector<1x1xf32>
    %492 = arith.mulf %16, %491 : vector<1x1xf32>
    %493 = arith.addf %12, %492 : vector<1x1xf32>
    %cst_85 = arith.constant 0.977777779 : f32
    %494 = vector.broadcast %cst_85 : f32 to vector<8x256xf32>
    %495 = arith.mulf %494, %18 : vector<8x256xf32>
    %cst_86 = arith.constant 3.73333335 : f32
    %496 = vector.broadcast %cst_86 : f32 to vector<8x256xf32>
    %497 = arith.mulf %496, %253 : vector<8x256xf32>
    %498 = arith.subf %495, %497 : vector<8x256xf32>
    %cst_87 = arith.constant 3.55555558 : f32
    %499 = vector.broadcast %cst_87 : f32 to vector<8x256xf32>
    %500 = arith.mulf %499, %490 : vector<8x256xf32>
    %501 = arith.addf %498, %500 : vector<8x256xf32>
    %502 = vector.broadcast %16 : vector<1x1xf32> to vector<8x256xf32>
    %503 = arith.mulf %502, %501 : vector<8x256xf32>
    %504 = arith.addf %17, %503 : vector<8x256xf32>
    %cst_88 = arith.constant dense<0.000000e+00> : vector<8xf32>
    %505 = vector.multi_reduction <add>, %504, %cst_88 [1] : vector<8x256xf32> to vector<8xf32>
    %506 = vector.shape_cast %505 : vector<8xf32> to vector<8x1xf32>
    %cst_89 = arith.constant 2.560000e+02 : f32
    %507 = vector.broadcast %cst_89 : f32 to vector<8x1xf32>
    %508 = arith.divf %506, %507 : vector<8x1xf32>
    %509 = vector.broadcast %508 : vector<8x1xf32> to vector<8x256xf32>
    %510 = arith.subf %504, %509 : vector<8x256xf32>
    %511 = arith.mulf %510, %510 : vector<8x256xf32>
    %cst_90 = arith.constant dense<0.000000e+00> : vector<8xf32>
    %512 = vector.multi_reduction <add>, %511, %cst_90 [1] : vector<8x256xf32> to vector<8xf32>
    %513 = vector.shape_cast %512 : vector<8xf32> to vector<8x1xf32>
    %cst_91 = arith.constant 2.560000e+02 : f32
    %514 = vector.broadcast %cst_91 : f32 to vector<8x1xf32>
    %515 = arith.divf %513, %514 : vector<8x1xf32>
    %cst_92 = arith.constant 9.99999974E-6 : f32
    %516 = vector.broadcast %cst_92 : f32 to vector<8x1xf32>
    %517 = arith.addf %515, %516 : vector<8x1xf32>
    %518 = math.rsqrt %517 : vector<8x1xf32>
    %519 = vector.broadcast %518 : vector<8x1xf32> to vector<8x256xf32>
    %520 = arith.mulf %510, %519 : vector<8x256xf32>
    %521 = vector.broadcast %0 : vector<8x1xf32> to vector<8x256xf32>
    %522 = arith.mulf %520, %521 : vector<8x256xf32>
    %523 = vector.broadcast %1 : vector<8x1xf32> to vector<8x256xf32>
    %524 = arith.addf %522, %523 : vector<8x256xf32>
    %cst_93 = arith.constant 0.000000e+00 : f32
    %525 = vector.broadcast %cst_93 : f32 to vector<8x256xf32>
    %526 = arith.maximumf %524, %525 : vector<8x256xf32>
    %527 = vector.extract_strided_slice %19 {offsets = [0, 0], sizes = [1, 256], strides = [1, 1]} : vector<9x256xf32> to vector<1x256xf32>
    %528 = vector.extract_strided_slice %526 {offsets = [0, 239], sizes = [8, 17], strides = [1, 1]} : vector<8x256xf32> to vector<8x17xf32>
    %529 = vector.extract_strided_slice %526 {offsets = [0, 0], sizes = [8, 239], strides = [1, 1]} : vector<8x256xf32> to vector<8x239xf32>
    %530 = tpu.concatenate %528, %529 in 1 : vector<8x17xf32>, vector<8x239xf32> -> vector<8x256xf32>
    %531 = vector.broadcast %527 : vector<1x256xf32> to vector<8x256xf32>
    %532 = arith.mulf %531, %530 : vector<8x256xf32>
    %533 = vector.extract_strided_slice %19 {offsets = [1, 0], sizes = [1, 256], strides = [1, 1]} : vector<9x256xf32> to vector<1x256xf32>
    %534 = vector.extract_strided_slice %526 {offsets = [0, 240], sizes = [8, 16], strides = [1, 1]} : vector<8x256xf32> to vector<8x16xf32>
    %535 = vector.extract_strided_slice %526 {offsets = [0, 0], sizes = [8, 240], strides = [1, 1]} : vector<8x256xf32> to vector<8x240xf32>
    %536 = tpu.concatenate %534, %535 in 1 : vector<8x16xf32>, vector<8x240xf32> -> vector<8x256xf32>
    %537 = vector.broadcast %533 : vector<1x256xf32> to vector<8x256xf32>
    %538 = arith.mulf %537, %536 : vector<8x256xf32>
    %539 = vector.extract_strided_slice %19 {offsets = [2, 0], sizes = [1, 256], strides = [1, 1]} : vector<9x256xf32> to vector<1x256xf32>
    %540 = vector.extract_strided_slice %526 {offsets = [0, 241], sizes = [8, 15], strides = [1, 1]} : vector<8x256xf32> to vector<8x15xf32>
    %541 = vector.extract_strided_slice %526 {offsets = [0, 0], sizes = [8, 241], strides = [1, 1]} : vector<8x256xf32> to vector<8x241xf32>
    %542 = tpu.concatenate %540, %541 in 1 : vector<8x15xf32>, vector<8x241xf32> -> vector<8x256xf32>
    %543 = vector.broadcast %539 : vector<1x256xf32> to vector<8x256xf32>
    %544 = arith.mulf %543, %542 : vector<8x256xf32>
    %545 = vector.extract_strided_slice %19 {offsets = [3, 0], sizes = [1, 256], strides = [1, 1]} : vector<9x256xf32> to vector<1x256xf32>
    %546 = vector.extract_strided_slice %526 {offsets = [0, 255], sizes = [8, 1], strides = [1, 1]} : vector<8x256xf32> to vector<8x1xf32>
    %547 = vector.extract_strided_slice %526 {offsets = [0, 0], sizes = [8, 255], strides = [1, 1]} : vector<8x256xf32> to vector<8x255xf32>
    %548 = tpu.concatenate %546, %547 in 1 : vector<8x1xf32>, vector<8x255xf32> -> vector<8x256xf32>
    %549 = vector.broadcast %545 : vector<1x256xf32> to vector<8x256xf32>
    %550 = arith.mulf %549, %548 : vector<8x256xf32>
    %551 = vector.extract_strided_slice %19 {offsets = [4, 0], sizes = [1, 256], strides = [1, 1]} : vector<9x256xf32> to vector<1x256xf32>
    %552 = vector.broadcast %551 : vector<1x256xf32> to vector<8x256xf32>
    %553 = arith.mulf %552, %526 : vector<8x256xf32>
    %554 = vector.extract_strided_slice %19 {offsets = [5, 0], sizes = [1, 256], strides = [1, 1]} : vector<9x256xf32> to vector<1x256xf32>
    %555 = vector.extract_strided_slice %526 {offsets = [0, 1], sizes = [8, 255], strides = [1, 1]} : vector<8x256xf32> to vector<8x255xf32>
    %556 = vector.extract_strided_slice %526 {offsets = [0, 0], sizes = [8, 1], strides = [1, 1]} : vector<8x256xf32> to vector<8x1xf32>
    %557 = tpu.concatenate %555, %556 in 1 : vector<8x255xf32>, vector<8x1xf32> -> vector<8x256xf32>
    %558 = vector.broadcast %554 : vector<1x256xf32> to vector<8x256xf32>
    %559 = arith.mulf %558, %557 : vector<8x256xf32>
    %560 = vector.extract_strided_slice %19 {offsets = [6, 0], sizes = [1, 256], strides = [1, 1]} : vector<9x256xf32> to vector<1x256xf32>
    %561 = vector.extract_strided_slice %526 {offsets = [0, 15], sizes = [8, 241], strides = [1, 1]} : vector<8x256xf32> to vector<8x241xf32>
    %562 = vector.extract_strided_slice %526 {offsets = [0, 0], sizes = [8, 15], strides = [1, 1]} : vector<8x256xf32> to vector<8x15xf32>
    %563 = tpu.concatenate %561, %562 in 1 : vector<8x241xf32>, vector<8x15xf32> -> vector<8x256xf32>
    %564 = vector.broadcast %560 : vector<1x256xf32> to vector<8x256xf32>
    %565 = arith.mulf %564, %563 : vector<8x256xf32>
    %566 = vector.extract_strided_slice %19 {offsets = [7, 0], sizes = [1, 256], strides = [1, 1]} : vector<9x256xf32> to vector<1x256xf32>
    %567 = vector.extract_strided_slice %526 {offsets = [0, 16], sizes = [8, 240], strides = [1, 1]} : vector<8x256xf32> to vector<8x240xf32>
    %568 = vector.extract_strided_slice %526 {offsets = [0, 0], sizes = [8, 16], strides = [1, 1]} : vector<8x256xf32> to vector<8x16xf32>
    %569 = tpu.concatenate %567, %568 in 1 : vector<8x240xf32>, vector<8x16xf32> -> vector<8x256xf32>
    %570 = vector.broadcast %566 : vector<1x256xf32> to vector<8x256xf32>
    %571 = arith.mulf %570, %569 : vector<8x256xf32>
    %572 = vector.extract_strided_slice %19 {offsets = [8, 0], sizes = [1, 256], strides = [1, 1]} : vector<9x256xf32> to vector<1x256xf32>
    %573 = vector.extract_strided_slice %526 {offsets = [0, 17], sizes = [8, 239], strides = [1, 1]} : vector<8x256xf32> to vector<8x239xf32>
    %574 = vector.extract_strided_slice %526 {offsets = [0, 0], sizes = [8, 17], strides = [1, 1]} : vector<8x256xf32> to vector<8x17xf32>
    %575 = tpu.concatenate %573, %574 in 1 : vector<8x239xf32>, vector<8x17xf32> -> vector<8x256xf32>
    %576 = vector.broadcast %572 : vector<1x256xf32> to vector<8x256xf32>
    %577 = arith.mulf %576, %575 : vector<8x256xf32>
    %cst_94 = arith.constant dense<0.000000e+00> : vector<4x256xf32>
    %578 = tpu.matmul %3, %19, %cst_94 {dimension_numbers = #tpu.dot_dimension_numbers<[1], [0], [0], [1], [0, 0, 1, 1], [], []>} : vector<4x9xf32>, vector<9x256xf32>, vector<4x256xf32> -> vector<4x256xf32>
    %579 = vector.broadcast %493 : vector<1x1xf32> to vector<4x256xf32>
    %580 = arith.mulf %579, %578 : vector<4x256xf32>
    %581 = vector.broadcast %4 : vector<4x1xf32> to vector<4x256xf32>
    %582 = arith.addf %580, %581 : vector<4x256xf32>
    %583 = vector.extract_strided_slice %532 {offsets = [0, 0], sizes = [4, 256], strides = [1, 1]} : vector<8x256xf32> to vector<4x256xf32>
    %584 = vector.extract_strided_slice %538 {offsets = [0, 0], sizes = [4, 256], strides = [1, 1]} : vector<8x256xf32> to vector<4x256xf32>
    %585 = vector.extract_strided_slice %544 {offsets = [0, 0], sizes = [4, 256], strides = [1, 1]} : vector<8x256xf32> to vector<4x256xf32>
    %586 = vector.extract_strided_slice %550 {offsets = [0, 0], sizes = [4, 256], strides = [1, 1]} : vector<8x256xf32> to vector<4x256xf32>
    %587 = vector.extract_strided_slice %553 {offsets = [0, 0], sizes = [4, 256], strides = [1, 1]} : vector<8x256xf32> to vector<4x256xf32>
    %588 = vector.extract_strided_slice %559 {offsets = [0, 0], sizes = [4, 256], strides = [1, 1]} : vector<8x256xf32> to vector<4x256xf32>
    %589 = vector.extract_strided_slice %565 {offsets = [0, 0], sizes = [4, 256], strides = [1, 1]} : vector<8x256xf32> to vector<4x256xf32>
    %590 = vector.extract_strided_slice %571 {offsets = [0, 0], sizes = [4, 256], strides = [1, 1]} : vector<8x256xf32> to vector<4x256xf32>
    %591 = vector.extract_strided_slice %577 {offsets = [0, 0], sizes = [4, 256], strides = [1, 1]} : vector<8x256xf32> to vector<4x256xf32>
    %592 = tpu.concatenate %583, %584, %585, %586, %587, %588, %589, %590, %591 in 0 : vector<4x256xf32>, vector<4x256xf32>, vector<4x256xf32>, vector<4x256xf32>, vector<4x256xf32>, vector<4x256xf32>, vector<4x256xf32>, vector<4x256xf32>, vector<4x256xf32> -> vector<36x256xf32>
    %cst_95 = arith.constant dense<0.000000e+00> : vector<4x256xf32>
    %593 = tpu.matmul %2, %592, %cst_95 {dimension_numbers = #tpu.dot_dimension_numbers<[1], [0], [0], [1], [0, 0, 1, 1], [], []>} : vector<4x36xf32>, vector<36x256xf32>, vector<4x256xf32> -> vector<4x256xf32>
    %594 = arith.addf %593, %582 : vector<4x256xf32>
    %595 = vector.extract_strided_slice %532 {offsets = [4, 0], sizes = [4, 256], strides = [1, 1]} : vector<8x256xf32> to vector<4x256xf32>
    %596 = vector.extract_strided_slice %538 {offsets = [4, 0], sizes = [4, 256], strides = [1, 1]} : vector<8x256xf32> to vector<4x256xf32>
    %597 = vector.extract_strided_slice %544 {offsets = [4, 0], sizes = [4, 256], strides = [1, 1]} : vector<8x256xf32> to vector<4x256xf32>
    %598 = vector.extract_strided_slice %550 {offsets = [4, 0], sizes = [4, 256], strides = [1, 1]} : vector<8x256xf32> to vector<4x256xf32>
    %599 = vector.extract_strided_slice %553 {offsets = [4, 0], sizes = [4, 256], strides = [1, 1]} : vector<8x256xf32> to vector<4x256xf32>
    %600 = vector.extract_strided_slice %559 {offsets = [4, 0], sizes = [4, 256], strides = [1, 1]} : vector<8x256xf32> to vector<4x256xf32>
    %601 = vector.extract_strided_slice %565 {offsets = [4, 0], sizes = [4, 256], strides = [1, 1]} : vector<8x256xf32> to vector<4x256xf32>
    %602 = vector.extract_strided_slice %571 {offsets = [4, 0], sizes = [4, 256], strides = [1, 1]} : vector<8x256xf32> to vector<4x256xf32>
    %603 = vector.extract_strided_slice %577 {offsets = [4, 0], sizes = [4, 256], strides = [1, 1]} : vector<8x256xf32> to vector<4x256xf32>
    %604 = tpu.concatenate %595, %596, %597, %598, %599, %600, %601, %602, %603 in 0 : vector<4x256xf32>, vector<4x256xf32>, vector<4x256xf32>, vector<4x256xf32>, vector<4x256xf32>, vector<4x256xf32>, vector<4x256xf32>, vector<4x256xf32>, vector<4x256xf32> -> vector<36x256xf32>
    %cst_96 = arith.constant dense<0.000000e+00> : vector<4x256xf32>
    %605 = tpu.matmul %2, %604, %cst_96 {dimension_numbers = #tpu.dot_dimension_numbers<[1], [0], [0], [1], [0, 0, 1, 1], [], []>} : vector<4x36xf32>, vector<36x256xf32>, vector<4x256xf32> -> vector<4x256xf32>
    %606 = arith.addf %605, %582 : vector<4x256xf32>
    %607 = tpu.concatenate %594, %606 in 0 : vector<4x256xf32>, vector<4x256xf32> -> vector<8x256xf32>
    %cst_97 = arith.constant dense<0.000000e+00> : vector<8xf32>
    %608 = vector.multi_reduction <add>, %607, %cst_97 [1] : vector<8x256xf32> to vector<8xf32>
    %609 = vector.shape_cast %608 : vector<8xf32> to vector<8x1xf32>
    %cst_98 = arith.constant 2.560000e+02 : f32
    %610 = vector.broadcast %cst_98 : f32 to vector<8x1xf32>
    %611 = arith.divf %609, %610 : vector<8x1xf32>
    %612 = vector.broadcast %611 : vector<8x1xf32> to vector<8x256xf32>
    %613 = arith.subf %607, %612 : vector<8x256xf32>
    %614 = arith.mulf %613, %613 : vector<8x256xf32>
    %cst_99 = arith.constant dense<0.000000e+00> : vector<8xf32>
    %615 = vector.multi_reduction <add>, %614, %cst_99 [1] : vector<8x256xf32> to vector<8xf32>
    %616 = vector.shape_cast %615 : vector<8xf32> to vector<8x1xf32>
    %cst_100 = arith.constant 2.560000e+02 : f32
    %617 = vector.broadcast %cst_100 : f32 to vector<8x1xf32>
    %618 = arith.divf %616, %617 : vector<8x1xf32>
    %cst_101 = arith.constant 9.99999974E-6 : f32
    %619 = vector.broadcast %cst_101 : f32 to vector<8x1xf32>
    %620 = arith.addf %618, %619 : vector<8x1xf32>
    %621 = math.rsqrt %620 : vector<8x1xf32>
    %622 = vector.broadcast %621 : vector<8x1xf32> to vector<8x256xf32>
    %623 = arith.mulf %613, %622 : vector<8x256xf32>
    %624 = vector.broadcast %5 : vector<8x1xf32> to vector<8x256xf32>
    %625 = arith.mulf %623, %624 : vector<8x256xf32>
    %626 = vector.broadcast %6 : vector<8x1xf32> to vector<8x256xf32>
    %627 = arith.addf %625, %626 : vector<8x256xf32>
    %cst_102 = arith.constant 0.000000e+00 : f32
    %628 = vector.broadcast %cst_102 : f32 to vector<8x256xf32>
    %629 = arith.maximumf %627, %628 : vector<8x256xf32>
    %630 = vector.extract_strided_slice %19 {offsets = [0, 0], sizes = [1, 256], strides = [1, 1]} : vector<9x256xf32> to vector<1x256xf32>
    %631 = vector.extract_strided_slice %629 {offsets = [0, 239], sizes = [8, 17], strides = [1, 1]} : vector<8x256xf32> to vector<8x17xf32>
    %632 = vector.extract_strided_slice %629 {offsets = [0, 0], sizes = [8, 239], strides = [1, 1]} : vector<8x256xf32> to vector<8x239xf32>
    %633 = tpu.concatenate %631, %632 in 1 : vector<8x17xf32>, vector<8x239xf32> -> vector<8x256xf32>
    %634 = vector.broadcast %630 : vector<1x256xf32> to vector<8x256xf32>
    %635 = arith.mulf %634, %633 : vector<8x256xf32>
    %636 = vector.extract_strided_slice %19 {offsets = [1, 0], sizes = [1, 256], strides = [1, 1]} : vector<9x256xf32> to vector<1x256xf32>
    %637 = vector.extract_strided_slice %629 {offsets = [0, 240], sizes = [8, 16], strides = [1, 1]} : vector<8x256xf32> to vector<8x16xf32>
    %638 = vector.extract_strided_slice %629 {offsets = [0, 0], sizes = [8, 240], strides = [1, 1]} : vector<8x256xf32> to vector<8x240xf32>
    %639 = tpu.concatenate %637, %638 in 1 : vector<8x16xf32>, vector<8x240xf32> -> vector<8x256xf32>
    %640 = vector.broadcast %636 : vector<1x256xf32> to vector<8x256xf32>
    %641 = arith.mulf %640, %639 : vector<8x256xf32>
    %642 = vector.extract_strided_slice %19 {offsets = [2, 0], sizes = [1, 256], strides = [1, 1]} : vector<9x256xf32> to vector<1x256xf32>
    %643 = vector.extract_strided_slice %629 {offsets = [0, 241], sizes = [8, 15], strides = [1, 1]} : vector<8x256xf32> to vector<8x15xf32>
    %644 = vector.extract_strided_slice %629 {offsets = [0, 0], sizes = [8, 241], strides = [1, 1]} : vector<8x256xf32> to vector<8x241xf32>
    %645 = tpu.concatenate %643, %644 in 1 : vector<8x15xf32>, vector<8x241xf32> -> vector<8x256xf32>
    %646 = vector.broadcast %642 : vector<1x256xf32> to vector<8x256xf32>
    %647 = arith.mulf %646, %645 : vector<8x256xf32>
    %648 = vector.extract_strided_slice %19 {offsets = [3, 0], sizes = [1, 256], strides = [1, 1]} : vector<9x256xf32> to vector<1x256xf32>
    %649 = vector.extract_strided_slice %629 {offsets = [0, 255], sizes = [8, 1], strides = [1, 1]} : vector<8x256xf32> to vector<8x1xf32>
    %650 = vector.extract_strided_slice %629 {offsets = [0, 0], sizes = [8, 255], strides = [1, 1]} : vector<8x256xf32> to vector<8x255xf32>
    %651 = tpu.concatenate %649, %650 in 1 : vector<8x1xf32>, vector<8x255xf32> -> vector<8x256xf32>
    %652 = vector.broadcast %648 : vector<1x256xf32> to vector<8x256xf32>
    %653 = arith.mulf %652, %651 : vector<8x256xf32>
    %654 = vector.extract_strided_slice %19 {offsets = [4, 0], sizes = [1, 256], strides = [1, 1]} : vector<9x256xf32> to vector<1x256xf32>
    %655 = vector.broadcast %654 : vector<1x256xf32> to vector<8x256xf32>
    %656 = arith.mulf %655, %629 : vector<8x256xf32>
    %657 = vector.extract_strided_slice %19 {offsets = [5, 0], sizes = [1, 256], strides = [1, 1]} : vector<9x256xf32> to vector<1x256xf32>
    %658 = vector.extract_strided_slice %629 {offsets = [0, 1], sizes = [8, 255], strides = [1, 1]} : vector<8x256xf32> to vector<8x255xf32>
    %659 = vector.extract_strided_slice %629 {offsets = [0, 0], sizes = [8, 1], strides = [1, 1]} : vector<8x256xf32> to vector<8x1xf32>
    %660 = tpu.concatenate %658, %659 in 1 : vector<8x255xf32>, vector<8x1xf32> -> vector<8x256xf32>
    %661 = vector.broadcast %657 : vector<1x256xf32> to vector<8x256xf32>
    %662 = arith.mulf %661, %660 : vector<8x256xf32>
    %663 = vector.extract_strided_slice %19 {offsets = [6, 0], sizes = [1, 256], strides = [1, 1]} : vector<9x256xf32> to vector<1x256xf32>
    %664 = vector.extract_strided_slice %629 {offsets = [0, 15], sizes = [8, 241], strides = [1, 1]} : vector<8x256xf32> to vector<8x241xf32>
    %665 = vector.extract_strided_slice %629 {offsets = [0, 0], sizes = [8, 15], strides = [1, 1]} : vector<8x256xf32> to vector<8x15xf32>
    %666 = tpu.concatenate %664, %665 in 1 : vector<8x241xf32>, vector<8x15xf32> -> vector<8x256xf32>
    %667 = vector.broadcast %663 : vector<1x256xf32> to vector<8x256xf32>
    %668 = arith.mulf %667, %666 : vector<8x256xf32>
    %669 = vector.extract_strided_slice %19 {offsets = [7, 0], sizes = [1, 256], strides = [1, 1]} : vector<9x256xf32> to vector<1x256xf32>
    %670 = vector.extract_strided_slice %629 {offsets = [0, 16], sizes = [8, 240], strides = [1, 1]} : vector<8x256xf32> to vector<8x240xf32>
    %671 = vector.extract_strided_slice %629 {offsets = [0, 0], sizes = [8, 16], strides = [1, 1]} : vector<8x256xf32> to vector<8x16xf32>
    %672 = tpu.concatenate %670, %671 in 1 : vector<8x240xf32>, vector<8x16xf32> -> vector<8x256xf32>
    %673 = vector.broadcast %669 : vector<1x256xf32> to vector<8x256xf32>
    %674 = arith.mulf %673, %672 : vector<8x256xf32>
    %675 = vector.extract_strided_slice %19 {offsets = [8, 0], sizes = [1, 256], strides = [1, 1]} : vector<9x256xf32> to vector<1x256xf32>
    %676 = vector.extract_strided_slice %629 {offsets = [0, 17], sizes = [8, 239], strides = [1, 1]} : vector<8x256xf32> to vector<8x239xf32>
    %677 = vector.extract_strided_slice %629 {offsets = [0, 0], sizes = [8, 17], strides = [1, 1]} : vector<8x256xf32> to vector<8x17xf32>
    %678 = tpu.concatenate %676, %677 in 1 : vector<8x239xf32>, vector<8x17xf32> -> vector<8x256xf32>
    %679 = vector.broadcast %675 : vector<1x256xf32> to vector<8x256xf32>
    %680 = arith.mulf %679, %678 : vector<8x256xf32>
    %cst_103 = arith.constant dense<0.000000e+00> : vector<4x256xf32>
    %681 = tpu.matmul %8, %19, %cst_103 {dimension_numbers = #tpu.dot_dimension_numbers<[1], [0], [0], [1], [0, 0, 1, 1], [], []>} : vector<4x9xf32>, vector<9x256xf32>, vector<4x256xf32> -> vector<4x256xf32>
    %682 = vector.broadcast %493 : vector<1x1xf32> to vector<4x256xf32>
    %683 = arith.mulf %682, %681 : vector<4x256xf32>
    %684 = vector.broadcast %9 : vector<4x1xf32> to vector<4x256xf32>
    %685 = arith.addf %683, %684 : vector<4x256xf32>
    %686 = vector.extract_strided_slice %635 {offsets = [0, 0], sizes = [4, 256], strides = [1, 1]} : vector<8x256xf32> to vector<4x256xf32>
    %687 = vector.extract_strided_slice %641 {offsets = [0, 0], sizes = [4, 256], strides = [1, 1]} : vector<8x256xf32> to vector<4x256xf32>
    %688 = vector.extract_strided_slice %647 {offsets = [0, 0], sizes = [4, 256], strides = [1, 1]} : vector<8x256xf32> to vector<4x256xf32>
    %689 = vector.extract_strided_slice %653 {offsets = [0, 0], sizes = [4, 256], strides = [1, 1]} : vector<8x256xf32> to vector<4x256xf32>
    %690 = vector.extract_strided_slice %656 {offsets = [0, 0], sizes = [4, 256], strides = [1, 1]} : vector<8x256xf32> to vector<4x256xf32>
    %691 = vector.extract_strided_slice %662 {offsets = [0, 0], sizes = [4, 256], strides = [1, 1]} : vector<8x256xf32> to vector<4x256xf32>
    %692 = vector.extract_strided_slice %668 {offsets = [0, 0], sizes = [4, 256], strides = [1, 1]} : vector<8x256xf32> to vector<4x256xf32>
    %693 = vector.extract_strided_slice %674 {offsets = [0, 0], sizes = [4, 256], strides = [1, 1]} : vector<8x256xf32> to vector<4x256xf32>
    %694 = vector.extract_strided_slice %680 {offsets = [0, 0], sizes = [4, 256], strides = [1, 1]} : vector<8x256xf32> to vector<4x256xf32>
    %695 = tpu.concatenate %686, %687, %688, %689, %690, %691, %692, %693, %694 in 0 : vector<4x256xf32>, vector<4x256xf32>, vector<4x256xf32>, vector<4x256xf32>, vector<4x256xf32>, vector<4x256xf32>, vector<4x256xf32>, vector<4x256xf32>, vector<4x256xf32> -> vector<36x256xf32>
    %cst_104 = arith.constant dense<0.000000e+00> : vector<4x256xf32>
    %696 = tpu.matmul %7, %695, %cst_104 {dimension_numbers = #tpu.dot_dimension_numbers<[1], [0], [0], [1], [0, 0, 1, 1], [], []>} : vector<4x36xf32>, vector<36x256xf32>, vector<4x256xf32> -> vector<4x256xf32>
    %697 = arith.addf %696, %685 : vector<4x256xf32>
    %698 = vector.extract_strided_slice %635 {offsets = [4, 0], sizes = [4, 256], strides = [1, 1]} : vector<8x256xf32> to vector<4x256xf32>
    %699 = vector.extract_strided_slice %641 {offsets = [4, 0], sizes = [4, 256], strides = [1, 1]} : vector<8x256xf32> to vector<4x256xf32>
    %700 = vector.extract_strided_slice %647 {offsets = [4, 0], sizes = [4, 256], strides = [1, 1]} : vector<8x256xf32> to vector<4x256xf32>
    %701 = vector.extract_strided_slice %653 {offsets = [4, 0], sizes = [4, 256], strides = [1, 1]} : vector<8x256xf32> to vector<4x256xf32>
    %702 = vector.extract_strided_slice %656 {offsets = [4, 0], sizes = [4, 256], strides = [1, 1]} : vector<8x256xf32> to vector<4x256xf32>
    %703 = vector.extract_strided_slice %662 {offsets = [4, 0], sizes = [4, 256], strides = [1, 1]} : vector<8x256xf32> to vector<4x256xf32>
    %704 = vector.extract_strided_slice %668 {offsets = [4, 0], sizes = [4, 256], strides = [1, 1]} : vector<8x256xf32> to vector<4x256xf32>
    %705 = vector.extract_strided_slice %674 {offsets = [4, 0], sizes = [4, 256], strides = [1, 1]} : vector<8x256xf32> to vector<4x256xf32>
    %706 = vector.extract_strided_slice %680 {offsets = [4, 0], sizes = [4, 256], strides = [1, 1]} : vector<8x256xf32> to vector<4x256xf32>
    %707 = tpu.concatenate %698, %699, %700, %701, %702, %703, %704, %705, %706 in 0 : vector<4x256xf32>, vector<4x256xf32>, vector<4x256xf32>, vector<4x256xf32>, vector<4x256xf32>, vector<4x256xf32>, vector<4x256xf32>, vector<4x256xf32>, vector<4x256xf32> -> vector<36x256xf32>
    %cst_105 = arith.constant dense<0.000000e+00> : vector<4x256xf32>
    %708 = tpu.matmul %7, %707, %cst_105 {dimension_numbers = #tpu.dot_dimension_numbers<[1], [0], [0], [1], [0, 0, 1, 1], [], []>} : vector<4x36xf32>, vector<36x256xf32>, vector<4x256xf32> -> vector<4x256xf32>
    %709 = arith.addf %708, %685 : vector<4x256xf32>
    %710 = tpu.concatenate %697, %709 in 0 : vector<4x256xf32>, vector<4x256xf32> -> vector<8x256xf32>
    %cst_106 = arith.constant dense<0.000000e+00> : vector<8xf32>
    %711 = vector.multi_reduction <add>, %710, %cst_106 [1] : vector<8x256xf32> to vector<8xf32>
    %712 = vector.shape_cast %711 : vector<8xf32> to vector<8x1xf32>
    %cst_107 = arith.constant 2.560000e+02 : f32
    %713 = vector.broadcast %cst_107 : f32 to vector<8x1xf32>
    %714 = arith.divf %712, %713 : vector<8x1xf32>
    %715 = vector.broadcast %714 : vector<8x1xf32> to vector<8x256xf32>
    %716 = arith.subf %710, %715 : vector<8x256xf32>
    %717 = arith.mulf %716, %716 : vector<8x256xf32>
    %cst_108 = arith.constant dense<0.000000e+00> : vector<8xf32>
    %718 = vector.multi_reduction <add>, %717, %cst_108 [1] : vector<8x256xf32> to vector<8xf32>
    %719 = vector.shape_cast %718 : vector<8xf32> to vector<8x1xf32>
    %cst_109 = arith.constant 2.560000e+02 : f32
    %720 = vector.broadcast %cst_109 : f32 to vector<8x1xf32>
    %721 = arith.divf %719, %720 : vector<8x1xf32>
    %cst_110 = arith.constant 9.99999974E-6 : f32
    %722 = vector.broadcast %cst_110 : f32 to vector<8x1xf32>
    %723 = arith.addf %721, %722 : vector<8x1xf32>
    %724 = math.rsqrt %723 : vector<8x1xf32>
    %725 = vector.broadcast %724 : vector<8x1xf32> to vector<8x256xf32>
    %726 = arith.mulf %716, %725 : vector<8x256xf32>
    %727 = vector.broadcast %10 : vector<8x1xf32> to vector<8x256xf32>
    %728 = arith.mulf %726, %727 : vector<8x256xf32>
    %729 = vector.broadcast %11 : vector<8x1xf32> to vector<8x256xf32>
    %730 = arith.addf %728, %729 : vector<8x256xf32>
    %cst_111 = arith.constant 0.888888895 : f32
    %731 = vector.broadcast %cst_111 : f32 to vector<1x1xf32>
    %732 = arith.mulf %16, %731 : vector<1x1xf32>
    %733 = arith.addf %12, %732 : vector<1x1xf32>
    %cst_112 = arith.constant 2.95259857 : f32
    %734 = vector.broadcast %cst_112 : f32 to vector<8x256xf32>
    %735 = arith.mulf %734, %18 : vector<8x256xf32>
    %cst_113 = arith.constant 11.5957937 : f32
    %736 = vector.broadcast %cst_113 : f32 to vector<8x256xf32>
    %737 = arith.mulf %736, %253 : vector<8x256xf32>
    %738 = arith.subf %735, %737 : vector<8x256xf32>
    %cst_114 = arith.constant 9.82289314 : f32
    %739 = vector.broadcast %cst_114 : f32 to vector<8x256xf32>
    %740 = arith.mulf %739, %490 : vector<8x256xf32>
    %741 = arith.addf %738, %740 : vector<8x256xf32>
    %cst_115 = arith.constant 0.290809333 : f32
    %742 = vector.broadcast %cst_115 : f32 to vector<8x256xf32>
    %743 = arith.mulf %742, %730 : vector<8x256xf32>
    %744 = arith.subf %741, %743 : vector<8x256xf32>
    %745 = vector.broadcast %16 : vector<1x1xf32> to vector<8x256xf32>
    %746 = arith.mulf %745, %744 : vector<8x256xf32>
    %747 = arith.addf %17, %746 : vector<8x256xf32>
    %cst_116 = arith.constant dense<0.000000e+00> : vector<8xf32>
    %748 = vector.multi_reduction <add>, %747, %cst_116 [1] : vector<8x256xf32> to vector<8xf32>
    %749 = vector.shape_cast %748 : vector<8xf32> to vector<8x1xf32>
    %cst_117 = arith.constant 2.560000e+02 : f32
    %750 = vector.broadcast %cst_117 : f32 to vector<8x1xf32>
    %751 = arith.divf %749, %750 : vector<8x1xf32>
    %752 = vector.broadcast %751 : vector<8x1xf32> to vector<8x256xf32>
    %753 = arith.subf %747, %752 : vector<8x256xf32>
    %754 = arith.mulf %753, %753 : vector<8x256xf32>
    %cst_118 = arith.constant dense<0.000000e+00> : vector<8xf32>
    %755 = vector.multi_reduction <add>, %754, %cst_118 [1] : vector<8x256xf32> to vector<8xf32>
    %756 = vector.shape_cast %755 : vector<8xf32> to vector<8x1xf32>
    %cst_119 = arith.constant 2.560000e+02 : f32
    %757 = vector.broadcast %cst_119 : f32 to vector<8x1xf32>
    %758 = arith.divf %756, %757 : vector<8x1xf32>
    %cst_120 = arith.constant 9.99999974E-6 : f32
    %759 = vector.broadcast %cst_120 : f32 to vector<8x1xf32>
    %760 = arith.addf %758, %759 : vector<8x1xf32>
    %761 = math.rsqrt %760 : vector<8x1xf32>
    %762 = vector.broadcast %761 : vector<8x1xf32> to vector<8x256xf32>
    %763 = arith.mulf %753, %762 : vector<8x256xf32>
    %764 = vector.broadcast %0 : vector<8x1xf32> to vector<8x256xf32>
    %765 = arith.mulf %763, %764 : vector<8x256xf32>
    %766 = vector.broadcast %1 : vector<8x1xf32> to vector<8x256xf32>
    %767 = arith.addf %765, %766 : vector<8x256xf32>
    %cst_121 = arith.constant 0.000000e+00 : f32
    %768 = vector.broadcast %cst_121 : f32 to vector<8x256xf32>
    %769 = arith.maximumf %767, %768 : vector<8x256xf32>
    %770 = vector.extract_strided_slice %19 {offsets = [0, 0], sizes = [1, 256], strides = [1, 1]} : vector<9x256xf32> to vector<1x256xf32>
    %771 = vector.extract_strided_slice %769 {offsets = [0, 239], sizes = [8, 17], strides = [1, 1]} : vector<8x256xf32> to vector<8x17xf32>
    %772 = vector.extract_strided_slice %769 {offsets = [0, 0], sizes = [8, 239], strides = [1, 1]} : vector<8x256xf32> to vector<8x239xf32>
    %773 = tpu.concatenate %771, %772 in 1 : vector<8x17xf32>, vector<8x239xf32> -> vector<8x256xf32>
    %774 = vector.broadcast %770 : vector<1x256xf32> to vector<8x256xf32>
    %775 = arith.mulf %774, %773 : vector<8x256xf32>
    %776 = vector.extract_strided_slice %19 {offsets = [1, 0], sizes = [1, 256], strides = [1, 1]} : vector<9x256xf32> to vector<1x256xf32>
    %777 = vector.extract_strided_slice %769 {offsets = [0, 240], sizes = [8, 16], strides = [1, 1]} : vector<8x256xf32> to vector<8x16xf32>
    %778 = vector.extract_strided_slice %769 {offsets = [0, 0], sizes = [8, 240], strides = [1, 1]} : vector<8x256xf32> to vector<8x240xf32>
    %779 = tpu.concatenate %777, %778 in 1 : vector<8x16xf32>, vector<8x240xf32> -> vector<8x256xf32>
    %780 = vector.broadcast %776 : vector<1x256xf32> to vector<8x256xf32>
    %781 = arith.mulf %780, %779 : vector<8x256xf32>
    %782 = vector.extract_strided_slice %19 {offsets = [2, 0], sizes = [1, 256], strides = [1, 1]} : vector<9x256xf32> to vector<1x256xf32>
    %783 = vector.extract_strided_slice %769 {offsets = [0, 241], sizes = [8, 15], strides = [1, 1]} : vector<8x256xf32> to vector<8x15xf32>
    %784 = vector.extract_strided_slice %769 {offsets = [0, 0], sizes = [8, 241], strides = [1, 1]} : vector<8x256xf32> to vector<8x241xf32>
    %785 = tpu.concatenate %783, %784 in 1 : vector<8x15xf32>, vector<8x241xf32> -> vector<8x256xf32>
    %786 = vector.broadcast %782 : vector<1x256xf32> to vector<8x256xf32>
    %787 = arith.mulf %786, %785 : vector<8x256xf32>
    %788 = vector.extract_strided_slice %19 {offsets = [3, 0], sizes = [1, 256], strides = [1, 1]} : vector<9x256xf32> to vector<1x256xf32>
    %789 = vector.extract_strided_slice %769 {offsets = [0, 255], sizes = [8, 1], strides = [1, 1]} : vector<8x256xf32> to vector<8x1xf32>
    %790 = vector.extract_strided_slice %769 {offsets = [0, 0], sizes = [8, 255], strides = [1, 1]} : vector<8x256xf32> to vector<8x255xf32>
    %791 = tpu.concatenate %789, %790 in 1 : vector<8x1xf32>, vector<8x255xf32> -> vector<8x256xf32>
    %792 = vector.broadcast %788 : vector<1x256xf32> to vector<8x256xf32>
    %793 = arith.mulf %792, %791 : vector<8x256xf32>
    %794 = vector.extract_strided_slice %19 {offsets = [4, 0], sizes = [1, 256], strides = [1, 1]} : vector<9x256xf32> to vector<1x256xf32>
    %795 = vector.broadcast %794 : vector<1x256xf32> to vector<8x256xf32>
    %796 = arith.mulf %795, %769 : vector<8x256xf32>
    %797 = vector.extract_strided_slice %19 {offsets = [5, 0], sizes = [1, 256], strides = [1, 1]} : vector<9x256xf32> to vector<1x256xf32>
    %798 = vector.extract_strided_slice %769 {offsets = [0, 1], sizes = [8, 255], strides = [1, 1]} : vector<8x256xf32> to vector<8x255xf32>
    %799 = vector.extract_strided_slice %769 {offsets = [0, 0], sizes = [8, 1], strides = [1, 1]} : vector<8x256xf32> to vector<8x1xf32>
    %800 = tpu.concatenate %798, %799 in 1 : vector<8x255xf32>, vector<8x1xf32> -> vector<8x256xf32>
    %801 = vector.broadcast %797 : vector<1x256xf32> to vector<8x256xf32>
    %802 = arith.mulf %801, %800 : vector<8x256xf32>
    %803 = vector.extract_strided_slice %19 {offsets = [6, 0], sizes = [1, 256], strides = [1, 1]} : vector<9x256xf32> to vector<1x256xf32>
    %804 = vector.extract_strided_slice %769 {offsets = [0, 15], sizes = [8, 241], strides = [1, 1]} : vector<8x256xf32> to vector<8x241xf32>
    %805 = vector.extract_strided_slice %769 {offsets = [0, 0], sizes = [8, 15], strides = [1, 1]} : vector<8x256xf32> to vector<8x15xf32>
    %806 = tpu.concatenate %804, %805 in 1 : vector<8x241xf32>, vector<8x15xf32> -> vector<8x256xf32>
    %807 = vector.broadcast %803 : vector<1x256xf32> to vector<8x256xf32>
    %808 = arith.mulf %807, %806 : vector<8x256xf32>
    %809 = vector.extract_strided_slice %19 {offsets = [7, 0], sizes = [1, 256], strides = [1, 1]} : vector<9x256xf32> to vector<1x256xf32>
    %810 = vector.extract_strided_slice %769 {offsets = [0, 16], sizes = [8, 240], strides = [1, 1]} : vector<8x256xf32> to vector<8x240xf32>
    %811 = vector.extract_strided_slice %769 {offsets = [0, 0], sizes = [8, 16], strides = [1, 1]} : vector<8x256xf32> to vector<8x16xf32>
    %812 = tpu.concatenate %810, %811 in 1 : vector<8x240xf32>, vector<8x16xf32> -> vector<8x256xf32>
    %813 = vector.broadcast %809 : vector<1x256xf32> to vector<8x256xf32>
    %814 = arith.mulf %813, %812 : vector<8x256xf32>
    %815 = vector.extract_strided_slice %19 {offsets = [8, 0], sizes = [1, 256], strides = [1, 1]} : vector<9x256xf32> to vector<1x256xf32>
    %816 = vector.extract_strided_slice %769 {offsets = [0, 17], sizes = [8, 239], strides = [1, 1]} : vector<8x256xf32> to vector<8x239xf32>
    %817 = vector.extract_strided_slice %769 {offsets = [0, 0], sizes = [8, 17], strides = [1, 1]} : vector<8x256xf32> to vector<8x17xf32>
    %818 = tpu.concatenate %816, %817 in 1 : vector<8x239xf32>, vector<8x17xf32> -> vector<8x256xf32>
    %819 = vector.broadcast %815 : vector<1x256xf32> to vector<8x256xf32>
    %820 = arith.mulf %819, %818 : vector<8x256xf32>
    %cst_122 = arith.constant dense<0.000000e+00> : vector<4x256xf32>
    %821 = tpu.matmul %3, %19, %cst_122 {dimension_numbers = #tpu.dot_dimension_numbers<[1], [0], [0], [1], [0, 0, 1, 1], [], []>} : vector<4x9xf32>, vector<9x256xf32>, vector<4x256xf32> -> vector<4x256xf32>
    %822 = vector.broadcast %733 : vector<1x1xf32> to vector<4x256xf32>
    %823 = arith.mulf %822, %821 : vector<4x256xf32>
    %824 = vector.broadcast %4 : vector<4x1xf32> to vector<4x256xf32>
    %825 = arith.addf %823, %824 : vector<4x256xf32>
    %826 = vector.extract_strided_slice %775 {offsets = [0, 0], sizes = [4, 256], strides = [1, 1]} : vector<8x256xf32> to vector<4x256xf32>
    %827 = vector.extract_strided_slice %781 {offsets = [0, 0], sizes = [4, 256], strides = [1, 1]} : vector<8x256xf32> to vector<4x256xf32>
    %828 = vector.extract_strided_slice %787 {offsets = [0, 0], sizes = [4, 256], strides = [1, 1]} : vector<8x256xf32> to vector<4x256xf32>
    %829 = vector.extract_strided_slice %793 {offsets = [0, 0], sizes = [4, 256], strides = [1, 1]} : vector<8x256xf32> to vector<4x256xf32>
    %830 = vector.extract_strided_slice %796 {offsets = [0, 0], sizes = [4, 256], strides = [1, 1]} : vector<8x256xf32> to vector<4x256xf32>
    %831 = vector.extract_strided_slice %802 {offsets = [0, 0], sizes = [4, 256], strides = [1, 1]} : vector<8x256xf32> to vector<4x256xf32>
    %832 = vector.extract_strided_slice %808 {offsets = [0, 0], sizes = [4, 256], strides = [1, 1]} : vector<8x256xf32> to vector<4x256xf32>
    %833 = vector.extract_strided_slice %814 {offsets = [0, 0], sizes = [4, 256], strides = [1, 1]} : vector<8x256xf32> to vector<4x256xf32>
    %834 = vector.extract_strided_slice %820 {offsets = [0, 0], sizes = [4, 256], strides = [1, 1]} : vector<8x256xf32> to vector<4x256xf32>
    %835 = tpu.concatenate %826, %827, %828, %829, %830, %831, %832, %833, %834 in 0 : vector<4x256xf32>, vector<4x256xf32>, vector<4x256xf32>, vector<4x256xf32>, vector<4x256xf32>, vector<4x256xf32>, vector<4x256xf32>, vector<4x256xf32>, vector<4x256xf32> -> vector<36x256xf32>
    %cst_123 = arith.constant dense<0.000000e+00> : vector<4x256xf32>
    %836 = tpu.matmul %2, %835, %cst_123 {dimension_numbers = #tpu.dot_dimension_numbers<[1], [0], [0], [1], [0, 0, 1, 1], [], []>} : vector<4x36xf32>, vector<36x256xf32>, vector<4x256xf32> -> vector<4x256xf32>
    %837 = arith.addf %836, %825 : vector<4x256xf32>
    %838 = vector.extract_strided_slice %775 {offsets = [4, 0], sizes = [4, 256], strides = [1, 1]} : vector<8x256xf32> to vector<4x256xf32>
    %839 = vector.extract_strided_slice %781 {offsets = [4, 0], sizes = [4, 256], strides = [1, 1]} : vector<8x256xf32> to vector<4x256xf32>
    %840 = vector.extract_strided_slice %787 {offsets = [4, 0], sizes = [4, 256], strides = [1, 1]} : vector<8x256xf32> to vector<4x256xf32>
    %841 = vector.extract_strided_slice %793 {offsets = [4, 0], sizes = [4, 256], strides = [1, 1]} : vector<8x256xf32> to vector<4x256xf32>
    %842 = vector.extract_strided_slice %796 {offsets = [4, 0], sizes = [4, 256], strides = [1, 1]} : vector<8x256xf32> to vector<4x256xf32>
    %843 = vector.extract_strided_slice %802 {offsets = [4, 0], sizes = [4, 256], strides = [1, 1]} : vector<8x256xf32> to vector<4x256xf32>
    %844 = vector.extract_strided_slice %808 {offsets = [4, 0], sizes = [4, 256], strides = [1, 1]} : vector<8x256xf32> to vector<4x256xf32>
    %845 = vector.extract_strided_slice %814 {offsets = [4, 0], sizes = [4, 256], strides = [1, 1]} : vector<8x256xf32> to vector<4x256xf32>
    %846 = vector.extract_strided_slice %820 {offsets = [4, 0], sizes = [4, 256], strides = [1, 1]} : vector<8x256xf32> to vector<4x256xf32>
    %847 = tpu.concatenate %838, %839, %840, %841, %842, %843, %844, %845, %846 in 0 : vector<4x256xf32>, vector<4x256xf32>, vector<4x256xf32>, vector<4x256xf32>, vector<4x256xf32>, vector<4x256xf32>, vector<4x256xf32>, vector<4x256xf32>, vector<4x256xf32> -> vector<36x256xf32>
    %cst_124 = arith.constant dense<0.000000e+00> : vector<4x256xf32>
    %848 = tpu.matmul %2, %847, %cst_124 {dimension_numbers = #tpu.dot_dimension_numbers<[1], [0], [0], [1], [0, 0, 1, 1], [], []>} : vector<4x36xf32>, vector<36x256xf32>, vector<4x256xf32> -> vector<4x256xf32>
    %849 = arith.addf %848, %825 : vector<4x256xf32>
    %850 = tpu.concatenate %837, %849 in 0 : vector<4x256xf32>, vector<4x256xf32> -> vector<8x256xf32>
    %cst_125 = arith.constant dense<0.000000e+00> : vector<8xf32>
    %851 = vector.multi_reduction <add>, %850, %cst_125 [1] : vector<8x256xf32> to vector<8xf32>
    %852 = vector.shape_cast %851 : vector<8xf32> to vector<8x1xf32>
    %cst_126 = arith.constant 2.560000e+02 : f32
    %853 = vector.broadcast %cst_126 : f32 to vector<8x1xf32>
    %854 = arith.divf %852, %853 : vector<8x1xf32>
    %855 = vector.broadcast %854 : vector<8x1xf32> to vector<8x256xf32>
    %856 = arith.subf %850, %855 : vector<8x256xf32>
    %857 = arith.mulf %856, %856 : vector<8x256xf32>
    %cst_127 = arith.constant dense<0.000000e+00> : vector<8xf32>
    %858 = vector.multi_reduction <add>, %857, %cst_127 [1] : vector<8x256xf32> to vector<8xf32>
    %859 = vector.shape_cast %858 : vector<8xf32> to vector<8x1xf32>
    %cst_128 = arith.constant 2.560000e+02 : f32
    %860 = vector.broadcast %cst_128 : f32 to vector<8x1xf32>
    %861 = arith.divf %859, %860 : vector<8x1xf32>
    %cst_129 = arith.constant 9.99999974E-6 : f32
    %862 = vector.broadcast %cst_129 : f32 to vector<8x1xf32>
    %863 = arith.addf %861, %862 : vector<8x1xf32>
    %864 = math.rsqrt %863 : vector<8x1xf32>
    %865 = vector.broadcast %864 : vector<8x1xf32> to vector<8x256xf32>
    %866 = arith.mulf %856, %865 : vector<8x256xf32>
    %867 = vector.broadcast %5 : vector<8x1xf32> to vector<8x256xf32>
    %868 = arith.mulf %866, %867 : vector<8x256xf32>
    %869 = vector.broadcast %6 : vector<8x1xf32> to vector<8x256xf32>
    %870 = arith.addf %868, %869 : vector<8x256xf32>
    %cst_130 = arith.constant 0.000000e+00 : f32
    %871 = vector.broadcast %cst_130 : f32 to vector<8x256xf32>
    %872 = arith.maximumf %870, %871 : vector<8x256xf32>
    %873 = vector.extract_strided_slice %19 {offsets = [0, 0], sizes = [1, 256], strides = [1, 1]} : vector<9x256xf32> to vector<1x256xf32>
    %874 = vector.extract_strided_slice %872 {offsets = [0, 239], sizes = [8, 17], strides = [1, 1]} : vector<8x256xf32> to vector<8x17xf32>
    %875 = vector.extract_strided_slice %872 {offsets = [0, 0], sizes = [8, 239], strides = [1, 1]} : vector<8x256xf32> to vector<8x239xf32>
    %876 = tpu.concatenate %874, %875 in 1 : vector<8x17xf32>, vector<8x239xf32> -> vector<8x256xf32>
    %877 = vector.broadcast %873 : vector<1x256xf32> to vector<8x256xf32>
    %878 = arith.mulf %877, %876 : vector<8x256xf32>
    %879 = vector.extract_strided_slice %19 {offsets = [1, 0], sizes = [1, 256], strides = [1, 1]} : vector<9x256xf32> to vector<1x256xf32>
    %880 = vector.extract_strided_slice %872 {offsets = [0, 240], sizes = [8, 16], strides = [1, 1]} : vector<8x256xf32> to vector<8x16xf32>
    %881 = vector.extract_strided_slice %872 {offsets = [0, 0], sizes = [8, 240], strides = [1, 1]} : vector<8x256xf32> to vector<8x240xf32>
    %882 = tpu.concatenate %880, %881 in 1 : vector<8x16xf32>, vector<8x240xf32> -> vector<8x256xf32>
    %883 = vector.broadcast %879 : vector<1x256xf32> to vector<8x256xf32>
    %884 = arith.mulf %883, %882 : vector<8x256xf32>
    %885 = vector.extract_strided_slice %19 {offsets = [2, 0], sizes = [1, 256], strides = [1, 1]} : vector<9x256xf32> to vector<1x256xf32>
    %886 = vector.extract_strided_slice %872 {offsets = [0, 241], sizes = [8, 15], strides = [1, 1]} : vector<8x256xf32> to vector<8x15xf32>
    %887 = vector.extract_strided_slice %872 {offsets = [0, 0], sizes = [8, 241], strides = [1, 1]} : vector<8x256xf32> to vector<8x241xf32>
    %888 = tpu.concatenate %886, %887 in 1 : vector<8x15xf32>, vector<8x241xf32> -> vector<8x256xf32>
    %889 = vector.broadcast %885 : vector<1x256xf32> to vector<8x256xf32>
    %890 = arith.mulf %889, %888 : vector<8x256xf32>
    %891 = vector.extract_strided_slice %19 {offsets = [3, 0], sizes = [1, 256], strides = [1, 1]} : vector<9x256xf32> to vector<1x256xf32>
    %892 = vector.extract_strided_slice %872 {offsets = [0, 255], sizes = [8, 1], strides = [1, 1]} : vector<8x256xf32> to vector<8x1xf32>
    %893 = vector.extract_strided_slice %872 {offsets = [0, 0], sizes = [8, 255], strides = [1, 1]} : vector<8x256xf32> to vector<8x255xf32>
    %894 = tpu.concatenate %892, %893 in 1 : vector<8x1xf32>, vector<8x255xf32> -> vector<8x256xf32>
    %895 = vector.broadcast %891 : vector<1x256xf32> to vector<8x256xf32>
    %896 = arith.mulf %895, %894 : vector<8x256xf32>
    %897 = vector.extract_strided_slice %19 {offsets = [4, 0], sizes = [1, 256], strides = [1, 1]} : vector<9x256xf32> to vector<1x256xf32>
    %898 = vector.broadcast %897 : vector<1x256xf32> to vector<8x256xf32>
    %899 = arith.mulf %898, %872 : vector<8x256xf32>
    %900 = vector.extract_strided_slice %19 {offsets = [5, 0], sizes = [1, 256], strides = [1, 1]} : vector<9x256xf32> to vector<1x256xf32>
    %901 = vector.extract_strided_slice %872 {offsets = [0, 1], sizes = [8, 255], strides = [1, 1]} : vector<8x256xf32> to vector<8x255xf32>
    %902 = vector.extract_strided_slice %872 {offsets = [0, 0], sizes = [8, 1], strides = [1, 1]} : vector<8x256xf32> to vector<8x1xf32>
    %903 = tpu.concatenate %901, %902 in 1 : vector<8x255xf32>, vector<8x1xf32> -> vector<8x256xf32>
    %904 = vector.broadcast %900 : vector<1x256xf32> to vector<8x256xf32>
    %905 = arith.mulf %904, %903 : vector<8x256xf32>
    %906 = vector.extract_strided_slice %19 {offsets = [6, 0], sizes = [1, 256], strides = [1, 1]} : vector<9x256xf32> to vector<1x256xf32>
    %907 = vector.extract_strided_slice %872 {offsets = [0, 15], sizes = [8, 241], strides = [1, 1]} : vector<8x256xf32> to vector<8x241xf32>
    %908 = vector.extract_strided_slice %872 {offsets = [0, 0], sizes = [8, 15], strides = [1, 1]} : vector<8x256xf32> to vector<8x15xf32>
    %909 = tpu.concatenate %907, %908 in 1 : vector<8x241xf32>, vector<8x15xf32> -> vector<8x256xf32>
    %910 = vector.broadcast %906 : vector<1x256xf32> to vector<8x256xf32>
    %911 = arith.mulf %910, %909 : vector<8x256xf32>
    %912 = vector.extract_strided_slice %19 {offsets = [7, 0], sizes = [1, 256], strides = [1, 1]} : vector<9x256xf32> to vector<1x256xf32>
    %913 = vector.extract_strided_slice %872 {offsets = [0, 16], sizes = [8, 240], strides = [1, 1]} : vector<8x256xf32> to vector<8x240xf32>
    %914 = vector.extract_strided_slice %872 {offsets = [0, 0], sizes = [8, 16], strides = [1, 1]} : vector<8x256xf32> to vector<8x16xf32>
    %915 = tpu.concatenate %913, %914 in 1 : vector<8x240xf32>, vector<8x16xf32> -> vector<8x256xf32>
    %916 = vector.broadcast %912 : vector<1x256xf32> to vector<8x256xf32>
    %917 = arith.mulf %916, %915 : vector<8x256xf32>
    %918 = vector.extract_strided_slice %19 {offsets = [8, 0], sizes = [1, 256], strides = [1, 1]} : vector<9x256xf32> to vector<1x256xf32>
    %919 = vector.extract_strided_slice %872 {offsets = [0, 17], sizes = [8, 239], strides = [1, 1]} : vector<8x256xf32> to vector<8x239xf32>
    %920 = vector.extract_strided_slice %872 {offsets = [0, 0], sizes = [8, 17], strides = [1, 1]} : vector<8x256xf32> to vector<8x17xf32>
    %921 = tpu.concatenate %919, %920 in 1 : vector<8x239xf32>, vector<8x17xf32> -> vector<8x256xf32>
    %922 = vector.broadcast %918 : vector<1x256xf32> to vector<8x256xf32>
    %923 = arith.mulf %922, %921 : vector<8x256xf32>
    %cst_131 = arith.constant dense<0.000000e+00> : vector<4x256xf32>
    %924 = tpu.matmul %8, %19, %cst_131 {dimension_numbers = #tpu.dot_dimension_numbers<[1], [0], [0], [1], [0, 0, 1, 1], [], []>} : vector<4x9xf32>, vector<9x256xf32>, vector<4x256xf32> -> vector<4x256xf32>
    %925 = vector.broadcast %733 : vector<1x1xf32> to vector<4x256xf32>
    %926 = arith.mulf %925, %924 : vector<4x256xf32>
    %927 = vector.broadcast %9 : vector<4x1xf32> to vector<4x256xf32>
    %928 = arith.addf %926, %927 : vector<4x256xf32>
    %929 = vector.extract_strided_slice %878 {offsets = [0, 0], sizes = [4, 256], strides = [1, 1]} : vector<8x256xf32> to vector<4x256xf32>
    %930 = vector.extract_strided_slice %884 {offsets = [0, 0], sizes = [4, 256], strides = [1, 1]} : vector<8x256xf32> to vector<4x256xf32>
    %931 = vector.extract_strided_slice %890 {offsets = [0, 0], sizes = [4, 256], strides = [1, 1]} : vector<8x256xf32> to vector<4x256xf32>
    %932 = vector.extract_strided_slice %896 {offsets = [0, 0], sizes = [4, 256], strides = [1, 1]} : vector<8x256xf32> to vector<4x256xf32>
    %933 = vector.extract_strided_slice %899 {offsets = [0, 0], sizes = [4, 256], strides = [1, 1]} : vector<8x256xf32> to vector<4x256xf32>
    %934 = vector.extract_strided_slice %905 {offsets = [0, 0], sizes = [4, 256], strides = [1, 1]} : vector<8x256xf32> to vector<4x256xf32>
    %935 = vector.extract_strided_slice %911 {offsets = [0, 0], sizes = [4, 256], strides = [1, 1]} : vector<8x256xf32> to vector<4x256xf32>
    %936 = vector.extract_strided_slice %917 {offsets = [0, 0], sizes = [4, 256], strides = [1, 1]} : vector<8x256xf32> to vector<4x256xf32>
    %937 = vector.extract_strided_slice %923 {offsets = [0, 0], sizes = [4, 256], strides = [1, 1]} : vector<8x256xf32> to vector<4x256xf32>
    %938 = tpu.concatenate %929, %930, %931, %932, %933, %934, %935, %936, %937 in 0 : vector<4x256xf32>, vector<4x256xf32>, vector<4x256xf32>, vector<4x256xf32>, vector<4x256xf32>, vector<4x256xf32>, vector<4x256xf32>, vector<4x256xf32>, vector<4x256xf32> -> vector<36x256xf32>
    %cst_132 = arith.constant dense<0.000000e+00> : vector<4x256xf32>
    %939 = tpu.matmul %7, %938, %cst_132 {dimension_numbers = #tpu.dot_dimension_numbers<[1], [0], [0], [1], [0, 0, 1, 1], [], []>} : vector<4x36xf32>, vector<36x256xf32>, vector<4x256xf32> -> vector<4x256xf32>
    %940 = arith.addf %939, %928 : vector<4x256xf32>
    %941 = vector.extract_strided_slice %878 {offsets = [4, 0], sizes = [4, 256], strides = [1, 1]} : vector<8x256xf32> to vector<4x256xf32>
    %942 = vector.extract_strided_slice %884 {offsets = [4, 0], sizes = [4, 256], strides = [1, 1]} : vector<8x256xf32> to vector<4x256xf32>
    %943 = vector.extract_strided_slice %890 {offsets = [4, 0], sizes = [4, 256], strides = [1, 1]} : vector<8x256xf32> to vector<4x256xf32>
    %944 = vector.extract_strided_slice %896 {offsets = [4, 0], sizes = [4, 256], strides = [1, 1]} : vector<8x256xf32> to vector<4x256xf32>
    %945 = vector.extract_strided_slice %899 {offsets = [4, 0], sizes = [4, 256], strides = [1, 1]} : vector<8x256xf32> to vector<4x256xf32>
    %946 = vector.extract_strided_slice %905 {offsets = [4, 0], sizes = [4, 256], strides = [1, 1]} : vector<8x256xf32> to vector<4x256xf32>
    %947 = vector.extract_strided_slice %911 {offsets = [4, 0], sizes = [4, 256], strides = [1, 1]} : vector<8x256xf32> to vector<4x256xf32>
    %948 = vector.extract_strided_slice %917 {offsets = [4, 0], sizes = [4, 256], strides = [1, 1]} : vector<8x256xf32> to vector<4x256xf32>
    %949 = vector.extract_strided_slice %923 {offsets = [4, 0], sizes = [4, 256], strides = [1, 1]} : vector<8x256xf32> to vector<4x256xf32>
    %950 = tpu.concatenate %941, %942, %943, %944, %945, %946, %947, %948, %949 in 0 : vector<4x256xf32>, vector<4x256xf32>, vector<4x256xf32>, vector<4x256xf32>, vector<4x256xf32>, vector<4x256xf32>, vector<4x256xf32>, vector<4x256xf32>, vector<4x256xf32> -> vector<36x256xf32>
    %cst_133 = arith.constant dense<0.000000e+00> : vector<4x256xf32>
    %951 = tpu.matmul %7, %950, %cst_133 {dimension_numbers = #tpu.dot_dimension_numbers<[1], [0], [0], [1], [0, 0, 1, 1], [], []>} : vector<4x36xf32>, vector<36x256xf32>, vector<4x256xf32> -> vector<4x256xf32>
    %952 = arith.addf %951, %928 : vector<4x256xf32>
    %953 = tpu.concatenate %940, %952 in 0 : vector<4x256xf32>, vector<4x256xf32> -> vector<8x256xf32>
    %cst_134 = arith.constant dense<0.000000e+00> : vector<8xf32>
    %954 = vector.multi_reduction <add>, %953, %cst_134 [1] : vector<8x256xf32> to vector<8xf32>
    %955 = vector.shape_cast %954 : vector<8xf32> to vector<8x1xf32>
    %cst_135 = arith.constant 2.560000e+02 : f32
    %956 = vector.broadcast %cst_135 : f32 to vector<8x1xf32>
    %957 = arith.divf %955, %956 : vector<8x1xf32>
    %958 = vector.broadcast %957 : vector<8x1xf32> to vector<8x256xf32>
    %959 = arith.subf %953, %958 : vector<8x256xf32>
    %960 = arith.mulf %959, %959 : vector<8x256xf32>
    %cst_136 = arith.constant dense<0.000000e+00> : vector<8xf32>
    %961 = vector.multi_reduction <add>, %960, %cst_136 [1] : vector<8x256xf32> to vector<8xf32>
    %962 = vector.shape_cast %961 : vector<8xf32> to vector<8x1xf32>
    %cst_137 = arith.constant 2.560000e+02 : f32
    %963 = vector.broadcast %cst_137 : f32 to vector<8x1xf32>
    %964 = arith.divf %962, %963 : vector<8x1xf32>
    %cst_138 = arith.constant 9.99999974E-6 : f32
    %965 = vector.broadcast %cst_138 : f32 to vector<8x1xf32>
    %966 = arith.addf %964, %965 : vector<8x1xf32>
    %967 = math.rsqrt %966 : vector<8x1xf32>
    %968 = vector.broadcast %967 : vector<8x1xf32> to vector<8x256xf32>
    %969 = arith.mulf %959, %968 : vector<8x256xf32>
    %970 = vector.broadcast %10 : vector<8x1xf32> to vector<8x256xf32>
    %971 = arith.mulf %969, %970 : vector<8x256xf32>
    %972 = vector.broadcast %11 : vector<8x1xf32> to vector<8x256xf32>
    %973 = arith.addf %971, %972 : vector<8x256xf32>
    %974 = arith.addf %12, %16 : vector<1x1xf32>
    %cst_139 = arith.constant 2.84627533 : f32
    %975 = vector.broadcast %cst_139 : f32 to vector<8x256xf32>
    %976 = arith.mulf %975, %18 : vector<8x256xf32>
    %cst_140 = arith.constant 10.757576 : f32
    %977 = vector.broadcast %cst_140 : f32 to vector<8x256xf32>
    %978 = arith.mulf %977, %253 : vector<8x256xf32>
    %979 = arith.subf %976, %978 : vector<8x256xf32>
    %cst_141 = arith.constant 8.90642261 : f32
    %980 = vector.broadcast %cst_141 : f32 to vector<8x256xf32>
    %981 = arith.mulf %980, %490 : vector<8x256xf32>
    %982 = arith.addf %979, %981 : vector<8x256xf32>
    %cst_142 = arith.constant 0.278409094 : f32
    %983 = vector.broadcast %cst_142 : f32 to vector<8x256xf32>
    %984 = arith.mulf %983, %730 : vector<8x256xf32>
    %985 = arith.addf %982, %984 : vector<8x256xf32>
    %cst_143 = arith.constant 0.273531318 : f32
    %986 = vector.broadcast %cst_143 : f32 to vector<8x256xf32>
    %987 = arith.mulf %986, %973 : vector<8x256xf32>
    %988 = arith.subf %985, %987 : vector<8x256xf32>
    %989 = vector.broadcast %16 : vector<1x1xf32> to vector<8x256xf32>
    %990 = arith.mulf %989, %988 : vector<8x256xf32>
    %991 = arith.addf %17, %990 : vector<8x256xf32>
    %cst_144 = arith.constant dense<0.000000e+00> : vector<8xf32>
    %992 = vector.multi_reduction <add>, %991, %cst_144 [1] : vector<8x256xf32> to vector<8xf32>
    %993 = vector.shape_cast %992 : vector<8xf32> to vector<8x1xf32>
    %cst_145 = arith.constant 2.560000e+02 : f32
    %994 = vector.broadcast %cst_145 : f32 to vector<8x1xf32>
    %995 = arith.divf %993, %994 : vector<8x1xf32>
    %996 = vector.broadcast %995 : vector<8x1xf32> to vector<8x256xf32>
    %997 = arith.subf %991, %996 : vector<8x256xf32>
    %998 = arith.mulf %997, %997 : vector<8x256xf32>
    %cst_146 = arith.constant dense<0.000000e+00> : vector<8xf32>
    %999 = vector.multi_reduction <add>, %998, %cst_146 [1] : vector<8x256xf32> to vector<8xf32>
    %1000 = vector.shape_cast %999 : vector<8xf32> to vector<8x1xf32>
    %cst_147 = arith.constant 2.560000e+02 : f32
    %1001 = vector.broadcast %cst_147 : f32 to vector<8x1xf32>
    %1002 = arith.divf %1000, %1001 : vector<8x1xf32>
    %cst_148 = arith.constant 9.99999974E-6 : f32
    %1003 = vector.broadcast %cst_148 : f32 to vector<8x1xf32>
    %1004 = arith.addf %1002, %1003 : vector<8x1xf32>
    %1005 = math.rsqrt %1004 : vector<8x1xf32>
    %1006 = vector.broadcast %1005 : vector<8x1xf32> to vector<8x256xf32>
    %1007 = arith.mulf %997, %1006 : vector<8x256xf32>
    %1008 = vector.broadcast %0 : vector<8x1xf32> to vector<8x256xf32>
    %1009 = arith.mulf %1007, %1008 : vector<8x256xf32>
    %1010 = vector.broadcast %1 : vector<8x1xf32> to vector<8x256xf32>
    %1011 = arith.addf %1009, %1010 : vector<8x256xf32>
    %cst_149 = arith.constant 0.000000e+00 : f32
    %1012 = vector.broadcast %cst_149 : f32 to vector<8x256xf32>
    %1013 = arith.maximumf %1011, %1012 : vector<8x256xf32>
    %1014 = vector.extract_strided_slice %19 {offsets = [0, 0], sizes = [1, 256], strides = [1, 1]} : vector<9x256xf32> to vector<1x256xf32>
    %1015 = vector.extract_strided_slice %1013 {offsets = [0, 239], sizes = [8, 17], strides = [1, 1]} : vector<8x256xf32> to vector<8x17xf32>
    %1016 = vector.extract_strided_slice %1013 {offsets = [0, 0], sizes = [8, 239], strides = [1, 1]} : vector<8x256xf32> to vector<8x239xf32>
    %1017 = tpu.concatenate %1015, %1016 in 1 : vector<8x17xf32>, vector<8x239xf32> -> vector<8x256xf32>
    %1018 = vector.broadcast %1014 : vector<1x256xf32> to vector<8x256xf32>
    %1019 = arith.mulf %1018, %1017 : vector<8x256xf32>
    %1020 = vector.extract_strided_slice %19 {offsets = [1, 0], sizes = [1, 256], strides = [1, 1]} : vector<9x256xf32> to vector<1x256xf32>
    %1021 = vector.extract_strided_slice %1013 {offsets = [0, 240], sizes = [8, 16], strides = [1, 1]} : vector<8x256xf32> to vector<8x16xf32>
    %1022 = vector.extract_strided_slice %1013 {offsets = [0, 0], sizes = [8, 240], strides = [1, 1]} : vector<8x256xf32> to vector<8x240xf32>
    %1023 = tpu.concatenate %1021, %1022 in 1 : vector<8x16xf32>, vector<8x240xf32> -> vector<8x256xf32>
    %1024 = vector.broadcast %1020 : vector<1x256xf32> to vector<8x256xf32>
    %1025 = arith.mulf %1024, %1023 : vector<8x256xf32>
    %1026 = vector.extract_strided_slice %19 {offsets = [2, 0], sizes = [1, 256], strides = [1, 1]} : vector<9x256xf32> to vector<1x256xf32>
    %1027 = vector.extract_strided_slice %1013 {offsets = [0, 241], sizes = [8, 15], strides = [1, 1]} : vector<8x256xf32> to vector<8x15xf32>
    %1028 = vector.extract_strided_slice %1013 {offsets = [0, 0], sizes = [8, 241], strides = [1, 1]} : vector<8x256xf32> to vector<8x241xf32>
    %1029 = tpu.concatenate %1027, %1028 in 1 : vector<8x15xf32>, vector<8x241xf32> -> vector<8x256xf32>
    %1030 = vector.broadcast %1026 : vector<1x256xf32> to vector<8x256xf32>
    %1031 = arith.mulf %1030, %1029 : vector<8x256xf32>
    %1032 = vector.extract_strided_slice %19 {offsets = [3, 0], sizes = [1, 256], strides = [1, 1]} : vector<9x256xf32> to vector<1x256xf32>
    %1033 = vector.extract_strided_slice %1013 {offsets = [0, 255], sizes = [8, 1], strides = [1, 1]} : vector<8x256xf32> to vector<8x1xf32>
    %1034 = vector.extract_strided_slice %1013 {offsets = [0, 0], sizes = [8, 255], strides = [1, 1]} : vector<8x256xf32> to vector<8x255xf32>
    %1035 = tpu.concatenate %1033, %1034 in 1 : vector<8x1xf32>, vector<8x255xf32> -> vector<8x256xf32>
    %1036 = vector.broadcast %1032 : vector<1x256xf32> to vector<8x256xf32>
    %1037 = arith.mulf %1036, %1035 : vector<8x256xf32>
    %1038 = vector.extract_strided_slice %19 {offsets = [4, 0], sizes = [1, 256], strides = [1, 1]} : vector<9x256xf32> to vector<1x256xf32>
    %1039 = vector.broadcast %1038 : vector<1x256xf32> to vector<8x256xf32>
    %1040 = arith.mulf %1039, %1013 : vector<8x256xf32>
    %1041 = vector.extract_strided_slice %19 {offsets = [5, 0], sizes = [1, 256], strides = [1, 1]} : vector<9x256xf32> to vector<1x256xf32>
    %1042 = vector.extract_strided_slice %1013 {offsets = [0, 1], sizes = [8, 255], strides = [1, 1]} : vector<8x256xf32> to vector<8x255xf32>
    %1043 = vector.extract_strided_slice %1013 {offsets = [0, 0], sizes = [8, 1], strides = [1, 1]} : vector<8x256xf32> to vector<8x1xf32>
    %1044 = tpu.concatenate %1042, %1043 in 1 : vector<8x255xf32>, vector<8x1xf32> -> vector<8x256xf32>
    %1045 = vector.broadcast %1041 : vector<1x256xf32> to vector<8x256xf32>
    %1046 = arith.mulf %1045, %1044 : vector<8x256xf32>
    %1047 = vector.extract_strided_slice %19 {offsets = [6, 0], sizes = [1, 256], strides = [1, 1]} : vector<9x256xf32> to vector<1x256xf32>
    %1048 = vector.extract_strided_slice %1013 {offsets = [0, 15], sizes = [8, 241], strides = [1, 1]} : vector<8x256xf32> to vector<8x241xf32>
    %1049 = vector.extract_strided_slice %1013 {offsets = [0, 0], sizes = [8, 15], strides = [1, 1]} : vector<8x256xf32> to vector<8x15xf32>
    %1050 = tpu.concatenate %1048, %1049 in 1 : vector<8x241xf32>, vector<8x15xf32> -> vector<8x256xf32>
    %1051 = vector.broadcast %1047 : vector<1x256xf32> to vector<8x256xf32>
    %1052 = arith.mulf %1051, %1050 : vector<8x256xf32>
    %1053 = vector.extract_strided_slice %19 {offsets = [7, 0], sizes = [1, 256], strides = [1, 1]} : vector<9x256xf32> to vector<1x256xf32>
    %1054 = vector.extract_strided_slice %1013 {offsets = [0, 16], sizes = [8, 240], strides = [1, 1]} : vector<8x256xf32> to vector<8x240xf32>
    %1055 = vector.extract_strided_slice %1013 {offsets = [0, 0], sizes = [8, 16], strides = [1, 1]} : vector<8x256xf32> to vector<8x16xf32>
    %1056 = tpu.concatenate %1054, %1055 in 1 : vector<8x240xf32>, vector<8x16xf32> -> vector<8x256xf32>
    %1057 = vector.broadcast %1053 : vector<1x256xf32> to vector<8x256xf32>
    %1058 = arith.mulf %1057, %1056 : vector<8x256xf32>
    %1059 = vector.extract_strided_slice %19 {offsets = [8, 0], sizes = [1, 256], strides = [1, 1]} : vector<9x256xf32> to vector<1x256xf32>
    %1060 = vector.extract_strided_slice %1013 {offsets = [0, 17], sizes = [8, 239], strides = [1, 1]} : vector<8x256xf32> to vector<8x239xf32>
    %1061 = vector.extract_strided_slice %1013 {offsets = [0, 0], sizes = [8, 17], strides = [1, 1]} : vector<8x256xf32> to vector<8x17xf32>
    %1062 = tpu.concatenate %1060, %1061 in 1 : vector<8x239xf32>, vector<8x17xf32> -> vector<8x256xf32>
    %1063 = vector.broadcast %1059 : vector<1x256xf32> to vector<8x256xf32>
    %1064 = arith.mulf %1063, %1062 : vector<8x256xf32>
    %cst_150 = arith.constant dense<0.000000e+00> : vector<4x256xf32>
    %1065 = tpu.matmul %3, %19, %cst_150 {dimension_numbers = #tpu.dot_dimension_numbers<[1], [0], [0], [1], [0, 0, 1, 1], [], []>} : vector<4x9xf32>, vector<9x256xf32>, vector<4x256xf32> -> vector<4x256xf32>
    %1066 = vector.broadcast %974 : vector<1x1xf32> to vector<4x256xf32>
    %1067 = arith.mulf %1066, %1065 : vector<4x256xf32>
    %1068 = vector.broadcast %4 : vector<4x1xf32> to vector<4x256xf32>
    %1069 = arith.addf %1067, %1068 : vector<4x256xf32>
    %1070 = vector.extract_strided_slice %1019 {offsets = [0, 0], sizes = [4, 256], strides = [1, 1]} : vector<8x256xf32> to vector<4x256xf32>
    %1071 = vector.extract_strided_slice %1025 {offsets = [0, 0], sizes = [4, 256], strides = [1, 1]} : vector<8x256xf32> to vector<4x256xf32>
    %1072 = vector.extract_strided_slice %1031 {offsets = [0, 0], sizes = [4, 256], strides = [1, 1]} : vector<8x256xf32> to vector<4x256xf32>
    %1073 = vector.extract_strided_slice %1037 {offsets = [0, 0], sizes = [4, 256], strides = [1, 1]} : vector<8x256xf32> to vector<4x256xf32>
    %1074 = vector.extract_strided_slice %1040 {offsets = [0, 0], sizes = [4, 256], strides = [1, 1]} : vector<8x256xf32> to vector<4x256xf32>
    %1075 = vector.extract_strided_slice %1046 {offsets = [0, 0], sizes = [4, 256], strides = [1, 1]} : vector<8x256xf32> to vector<4x256xf32>
    %1076 = vector.extract_strided_slice %1052 {offsets = [0, 0], sizes = [4, 256], strides = [1, 1]} : vector<8x256xf32> to vector<4x256xf32>
    %1077 = vector.extract_strided_slice %1058 {offsets = [0, 0], sizes = [4, 256], strides = [1, 1]} : vector<8x256xf32> to vector<4x256xf32>
    %1078 = vector.extract_strided_slice %1064 {offsets = [0, 0], sizes = [4, 256], strides = [1, 1]} : vector<8x256xf32> to vector<4x256xf32>
    %1079 = tpu.concatenate %1070, %1071, %1072, %1073, %1074, %1075, %1076, %1077, %1078 in 0 : vector<4x256xf32>, vector<4x256xf32>, vector<4x256xf32>, vector<4x256xf32>, vector<4x256xf32>, vector<4x256xf32>, vector<4x256xf32>, vector<4x256xf32>, vector<4x256xf32> -> vector<36x256xf32>
    %cst_151 = arith.constant dense<0.000000e+00> : vector<4x256xf32>
    %1080 = tpu.matmul %2, %1079, %cst_151 {dimension_numbers = #tpu.dot_dimension_numbers<[1], [0], [0], [1], [0, 0, 1, 1], [], []>} : vector<4x36xf32>, vector<36x256xf32>, vector<4x256xf32> -> vector<4x256xf32>
    %1081 = arith.addf %1080, %1069 : vector<4x256xf32>
    %1082 = vector.extract_strided_slice %1019 {offsets = [4, 0], sizes = [4, 256], strides = [1, 1]} : vector<8x256xf32> to vector<4x256xf32>
    %1083 = vector.extract_strided_slice %1025 {offsets = [4, 0], sizes = [4, 256], strides = [1, 1]} : vector<8x256xf32> to vector<4x256xf32>
    %1084 = vector.extract_strided_slice %1031 {offsets = [4, 0], sizes = [4, 256], strides = [1, 1]} : vector<8x256xf32> to vector<4x256xf32>
    %1085 = vector.extract_strided_slice %1037 {offsets = [4, 0], sizes = [4, 256], strides = [1, 1]} : vector<8x256xf32> to vector<4x256xf32>
    %1086 = vector.extract_strided_slice %1040 {offsets = [4, 0], sizes = [4, 256], strides = [1, 1]} : vector<8x256xf32> to vector<4x256xf32>
    %1087 = vector.extract_strided_slice %1046 {offsets = [4, 0], sizes = [4, 256], strides = [1, 1]} : vector<8x256xf32> to vector<4x256xf32>
    %1088 = vector.extract_strided_slice %1052 {offsets = [4, 0], sizes = [4, 256], strides = [1, 1]} : vector<8x256xf32> to vector<4x256xf32>
    %1089 = vector.extract_strided_slice %1058 {offsets = [4, 0], sizes = [4, 256], strides = [1, 1]} : vector<8x256xf32> to vector<4x256xf32>
    %1090 = vector.extract_strided_slice %1064 {offsets = [4, 0], sizes = [4, 256], strides = [1, 1]} : vector<8x256xf32> to vector<4x256xf32>
    %1091 = tpu.concatenate %1082, %1083, %1084, %1085, %1086, %1087, %1088, %1089, %1090 in 0 : vector<4x256xf32>, vector<4x256xf32>, vector<4x256xf32>, vector<4x256xf32>, vector<4x256xf32>, vector<4x256xf32>, vector<4x256xf32>, vector<4x256xf32>, vector<4x256xf32> -> vector<36x256xf32>
    %cst_152 = arith.constant dense<0.000000e+00> : vector<4x256xf32>
    %1092 = tpu.matmul %2, %1091, %cst_152 {dimension_numbers = #tpu.dot_dimension_numbers<[1], [0], [0], [1], [0, 0, 1, 1], [], []>} : vector<4x36xf32>, vector<36x256xf32>, vector<4x256xf32> -> vector<4x256xf32>
    %1093 = arith.addf %1092, %1069 : vector<4x256xf32>
    %1094 = tpu.concatenate %1081, %1093 in 0 : vector<4x256xf32>, vector<4x256xf32> -> vector<8x256xf32>
    %cst_153 = arith.constant dense<0.000000e+00> : vector<8xf32>
    %1095 = vector.multi_reduction <add>, %1094, %cst_153 [1] : vector<8x256xf32> to vector<8xf32>
    %1096 = vector.shape_cast %1095 : vector<8xf32> to vector<8x1xf32>
    %cst_154 = arith.constant 2.560000e+02 : f32
    %1097 = vector.broadcast %cst_154 : f32 to vector<8x1xf32>
    %1098 = arith.divf %1096, %1097 : vector<8x1xf32>
    %1099 = vector.broadcast %1098 : vector<8x1xf32> to vector<8x256xf32>
    %1100 = arith.subf %1094, %1099 : vector<8x256xf32>
    %1101 = arith.mulf %1100, %1100 : vector<8x256xf32>
    %cst_155 = arith.constant dense<0.000000e+00> : vector<8xf32>
    %1102 = vector.multi_reduction <add>, %1101, %cst_155 [1] : vector<8x256xf32> to vector<8xf32>
    %1103 = vector.shape_cast %1102 : vector<8xf32> to vector<8x1xf32>
    %cst_156 = arith.constant 2.560000e+02 : f32
    %1104 = vector.broadcast %cst_156 : f32 to vector<8x1xf32>
    %1105 = arith.divf %1103, %1104 : vector<8x1xf32>
    %cst_157 = arith.constant 9.99999974E-6 : f32
    %1106 = vector.broadcast %cst_157 : f32 to vector<8x1xf32>
    %1107 = arith.addf %1105, %1106 : vector<8x1xf32>
    %1108 = math.rsqrt %1107 : vector<8x1xf32>
    %1109 = vector.broadcast %1108 : vector<8x1xf32> to vector<8x256xf32>
    %1110 = arith.mulf %1100, %1109 : vector<8x256xf32>
    %1111 = vector.broadcast %5 : vector<8x1xf32> to vector<8x256xf32>
    %1112 = arith.mulf %1110, %1111 : vector<8x256xf32>
    %1113 = vector.broadcast %6 : vector<8x1xf32> to vector<8x256xf32>
    %1114 = arith.addf %1112, %1113 : vector<8x256xf32>
    %cst_158 = arith.constant 0.000000e+00 : f32
    %1115 = vector.broadcast %cst_158 : f32 to vector<8x256xf32>
    %1116 = arith.maximumf %1114, %1115 : vector<8x256xf32>
    %1117 = vector.extract_strided_slice %19 {offsets = [0, 0], sizes = [1, 256], strides = [1, 1]} : vector<9x256xf32> to vector<1x256xf32>
    %1118 = vector.extract_strided_slice %1116 {offsets = [0, 239], sizes = [8, 17], strides = [1, 1]} : vector<8x256xf32> to vector<8x17xf32>
    %1119 = vector.extract_strided_slice %1116 {offsets = [0, 0], sizes = [8, 239], strides = [1, 1]} : vector<8x256xf32> to vector<8x239xf32>
    %1120 = tpu.concatenate %1118, %1119 in 1 : vector<8x17xf32>, vector<8x239xf32> -> vector<8x256xf32>
    %1121 = vector.broadcast %1117 : vector<1x256xf32> to vector<8x256xf32>
    %1122 = arith.mulf %1121, %1120 : vector<8x256xf32>
    %1123 = vector.extract_strided_slice %19 {offsets = [1, 0], sizes = [1, 256], strides = [1, 1]} : vector<9x256xf32> to vector<1x256xf32>
    %1124 = vector.extract_strided_slice %1116 {offsets = [0, 240], sizes = [8, 16], strides = [1, 1]} : vector<8x256xf32> to vector<8x16xf32>
    %1125 = vector.extract_strided_slice %1116 {offsets = [0, 0], sizes = [8, 240], strides = [1, 1]} : vector<8x256xf32> to vector<8x240xf32>
    %1126 = tpu.concatenate %1124, %1125 in 1 : vector<8x16xf32>, vector<8x240xf32> -> vector<8x256xf32>
    %1127 = vector.broadcast %1123 : vector<1x256xf32> to vector<8x256xf32>
    %1128 = arith.mulf %1127, %1126 : vector<8x256xf32>
    %1129 = vector.extract_strided_slice %19 {offsets = [2, 0], sizes = [1, 256], strides = [1, 1]} : vector<9x256xf32> to vector<1x256xf32>
    %1130 = vector.extract_strided_slice %1116 {offsets = [0, 241], sizes = [8, 15], strides = [1, 1]} : vector<8x256xf32> to vector<8x15xf32>
    %1131 = vector.extract_strided_slice %1116 {offsets = [0, 0], sizes = [8, 241], strides = [1, 1]} : vector<8x256xf32> to vector<8x241xf32>
    %1132 = tpu.concatenate %1130, %1131 in 1 : vector<8x15xf32>, vector<8x241xf32> -> vector<8x256xf32>
    %1133 = vector.broadcast %1129 : vector<1x256xf32> to vector<8x256xf32>
    %1134 = arith.mulf %1133, %1132 : vector<8x256xf32>
    %1135 = vector.extract_strided_slice %19 {offsets = [3, 0], sizes = [1, 256], strides = [1, 1]} : vector<9x256xf32> to vector<1x256xf32>
    %1136 = vector.extract_strided_slice %1116 {offsets = [0, 255], sizes = [8, 1], strides = [1, 1]} : vector<8x256xf32> to vector<8x1xf32>
    %1137 = vector.extract_strided_slice %1116 {offsets = [0, 0], sizes = [8, 255], strides = [1, 1]} : vector<8x256xf32> to vector<8x255xf32>
    %1138 = tpu.concatenate %1136, %1137 in 1 : vector<8x1xf32>, vector<8x255xf32> -> vector<8x256xf32>
    %1139 = vector.broadcast %1135 : vector<1x256xf32> to vector<8x256xf32>
    %1140 = arith.mulf %1139, %1138 : vector<8x256xf32>
    %1141 = vector.extract_strided_slice %19 {offsets = [4, 0], sizes = [1, 256], strides = [1, 1]} : vector<9x256xf32> to vector<1x256xf32>
    %1142 = vector.broadcast %1141 : vector<1x256xf32> to vector<8x256xf32>
    %1143 = arith.mulf %1142, %1116 : vector<8x256xf32>
    %1144 = vector.extract_strided_slice %19 {offsets = [5, 0], sizes = [1, 256], strides = [1, 1]} : vector<9x256xf32> to vector<1x256xf32>
    %1145 = vector.extract_strided_slice %1116 {offsets = [0, 1], sizes = [8, 255], strides = [1, 1]} : vector<8x256xf32> to vector<8x255xf32>
    %1146 = vector.extract_strided_slice %1116 {offsets = [0, 0], sizes = [8, 1], strides = [1, 1]} : vector<8x256xf32> to vector<8x1xf32>
    %1147 = tpu.concatenate %1145, %1146 in 1 : vector<8x255xf32>, vector<8x1xf32> -> vector<8x256xf32>
    %1148 = vector.broadcast %1144 : vector<1x256xf32> to vector<8x256xf32>
    %1149 = arith.mulf %1148, %1147 : vector<8x256xf32>
    %1150 = vector.extract_strided_slice %19 {offsets = [6, 0], sizes = [1, 256], strides = [1, 1]} : vector<9x256xf32> to vector<1x256xf32>
    %1151 = vector.extract_strided_slice %1116 {offsets = [0, 15], sizes = [8, 241], strides = [1, 1]} : vector<8x256xf32> to vector<8x241xf32>
    %1152 = vector.extract_strided_slice %1116 {offsets = [0, 0], sizes = [8, 15], strides = [1, 1]} : vector<8x256xf32> to vector<8x15xf32>
    %1153 = tpu.concatenate %1151, %1152 in 1 : vector<8x241xf32>, vector<8x15xf32> -> vector<8x256xf32>
    %1154 = vector.broadcast %1150 : vector<1x256xf32> to vector<8x256xf32>
    %1155 = arith.mulf %1154, %1153 : vector<8x256xf32>
    %1156 = vector.extract_strided_slice %19 {offsets = [7, 0], sizes = [1, 256], strides = [1, 1]} : vector<9x256xf32> to vector<1x256xf32>
    %1157 = vector.extract_strided_slice %1116 {offsets = [0, 16], sizes = [8, 240], strides = [1, 1]} : vector<8x256xf32> to vector<8x240xf32>
    %1158 = vector.extract_strided_slice %1116 {offsets = [0, 0], sizes = [8, 16], strides = [1, 1]} : vector<8x256xf32> to vector<8x16xf32>
    %1159 = tpu.concatenate %1157, %1158 in 1 : vector<8x240xf32>, vector<8x16xf32> -> vector<8x256xf32>
    %1160 = vector.broadcast %1156 : vector<1x256xf32> to vector<8x256xf32>
    %1161 = arith.mulf %1160, %1159 : vector<8x256xf32>
    %1162 = vector.extract_strided_slice %19 {offsets = [8, 0], sizes = [1, 256], strides = [1, 1]} : vector<9x256xf32> to vector<1x256xf32>
    %1163 = vector.extract_strided_slice %1116 {offsets = [0, 17], sizes = [8, 239], strides = [1, 1]} : vector<8x256xf32> to vector<8x239xf32>
    %1164 = vector.extract_strided_slice %1116 {offsets = [0, 0], sizes = [8, 17], strides = [1, 1]} : vector<8x256xf32> to vector<8x17xf32>
    %1165 = tpu.concatenate %1163, %1164 in 1 : vector<8x239xf32>, vector<8x17xf32> -> vector<8x256xf32>
    %1166 = vector.broadcast %1162 : vector<1x256xf32> to vector<8x256xf32>
    %1167 = arith.mulf %1166, %1165 : vector<8x256xf32>
    %cst_159 = arith.constant dense<0.000000e+00> : vector<4x256xf32>
    %1168 = tpu.matmul %8, %19, %cst_159 {dimension_numbers = #tpu.dot_dimension_numbers<[1], [0], [0], [1], [0, 0, 1, 1], [], []>} : vector<4x9xf32>, vector<9x256xf32>, vector<4x256xf32> -> vector<4x256xf32>
    %1169 = vector.broadcast %974 : vector<1x1xf32> to vector<4x256xf32>
    %1170 = arith.mulf %1169, %1168 : vector<4x256xf32>
    %1171 = vector.broadcast %9 : vector<4x1xf32> to vector<4x256xf32>
    %1172 = arith.addf %1170, %1171 : vector<4x256xf32>
    %1173 = vector.extract_strided_slice %1122 {offsets = [0, 0], sizes = [4, 256], strides = [1, 1]} : vector<8x256xf32> to vector<4x256xf32>
    %1174 = vector.extract_strided_slice %1128 {offsets = [0, 0], sizes = [4, 256], strides = [1, 1]} : vector<8x256xf32> to vector<4x256xf32>
    %1175 = vector.extract_strided_slice %1134 {offsets = [0, 0], sizes = [4, 256], strides = [1, 1]} : vector<8x256xf32> to vector<4x256xf32>
    %1176 = vector.extract_strided_slice %1140 {offsets = [0, 0], sizes = [4, 256], strides = [1, 1]} : vector<8x256xf32> to vector<4x256xf32>
    %1177 = vector.extract_strided_slice %1143 {offsets = [0, 0], sizes = [4, 256], strides = [1, 1]} : vector<8x256xf32> to vector<4x256xf32>
    %1178 = vector.extract_strided_slice %1149 {offsets = [0, 0], sizes = [4, 256], strides = [1, 1]} : vector<8x256xf32> to vector<4x256xf32>
    %1179 = vector.extract_strided_slice %1155 {offsets = [0, 0], sizes = [4, 256], strides = [1, 1]} : vector<8x256xf32> to vector<4x256xf32>
    %1180 = vector.extract_strided_slice %1161 {offsets = [0, 0], sizes = [4, 256], strides = [1, 1]} : vector<8x256xf32> to vector<4x256xf32>
    %1181 = vector.extract_strided_slice %1167 {offsets = [0, 0], sizes = [4, 256], strides = [1, 1]} : vector<8x256xf32> to vector<4x256xf32>
    %1182 = tpu.concatenate %1173, %1174, %1175, %1176, %1177, %1178, %1179, %1180, %1181 in 0 : vector<4x256xf32>, vector<4x256xf32>, vector<4x256xf32>, vector<4x256xf32>, vector<4x256xf32>, vector<4x256xf32>, vector<4x256xf32>, vector<4x256xf32>, vector<4x256xf32> -> vector<36x256xf32>
    %cst_160 = arith.constant dense<0.000000e+00> : vector<4x256xf32>
    %1183 = tpu.matmul %7, %1182, %cst_160 {dimension_numbers = #tpu.dot_dimension_numbers<[1], [0], [0], [1], [0, 0, 1, 1], [], []>} : vector<4x36xf32>, vector<36x256xf32>, vector<4x256xf32> -> vector<4x256xf32>
    %1184 = arith.addf %1183, %1172 : vector<4x256xf32>
    %1185 = vector.extract_strided_slice %1122 {offsets = [4, 0], sizes = [4, 256], strides = [1, 1]} : vector<8x256xf32> to vector<4x256xf32>
    %1186 = vector.extract_strided_slice %1128 {offsets = [4, 0], sizes = [4, 256], strides = [1, 1]} : vector<8x256xf32> to vector<4x256xf32>
    %1187 = vector.extract_strided_slice %1134 {offsets = [4, 0], sizes = [4, 256], strides = [1, 1]} : vector<8x256xf32> to vector<4x256xf32>
    %1188 = vector.extract_strided_slice %1140 {offsets = [4, 0], sizes = [4, 256], strides = [1, 1]} : vector<8x256xf32> to vector<4x256xf32>
    %1189 = vector.extract_strided_slice %1143 {offsets = [4, 0], sizes = [4, 256], strides = [1, 1]} : vector<8x256xf32> to vector<4x256xf32>
    %1190 = vector.extract_strided_slice %1149 {offsets = [4, 0], sizes = [4, 256], strides = [1, 1]} : vector<8x256xf32> to vector<4x256xf32>
    %1191 = vector.extract_strided_slice %1155 {offsets = [4, 0], sizes = [4, 256], strides = [1, 1]} : vector<8x256xf32> to vector<4x256xf32>
    %1192 = vector.extract_strided_slice %1161 {offsets = [4, 0], sizes = [4, 256], strides = [1, 1]} : vector<8x256xf32> to vector<4x256xf32>
    %1193 = vector.extract_strided_slice %1167 {offsets = [4, 0], sizes = [4, 256], strides = [1, 1]} : vector<8x256xf32> to vector<4x256xf32>
    %1194 = tpu.concatenate %1185, %1186, %1187, %1188, %1189, %1190, %1191, %1192, %1193 in 0 : vector<4x256xf32>, vector<4x256xf32>, vector<4x256xf32>, vector<4x256xf32>, vector<4x256xf32>, vector<4x256xf32>, vector<4x256xf32>, vector<4x256xf32>, vector<4x256xf32> -> vector<36x256xf32>
    %cst_161 = arith.constant dense<0.000000e+00> : vector<4x256xf32>
    %1195 = tpu.matmul %7, %1194, %cst_161 {dimension_numbers = #tpu.dot_dimension_numbers<[1], [0], [0], [1], [0, 0, 1, 1], [], []>} : vector<4x36xf32>, vector<36x256xf32>, vector<4x256xf32> -> vector<4x256xf32>
    %1196 = arith.addf %1195, %1172 : vector<4x256xf32>
    %1197 = tpu.concatenate %1184, %1196 in 0 : vector<4x256xf32>, vector<4x256xf32> -> vector<8x256xf32>
    %cst_162 = arith.constant dense<0.000000e+00> : vector<8xf32>
    %1198 = vector.multi_reduction <add>, %1197, %cst_162 [1] : vector<8x256xf32> to vector<8xf32>
    %1199 = vector.shape_cast %1198 : vector<8xf32> to vector<8x1xf32>
    %cst_163 = arith.constant 2.560000e+02 : f32
    %1200 = vector.broadcast %cst_163 : f32 to vector<8x1xf32>
    %1201 = arith.divf %1199, %1200 : vector<8x1xf32>
    %1202 = vector.broadcast %1201 : vector<8x1xf32> to vector<8x256xf32>
    %1203 = arith.subf %1197, %1202 : vector<8x256xf32>
    %1204 = arith.mulf %1203, %1203 : vector<8x256xf32>
    %cst_164 = arith.constant dense<0.000000e+00> : vector<8xf32>
    %1205 = vector.multi_reduction <add>, %1204, %cst_164 [1] : vector<8x256xf32> to vector<8xf32>
    %1206 = vector.shape_cast %1205 : vector<8xf32> to vector<8x1xf32>
    %cst_165 = arith.constant 2.560000e+02 : f32
    %1207 = vector.broadcast %cst_165 : f32 to vector<8x1xf32>
    %1208 = arith.divf %1206, %1207 : vector<8x1xf32>
    %cst_166 = arith.constant 9.99999974E-6 : f32
    %1209 = vector.broadcast %cst_166 : f32 to vector<8x1xf32>
    %1210 = arith.addf %1208, %1209 : vector<8x1xf32>
    %1211 = math.rsqrt %1210 : vector<8x1xf32>
    %1212 = vector.broadcast %1211 : vector<8x1xf32> to vector<8x256xf32>
    %1213 = arith.mulf %1203, %1212 : vector<8x256xf32>
    %1214 = vector.broadcast %10 : vector<8x1xf32> to vector<8x256xf32>
    %1215 = arith.mulf %1213, %1214 : vector<8x256xf32>
    %1216 = vector.broadcast %11 : vector<8x1xf32> to vector<8x256xf32>
    %1217 = arith.addf %1215, %1216 : vector<8x256xf32>
    %cst_167 = arith.constant 0.0911458358 : f32
    %1218 = vector.broadcast %cst_167 : f32 to vector<8x256xf32>
    %1219 = arith.mulf %1218, %18 : vector<8x256xf32>
    %cst_168 = arith.constant 0.449236304 : f32
    %1220 = vector.broadcast %cst_168 : f32 to vector<8x256xf32>
    %1221 = arith.mulf %1220, %490 : vector<8x256xf32>
    %1222 = arith.addf %1219, %1221 : vector<8x256xf32>
    %cst_169 = arith.constant 0.651041686 : f32
    %1223 = vector.broadcast %cst_169 : f32 to vector<8x256xf32>
    %1224 = arith.mulf %1223, %730 : vector<8x256xf32>
    %1225 = arith.addf %1222, %1224 : vector<8x256xf32>
    %cst_170 = arith.constant 0.322376192 : f32
    %1226 = vector.broadcast %cst_170 : f32 to vector<8x256xf32>
    %1227 = arith.mulf %1226, %973 : vector<8x256xf32>
    %1228 = arith.subf %1225, %1227 : vector<8x256xf32>
    %cst_171 = arith.constant 0.130952388 : f32
    %1229 = vector.broadcast %cst_171 : f32 to vector<8x256xf32>
    %1230 = arith.mulf %1229, %1217 : vector<8x256xf32>
    %1231 = arith.addf %1228, %1230 : vector<8x256xf32>
    %1232 = vector.broadcast %16 : vector<1x1xf32> to vector<8x256xf32>
    %1233 = arith.mulf %1232, %1231 : vector<8x256xf32>
    %1234 = arith.addf %17, %1233 : vector<8x256xf32>
    %1235 = arith.addf %12, %16 : vector<1x1xf32>
    %cst_172 = arith.constant dense<0.000000e+00> : vector<8xf32>
    %1236 = vector.multi_reduction <add>, %1234, %cst_172 [1] : vector<8x256xf32> to vector<8xf32>
    %1237 = vector.shape_cast %1236 : vector<8xf32> to vector<8x1xf32>
    %cst_173 = arith.constant 2.560000e+02 : f32
    %1238 = vector.broadcast %cst_173 : f32 to vector<8x1xf32>
    %1239 = arith.divf %1237, %1238 : vector<8x1xf32>
    %1240 = vector.broadcast %1239 : vector<8x1xf32> to vector<8x256xf32>
    %1241 = arith.subf %1234, %1240 : vector<8x256xf32>
    %1242 = arith.mulf %1241, %1241 : vector<8x256xf32>
    %cst_174 = arith.constant dense<0.000000e+00> : vector<8xf32>
    %1243 = vector.multi_reduction <add>, %1242, %cst_174 [1] : vector<8x256xf32> to vector<8xf32>
    %1244 = vector.shape_cast %1243 : vector<8xf32> to vector<8x1xf32>
    %cst_175 = arith.constant 2.560000e+02 : f32
    %1245 = vector.broadcast %cst_175 : f32 to vector<8x1xf32>
    %1246 = arith.divf %1244, %1245 : vector<8x1xf32>
    %cst_176 = arith.constant 9.99999974E-6 : f32
    %1247 = vector.broadcast %cst_176 : f32 to vector<8x1xf32>
    %1248 = arith.addf %1246, %1247 : vector<8x1xf32>
    %1249 = math.rsqrt %1248 : vector<8x1xf32>
    %1250 = vector.broadcast %1249 : vector<8x1xf32> to vector<8x256xf32>
    %1251 = arith.mulf %1241, %1250 : vector<8x256xf32>
    %1252 = vector.broadcast %0 : vector<8x1xf32> to vector<8x256xf32>
    %1253 = arith.mulf %1251, %1252 : vector<8x256xf32>
    %1254 = vector.broadcast %1 : vector<8x1xf32> to vector<8x256xf32>
    %1255 = arith.addf %1253, %1254 : vector<8x256xf32>
    %cst_177 = arith.constant 0.000000e+00 : f32
    %1256 = vector.broadcast %cst_177 : f32 to vector<8x256xf32>
    %1257 = arith.maximumf %1255, %1256 : vector<8x256xf32>
    %1258 = vector.extract_strided_slice %19 {offsets = [0, 0], sizes = [1, 256], strides = [1, 1]} : vector<9x256xf32> to vector<1x256xf32>
    %1259 = vector.extract_strided_slice %1257 {offsets = [0, 239], sizes = [8, 17], strides = [1, 1]} : vector<8x256xf32> to vector<8x17xf32>
    %1260 = vector.extract_strided_slice %1257 {offsets = [0, 0], sizes = [8, 239], strides = [1, 1]} : vector<8x256xf32> to vector<8x239xf32>
    %1261 = tpu.concatenate %1259, %1260 in 1 : vector<8x17xf32>, vector<8x239xf32> -> vector<8x256xf32>
    %1262 = vector.broadcast %1258 : vector<1x256xf32> to vector<8x256xf32>
    %1263 = arith.mulf %1262, %1261 : vector<8x256xf32>
    %1264 = vector.extract_strided_slice %19 {offsets = [1, 0], sizes = [1, 256], strides = [1, 1]} : vector<9x256xf32> to vector<1x256xf32>
    %1265 = vector.extract_strided_slice %1257 {offsets = [0, 240], sizes = [8, 16], strides = [1, 1]} : vector<8x256xf32> to vector<8x16xf32>
    %1266 = vector.extract_strided_slice %1257 {offsets = [0, 0], sizes = [8, 240], strides = [1, 1]} : vector<8x256xf32> to vector<8x240xf32>
    %1267 = tpu.concatenate %1265, %1266 in 1 : vector<8x16xf32>, vector<8x240xf32> -> vector<8x256xf32>
    %1268 = vector.broadcast %1264 : vector<1x256xf32> to vector<8x256xf32>
    %1269 = arith.mulf %1268, %1267 : vector<8x256xf32>
    %1270 = vector.extract_strided_slice %19 {offsets = [2, 0], sizes = [1, 256], strides = [1, 1]} : vector<9x256xf32> to vector<1x256xf32>
    %1271 = vector.extract_strided_slice %1257 {offsets = [0, 241], sizes = [8, 15], strides = [1, 1]} : vector<8x256xf32> to vector<8x15xf32>
    %1272 = vector.extract_strided_slice %1257 {offsets = [0, 0], sizes = [8, 241], strides = [1, 1]} : vector<8x256xf32> to vector<8x241xf32>
    %1273 = tpu.concatenate %1271, %1272 in 1 : vector<8x15xf32>, vector<8x241xf32> -> vector<8x256xf32>
    %1274 = vector.broadcast %1270 : vector<1x256xf32> to vector<8x256xf32>
    %1275 = arith.mulf %1274, %1273 : vector<8x256xf32>
    %1276 = vector.extract_strided_slice %19 {offsets = [3, 0], sizes = [1, 256], strides = [1, 1]} : vector<9x256xf32> to vector<1x256xf32>
    %1277 = vector.extract_strided_slice %1257 {offsets = [0, 255], sizes = [8, 1], strides = [1, 1]} : vector<8x256xf32> to vector<8x1xf32>
    %1278 = vector.extract_strided_slice %1257 {offsets = [0, 0], sizes = [8, 255], strides = [1, 1]} : vector<8x256xf32> to vector<8x255xf32>
    %1279 = tpu.concatenate %1277, %1278 in 1 : vector<8x1xf32>, vector<8x255xf32> -> vector<8x256xf32>
    %1280 = vector.broadcast %1276 : vector<1x256xf32> to vector<8x256xf32>
    %1281 = arith.mulf %1280, %1279 : vector<8x256xf32>
    %1282 = vector.extract_strided_slice %19 {offsets = [4, 0], sizes = [1, 256], strides = [1, 1]} : vector<9x256xf32> to vector<1x256xf32>
    %1283 = vector.broadcast %1282 : vector<1x256xf32> to vector<8x256xf32>
    %1284 = arith.mulf %1283, %1257 : vector<8x256xf32>
    %1285 = vector.extract_strided_slice %19 {offsets = [5, 0], sizes = [1, 256], strides = [1, 1]} : vector<9x256xf32> to vector<1x256xf32>
    %1286 = vector.extract_strided_slice %1257 {offsets = [0, 1], sizes = [8, 255], strides = [1, 1]} : vector<8x256xf32> to vector<8x255xf32>
    %1287 = vector.extract_strided_slice %1257 {offsets = [0, 0], sizes = [8, 1], strides = [1, 1]} : vector<8x256xf32> to vector<8x1xf32>
    %1288 = tpu.concatenate %1286, %1287 in 1 : vector<8x255xf32>, vector<8x1xf32> -> vector<8x256xf32>
    %1289 = vector.broadcast %1285 : vector<1x256xf32> to vector<8x256xf32>
    %1290 = arith.mulf %1289, %1288 : vector<8x256xf32>
    %1291 = vector.extract_strided_slice %19 {offsets = [6, 0], sizes = [1, 256], strides = [1, 1]} : vector<9x256xf32> to vector<1x256xf32>
    %1292 = vector.extract_strided_slice %1257 {offsets = [0, 15], sizes = [8, 241], strides = [1, 1]} : vector<8x256xf32> to vector<8x241xf32>
    %1293 = vector.extract_strided_slice %1257 {offsets = [0, 0], sizes = [8, 15], strides = [1, 1]} : vector<8x256xf32> to vector<8x15xf32>
    %1294 = tpu.concatenate %1292, %1293 in 1 : vector<8x241xf32>, vector<8x15xf32> -> vector<8x256xf32>
    %1295 = vector.broadcast %1291 : vector<1x256xf32> to vector<8x256xf32>
    %1296 = arith.mulf %1295, %1294 : vector<8x256xf32>
    %1297 = vector.extract_strided_slice %19 {offsets = [7, 0], sizes = [1, 256], strides = [1, 1]} : vector<9x256xf32> to vector<1x256xf32>
    %1298 = vector.extract_strided_slice %1257 {offsets = [0, 16], sizes = [8, 240], strides = [1, 1]} : vector<8x256xf32> to vector<8x240xf32>
    %1299 = vector.extract_strided_slice %1257 {offsets = [0, 0], sizes = [8, 16], strides = [1, 1]} : vector<8x256xf32> to vector<8x16xf32>
    %1300 = tpu.concatenate %1298, %1299 in 1 : vector<8x240xf32>, vector<8x16xf32> -> vector<8x256xf32>
    %1301 = vector.broadcast %1297 : vector<1x256xf32> to vector<8x256xf32>
    %1302 = arith.mulf %1301, %1300 : vector<8x256xf32>
    %1303 = vector.extract_strided_slice %19 {offsets = [8, 0], sizes = [1, 256], strides = [1, 1]} : vector<9x256xf32> to vector<1x256xf32>
    %1304 = vector.extract_strided_slice %1257 {offsets = [0, 17], sizes = [8, 239], strides = [1, 1]} : vector<8x256xf32> to vector<8x239xf32>
    %1305 = vector.extract_strided_slice %1257 {offsets = [0, 0], sizes = [8, 17], strides = [1, 1]} : vector<8x256xf32> to vector<8x17xf32>
    %1306 = tpu.concatenate %1304, %1305 in 1 : vector<8x239xf32>, vector<8x17xf32> -> vector<8x256xf32>
    %1307 = vector.broadcast %1303 : vector<1x256xf32> to vector<8x256xf32>
    %1308 = arith.mulf %1307, %1306 : vector<8x256xf32>
    %cst_178 = arith.constant dense<0.000000e+00> : vector<4x256xf32>
    %1309 = tpu.matmul %3, %19, %cst_178 {dimension_numbers = #tpu.dot_dimension_numbers<[1], [0], [0], [1], [0, 0, 1, 1], [], []>} : vector<4x9xf32>, vector<9x256xf32>, vector<4x256xf32> -> vector<4x256xf32>
    %1310 = vector.broadcast %1235 : vector<1x1xf32> to vector<4x256xf32>
    %1311 = arith.mulf %1310, %1309 : vector<4x256xf32>
    %1312 = vector.broadcast %4 : vector<4x1xf32> to vector<4x256xf32>
    %1313 = arith.addf %1311, %1312 : vector<4x256xf32>
    %1314 = vector.extract_strided_slice %1263 {offsets = [0, 0], sizes = [4, 256], strides = [1, 1]} : vector<8x256xf32> to vector<4x256xf32>
    %1315 = vector.extract_strided_slice %1269 {offsets = [0, 0], sizes = [4, 256], strides = [1, 1]} : vector<8x256xf32> to vector<4x256xf32>
    %1316 = vector.extract_strided_slice %1275 {offsets = [0, 0], sizes = [4, 256], strides = [1, 1]} : vector<8x256xf32> to vector<4x256xf32>
    %1317 = vector.extract_strided_slice %1281 {offsets = [0, 0], sizes = [4, 256], strides = [1, 1]} : vector<8x256xf32> to vector<4x256xf32>
    %1318 = vector.extract_strided_slice %1284 {offsets = [0, 0], sizes = [4, 256], strides = [1, 1]} : vector<8x256xf32> to vector<4x256xf32>
    %1319 = vector.extract_strided_slice %1290 {offsets = [0, 0], sizes = [4, 256], strides = [1, 1]} : vector<8x256xf32> to vector<4x256xf32>
    %1320 = vector.extract_strided_slice %1296 {offsets = [0, 0], sizes = [4, 256], strides = [1, 1]} : vector<8x256xf32> to vector<4x256xf32>
    %1321 = vector.extract_strided_slice %1302 {offsets = [0, 0], sizes = [4, 256], strides = [1, 1]} : vector<8x256xf32> to vector<4x256xf32>
    %1322 = vector.extract_strided_slice %1308 {offsets = [0, 0], sizes = [4, 256], strides = [1, 1]} : vector<8x256xf32> to vector<4x256xf32>
    %1323 = tpu.concatenate %1314, %1315, %1316, %1317, %1318, %1319, %1320, %1321, %1322 in 0 : vector<4x256xf32>, vector<4x256xf32>, vector<4x256xf32>, vector<4x256xf32>, vector<4x256xf32>, vector<4x256xf32>, vector<4x256xf32>, vector<4x256xf32>, vector<4x256xf32> -> vector<36x256xf32>
    %cst_179 = arith.constant dense<0.000000e+00> : vector<4x256xf32>
    %1324 = tpu.matmul %2, %1323, %cst_179 {dimension_numbers = #tpu.dot_dimension_numbers<[1], [0], [0], [1], [0, 0, 1, 1], [], []>} : vector<4x36xf32>, vector<36x256xf32>, vector<4x256xf32> -> vector<4x256xf32>
    %1325 = arith.addf %1324, %1313 : vector<4x256xf32>
    %1326 = vector.extract_strided_slice %1263 {offsets = [4, 0], sizes = [4, 256], strides = [1, 1]} : vector<8x256xf32> to vector<4x256xf32>
    %1327 = vector.extract_strided_slice %1269 {offsets = [4, 0], sizes = [4, 256], strides = [1, 1]} : vector<8x256xf32> to vector<4x256xf32>
    %1328 = vector.extract_strided_slice %1275 {offsets = [4, 0], sizes = [4, 256], strides = [1, 1]} : vector<8x256xf32> to vector<4x256xf32>
    %1329 = vector.extract_strided_slice %1281 {offsets = [4, 0], sizes = [4, 256], strides = [1, 1]} : vector<8x256xf32> to vector<4x256xf32>
    %1330 = vector.extract_strided_slice %1284 {offsets = [4, 0], sizes = [4, 256], strides = [1, 1]} : vector<8x256xf32> to vector<4x256xf32>
    %1331 = vector.extract_strided_slice %1290 {offsets = [4, 0], sizes = [4, 256], strides = [1, 1]} : vector<8x256xf32> to vector<4x256xf32>
    %1332 = vector.extract_strided_slice %1296 {offsets = [4, 0], sizes = [4, 256], strides = [1, 1]} : vector<8x256xf32> to vector<4x256xf32>
    %1333 = vector.extract_strided_slice %1302 {offsets = [4, 0], sizes = [4, 256], strides = [1, 1]} : vector<8x256xf32> to vector<4x256xf32>
    %1334 = vector.extract_strided_slice %1308 {offsets = [4, 0], sizes = [4, 256], strides = [1, 1]} : vector<8x256xf32> to vector<4x256xf32>
    %1335 = tpu.concatenate %1326, %1327, %1328, %1329, %1330, %1331, %1332, %1333, %1334 in 0 : vector<4x256xf32>, vector<4x256xf32>, vector<4x256xf32>, vector<4x256xf32>, vector<4x256xf32>, vector<4x256xf32>, vector<4x256xf32>, vector<4x256xf32>, vector<4x256xf32> -> vector<36x256xf32>
    %cst_180 = arith.constant dense<0.000000e+00> : vector<4x256xf32>
    %1336 = tpu.matmul %2, %1335, %cst_180 {dimension_numbers = #tpu.dot_dimension_numbers<[1], [0], [0], [1], [0, 0, 1, 1], [], []>} : vector<4x36xf32>, vector<36x256xf32>, vector<4x256xf32> -> vector<4x256xf32>
    %1337 = arith.addf %1336, %1313 : vector<4x256xf32>
    %1338 = tpu.concatenate %1325, %1337 in 0 : vector<4x256xf32>, vector<4x256xf32> -> vector<8x256xf32>
    %cst_181 = arith.constant dense<0.000000e+00> : vector<8xf32>
    %1339 = vector.multi_reduction <add>, %1338, %cst_181 [1] : vector<8x256xf32> to vector<8xf32>
    %1340 = vector.shape_cast %1339 : vector<8xf32> to vector<8x1xf32>
    %cst_182 = arith.constant 2.560000e+02 : f32
    %1341 = vector.broadcast %cst_182 : f32 to vector<8x1xf32>
    %1342 = arith.divf %1340, %1341 : vector<8x1xf32>
    %1343 = vector.broadcast %1342 : vector<8x1xf32> to vector<8x256xf32>
    %1344 = arith.subf %1338, %1343 : vector<8x256xf32>
    %1345 = arith.mulf %1344, %1344 : vector<8x256xf32>
    %cst_183 = arith.constant dense<0.000000e+00> : vector<8xf32>
    %1346 = vector.multi_reduction <add>, %1345, %cst_183 [1] : vector<8x256xf32> to vector<8xf32>
    %1347 = vector.shape_cast %1346 : vector<8xf32> to vector<8x1xf32>
    %cst_184 = arith.constant 2.560000e+02 : f32
    %1348 = vector.broadcast %cst_184 : f32 to vector<8x1xf32>
    %1349 = arith.divf %1347, %1348 : vector<8x1xf32>
    %cst_185 = arith.constant 9.99999974E-6 : f32
    %1350 = vector.broadcast %cst_185 : f32 to vector<8x1xf32>
    %1351 = arith.addf %1349, %1350 : vector<8x1xf32>
    %1352 = math.rsqrt %1351 : vector<8x1xf32>
    %1353 = vector.broadcast %1352 : vector<8x1xf32> to vector<8x256xf32>
    %1354 = arith.mulf %1344, %1353 : vector<8x256xf32>
    %1355 = vector.broadcast %5 : vector<8x1xf32> to vector<8x256xf32>
    %1356 = arith.mulf %1354, %1355 : vector<8x256xf32>
    %1357 = vector.broadcast %6 : vector<8x1xf32> to vector<8x256xf32>
    %1358 = arith.addf %1356, %1357 : vector<8x256xf32>
    %cst_186 = arith.constant 0.000000e+00 : f32
    %1359 = vector.broadcast %cst_186 : f32 to vector<8x256xf32>
    %1360 = arith.maximumf %1358, %1359 : vector<8x256xf32>
    %1361 = vector.extract_strided_slice %19 {offsets = [0, 0], sizes = [1, 256], strides = [1, 1]} : vector<9x256xf32> to vector<1x256xf32>
    %1362 = vector.extract_strided_slice %1360 {offsets = [0, 239], sizes = [8, 17], strides = [1, 1]} : vector<8x256xf32> to vector<8x17xf32>
    %1363 = vector.extract_strided_slice %1360 {offsets = [0, 0], sizes = [8, 239], strides = [1, 1]} : vector<8x256xf32> to vector<8x239xf32>
    %1364 = tpu.concatenate %1362, %1363 in 1 : vector<8x17xf32>, vector<8x239xf32> -> vector<8x256xf32>
    %1365 = vector.broadcast %1361 : vector<1x256xf32> to vector<8x256xf32>
    %1366 = arith.mulf %1365, %1364 : vector<8x256xf32>
    %1367 = vector.extract_strided_slice %19 {offsets = [1, 0], sizes = [1, 256], strides = [1, 1]} : vector<9x256xf32> to vector<1x256xf32>
    %1368 = vector.extract_strided_slice %1360 {offsets = [0, 240], sizes = [8, 16], strides = [1, 1]} : vector<8x256xf32> to vector<8x16xf32>
    %1369 = vector.extract_strided_slice %1360 {offsets = [0, 0], sizes = [8, 240], strides = [1, 1]} : vector<8x256xf32> to vector<8x240xf32>
    %1370 = tpu.concatenate %1368, %1369 in 1 : vector<8x16xf32>, vector<8x240xf32> -> vector<8x256xf32>
    %1371 = vector.broadcast %1367 : vector<1x256xf32> to vector<8x256xf32>
    %1372 = arith.mulf %1371, %1370 : vector<8x256xf32>
    %1373 = vector.extract_strided_slice %19 {offsets = [2, 0], sizes = [1, 256], strides = [1, 1]} : vector<9x256xf32> to vector<1x256xf32>
    %1374 = vector.extract_strided_slice %1360 {offsets = [0, 241], sizes = [8, 15], strides = [1, 1]} : vector<8x256xf32> to vector<8x15xf32>
    %1375 = vector.extract_strided_slice %1360 {offsets = [0, 0], sizes = [8, 241], strides = [1, 1]} : vector<8x256xf32> to vector<8x241xf32>
    %1376 = tpu.concatenate %1374, %1375 in 1 : vector<8x15xf32>, vector<8x241xf32> -> vector<8x256xf32>
    %1377 = vector.broadcast %1373 : vector<1x256xf32> to vector<8x256xf32>
    %1378 = arith.mulf %1377, %1376 : vector<8x256xf32>
    %1379 = vector.extract_strided_slice %19 {offsets = [3, 0], sizes = [1, 256], strides = [1, 1]} : vector<9x256xf32> to vector<1x256xf32>
    %1380 = vector.extract_strided_slice %1360 {offsets = [0, 255], sizes = [8, 1], strides = [1, 1]} : vector<8x256xf32> to vector<8x1xf32>
    %1381 = vector.extract_strided_slice %1360 {offsets = [0, 0], sizes = [8, 255], strides = [1, 1]} : vector<8x256xf32> to vector<8x255xf32>
    %1382 = tpu.concatenate %1380, %1381 in 1 : vector<8x1xf32>, vector<8x255xf32> -> vector<8x256xf32>
    %1383 = vector.broadcast %1379 : vector<1x256xf32> to vector<8x256xf32>
    %1384 = arith.mulf %1383, %1382 : vector<8x256xf32>
    %1385 = vector.extract_strided_slice %19 {offsets = [4, 0], sizes = [1, 256], strides = [1, 1]} : vector<9x256xf32> to vector<1x256xf32>
    %1386 = vector.broadcast %1385 : vector<1x256xf32> to vector<8x256xf32>
    %1387 = arith.mulf %1386, %1360 : vector<8x256xf32>
    %1388 = vector.extract_strided_slice %19 {offsets = [5, 0], sizes = [1, 256], strides = [1, 1]} : vector<9x256xf32> to vector<1x256xf32>
    %1389 = vector.extract_strided_slice %1360 {offsets = [0, 1], sizes = [8, 255], strides = [1, 1]} : vector<8x256xf32> to vector<8x255xf32>
    %1390 = vector.extract_strided_slice %1360 {offsets = [0, 0], sizes = [8, 1], strides = [1, 1]} : vector<8x256xf32> to vector<8x1xf32>
    %1391 = tpu.concatenate %1389, %1390 in 1 : vector<8x255xf32>, vector<8x1xf32> -> vector<8x256xf32>
    %1392 = vector.broadcast %1388 : vector<1x256xf32> to vector<8x256xf32>
    %1393 = arith.mulf %1392, %1391 : vector<8x256xf32>
    %1394 = vector.extract_strided_slice %19 {offsets = [6, 0], sizes = [1, 256], strides = [1, 1]} : vector<9x256xf32> to vector<1x256xf32>
    %1395 = vector.extract_strided_slice %1360 {offsets = [0, 15], sizes = [8, 241], strides = [1, 1]} : vector<8x256xf32> to vector<8x241xf32>
    %1396 = vector.extract_strided_slice %1360 {offsets = [0, 0], sizes = [8, 15], strides = [1, 1]} : vector<8x256xf32> to vector<8x15xf32>
    %1397 = tpu.concatenate %1395, %1396 in 1 : vector<8x241xf32>, vector<8x15xf32> -> vector<8x256xf32>
    %1398 = vector.broadcast %1394 : vector<1x256xf32> to vector<8x256xf32>
    %1399 = arith.mulf %1398, %1397 : vector<8x256xf32>
    %1400 = vector.extract_strided_slice %19 {offsets = [7, 0], sizes = [1, 256], strides = [1, 1]} : vector<9x256xf32> to vector<1x256xf32>
    %1401 = vector.extract_strided_slice %1360 {offsets = [0, 16], sizes = [8, 240], strides = [1, 1]} : vector<8x256xf32> to vector<8x240xf32>
    %1402 = vector.extract_strided_slice %1360 {offsets = [0, 0], sizes = [8, 16], strides = [1, 1]} : vector<8x256xf32> to vector<8x16xf32>
    %1403 = tpu.concatenate %1401, %1402 in 1 : vector<8x240xf32>, vector<8x16xf32> -> vector<8x256xf32>
    %1404 = vector.broadcast %1400 : vector<1x256xf32> to vector<8x256xf32>
    %1405 = arith.mulf %1404, %1403 : vector<8x256xf32>
    %1406 = vector.extract_strided_slice %19 {offsets = [8, 0], sizes = [1, 256], strides = [1, 1]} : vector<9x256xf32> to vector<1x256xf32>
    %1407 = vector.extract_strided_slice %1360 {offsets = [0, 17], sizes = [8, 239], strides = [1, 1]} : vector<8x256xf32> to vector<8x239xf32>
    %1408 = vector.extract_strided_slice %1360 {offsets = [0, 0], sizes = [8, 17], strides = [1, 1]} : vector<8x256xf32> to vector<8x17xf32>
    %1409 = tpu.concatenate %1407, %1408 in 1 : vector<8x239xf32>, vector<8x17xf32> -> vector<8x256xf32>
    %1410 = vector.broadcast %1406 : vector<1x256xf32> to vector<8x256xf32>
    %1411 = arith.mulf %1410, %1409 : vector<8x256xf32>
    %cst_187 = arith.constant dense<0.000000e+00> : vector<4x256xf32>
    %1412 = tpu.matmul %8, %19, %cst_187 {dimension_numbers = #tpu.dot_dimension_numbers<[1], [0], [0], [1], [0, 0, 1, 1], [], []>} : vector<4x9xf32>, vector<9x256xf32>, vector<4x256xf32> -> vector<4x256xf32>
    %1413 = vector.broadcast %1235 : vector<1x1xf32> to vector<4x256xf32>
    %1414 = arith.mulf %1413, %1412 : vector<4x256xf32>
    %1415 = vector.broadcast %9 : vector<4x1xf32> to vector<4x256xf32>
    %1416 = arith.addf %1414, %1415 : vector<4x256xf32>
    %1417 = vector.extract_strided_slice %1366 {offsets = [0, 0], sizes = [4, 256], strides = [1, 1]} : vector<8x256xf32> to vector<4x256xf32>
    %1418 = vector.extract_strided_slice %1372 {offsets = [0, 0], sizes = [4, 256], strides = [1, 1]} : vector<8x256xf32> to vector<4x256xf32>
    %1419 = vector.extract_strided_slice %1378 {offsets = [0, 0], sizes = [4, 256], strides = [1, 1]} : vector<8x256xf32> to vector<4x256xf32>
    %1420 = vector.extract_strided_slice %1384 {offsets = [0, 0], sizes = [4, 256], strides = [1, 1]} : vector<8x256xf32> to vector<4x256xf32>
    %1421 = vector.extract_strided_slice %1387 {offsets = [0, 0], sizes = [4, 256], strides = [1, 1]} : vector<8x256xf32> to vector<4x256xf32>
    %1422 = vector.extract_strided_slice %1393 {offsets = [0, 0], sizes = [4, 256], strides = [1, 1]} : vector<8x256xf32> to vector<4x256xf32>
    %1423 = vector.extract_strided_slice %1399 {offsets = [0, 0], sizes = [4, 256], strides = [1, 1]} : vector<8x256xf32> to vector<4x256xf32>
    %1424 = vector.extract_strided_slice %1405 {offsets = [0, 0], sizes = [4, 256], strides = [1, 1]} : vector<8x256xf32> to vector<4x256xf32>
    %1425 = vector.extract_strided_slice %1411 {offsets = [0, 0], sizes = [4, 256], strides = [1, 1]} : vector<8x256xf32> to vector<4x256xf32>
    %1426 = tpu.concatenate %1417, %1418, %1419, %1420, %1421, %1422, %1423, %1424, %1425 in 0 : vector<4x256xf32>, vector<4x256xf32>, vector<4x256xf32>, vector<4x256xf32>, vector<4x256xf32>, vector<4x256xf32>, vector<4x256xf32>, vector<4x256xf32>, vector<4x256xf32> -> vector<36x256xf32>
    %cst_188 = arith.constant dense<0.000000e+00> : vector<4x256xf32>
    %1427 = tpu.matmul %7, %1426, %cst_188 {dimension_numbers = #tpu.dot_dimension_numbers<[1], [0], [0], [1], [0, 0, 1, 1], [], []>} : vector<4x36xf32>, vector<36x256xf32>, vector<4x256xf32> -> vector<4x256xf32>
    %1428 = arith.addf %1427, %1416 : vector<4x256xf32>
    %1429 = vector.extract_strided_slice %1366 {offsets = [4, 0], sizes = [4, 256], strides = [1, 1]} : vector<8x256xf32> to vector<4x256xf32>
    %1430 = vector.extract_strided_slice %1372 {offsets = [4, 0], sizes = [4, 256], strides = [1, 1]} : vector<8x256xf32> to vector<4x256xf32>
    %1431 = vector.extract_strided_slice %1378 {offsets = [4, 0], sizes = [4, 256], strides = [1, 1]} : vector<8x256xf32> to vector<4x256xf32>
    %1432 = vector.extract_strided_slice %1384 {offsets = [4, 0], sizes = [4, 256], strides = [1, 1]} : vector<8x256xf32> to vector<4x256xf32>
    %1433 = vector.extract_strided_slice %1387 {offsets = [4, 0], sizes = [4, 256], strides = [1, 1]} : vector<8x256xf32> to vector<4x256xf32>
    %1434 = vector.extract_strided_slice %1393 {offsets = [4, 0], sizes = [4, 256], strides = [1, 1]} : vector<8x256xf32> to vector<4x256xf32>
    %1435 = vector.extract_strided_slice %1399 {offsets = [4, 0], sizes = [4, 256], strides = [1, 1]} : vector<8x256xf32> to vector<4x256xf32>
    %1436 = vector.extract_strided_slice %1405 {offsets = [4, 0], sizes = [4, 256], strides = [1, 1]} : vector<8x256xf32> to vector<4x256xf32>
    %1437 = vector.extract_strided_slice %1411 {offsets = [4, 0], sizes = [4, 256], strides = [1, 1]} : vector<8x256xf32> to vector<4x256xf32>
    %1438 = tpu.concatenate %1429, %1430, %1431, %1432, %1433, %1434, %1435, %1436, %1437 in 0 : vector<4x256xf32>, vector<4x256xf32>, vector<4x256xf32>, vector<4x256xf32>, vector<4x256xf32>, vector<4x256xf32>, vector<4x256xf32>, vector<4x256xf32>, vector<4x256xf32> -> vector<36x256xf32>
    %cst_189 = arith.constant dense<0.000000e+00> : vector<4x256xf32>
    %1439 = tpu.matmul %7, %1438, %cst_189 {dimension_numbers = #tpu.dot_dimension_numbers<[1], [0], [0], [1], [0, 0, 1, 1], [], []>} : vector<4x36xf32>, vector<36x256xf32>, vector<4x256xf32> -> vector<4x256xf32>
    %1440 = arith.addf %1439, %1416 : vector<4x256xf32>
    %1441 = tpu.concatenate %1428, %1440 in 0 : vector<4x256xf32>, vector<4x256xf32> -> vector<8x256xf32>
    %cst_190 = arith.constant dense<0.000000e+00> : vector<8xf32>
    %1442 = vector.multi_reduction <add>, %1441, %cst_190 [1] : vector<8x256xf32> to vector<8xf32>
    %1443 = vector.shape_cast %1442 : vector<8xf32> to vector<8x1xf32>
    %cst_191 = arith.constant 2.560000e+02 : f32
    %1444 = vector.broadcast %cst_191 : f32 to vector<8x1xf32>
    %1445 = arith.divf %1443, %1444 : vector<8x1xf32>
    %1446 = vector.broadcast %1445 : vector<8x1xf32> to vector<8x256xf32>
    %1447 = arith.subf %1441, %1446 : vector<8x256xf32>
    %1448 = arith.mulf %1447, %1447 : vector<8x256xf32>
    %cst_192 = arith.constant dense<0.000000e+00> : vector<8xf32>
    %1449 = vector.multi_reduction <add>, %1448, %cst_192 [1] : vector<8x256xf32> to vector<8xf32>
    %1450 = vector.shape_cast %1449 : vector<8xf32> to vector<8x1xf32>
    %cst_193 = arith.constant 2.560000e+02 : f32
    %1451 = vector.broadcast %cst_193 : f32 to vector<8x1xf32>
    %1452 = arith.divf %1450, %1451 : vector<8x1xf32>
    %cst_194 = arith.constant 9.99999974E-6 : f32
    %1453 = vector.broadcast %cst_194 : f32 to vector<8x1xf32>
    %1454 = arith.addf %1452, %1453 : vector<8x1xf32>
    %1455 = math.rsqrt %1454 : vector<8x1xf32>
    %1456 = vector.broadcast %1455 : vector<8x1xf32> to vector<8x256xf32>
    %1457 = arith.mulf %1447, %1456 : vector<8x256xf32>
    %1458 = vector.broadcast %10 : vector<8x1xf32> to vector<8x256xf32>
    %1459 = arith.mulf %1457, %1458 : vector<8x256xf32>
    %1460 = vector.broadcast %11 : vector<8x1xf32> to vector<8x256xf32>
    %1461 = arith.addf %1459, %1460 : vector<8x256xf32>
    %cst_195 = arith.constant 0.00123263884 : f32
    %1462 = vector.broadcast %cst_195 : f32 to vector<8x256xf32>
    %1463 = arith.mulf %1462, %18 : vector<8x256xf32>
    %cst_196 = arith.constant -0.00425277045 : f32
    %1464 = vector.broadcast %cst_196 : f32 to vector<8x256xf32>
    %1465 = arith.mulf %1464, %490 : vector<8x256xf32>
    %1466 = arith.addf %1463, %1465 : vector<8x256xf32>
    %cst_197 = arith.constant 0.0369791649 : f32
    %1467 = vector.broadcast %cst_197 : f32 to vector<8x256xf32>
    %1468 = arith.mulf %1467, %730 : vector<8x256xf32>
    %1469 = arith.addf %1466, %1468 : vector<8x256xf32>
    %cst_198 = arith.constant -5.086380e-02 : f32
    %1470 = vector.broadcast %cst_198 : f32 to vector<8x256xf32>
    %1471 = arith.mulf %1470, %973 : vector<8x256xf32>
    %1472 = arith.addf %1469, %1471 : vector<8x256xf32>
    %cst_199 = arith.constant 0.0419047624 : f32
    %1473 = vector.broadcast %cst_199 : f32 to vector<8x256xf32>
    %1474 = arith.mulf %1473, %1217 : vector<8x256xf32>
    %1475 = arith.addf %1472, %1474 : vector<8x256xf32>
    %cst_200 = arith.constant -2.500000e-02 : f32
    %1476 = vector.broadcast %cst_200 : f32 to vector<8x256xf32>
    %1477 = arith.mulf %1476, %1461 : vector<8x256xf32>
    %1478 = arith.addf %1475, %1477 : vector<8x256xf32>
    %1479 = vector.broadcast %16 : vector<1x1xf32> to vector<8x256xf32>
    %1480 = arith.mulf %1479, %1478 : vector<8x256xf32>
    %1481 = math.absf %17 : vector<8x256xf32>
    %1482 = math.absf %1234 : vector<8x256xf32>
    %1483 = arith.maximumf %1481, %1482 : vector<8x256xf32>
    %cst_201 = arith.constant 1.000000e-03 : f32
    %1484 = vector.broadcast %cst_201 : f32 to vector<8x256xf32>
    %1485 = arith.mulf %1484, %1483 : vector<8x256xf32>
    %cst_202 = arith.constant 1.000000e-03 : f32
    %1486 = vector.broadcast %cst_202 : f32 to vector<8x256xf32>
    %1487 = arith.addf %1486, %1485 : vector<8x256xf32>
    %1488 = arith.divf %1480, %1487 : vector<8x256xf32>
    %1489 = arith.mulf %1488, %1488 : vector<8x256xf32>
    %cst_203 = arith.constant dense<0.000000e+00> : vector<8xf32>
    %1490 = vector.multi_reduction <add>, %1489, %cst_203 [1] : vector<8x256xf32> to vector<8xf32>
    %1491 = vector.shape_cast %1490 : vector<8xf32> to vector<8x1xf32>
    %cst_204 = arith.constant 2.560000e+02 : f32
    %1492 = vector.broadcast %cst_204 : f32 to vector<8x1xf32>
    %1493 = arith.divf %1491, %1492 : vector<8x1xf32>
    %cst_205 = arith.constant dense<0.000000e+00> : vector<1xf32>
    %1494 = vector.multi_reduction <add>, %1493, %cst_205 [0] : vector<8x1xf32> to vector<1xf32>
    %1495 = vector.shape_cast %1494 : vector<1xf32> to vector<1x1xf32>
    %cst_206 = arith.constant 8.000000e+00 : f32
    %1496 = vector.broadcast %cst_206 : f32 to vector<1x1xf32>
    %1497 = arith.divf %1495, %1496 : vector<1x1xf32>
    %1498 = math.sqrt %1497 : vector<1x1xf32>
    %cst_207 = arith.constant 1.000000e+00 : f32
    %1499 = vector.broadcast %cst_207 : f32 to vector<1x1xf32>
    %1500 = arith.cmpf ole, %1498, %1499 : vector<1x1xf32>
    %1501 = arith.extui %1500 : vector<1x1xi1> to vector<1x1xi32>
    %1502 = arith.sitofp %1501 : vector<1x1xi32> to vector<1x1xf32>
    %cst_208 = arith.constant 9.99999993E-9 : f32
    %1503 = vector.broadcast %cst_208 : f32 to vector<1x1xf32>
    %1504 = arith.maximumf %1498, %1503 : vector<1x1xf32>
    %1505 = math.log %1504 : vector<1x1xf32>
    %cst_209 = arith.constant -2.000000e-01 : f32
    %1506 = vector.broadcast %cst_209 : f32 to vector<1x1xf32>
    %1507 = arith.mulf %1506, %1505 : vector<1x1xf32>
    %1508 = math.exp %1507 : vector<1x1xf32>
    %cst_210 = arith.constant 0.899999976 : f32
    %1509 = vector.broadcast %cst_210 : f32 to vector<1x1xf32>
    %1510 = arith.mulf %1509, %1508 : vector<1x1xf32>
    %cst_211 = arith.constant 2.000000e-01 : f32
    %cst_212 = arith.constant 1.000000e+01 : f32
    %1511 = vector.broadcast %cst_211 : f32 to vector<1x1xf32>
    %1512 = arith.maximumf %1511, %1510 : vector<1x1xf32>
    %1513 = vector.broadcast %cst_212 : f32 to vector<1x1xf32>
    %1514 = arith.minimumf %1513, %1512 : vector<1x1xf32>
    %1515 = vector.broadcast %1502 : vector<1x1xf32> to vector<8x256xf32>
    %1516 = arith.mulf %1515, %1234 : vector<8x256xf32>
    %cst_213 = arith.constant 1.000000e+00 : f32
    %1517 = vector.broadcast %cst_213 : f32 to vector<1x1xf32>
    %1518 = arith.subf %1517, %1502 : vector<1x1xf32>
    %1519 = vector.broadcast %1518 : vector<1x1xf32> to vector<8x256xf32>
    %1520 = arith.mulf %1519, %17 : vector<8x256xf32>
    %1521 = arith.addf %1516, %1520 : vector<8x256xf32>
    %c0_214 = arith.constant 0 : index
    %c0_215 = arith.constant 0 : index
    %1522 = vector.load %arg17[%c0_214, %c0_215] : memref<8x256xf32, #tpu.memory_space<vmem>>, vector<8x256xf32>
    tpu.vector_store %arg17[%c0_214, %c0_215], %1521 {strides = array<i32>} : memref<8x256xf32, #tpu.memory_space<vmem>>, vector<8x256xf32>,
    %1523 = vector.broadcast %1502 : vector<1x1xf32> to vector<8x256xf32>
    %1524 = arith.mulf %1523, %1461 : vector<8x256xf32>
    %cst_216 = arith.constant 1.000000e+00 : f32
    %1525 = vector.broadcast %cst_216 : f32 to vector<1x1xf32>
    %1526 = arith.subf %1525, %1502 : vector<1x1xf32>
    %1527 = vector.broadcast %1526 : vector<1x1xf32> to vector<8x256xf32>
    %1528 = arith.mulf %1527, %18 : vector<8x256xf32>
    %1529 = arith.addf %1524, %1528 : vector<8x256xf32>
    %c0_217 = arith.constant 0 : index
    %c0_218 = arith.constant 0 : index
    %1530 = vector.load %arg18[%c0_217, %c0_218] : memref<8x256xf32, #tpu.memory_space<vmem>>, vector<8x256xf32>
    tpu.vector_store %arg18[%c0_217, %c0_218], %1529 {strides = array<i32>} : memref<8x256xf32, #tpu.memory_space<vmem>>, vector<8x256xf32>,
    %1531 = arith.mulf %1502, %16 : vector<1x1xf32>
    %1532 = arith.addf %12, %1531 : vector<1x1xf32>
    %c0_219 = arith.constant 0 : index
    %c0_220 = arith.constant 0 : index
    %1533 = vector.load %arg19[%c0_219, %c0_220] : memref<1x1xf32, #tpu.memory_space<vmem>>, vector<1x1xf32>
    tpu.vector_store %arg19[%c0_219, %c0_220], %1532 {strides = array<i32>} : memref<1x1xf32, #tpu.memory_space<vmem>>, vector<1x1xf32>,
    %1534 = arith.mulf %16, %1514 : vector<1x1xf32>
    %cst_221 = arith.constant 9.99999974E-6 : f32
    %1535 = vector.broadcast %cst_221 : f32 to vector<1x1xf32>
    %1536 = arith.maximumf %1534, %1535 : vector<1x1xf32>
    %c0_222 = arith.constant 0 : index
    %c0_223 = arith.constant 0 : index
    %1537 = vector.load %arg20[%c0_222, %c0_223] : memref<1x1xf32, #tpu.memory_space<vmem>>, vector<1x1xf32>
    tpu.vector_store %arg20[%c0_222, %c0_223], %1536 {strides = array<i32>} : memref<1x1xf32, #tpu.memory_space<vmem>>, vector<1x1xf32>,
    return
  }
}

</mosaic_0001>

<llo_original>
// kernel: tile.33
$region0: #{tile.33}
  #allocation0 [shape = 's32[1]{0}', space=sflag, size = 0x4, scoped, tag = 'scoped memory for tile.33']
  %s0 = inlined_call_operand.vmem [shape: f32[4], index: 0, kind: input, shape index: {}]
  %s1 = inlined_call_operand.vmem [shape: f32[2,4], index: 1, kind: output, shape index: {}]
  // Predicated region
  $region2: #{tile.33} parent=0 // pred_check
    _
  $region3: #{tile.33} parent=0 // pred_check_branch
    %3 = sbr.rel (0) target = $region5
  $region4: #{tile.33} parent=0 // pred_region
    _
  $region5: #{tile.33} parent=0 // pred_fallthru
    _
  %v4 = vld [vmem:[%s0] ss:$0 sm:$0xff]
  %5 = vst [vmem:[%s1] sm:$0x3] %v4

// kernel: tile.78
$region0: #{tile.78}
  %s0 = inlined_call_operand.vmem [shape: f32[2,4], index: 0, kind: input, shape index: {}]
  %s1 = inlined_call_operand.vmem [shape: f32[8,1], index: 1, kind: output, shape index: {}]
  $region1: #{tile.78} parent=0
    #allocation0 [shape = 'u8[4096]{0}', space=vmem, size = 0x1000, scoped, tag = 'scoped mem for input reshape']
    %s3 = sshll.u32 1, 2
    %s4 = ssub.s32 %s3, 1
    %v5 = vld [vmem:[%s0] sm:%s4]
    %6 = vst [vmem:[#allocation0] sm:%s4] %v5
    %v7 = vld [vmem:[#allocation0] sm:$0x3]
    %vm8 = vcmask 7168
    %9 = vst.msk [vmem:[%s1] ss:$4 sm:$0x3] %vm8, %v7
    %v10 = vld [vmem:[#allocation0] sm:$0x3]
    %11 = vrot.lane.b32.xlu0 %v10, 127
    %v12 = vpop.permute.xlu0 %11
    %vm13 = vcmask 7168
    %s14 = scalar_lea.vmem %s1, 1
    %15 = vst.msk [vmem:[%s14] ss:$4 sm:$0x3] %vm13, %v12
    %v16 = vld [vmem:[#allocation0] sm:$0x3]
    %17 = vrot.lane.b32.xlu0 %v16, 126
    %v18 = vpop.permute.xlu0 %17
    %vm19 = vcmask 7168
    %s20 = scalar_lea.vmem %s1, 2
    %21 = vst.msk [vmem:[%s20] ss:$4 sm:$0x3] %vm19, %v18
    %v22 = vld [vmem:[#allocation0] sm:$0x3]
    %23 = vrot.lane.b32.xlu0 %v22, 125
    %v24 = vpop.permute.xlu0 %23
    %vm25 = vcmask 7168
    %s26 = scalar_lea.vmem %s1, 3
    %27 = vst.msk [vmem:[%s26] ss:$4 sm:$0x3] %vm25, %v24

// kernel: ode_block_forward.1
$region0: #{ode_block_forward.1}
  #allocation0 [shape = 'u32[]', space=smem, size = 0x4, offset = 0x4, fixed_abs, tag = 'smem constant byte address 0x4 - core index']
  #allocation1 [shape = 'u32[144,128]{1,0:T(1,128)}', space=vmem, size = 0x12000, scoped, tag = 'internal scratch']
  #allocation2 [shape = 'f32[1,1]{1,0:T(1,128)S(1)}', space=vmem, size = 0x200, scoped, tag = 'scoped memory for ode_block_forward.1']
  %s0 = inlined_call_operand.<no memory space> [shape: f32[1,1], index: 0, kind: input, shape index: {}]
  %s1 = inlined_call_operand.vmem [shape: f32[8,256], index: 1, kind: input, shape index: {}]
  %s2 = inlined_call_operand.vmem [shape: f32[9,256], index: 2, kind: input, shape index: {}]
  %s3 = inlined_call_operand.vmem [shape: f32[8,1], index: 3, kind: input, shape index: {}]
  %s4 = inlined_call_operand.vmem [shape: f32[8,1], index: 4, kind: input, shape index: {}]
  %s5 = inlined_call_operand.vmem [shape: f32[4,36], index: 5, kind: input, shape index: {}]
  %s6 = inlined_call_operand.vmem [shape: f32[4,9], index: 6, kind: input, shape index: {}]
  %s7 = inlined_call_operand.vmem [shape: f32[4,1], index: 7, kind: input, shape index: {}]
  %s8 = inlined_call_operand.vmem [shape: f32[8,1], index: 8, kind: input, shape index: {}]
  %s9 = inlined_call_operand.vmem [shape: f32[8,1], index: 9, kind: input, shape index: {}]
  %s10 = inlined_call_operand.vmem [shape: f32[4,36], index: 10, kind: input, shape index: {}]
  %s11 = inlined_call_operand.vmem [shape: f32[4,9], index: 11, kind: input, shape index: {}]
  %s12 = inlined_call_operand.vmem [shape: f32[4,1], index: 12, kind: input, shape index: {}]
  %s13 = inlined_call_operand.vmem [shape: f32[8,1], index: 13, kind: input, shape index: {}]
  %s14 = inlined_call_operand.vmem [shape: f32[8,1], index: 14, kind: input, shape index: {}]
  %s15 = inlined_call_operand.vmem [shape: f32[8,256], index: 15, kind: output, shape index: {}]
  %s16 = sld [smem:[#allocation0]]
  $region70: #{ode_block_forward.1} parent=0
    _
  %s18 = ssub.s32 1, %s16
  %s19 = scalar_select 0, %s18, %s16
  %v20 = vstv %s0
  %21 = vst [vmem:[#allocation2] sm:$0x1] %v20
  // Predicated region
  $region2: #{ode_block_forward.1} parent=0 // pred_check
    _
  $region3: #{ode_block_forward.1} parent=0 // pred_check_branch
    %23 = sbr.rel (0) target = $region5
  $region4: #{ode_block_forward.1} parent=0 // pred_region
    _
  $region5: #{ode_block_forward.1} parent=0 // pred_fallthru
    _
  // Predicated region
  $region6: #{ode_block_forward.1} parent=0 // pred_check
    _
  $region7: #{ode_block_forward.1} parent=0 // pred_check_branch
    %25 = sbr.rel (0) target = $region9
  $region8: #{ode_block_forward.1} parent=0 // pred_region
    _
  $region9: #{ode_block_forward.1} parent=0 // pred_fallthru
    _
  // Predicated region
  $region10: #{ode_block_forward.1} parent=0 // pred_check
    _
  $region11: #{ode_block_forward.1} parent=0 // pred_check_branch
    %27 = sbr.rel (0) target = $region13
  $region12: #{ode_block_forward.1} parent=0 // pred_region
    _
  $region13: #{ode_block_forward.1} parent=0 // pred_fallthru
    _
  // Predicated region
  $region14: #{ode_block_forward.1} parent=0 // pred_check
    _
  $region15: #{ode_block_forward.1} parent=0 // pred_check_branch
    %29 = sbr.rel (0) target = $region17
  $region16: #{ode_block_forward.1} parent=0 // pred_region
    _
  $region17: #{ode_block_forward.1} parent=0 // pred_fallthru
    _
  // Predicated region
  $region18: #{ode_block_forward.1} parent=0 // pred_check
    _
  $region19: #{ode_block_forward.1} parent=0 // pred_check_branch
    %31 = sbr.rel (0) target = $region21
  $region20: #{ode_block_forward.1} parent=0 // pred_region
    _
  $region21: #{ode_block_forward.1} parent=0 // pred_fallthru
    _
  // Predicated region
  $region22: #{ode_block_forward.1} parent=0 // pred_check
    _
  $region23: #{ode_block_forward.1} parent=0 // pred_check_branch
    %33 = sbr.rel (0) target = $region25
  $region24: #{ode_block_forward.1} parent=0 // pred_region
    _
  $region25: #{ode_block_forward.1} parent=0 // pred_fallthru
    _
  // Predicated region
  $region26: #{ode_block_forward.1} parent=0 // pred_check
    _
  $region27: #{ode_block_forward.1} parent=0 // pred_check_branch
    %35 = sbr.rel (0) target = $region29
  $region28: #{ode_block_forward.1} parent=0 // pred_region
    _
  $region29: #{ode_block_forward.1} parent=0 // pred_fallthru
    _
  // Predicated region
  $region30: #{ode_block_forward.1} parent=0 // pred_check
    _
  $region31: #{ode_block_forward.1} parent=0 // pred_check_branch
    %37 = sbr.rel (0) target = $region33
  $region32: #{ode_block_forward.1} parent=0 // pred_region
    _
  $region33: #{ode_block_forward.1} parent=0 // pred_fallthru
    _
  // Predicated region
  $region34: #{ode_block_forward.1} parent=0 // pred_check
    _
  $region35: #{ode_block_forward.1} parent=0 // pred_check_branch
    %39 = sbr.rel (0) target = $region37
  $region36: #{ode_block_forward.1} parent=0 // pred_region
    _
  $region37: #{ode_block_forward.1} parent=0 // pred_fallthru
    _
  // Predicated region
  $region38: #{ode_block_forward.1} parent=0 // pred_check
    _
  $region39: #{ode_block_forward.1} parent=0 // pred_check_branch
    %41 = sbr.rel (0) target = $region41
  $region40: #{ode_block_forward.1} parent=0 // pred_region
    _
  $region41: #{ode_block_forward.1} parent=0 // pred_fallthru
    _
  // Predicated region
  $region42: #{ode_block_forward.1} parent=0 // pred_check
    _
  $region43: #{ode_block_forward.1} parent=0 // pred_check_branch
    %43 = sbr.rel (0) target = $region45
  $region44: #{ode_block_forward.1} parent=0 // pred_region
    _
  $region45: #{ode_block_forward.1} parent=0 // pred_fallthru
    _
  // Predicated region
  $region46: #{ode_block_forward.1} parent=0 // pred_check
    _
  $region47: #{ode_block_forward.1} parent=0 // pred_check_branch
    %45 = sbr.rel (0) target = $region49
  $region48: #{ode_block_forward.1} parent=0 // pred_region
    _
  $region49: #{ode_block_forward.1} parent=0 // pred_fallthru
    _
  // Predicated region
  $region50: #{ode_block_forward.1} parent=0 // pred_check
    _
  $region51: #{ode_block_forward.1} parent=0 // pred_check_branch
    %47 = sbr.rel (0) target = $region53
  $region52: #{ode_block_forward.1} parent=0 // pred_region
    _
  $region53: #{ode_block_forward.1} parent=0 // pred_fallthru
    _
  // Predicated region
  $region54: #{ode_block_forward.1} parent=0 // pred_check
    _
  $region55: #{ode_block_forward.1} parent=0 // pred_check_branch
    %49 = sbr.rel (0) target = $region57
  $region56: #{ode_block_forward.1} parent=0 // pred_region
    _
  $region57: #{ode_block_forward.1} parent=0 // pred_fallthru
    _
  // Predicated region
  $region58: #{ode_block_forward.1} parent=0 // pred_check
    _
  $region59: #{ode_block_forward.1} parent=0 // pred_check_branch
    %51 = sbr.rel (0) target = $region61
  $region60: #{ode_block_forward.1} parent=0 // pred_region
    _
  $region61: #{ode_block_forward.1} parent=0 // pred_fallthru
    _
  %v52 = vld [vmem:[#allocation2] sm:$0x1]
  %v53 = vld [vmem:[%s1] sm:$0xff]
  %v54 = vld [vmem:[%s1 + $0x8] sm:$0xff]
  %v55 = vld [vmem:[%s2] sm:$0xff]
  %v56 = vld [vmem:[%s2 + $0x8] sm:$0xff]
  %v57 = vld [vmem:[%s2 + $0x10] sm:$0x1]
  %v58 = vld [vmem:[%s2 + $0x18] sm:$0x1]
  %v59 = vld [vmem:[%s3] sm:$0xff]
  %v60 = vld [vmem:[%s4] sm:$0xff]
  %v61 = vld [vmem:[%s5] sm:$0xf]
  %v62 = vld [vmem:[%s6] sm:$0xf]
  %v63 = vld [vmem:[%s7] sm:$0xf]
  %v64 = vld [vmem:[%s8] sm:$0xff]
  %v65 = vld [vmem:[%s9] sm:$0xff]
  %v66 = vld [vmem:[%s10] sm:$0xf]
  %v67 = vld [vmem:[%s11] sm:$0xf]
  %v68 = vld [vmem:[%s12] sm:$0xf]
  %v69 = vld [vmem:[%s13] sm:$0xff]
  %v70 = vld [vmem:[%s14] sm:$0xff]
  %v71 = vadd.f32 %v53, %v54
  %72 = vadd.xlane.f32.xlu0 %v71
  %v73 = vpop.xlane.xlu0 %72
  %v74 = vrcp.pop 256.0
  %v75 = vmul.f32 %v73, %v74
  %v76 = vsub.f32 %v53, %v75
  %v77 = vsub.f32 %v54, %v75
  %v78 = vmul.f32 %v76, %v76
  %v79 = vmul.f32 %v77, %v77
  %v80 = vadd.f32 %v78, %v79
  %81 = vadd.xlane.f32.xlu0 %v80
  %v82 = vpop.xlane.xlu0 %81
  %v83 = vmul.f32 %v82, %v74
  %v84 = vadd.f32 %v83, 1e-05
  %v85 = vrsqrt.pop %v84
  %v86 = vmul.f32 %v76, %v85
  %v87 = vmul.f32 %v77, %v85
  %89 = vset.pattern.permute.xlu0 0
  %90 = vperm.xlu0 %89, %v59
  %v91 = vpop.permute.xlu0 %90
  %v93 = vmul.f32 %v86, %v91
  %v94 = vmul.f32 %v87, %v91
  %96 = vset.pattern.permute.xlu0 0
  %97 = vperm.xlu0 %96, %v60
  %v98 = vpop.permute.xlu0 %97
  %v100 = vadd.f32 %v93, %v98
  %v101 = vadd.f32 %v94, %v98
  %v102 = vmax.f32 %v100, 0.0
  %v103 = vmax.f32 %v101, 0.0
  %105 = vrot.lane.b32.xlu0 %v103, 17
  %v106 = vpop.permute.xlu0 %105
  %109 = vrot.lane.b32.xlu0 %v102, 17
  %v110 = vpop.permute.xlu0 %109
  %vm111 = vcmask 138240
  %v112 = vsel %vm111, %v110, %v106
  %v115 = vsel %vm111, %v106, %v110
  %v116 = vlaneseq
  %v117 = vshrl.u32 %v116, 7
  %v118 = vsub.s32 0, %v117
  %v119 = vrot.slane %v55, %v118
  %v120 = vlaneseq
  %v121 = vshrl.u32 %v120, 7
  %v122 = vsub.s32 0, %v121
  %v123 = vrot.slane %v56, %v122
  %v124 = vmul.f32 %v119, %v115
  %v125 = vmul.f32 %v123, %v112
  %126 = vrot.lane.b32.xlu0 %v103, 16
  %v127 = vpop.permute.xlu0 %126
  %129 = vrot.lane.b32.xlu0 %v102, 16
  %v130 = vpop.permute.xlu0 %129
  %vm131 = vcmask 130048
  %v132 = vsel %vm131, %v130, %v127
  %v135 = vsel %vm131, %v127, %v130
  %v136 = vlaneseq
  %v137 = vshrl.u32 %v136, 7
  %v138 = vsub.s32 1, %v137
  %v139 = vrot.slane %v55, %v138
  %v140 = vlaneseq
  %v141 = vshrl.u32 %v140, 7
  %v142 = vsub.s32 1, %v141
  %v143 = vrot.slane %v56, %v142
  %v144 = vmul.f32 %v139, %v135
  %v145 = vmul.f32 %v143, %v132
  %146 = vrot.lane.b32.xlu0 %v103, 15
  %v147 = vpop.permute.xlu0 %146
  %149 = vrot.lane.b32.xlu0 %v102, 15
  %v150 = vpop.permute.xlu0 %149
  %vm151 = vcmask 121856
  %v152 = vsel %vm151, %v150, %v147
  %v155 = vsel %vm151, %v147, %v150
  %v156 = vlaneseq
  %v157 = vshrl.u32 %v156, 7
  %v158 = vsub.s32 2, %v157
  %v159 = vrot.slane %v55, %v158
  %v160 = vlaneseq
  %v161 = vshrl.u32 %v160, 7
  %v162 = vsub.s32 2, %v161
  %v163 = vrot.slane %v56, %v162
  %v164 = vmul.f32 %v159, %v155
  %v165 = vmul.f32 %v163, %v152
  %166 = vrot.lane.b32.xlu0 %v103, 1
  %v167 = vpop.permute.xlu0 %166
  %169 = vrot.lane.b32.xlu0 %v102, 1
  %v170 = vpop.permute.xlu0 %169
  %vm171 = vcmask 7168
  %v172 = vsel %vm171, %v170, %v167
  %v175 = vsel %vm171, %v167, %v170
  %v176 = vlaneseq
  %v177 = vshrl.u32 %v176, 7
  %v178 = vsub.s32 3, %v177
  %v179 = vrot.slane %v55, %v178
  %v180 = vlaneseq
  %v181 = vshrl.u32 %v180, 7
  %v182 = vsub.s32 3, %v181
  %v183 = vrot.slane %v56, %v182
  %v184 = vmul.f32 %v179, %v175
  %v185 = vmul.f32 %v183, %v172
  %v186 = vlaneseq
  %v187 = vshrl.u32 %v186, 7
  %v188 = vsub.s32 4, %v187
  %v189 = vrot.slane %v55, %v188
  %v190 = vlaneseq
  %v191 = vshrl.u32 %v190, 7
  %v192 = vsub.s32 4, %v191
  %v193 = vrot.slane %v56, %v192
  %v194 = vmul.f32 %v189, %v102
  %v195 = vmul.f32 %v193, %v103
  %196 = vrot.lane.b32.xlu0 %v102, 127
  %v197 = vpop.permute.xlu0 %196
  %198 = vrot.lane.b32.xlu0 %v103, 127
  %v199 = vpop.permute.xlu0 %198
  %vm200 = vcmask 1039360
  %v201 = vsel %vm200, %v197, %v199
  %v205 = vsel %vm200, %v199, %v197
  %v206 = vlaneseq
  %v207 = vshrl.u32 %v206, 7
  %v208 = vsub.s32 5, %v207
  %v209 = vrot.slane %v55, %v208
  %v210 = vlaneseq
  %v211 = vshrl.u32 %v210, 7
  %v212 = vsub.s32 5, %v211
  %v213 = vrot.slane %v56, %v212
  %v214 = vmul.f32 %v209, %v201
  %v215 = vmul.f32 %v213, %v205
  %216 = vrot.lane.b32.xlu0 %v102, 113
  %v217 = vpop.permute.xlu0 %216
  %218 = vrot.lane.b32.xlu0 %v103, 113
  %v219 = vpop.permute.xlu0 %218
  %vm220 = vcmask 924672
  %v221 = vsel %vm220, %v217, %v219
  %v225 = vsel %vm220, %v219, %v217
  %v226 = vlaneseq
  %v227 = vshrl.u32 %v226, 7
  %v228 = vsub.s32 6, %v227
  %v229 = vrot.slane %v55, %v228
  %v230 = vlaneseq
  %v231 = vshrl.u32 %v230, 7
  %v232 = vsub.s32 6, %v231
  %v233 = vrot.slane %v56, %v232
  %v234 = vmul.f32 %v229, %v221
  %v235 = vmul.f32 %v233, %v225
  %236 = vrot.lane.b32.xlu0 %v102, 112
  %v237 = vpop.permute.xlu0 %236
  %238 = vrot.lane.b32.xlu0 %v103, 112
  %v239 = vpop.permute.xlu0 %238
  %vm240 = vcmask 916480
  %v241 = vsel %vm240, %v237, %v239
  %v245 = vsel %vm240, %v239, %v237
  %v246 = vlaneseq
  %v247 = vshrl.u32 %v246, 7
  %v248 = vsub.s32 7, %v247
  %v249 = vrot.slane %v55, %v248
  %v250 = vlaneseq
  %v251 = vshrl.u32 %v250, 7
  %v252 = vsub.s32 7, %v251
  %v253 = vrot.slane %v56, %v252
  %v254 = vmul.f32 %v249, %v241
  %v255 = vmul.f32 %v253, %v245
  %256 = vrot.lane.b32.xlu0 %v102, 111
  %v257 = vpop.permute.xlu0 %256
  %258 = vrot.lane.b32.xlu0 %v103, 111
  %v259 = vpop.permute.xlu0 %258
  %vm260 = vcmask 908288
  %v261 = vsel %vm260, %v257, %v259
  %v265 = vsel %vm260, %v259, %v257
  %v266 = vlaneseq
  %v267 = vshrl.u32 %v266, 7
  %v268 = vsub.s32 0, %v267
  %v269 = vrot.slane %v57, %v268
  %v270 = vlaneseq
  %v271 = vshrl.u32 %v270, 7
  %v272 = vsub.s32 0, %v271
  %v273 = vrot.slane %v58, %v272
  %v274 = vmul.f32 %v269, %v261
  %v275 = vmul.f32 %v273, %v265
  %vm276 = vcmask 72704
  %v278 = vsel %vm276, %v62, 0
  %vm280 = vcmask 1040384
  %v282 = vsel %vm280, %v57, 0
  %v285 = vsel %vm280, %v58, 0
  %287 = vmatprep.subr.mxu0 0.0
  %288 = vmatpush1.msra.mxu0 0.0
  %289 = vmatprep.subr.mxu0 0.0
  %290 = vmatpush1.msra.mxu0 0.0
  %291 = vmatprep.subr.mxu0 0.0
  %292 = vmatpush1.msra.mxu0 0.0
  %293 = vmatprep.subr.mxu0 0.0
  %294 = vmatpush1.msra.mxu0 0.0
  %295 = vmatprep.subr.mxu0 0.0
  %296 = vmatpush1.msra.mxu0 0.0
  %297 = vmatprep.subr.mxu0 0.0
  %298 = vmatpush1.msra.mxu0 0.0
  %299 = vmatprep.subr.mxu0 0.0
  %300 = vmatpush1.msra.mxu0 0.0
  %301 = vmatprep.subr.mxu0 0.0
  %302 = vmatpush1.msra.mxu0 0.0
  %303 = vmatprep.subr.mxu0 0.0
  %304 = vmatpush1.msra.mxu0 0.0
  %305 = vmatprep.subr.mxu0 0.0
  %306 = vmatpush1.msra.mxu0 0.0
  %307 = vmatprep.subr.mxu0 0.0
  %308 = vmatpush1.msra.mxu0 0.0
  %309 = vmatprep.subr.mxu0 0.0
  %310 = vmatpush1.msra.mxu0 0.0
  %311 = vmatprep.subr.mxu0 0.0
  %312 = vmatpush1.msra.mxu0 0.0
  %313 = vmatprep.subr.mxu0 0.0
  %314 = vmatpush1.msra.mxu0 0.0
  %315 = vmatprep.subr.mxu0 %v285
  %316 = vmatpush1.msra.mxu0 %v282
  %317 = vmatprep.subr.mxu0 %v56
  %318 = vmatpush1.msra.mxu0 %v55
  %319 = vmatprep.subr.mxu0 0.0
  %320 = vmatpush2.msra.mxu0 0.0
  %321 = vmatprep.subr.mxu0 0.0
  %322 = vmatpush2.msra.mxu0 0.0
  %323 = vmatprep.subr.mxu0 0.0
  %324 = vmatpush2.msra.mxu0 0.0
  %325 = vmatprep.subr.mxu0 0.0
  %326 = vmatpush2.msra.mxu0 0.0
  %327 = vmatprep.subr.mxu0 0.0
  %328 = vmatpush2.msra.mxu0 0.0
  %329 = vmatprep.subr.mxu0 0.0
  %330 = vmatpush2.msra.mxu0 0.0
  %331 = vmatprep.subr.mxu0 0.0
  %332 = vmatpush2.msra.mxu0 0.0
  %333 = vmatprep.subr.mxu0 0.0
  %334 = vmatpush2.msra.mxu0 0.0
  %335 = vmatprep.subr.mxu0 0.0
  %336 = vmatpush2.msra.mxu0 0.0
  %337 = vmatprep.subr.mxu0 0.0
  %338 = vmatpush2.msra.mxu0 0.0
  %339 = vmatprep.subr.mxu0 0.0
  %340 = vmatpush2.msra.mxu0 0.0
  %341 = vmatprep.subr.mxu0 0.0
  %342 = vmatpush2.msra.mxu0 0.0
  %343 = vmatprep.subr.mxu0 0.0
  %344 = vmatpush2.msra.mxu0 0.0
  %345 = vmatprep.subr.mxu0 0.0
  %346 = vmatpush2.msra.mxu0 0.0
  %347 = vmatprep.subr.mxu0 0.0
  %348 = vmatpush2.msra.mxu0 0.0
  %349 = vmatprep.subr.mxu0 0.0
  %350 = vmatpush2.msra.mxu0 0.0
  %351 = vmatprep.mubr.f32.mxu0 0.0
  %352 = vmatmul.mubr.f32.gmra.mxu0 %v278
  %v353 = vpop.f32.mrf.mxu0
  %v354 = vadd.f32 0.0, %v353
  %v355 = vpop.f32.mrf.mxu0
  %v356 = vadd.f32 0.0, %v355
  %357 = vdwg.mxu0
  %v359 = vlaneseq
  %v360 = vshrl.u32 %v359, 7
  %v361 = vsub.s32 0, %v360
  %v362 = vrot.slane %v52, %v361
  %363 = vset.pattern.permute.xlu0 0
  %364 = vperm.xlu0 %363, %v362
  %v365 = vpop.permute.xlu0 %364
  %v367 = vmul.f32 %v365, %v354
  %v368 = vmul.f32 %v365, %v356
  %370 = vset.pattern.permute.xlu0 0
  %371 = vperm.xlu0 %370, %v63
  %v372 = vpop.permute.xlu0 %371
  %v374 = vadd.f32 %v367, %v372
  %v375 = vadd.f32 %v368, %v372
  %v378 = vrot.slane %v144, 4
  %v379 = vrot.slane %v145, 4
  %v384 = vrot.slane %v184, 4
  %v385 = vrot.slane %v185, 4
  %v390 = vrot.slane %v214, 4
  %v391 = vrot.slane %v215, 4
  %v396 = vrot.slane %v254, 4
  %v397 = vrot.slane %v255, 4
  %vm400 = vcmask 1043456
  %v401 = vsel %vm400, %v124, %v378
  %v402 = vsel %vm400, %v125, %v379
  %v403 = vsel %vm400, %v164, %v384
  %v404 = vsel %vm400, %v165, %v385
  %v405 = vsel %vm400, %v194, %v390
  %v406 = vsel %vm400, %v195, %v391
  %v407 = vsel %vm400, %v234, %v396
  %v408 = vsel %vm400, %v235, %v397
  %vm409 = vcmask 293888
  %v411 = vsel %vm409, %v61, 0
  %v414 = vsel %vm400, %v274, 0
  %v417 = vsel %vm400, %v275, 0
  %419 = vmatprep.subr.mxu0 0.0
  %420 = vmatpush1.msra.mxu0 0.0
  %421 = vmatprep.subr.mxu0 0.0
  %422 = vmatpush1.msra.mxu0 0.0
  %423 = vmatprep.subr.mxu0 0.0
  %424 = vmatpush1.msra.mxu0 0.0
  %425 = vmatprep.subr.mxu0 0.0
  %426 = vmatpush1.msra.mxu0 0.0
  %427 = vmatprep.subr.mxu0 0.0
  %428 = vmatpush1.msra.mxu0 0.0
  %429 = vmatprep.subr.mxu0 0.0
  %430 = vmatpush1.msra.mxu0 0.0
  %431 = vmatprep.subr.mxu0 0.0
  %432 = vmatpush1.msra.mxu0 0.0
  %433 = vmatprep.subr.mxu0 0.0
  %434 = vmatpush1.msra.mxu0 0.0
  %435 = vmatprep.subr.mxu0 0.0
  %436 = vmatpush1.msra.mxu0 0.0
  %437 = vmatprep.subr.mxu0 0.0
  %438 = vmatpush1.msra.mxu0 0.0
  %439 = vmatprep.subr.mxu0 0.0
  %440 = vmatpush1.msra.mxu0 0.0
  %441 = vmatprep.subr.mxu0 %v417
  %442 = vmatpush1.msra.mxu0 %v414
  %443 = vmatprep.subr.mxu0 %v408
  %444 = vmatpush1.msra.mxu0 %v407
  %445 = vmatprep.subr.mxu0 %v406
  %446 = vmatpush1.msra.mxu0 %v405
  %447 = vmatprep.subr.mxu0 %v404
  %448 = vmatpush1.msra.mxu0 %v403
  %449 = vmatprep.subr.mxu0 %v402
  %450 = vmatpush1.msra.mxu0 %v401
  %451 = vmatprep.subr.mxu0 0.0
  %452 = vmatpush2.msra.mxu0 0.0
  %453 = vmatprep.subr.mxu0 0.0
  %454 = vmatpush2.msra.mxu0 0.0
  %455 = vmatprep.subr.mxu0 0.0
  %456 = vmatpush2.msra.mxu0 0.0
  %457 = vmatprep.subr.mxu0 0.0
  %458 = vmatpush2.msra.mxu0 0.0
  %459 = vmatprep.subr.mxu0 0.0
  %460 = vmatpush2.msra.mxu0 0.0
  %461 = vmatprep.subr.mxu0 0.0
  %462 = vmatpush2.msra.mxu0 0.0
  %463 = vmatprep.subr.mxu0 0.0
  %464 = vmatpush2.msra.mxu0 0.0
  %465 = vmatprep.subr.mxu0 0.0
  %466 = vmatpush2.msra.mxu0 0.0
  %467 = vmatprep.subr.mxu0 0.0
  %468 = vmatpush2.msra.mxu0 0.0
  %469 = vmatprep.subr.mxu0 0.0
  %470 = vmatpush2.msra.mxu0 0.0
  %471 = vmatprep.subr.mxu0 0.0
  %472 = vmatpush2.msra.mxu0 0.0
  %473 = vmatprep.subr.mxu0 0.0
  %474 = vmatpush2.msra.mxu0 0.0
  %475 = vmatprep.subr.mxu0 0.0
  %476 = vmatpush2.msra.mxu0 0.0
  %477 = vmatprep.subr.mxu0 0.0
  %478 = vmatpush2.msra.mxu0 0.0
  %479 = vmatprep.subr.mxu0 0.0
  %480 = vmatpush2.msra.mxu0 0.0
  %481 = vmatprep.subr.mxu0 0.0
  %482 = vmatpush2.msra.mxu0 0.0
  %483 = vmatprep.mubr.f32.mxu0 0.0
  %484 = vmatmul.mubr.f32.gmra.mxu0 %v411
  %v485 = vpop.f32.mrf.mxu0
  %v486 = vadd.f32 %v374, %v485
  %v487 = vpop.f32.mrf.mxu0
  %v488 = vadd.f32 %v375, %v487
  %489 = vdwg.mxu0
  %v492 = vrot.slane %v124, 4
  %v493 = vrot.slane %v125, 4
  %v498 = vrot.slane %v164, 4
  %v499 = vrot.slane %v165, 4
  %v504 = vrot.slane %v194, 4
  %v505 = vrot.slane %v195, 4
  %v510 = vrot.slane %v234, 4
  %v511 = vrot.slane %v235, 4
  %v514 = vrot.slane %v274, 4
  %v515 = vrot.slane %v275, 4
  %v516 = vsel %vm400, %v492, %v144
  %v517 = vsel %vm400, %v493, %v145
  %v518 = vsel %vm400, %v498, %v184
  %v519 = vsel %vm400, %v499, %v185
  %v520 = vsel %vm400, %v504, %v214
  %v521 = vsel %vm400, %v505, %v215
  %v522 = vsel %vm400, %v510, %v254
  %v523 = vsel %vm400, %v511, %v255
  %v524 = vsel %vm400, %v514, 0
  %v526 = vsel %vm400, %v515, 0
  %528 = vmatprep.subr.mxu0 0.0
  %529 = vmatpush1.msra.mxu0 0.0
  %530 = vmatprep.subr.mxu0 0.0
  %531 = vmatpush1.msra.mxu0 0.0
  %532 = vmatprep.subr.mxu0 0.0
  %533 = vmatpush1.msra.mxu0 0.0
  %534 = vmatprep.subr.mxu0 0.0
  %535 = vmatpush1.msra.mxu0 0.0
  %536 = vmatprep.subr.mxu0 0.0
  %537 = vmatpush1.msra.mxu0 0.0
  %538 = vmatprep.subr.mxu0 0.0
  %539 = vmatpush1.msra.mxu0 0.0
  %540 = vmatprep.subr.mxu0 0.0
  %541 = vmatpush1.msra.mxu0 0.0
  %542 = vmatprep.subr.mxu0 0.0
  %543 = vmatpush1.msra.mxu0 0.0
  %544 = vmatprep.subr.mxu0 0.0
  %545 = vmatpush1.msra.mxu0 0.0
  %546 = vmatprep.subr.mxu0 0.0
  %547 = vmatpush1.msra.mxu0 0.0
  %548 = vmatprep.subr.mxu0 0.0
  %549 = vmatpush1.msra.mxu0 0.0
  %550 = vmatprep.subr.mxu0 %v526
  %551 = vmatpush1.msra.mxu0 %v524
  %552 = vmatprep.subr.mxu0 %v523
  %553 = vmatpush1.msra.mxu0 %v522
  %554 = vmatprep.subr.mxu0 %v521
  %555 = vmatpush1.msra.mxu0 %v520
  %556 = vmatprep.subr.mxu0 %v519
  %557 = vmatpush1.msra.mxu0 %v518
  %558 = vmatprep.subr.mxu0 %v517
  %559 = vmatpush1.msra.mxu0 %v516
  %560 = vmatprep.subr.mxu0 0.0
  %561 = vmatpush2.msra.mxu0 0.0
  %562 = vmatprep.subr.mxu0 0.0
  %563 = vmatpush2.msra.mxu0 0.0
  %564 = vmatprep.subr.mxu0 0.0
  %565 = vmatpush2.msra.mxu0 0.0
  %566 = vmatprep.subr.mxu0 0.0
  %567 = vmatpush2.msra.mxu0 0.0
  %568 = vmatprep.subr.mxu0 0.0
  %569 = vmatpush2.msra.mxu0 0.0
  %570 = vmatprep.subr.mxu0 0.0
  %571 = vmatpush2.msra.mxu0 0.0
  %572 = vmatprep.subr.mxu0 0.0
  %573 = vmatpush2.msra.mxu0 0.0
  %574 = vmatprep.subr.mxu0 0.0
  %575 = vmatpush2.msra.mxu0 0.0
  %576 = vmatprep.subr.mxu0 0.0
  %577 = vmatpush2.msra.mxu0 0.0
  %578 = vmatprep.subr.mxu0 0.0
  %579 = vmatpush2.msra.mxu0 0.0
  %580 = vmatprep.subr.mxu0 0.0
  %581 = vmatpush2.msra.mxu0 0.0
  %582 = vmatprep.subr.mxu0 0.0
  %583 = vmatpush2.msra.mxu0 0.0
  %584 = vmatprep.subr.mxu0 0.0
  %585 = vmatpush2.msra.mxu0 0.0
  %586 = vmatprep.subr.mxu0 0.0
  %587 = vmatpush2.msra.mxu0 0.0
  %588 = vmatprep.subr.mxu0 0.0
  %589 = vmatpush2.msra.mxu0 0.0
  %590 = vmatprep.subr.mxu0 0.0
  %591 = vmatpush2.msra.mxu0 0.0
  %592 = vmatprep.mubr.f32.mxu0 0.0
  %593 = vmatmul.mubr.f32.gmra.mxu0 %v411
  %v594 = vpop.f32.mrf.mxu0
  %v595 = vadd.f32 %v374, %v594
  %v596 = vpop.f32.mrf.mxu0
  %v597 = vadd.f32 %v375, %v596
  %598 = vdwg.mxu0
  %v601 = vrot.slane %v595, 4
  %v602 = vrot.slane %v597, 4
  %v605 = vsel %vm400, %v486, %v601
  %v606 = vsel %vm400, %v488, %v602
  %v607 = vadd.f32 %v605, %v606
  %608 = vadd.xlane.f32.xlu0 %v607
  %v609 = vpop.xlane.xlu0 %608
  %v610 = vmul.f32 %v609, %v74
  %v611 = vsub.f32 %v605, %v610
  %v612 = vsub.f32 %v606, %v610
  %v613 = vmul.f32 %v611, %v611
  %v614 = vmul.f32 %v612, %v612
  %v615 = vadd.f32 %v613, %v614
  %616 = vadd.xlane.f32.xlu0 %v615
  %v617 = vpop.xlane.xlu0 %616
  %v618 = vmul.f32 %v617, %v74
  %v619 = vadd.f32 %v618, 1e-05
  %v620 = vrsqrt.pop %v619
  %v621 = vmul.f32 %v611, %v620
  %v622 = vmul.f32 %v612, %v620
  %624 = vset.pattern.permute.xlu0 0
  %625 = vperm.xlu0 %624, %v64
  %v626 = vpop.permute.xlu0 %625
  %v628 = vmul.f32 %v621, %v626
  %v629 = vmul.f32 %v622, %v626
  %631 = vset.pattern.permute.xlu0 0
  %632 = vperm.xlu0 %631, %v65
  %v633 = vpop.permute.xlu0 %632
  %v635 = vadd.f32 %v628, %v633
  %v636 = vadd.f32 %v629, %v633
  %v637 = vmax.f32 %v635, 0.0
  %v638 = vmax.f32 %v636, 0.0
  %640 = vrot.lane.b32.xlu0 %v638, 17
  %v641 = vpop.permute.xlu0 %640
  %644 = vrot.lane.b32.xlu0 %v637, 17
  %v645 = vpop.permute.xlu0 %644
  %v646 = vsel %vm111, %v645, %v641
  %v649 = vsel %vm111, %v641, %v645
  %v650 = vmul.f32 %v119, %v649
  %v651 = vmul.f32 %v123, %v646
  %652 = vrot.lane.b32.xlu0 %v638, 16
  %v653 = vpop.permute.xlu0 %652
  %655 = vrot.lane.b32.xlu0 %v637, 16
  %v656 = vpop.permute.xlu0 %655
  %v657 = vsel %vm131, %v656, %v653
  %v660 = vsel %vm131, %v653, %v656
  %v661 = vmul.f32 %v139, %v660
  %v662 = vmul.f32 %v143, %v657
  %663 = vrot.lane.b32.xlu0 %v638, 15
  %v664 = vpop.permute.xlu0 %663
  %666 = vrot.lane.b32.xlu0 %v637, 15
  %v667 = vpop.permute.xlu0 %666
  %v668 = vsel %vm151, %v667, %v664
  %v671 = vsel %vm151, %v664, %v667
  %v672 = vmul.f32 %v159, %v671
  %v673 = vmul.f32 %v163, %v668
  %674 = vrot.lane.b32.xlu0 %v638, 1
  %v675 = vpop.permute.xlu0 %674
  %677 = vrot.lane.b32.xlu0 %v637, 1
  %v678 = vpop.permute.xlu0 %677
  %v679 = vsel %vm171, %v678, %v675
  %v682 = vsel %vm171, %v675, %v678
  %v683 = vmul.f32 %v179, %v682
  %v684 = vmul.f32 %v183, %v679
  %v685 = vmul.f32 %v189, %v637
  %v686 = vmul.f32 %v193, %v638
  %687 = vrot.lane.b32.xlu0 %v637, 127
  %v688 = vpop.permute.xlu0 %687
  %689 = vrot.lane.b32.xlu0 %v638, 127
  %v690 = vpop.permute.xlu0 %689
  %v691 = vsel %vm200, %v688, %v690
  %v695 = vsel %vm200, %v690, %v688
  %v696 = vmul.f32 %v209, %v691
  %v697 = vmul.f32 %v213, %v695
  %698 = vrot.lane.b32.xlu0 %v637, 113
  %v699 = vpop.permute.xlu0 %698
  %700 = vrot.lane.b32.xlu0 %v638, 113
  %v701 = vpop.permute.xlu0 %700
  %v702 = vsel %vm220, %v699, %v701
  %v706 = vsel %vm220, %v701, %v699
  %v707 = vmul.f32 %v229, %v702
  %v708 = vmul.f32 %v233, %v706
  %709 = vrot.lane.b32.xlu0 %v637, 112
  %v710 = vpop.permute.xlu0 %709
  %711 = vrot.lane.b32.xlu0 %v638, 112
  %v712 = vpop.permute.xlu0 %711
  %v713 = vsel %vm240, %v710, %v712
  %v717 = vsel %vm240, %v712, %v710
  %v718 = vmul.f32 %v249, %v713
  %v719 = vmul.f32 %v253, %v717
  %720 = vrot.lane.b32.xlu0 %v637, 111
  %v721 = vpop.permute.xlu0 %720
  %722 = vrot.lane.b32.xlu0 %v638, 111
  %v723 = vpop.permute.xlu0 %722
  %v724 = vsel %vm260, %v721, %v723
  %v728 = vsel %vm260, %v723, %v721
  %v729 = vmul.f32 %v269, %v724
  %v730 = vmul.f32 %v273, %v728
  %v732 = vsel %vm276, %v67, 0
  %734 = vmatprep.subr.mxu0 0.0
  %735 = vmatpush1.msra.mxu0 0.0
  %736 = vmatprep.subr.mxu0 0.0
  %737 = vmatpush1.msra.mxu0 0.0
  %738 = vmatprep.subr.mxu0 0.0
  %739 = vmatpush1.msra.mxu0 0.0
  %740 = vmatprep.subr.mxu0 0.0
  %741 = vmatpush1.msra.mxu0 0.0
  %742 = vmatprep.subr.mxu0 0.0
  %743 = vmatpush1.msra.mxu0 0.0
  %744 = vmatprep.subr.mxu0 0.0
  %745 = vmatpush1.msra.mxu0 0.0
  %746 = vmatprep.subr.mxu0 0.0
  %747 = vmatpush1.msra.mxu0 0.0
  %748 = vmatprep.subr.mxu0 0.0
  %749 = vmatpush1.msra.mxu0 0.0
  %750 = vmatprep.subr.mxu0 0.0
  %751 = vmatpush1.msra.mxu0 0.0
  %752 = vmatprep.subr.mxu0 0.0
  %753 = vmatpush1.msra.mxu0 0.0
  %754 = vmatprep.subr.mxu0 0.0
  %755 = vmatpush1.msra.mxu0 0.0
  %756 = vmatprep.subr.mxu0 0.0
  %757 = vmatpush1.msra.mxu0 0.0
  %758 = vmatprep.subr.mxu0 0.0
  %759 = vmatpush1.msra.mxu0 0.0
  %760 = vmatprep.subr.mxu0 0.0
  %761 = vmatpush1.msra.mxu0 0.0
  %762 = vmatprep.subr.mxu0 %v285
  %763 = vmatpush1.msra.mxu0 %v282
  %764 = vmatprep.subr.mxu0 %v56
  %765 = vmatpush1.msra.mxu0 %v55
  %766 = vmatprep.subr.mxu0 0.0
  %767 = vmatpush2.msra.mxu0 0.0
  %768 = vmatprep.subr.mxu0 0.0
  %769 = vmatpush2.msra.mxu0 0.0
  %770 = vmatprep.subr.mxu0 0.0
  %771 = vmatpush2.msra.mxu0 0.0
  %772 = vmatprep.subr.mxu0 0.0
  %773 = vmatpush2.msra.mxu0 0.0
  %774 = vmatprep.subr.mxu0 0.0
  %775 = vmatpush2.msra.mxu0 0.0
  %776 = vmatprep.subr.mxu0 0.0
  %777 = vmatpush2.msra.mxu0 0.0
  %778 = vmatprep.subr.mxu0 0.0
  %779 = vmatpush2.msra.mxu0 0.0
  %780 = vmatprep.subr.mxu0 0.0
  %781 = vmatpush2.msra.mxu0 0.0
  %782 = vmatprep.subr.mxu0 0.0
  %783 = vmatpush2.msra.mxu0 0.0
  %784 = vmatprep.subr.mxu0 0.0
  %785 = vmatpush2.msra.mxu0 0.0
  %786 = vmatprep.subr.mxu0 0.0
  %787 = vmatpush2.msra.mxu0 0.0
  %788 = vmatprep.subr.mxu0 0.0
  %789 = vmatpush2.msra.mxu0 0.0
  %790 = vmatprep.subr.mxu0 0.0
  %791 = vmatpush2.msra.mxu0 0.0
  %792 = vmatprep.subr.mxu0 0.0
  %793 = vmatpush2.msra.mxu0 0.0
  %794 = vmatprep.subr.mxu0 0.0
  %795 = vmatpush2.msra.mxu0 0.0
  %796 = vmatprep.subr.mxu0 0.0
  %797 = vmatpush2.msra.mxu0 0.0
  %798 = vmatprep.mubr.f32.mxu0 0.0
  %799 = vmatmul.mubr.f32.gmra.mxu0 %v732
  %v800 = vpop.f32.mrf.mxu0
  %v801 = vadd.f32 0.0, %v800
  %v802 = vpop.f32.mrf.mxu0
  %v803 = vadd.f32 0.0, %v802
  %804 = vdwg.mxu0
  %v805 = vmul.f32 %v365, %v801
  %v806 = vmul.f32 %v365, %v803
  %808 = vset.pattern.permute.xlu0 0
  %809 = vperm.xlu0 %808, %v68
  %v810 = vpop.permute.xlu0 %809
  %v812 = vadd.f32 %v805, %v810
  %v813 = vadd.f32 %v806, %v810
  %v816 = vrot.slane %v661, 4
  %v817 = vrot.slane %v662, 4
  %v822 = vrot.slane %v683, 4
  %v823 = vrot.slane %v684, 4
  %v828 = vrot.slane %v696, 4
  %v829 = vrot.slane %v697, 4
  %v834 = vrot.slane %v718, 4
  %v835 = vrot.slane %v719, 4
  %v838 = vsel %vm400, %v650, %v816
  %v839 = vsel %vm400, %v651, %v817
  %v840 = vsel %vm400, %v672, %v822
  %v841 = vsel %vm400, %v673, %v823
  %v842 = vsel %vm400, %v685, %v828
  %v843 = vsel %vm400, %v686, %v829
  %v844 = vsel %vm400, %v707, %v834
  %v845 = vsel %vm400, %v708, %v835
  %v847 = vsel %vm409, %v66, 0
  %v850 = vsel %vm400, %v729, 0
  %v853 = vsel %vm400, %v730, 0
  %855 = vmatprep.subr.mxu0 0.0
  %856 = vmatpush1.msra.mxu0 0.0
  %857 = vmatprep.subr.mxu0 0.0
  %858 = vmatpush1.msra.mxu0 0.0
  %859 = vmatprep.subr.mxu0 0.0
  %860 = vmatpush1.msra.mxu0 0.0
  %861 = vmatprep.subr.mxu0 0.0
  %862 = vmatpush1.msra.mxu0 0.0
  %863 = vmatprep.subr.mxu0 0.0
  %864 = vmatpush1.msra.mxu0 0.0
  %865 = vmatprep.subr.mxu0 0.0
  %866 = vmatpush1.msra.mxu0 0.0
  %867 = vmatprep.subr.mxu0 0.0
  %868 = vmatpush1.msra.mxu0 0.0
  %869 = vmatprep.subr.mxu0 0.0
  %870 = vmatpush1.msra.mxu0 0.0
  %871 = vmatprep.subr.mxu0 0.0
  %872 = vmatpush1.msra.mxu0 0.0
  %873 = vmatprep.subr.mxu0 0.0
  %874 = vmatpush1.msra.mxu0 0.0
  %875 = vmatprep.subr.mxu0 0.0
  %876 = vmatpush1.msra.mxu0 0.0
  %877 = vmatprep.subr.mxu0 %v853
  %878 = vmatpush1.msra.mxu0 %v850
  %879 = vmatprep.subr.mxu0 %v845
  %880 = vmatpush1.msra.mxu0 %v844
  %881 = vmatprep.subr.mxu0 %v843
  %882 = vmatpush1.msra.mxu0 %v842
  %883 = vmatprep.subr.mxu0 %v841
  %884 = vmatpush1.msra.mxu0 %v840
  %885 = vmatprep.subr.mxu0 %v839
  %886 = vmatpush1.msra.mxu0 %v838
  %887 = vmatprep.subr.mxu0 0.0
  %888 = vmatpush2.msra.mxu0 0.0
  %889 = vmatprep.subr.mxu0 0.0
  %890 = vmatpush2.msra.mxu0 0.0
  %891 = vmatprep.subr.mxu0 0.0
  %892 = vmatpush2.msra.mxu0 0.0
  %893 = vmatprep.subr.mxu0 0.0
  %894 = vmatpush2.msra.mxu0 0.0
  %895 = vmatprep.subr.mxu0 0.0
  %896 = vmatpush2.msra.mxu0 0.0
  %897 = vmatprep.subr.mxu0 0.0
  %898 = vmatpush2.msra.mxu0 0.0
  %899 = vmatprep.subr.mxu0 0.0
  %900 = vmatpush2.msra.mxu0 0.0
  %901 = vmatprep.subr.mxu0 0.0
  %902 = vmatpush2.msra.mxu0 0.0
  %903 = vmatprep.subr.mxu0 0.0
  %904 = vmatpush2.msra.mxu0 0.0
  %905 = vmatprep.subr.mxu0 0.0
  %906 = vmatpush2.msra.mxu0 0.0
  %907 = vmatprep.subr.mxu0 0.0
  %908 = vmatpush2.msra.mxu0 0.0
  %909 = vmatprep.subr.mxu0 0.0
  %910 = vmatpush2.msra.mxu0 0.0
  %911 = vmatprep.subr.mxu0 0.0
  %912 = vmatpush2.msra.mxu0 0.0
  %913 = vmatprep.subr.mxu0 0.0
  %914 = vmatpush2.msra.mxu0 0.0
  %915 = vmatprep.subr.mxu0 0.0
  %916 = vmatpush2.msra.mxu0 0.0
  %917 = vmatprep.subr.mxu0 0.0
  %918 = vmatpush2.msra.mxu0 0.0
  %919 = vmatprep.mubr.f32.mxu0 0.0
  %920 = vmatmul.mubr.f32.gmra.mxu0 %v847
  %v921 = vpop.f32.mrf.mxu0
  %v922 = vadd.f32 %v812, %v921
  %v923 = vpop.f32.mrf.mxu0
  %v924 = vadd.f32 %v813, %v923
  %925 = vdwg.mxu0
  %v928 = vrot.slane %v650, 4
  %v929 = vrot.slane %v651, 4
  %v934 = vrot.slane %v672, 4
  %v935 = vrot.slane %v673, 4
  %v940 = vrot.slane %v685, 4
  %v941 = vrot.slane %v686, 4
  %v946 = vrot.slane %v707, 4
  %v947 = vrot.slane %v708, 4
  %v950 = vrot.slane %v729, 4
  %v951 = vrot.slane %v730, 4
  %v952 = vsel %vm400, %v928, %v661
  %v953 = vsel %vm400, %v929, %v662
  %v954 = vsel %vm400, %v934, %v683
  %v955 = vsel %vm400, %v935, %v684
  %v956 = vsel %vm400, %v940, %v696
  %v957 = vsel %vm400, %v941, %v697
  %v958 = vsel %vm400, %v946, %v718
  %v959 = vsel %vm400, %v947, %v719
  %v960 = vsel %vm400, %v950, 0
  %v962 = vsel %vm400, %v951, 0
  %964 = vmatprep.subr.mxu0 0.0
  %965 = vmatpush1.msra.mxu0 0.0
  %966 = vmatprep.subr.mxu0 0.0
  %967 = vmatpush1.msra.mxu0 0.0
  %968 = vmatprep.subr.mxu0 0.0
  %969 = vmatpush1.msra.mxu0 0.0
  %970 = vmatprep.subr.mxu0 0.0
  %971 = vmatpush1.msra.mxu0 0.0
  %972 = vmatprep.subr.mxu0 0.0
  %973 = vmatpush1.msra.mxu0 0.0
  %974 = vmatprep.subr.mxu0 0.0
  %975 = vmatpush1.msra.mxu0 0.0
  %976 = vmatprep.subr.mxu0 0.0
  %977 = vmatpush1.msra.mxu0 0.0
  %978 = vmatprep.subr.mxu0 0.0
  %979 = vmatpush1.msra.mxu0 0.0
  %980 = vmatprep.subr.mxu0 0.0
  %981 = vmatpush1.msra.mxu0 0.0
  %982 = vmatprep.subr.mxu0 0.0
  %983 = vmatpush1.msra.mxu0 0.0
  %984 = vmatprep.subr.mxu0 0.0
  %985 = vmatpush1.msra.mxu0 0.0
  %986 = vmatprep.subr.mxu0 %v962
  %987 = vmatpush1.msra.mxu0 %v960
  %988 = vmatprep.subr.mxu0 %v959
  %989 = vmatpush1.msra.mxu0 %v958
  %990 = vmatprep.subr.mxu0 %v957
  %991 = vmatpush1.msra.mxu0 %v956
  %992 = vmatprep.subr.mxu0 %v955
  %993 = vmatpush1.msra.mxu0 %v954
  %994 = vmatprep.subr.mxu0 %v953
  %995 = vmatpush1.msra.mxu0 %v952
  %996 = vmatprep.subr.mxu0 0.0
  %997 = vmatpush2.msra.mxu0 0.0
  %998 = vmatprep.subr.mxu0 0.0
  %999 = vmatpush2.msra.mxu0 0.0
  %1000 = vmatprep.subr.mxu0 0.0
  %1001 = vmatpush2.msra.mxu0 0.0
  %1002 = vmatprep.subr.mxu0 0.0
  %1003 = vmatpush2.msra.mxu0 0.0
  %1004 = vmatprep.subr.mxu0 0.0
  %1005 = vmatpush2.msra.mxu0 0.0
  %1006 = vmatprep.subr.mxu0 0.0
  %1007 = vmatpush2.msra.mxu0 0.0
  %1008 = vmatprep.subr.mxu0 0.0
  %1009 = vmatpush2.msra.mxu0 0.0
  %1010 = vmatprep.subr.mxu0 0.0
  %1011 = vmatpush2.msra.mxu0 0.0
  %1012 = vmatprep.subr.mxu0 0.0
  %1013 = vmatpush2.msra.mxu0 0.0
  %1014 = vmatprep.subr.mxu0 0.0
  %1015 = vmatpush2.msra.mxu0 0.0
  %1016 = vmatprep.subr.mxu0 0.0
  %1017 = vmatpush2.msra.mxu0 0.0
  %1018 = vmatprep.subr.mxu0 0.0
  %1019 = vmatpush2.msra.mxu0 0.0
  %1020 = vmatprep.subr.mxu0 0.0
  %1021 = vmatpush2.msra.mxu0 0.0
  %1022 = vmatprep.subr.mxu0 0.0
  %1023 = vmatpush2.msra.mxu0 0.0
  %1024 = vmatprep.subr.mxu0 0.0
  %1025 = vmatpush2.msra.mxu0 0.0
  %1026 = vmatprep.subr.mxu0 0.0
  %1027 = vmatpush2.msra.mxu0 0.0
  %1028 = vmatprep.mubr.f32.mxu0 0.0
  %1029 = vmatmul.mubr.f32.gmra.mxu0 %v847
  %v1030 = vpop.f32.mrf.mxu0
  %v1031 = vadd.f32 %v812, %v1030
  %v1032 = vpop.f32.mrf.mxu0
  %v1033 = vadd.f32 %v813, %v1032
  %1034 = vdwg.mxu0
  %v1037 = vrot.slane %v1031, 4
  %v1038 = vrot.slane %v1033, 4
  %v1041 = vsel %vm400, %v922, %v1037
  %v1042 = vsel %vm400, %v924, %v1038
  %v1043 = vadd.f32 %v1041, %v1042
  %1044 = vadd.xlane.f32.xlu0 %v1043
  %v1045 = vpop.xlane.xlu0 %1044
  %v1046 = vmul.f32 %v1045, %v74
  %v1047 = vsub.f32 %v1041, %v1046
  %v1048 = vsub.f32 %v1042, %v1046
  %v1049 = vmul.f32 %v1047, %v1047
  %v1050 = vmul.f32 %v1048, %v1048
  %v1051 = vadd.f32 %v1049, %v1050
  %1052 = vadd.xlane.f32.xlu0 %v1051
  %v1053 = vpop.xlane.xlu0 %1052
  %v1054 = vmul.f32 %v1053, %v74
  %v1055 = vadd.f32 %v1054, 1e-05
  %v1056 = vrsqrt.pop %v1055
  %v1057 = vmul.f32 %v1047, %v1056
  %v1058 = vmul.f32 %v1048, %v1056
  %1060 = vset.pattern.permute.xlu0 0
  %1061 = vperm.xlu0 %1060, %v69
  %v1062 = vpop.permute.xlu0 %1061
  %v1064 = vmul.f32 %v1057, %v1062
  %v1065 = vmul.f32 %v1058, %v1062
  %1067 = vset.pattern.permute.xlu0 0
  %1068 = vperm.xlu0 %1067, %v70
  %v1069 = vpop.permute.xlu0 %1068
  %v1071 = vadd.f32 %v1064, %v1069
  %v1072 = vadd.f32 %v1065, %v1069
  %1073 = vst [vmem:[%s15] sm:$0xff] %v1071
  %1074 = vst [vmem:[%s15 + $0x8] sm:$0xff] %v1072
  // Predicated region
  $region62: #{ode_block_forward.1} parent=0 // pred_check
    _
  $region63: #{ode_block_forward.1} parent=0 // pred_check_branch
    %1076 = sbr.rel (0) target = $region65
  $region64: #{ode_block_forward.1} parent=0 // pred_region
    _
  $region65: #{ode_block_forward.1} parent=0 // pred_fallthru
    _
  // Predicated region
  $region66: #{ode_block_forward.1} parent=0 // pred_check
    _
  $region67: #{ode_block_forward.1} parent=0 // pred_check_branch
    %1078 = sbr.rel (0) target = $region69
  $region68: #{ode_block_forward.1} parent=0 // pred_region
    _
  $region69: #{ode_block_forward.1} parent=0 // pred_fallthru
    _

// kernel: body.3
$region0: #{body.3}
  #allocation0 [shape = 'u32[]', space=smem, size = 0x4, offset = 0x4, fixed_abs, tag = 'smem constant byte address 0x4 - core index']
  #allocation1 [shape = 'u32[144,128]{1,0:T(1,128)}', space=vmem, size = 0x12000, scoped, tag = 'internal scratch']
  #allocation2 [shape = 'f32[1,1]{1,0:T(1,128)S(1)}', space=vmem, size = 0x200, scoped, tag = 'scoped memory for body.3']
  #allocation3 [shape = 'f32[1,1]{1,0:T(1,128)S(1)}', space=vmem, size = 0x200, scoped, tag = 'scoped memory for body.3']
  %s0 = inlined_call_operand.<no memory space> [shape: f32[1,1], index: 0, kind: input, shape index: {}]
  %s1 = inlined_call_operand.<no memory space> [shape: f32[1,1], index: 1, kind: input, shape index: {}]
  %s2 = inlined_call_operand.vmem [shape: f32[8,256], index: 2, kind: input, shape index: {}]
  %s3 = inlined_call_operand.vmem [shape: f32[8,256], index: 3, kind: input, shape index: {}]
  %s4 = inlined_call_operand.vmem [shape: f32[9,256], index: 4, kind: input, shape index: {}]
  %s5 = inlined_call_operand.vmem [shape: f32[8,1], index: 5, kind: input, shape index: {}]
  %s6 = inlined_call_operand.vmem [shape: f32[8,1], index: 6, kind: input, shape index: {}]
  %s7 = inlined_call_operand.vmem [shape: f32[4,36], index: 7, kind: input, shape index: {}]
  %s8 = inlined_call_operand.vmem [shape: f32[4,9], index: 8, kind: input, shape index: {}]
  %s9 = inlined_call_operand.vmem [shape: f32[4,1], index: 9, kind: input, shape index: {}]
  %s10 = inlined_call_operand.vmem [shape: f32[8,1], index: 10, kind: input, shape index: {}]
  %s11 = inlined_call_operand.vmem [shape: f32[8,1], index: 11, kind: input, shape index: {}]
  %s12 = inlined_call_operand.vmem [shape: f32[4,36], index: 12, kind: input, shape index: {}]
  %s13 = inlined_call_operand.vmem [shape: f32[4,9], index: 13, kind: input, shape index: {}]
  %s14 = inlined_call_operand.vmem [shape: f32[4,1], index: 14, kind: input, shape index: {}]
  %s15 = inlined_call_operand.vmem [shape: f32[8,1], index: 15, kind: input, shape index: {}]
  %s16 = inlined_call_operand.vmem [shape: f32[8,1], index: 16, kind: input, shape index: {}]
  %s17 = inlined_call_operand.vmem [shape: f32[8,256], index: 17, kind: output, shape index: {0}]
  %s18 = inlined_call_operand.vmem [shape: f32[8,256], index: 18, kind: output, shape index: {1}]
  %s19 = inlined_call_operand.hbm [shape: f32[1,1], index: 19, kind: output, shape index: {2}]
  %s20 = inlined_call_operand.hbm [shape: f32[1,1], index: 20, kind: output, shape index: {3}]
  %21 = xla_tuple %s17, %s18, %s19, %s20
  %s22 = sld [smem:[#allocation0]]
  $region102: #{body.3} parent=0
    _
  %s24 = ssub.s32 1, %s22
  %s25 = scalar_select 0, %s24, %s22
  %v26 = vstv %s0
  %27 = vst [vmem:[#allocation2] sm:$0x1] %v26
  %v28 = vstv %s1
  %29 = vst [vmem:[#allocation3] sm:$0x1] %v28
  $region1: #{body.3} parent=0
    #allocation4 [shape = 'u8[512]{0}', space=vmem, size = 0x400, scoped, tag = 'output window, operand 2, single buffered']
    #allocation5 [shape = 's32[1]{0}', space=sflag, size = 0x4, scoped, tag = 'scoped memory for body.3']
    #allocation6 [shape = 'u8[512]{0}', space=vmem, size = 0x400, scoped, tag = 'output window, operand 3, single buffered']
    #allocation7 [shape = 's32[1]{0}', space=sflag, size = 0x4, scoped, tag = 'scoped memory for body.3']
    %30 = vsyncpa [#allocation5], 0
    %31 = vsyncpa [#allocation7], 0
    // Predicated region
    $region2: #{body.3} parent=1 // pred_check
      _
    $region3: #{body.3} parent=1 // pred_check_branch
      %33 = sbr.rel (0) target = $region5
    $region4: #{body.3} parent=1 // pred_region
      _
    $region5: #{body.3} parent=1 // pred_fallthru
      _
    // Predicated region
    $region6: #{body.3} parent=1 // pred_check
      _
    $region7: #{body.3} parent=1 // pred_check_branch
      %35 = sbr.rel (0) target = $region9
    $region8: #{body.3} parent=1 // pred_region
      _
    $region9: #{body.3} parent=1 // pred_fallthru
      _
    // Predicated region
    $region10: #{body.3} parent=1 // pred_check
      _
    $region11: #{body.3} parent=1 // pred_check_branch
      %37 = sbr.rel (0) target = $region13
    $region12: #{body.3} parent=1 // pred_region
      _
    $region13: #{body.3} parent=1 // pred_fallthru
      _
    // Predicated region
    $region14: #{body.3} parent=1 // pred_check
      _
    $region15: #{body.3} parent=1 // pred_check_branch
      %39 = sbr.rel (0) target = $region17
    $region16: #{body.3} parent=1 // pred_region
      _
    $region17: #{body.3} parent=1 // pred_fallthru
      _
    // Predicated region
    $region18: #{body.3} parent=1 // pred_check
      _
    $region19: #{body.3} parent=1 // pred_check_branch
      %41 = sbr.rel (0) target = $region21
    $region20: #{body.3} parent=1 // pred_region
      _
    $region21: #{body.3} parent=1 // pred_fallthru
      _
    // Predicated region
    $region22: #{body.3} parent=1 // pred_check
      _
    $region23: #{body.3} parent=1 // pred_check_branch
      %43 = sbr.rel (0) target = $region25
    $region24: #{body.3} parent=1 // pred_region
      _
    $region25: #{body.3} parent=1 // pred_fallthru
      _
    // Predicated region
    $region26: #{body.3} parent=1 // pred_check
      _
    $region27: #{body.3} parent=1 // pred_check_branch
      %45 = sbr.rel (0) target = $region29
    $region28: #{body.3} parent=1 // pred_region
      _
    $region29: #{body.3} parent=1 // pred_fallthru
      _
    // Predicated region
    $region30: #{body.3} parent=1 // pred_check
      _
    $region31: #{body.3} parent=1 // pred_check_branch
      %47 = sbr.rel (0) target = $region33
    $region32: #{body.3} parent=1 // pred_region
      _
    $region33: #{body.3} parent=1 // pred_fallthru
      _
    // Predicated region
    $region34: #{body.3} parent=1 // pred_check
      _
    $region35: #{body.3} parent=1 // pred_check_branch
      %49 = sbr.rel (0) target = $region37
    $region36: #{body.3} parent=1 // pred_region
      _
    $region37: #{body.3} parent=1 // pred_fallthru
      _
    // Predicated region
    $region38: #{body.3} parent=1 // pred_check
      _
    $region39: #{body.3} parent=1 // pred_check_branch
      %51 = sbr.rel (0) target = $region41
    $region40: #{body.3} parent=1 // pred_region
      _
    $region41: #{body.3} parent=1 // pred_fallthru
      _
    // Predicated region
    $region42: #{body.3} parent=1 // pred_check
      _
    $region43: #{body.3} parent=1 // pred_check_branch
      %53 = sbr.rel (0) target = $region45
    $region44: #{body.3} parent=1 // pred_region
      _
    $region45: #{body.3} parent=1 // pred_fallthru
      _
    // Predicated region
    $region46: #{body.3} parent=1 // pred_check
      _
    $region47: #{body.3} parent=1 // pred_check_branch
      %55 = sbr.rel (0) target = $region49
    $region48: #{body.3} parent=1 // pred_region
      _
    $region49: #{body.3} parent=1 // pred_fallthru
      _
    // Predicated region
    $region50: #{body.3} parent=1 // pred_check
      _
    $region51: #{body.3} parent=1 // pred_check_branch
      %57 = sbr.rel (0) target = $region53
    $region52: #{body.3} parent=1 // pred_region
      _
    $region53: #{body.3} parent=1 // pred_fallthru
      _
    // Predicated region
    $region54: #{body.3} parent=1 // pred_check
      _
    $region55: #{body.3} parent=1 // pred_check_branch
      %59 = sbr.rel (0) target = $region57
    $region56: #{body.3} parent=1 // pred_region
      _
    $region57: #{body.3} parent=1 // pred_fallthru
      _
    // Predicated region
    $region58: #{body.3} parent=1 // pred_check
      _
    $region59: #{body.3} parent=1 // pred_check_branch
      %61 = sbr.rel (0) target = $region61
    $region60: #{body.3} parent=1 // pred_region
      _
    $region61: #{body.3} parent=1 // pred_fallthru
      _
    // Predicated region
    $region62: #{body.3} parent=1 // pred_check
      _
    $region63: #{body.3} parent=1 // pred_check_branch
      %63 = sbr.rel (0) target = $region65
    $region64: #{body.3} parent=1 // pred_region
      _
    $region65: #{body.3} parent=1 // pred_fallthru
      _
    // Predicated region
    $region66: #{body.3} parent=1 // pred_check
      _
    $region67: #{body.3} parent=1 // pred_check_branch
      %65 = sbr.rel (0) target = $region69
    $region68: #{body.3} parent=1 // pred_region
      _
    $region69: #{body.3} parent=1 // pred_fallthru
      _
    %v66 = vld [vmem:[%s5] sm:$0xff]
    %v67 = vld [vmem:[%s6] sm:$0xff]
    %v68 = vld [vmem:[%s7] sm:$0xf]
    %v69 = vld [vmem:[%s8] sm:$0xf]
    %v70 = vld [vmem:[%s9] sm:$0xf]
    %v71 = vld [vmem:[%s10] sm:$0xff]
    %v72 = vld [vmem:[%s11] sm:$0xff]
    %v73 = vld [vmem:[%s12] sm:$0xf]
    %v74 = vld [vmem:[%s13] sm:$0xf]
    %v75 = vld [vmem:[%s14] sm:$0xf]
    %v76 = vld [vmem:[%s15] sm:$0xff]
    %v77 = vld [vmem:[%s16] sm:$0xff]
    %v78 = vld [vmem:[#allocation2] sm:$0x1]
    %v79 = vld [vmem:[#allocation3] sm:$0x1]
    %v80 = vsub.f32 1.0, %v78
    %v81 = vmin.f32 %v79, %v80
    %v82 = vld [vmem:[%s2] sm:$0xff]
    %v83 = vld [vmem:[%s2 + $0x8] sm:$0xff]
    %v84 = vld [vmem:[%s3] sm:$0xff]
    %v85 = vld [vmem:[%s3 + $0x8] sm:$0xff]
    %v86 = vld [vmem:[%s4] sm:$0xff]
    %v87 = vld [vmem:[%s4 + $0x8] sm:$0xff]
    %v88 = vld [vmem:[%s4 + $0x10] sm:$0x1]
    %v89 = vld [vmem:[%s4 + $0x18] sm:$0x1]
    %v90 = vmul.f32 %v81, 0.2
    %v91 = vadd.f32 %v78, %v90
    %v92 = vmul.f32 %v84, 0.2
    %v93 = vmul.f32 %v85, 0.2
    %v95 = vlaneseq
    %v96 = vshrl.u32 %v95, 7
    %v97 = vsub.s32 0, %v96
    %v98 = vrot.slane %v81, %v97
    %99 = vset.pattern.permute.xlu0 0
    %100 = vperm.xlu0 %99, %v98
    %v101 = vpop.permute.xlu0 %100
    %v103 = vmul.f32 %v101, %v92
    %v104 = vmul.f32 %v101, %v93
    %v105 = vadd.f32 %v82, %v103
    %v106 = vadd.f32 %v83, %v104
    %v107 = vadd.f32 %v105, %v106
    %108 = vadd.xlane.f32.xlu0 %v107
    %v109 = vpop.xlane.xlu0 %108
    %v110 = vrcp.pop 256.0
    %v111 = vmul.f32 %v109, %v110
    %v112 = vsub.f32 %v105, %v111
    %v113 = vsub.f32 %v106, %v111
    %v114 = vmul.f32 %v112, %v112
    %v115 = vmul.f32 %v113, %v113
    %v116 = vadd.f32 %v114, %v115
    %117 = vadd.xlane.f32.xlu0 %v116
    %v118 = vpop.xlane.xlu0 %117
    %v119 = vmul.f32 %v118, %v110
    %v120 = vadd.f32 %v119, 1e-05
    %v121 = vrsqrt.pop %v120
    %v122 = vmul.f32 %v112, %v121
    %v123 = vmul.f32 %v113, %v121
    %125 = vset.pattern.permute.xlu0 0
    %126 = vperm.xlu0 %125, %v66
    %v127 = vpop.permute.xlu0 %126
    %v129 = vmul.f32 %v122, %v127
    %v130 = vmul.f32 %v123, %v127
    %132 = vset.pattern.permute.xlu0 0
    %133 = vperm.xlu0 %132, %v67
    %v134 = vpop.permute.xlu0 %133
    %v136 = vadd.f32 %v129, %v134
    %v137 = vadd.f32 %v130, %v134
    %v138 = vmax.f32 %v136, 0.0
    %v139 = vmax.f32 %v137, 0.0
    %141 = vrot.lane.b32.xlu0 %v139, 17
    %v142 = vpop.permute.xlu0 %141
    %145 = vrot.lane.b32.xlu0 %v138, 17
    %v146 = vpop.permute.xlu0 %145
    %vm147 = vcmask 138240
    %v148 = vsel %vm147, %v146, %v142
    %v151 = vsel %vm147, %v142, %v146
    %v152 = vlaneseq
    %v153 = vshrl.u32 %v152, 7
    %v154 = vsub.s32 0, %v153
    %v155 = vrot.slane %v86, %v154
    %v156 = vlaneseq
    %v157 = vshrl.u32 %v156, 7
    %v158 = vsub.s32 0, %v157
    %v159 = vrot.slane %v87, %v158
    %v160 = vmul.f32 %v155, %v151
    %v161 = vmul.f32 %v159, %v148
    %162 = vrot.lane.b32.xlu0 %v139, 16
    %v163 = vpop.permute.xlu0 %162
    %165 = vrot.lane.b32.xlu0 %v138, 16
    %v166 = vpop.permute.xlu0 %165
    %vm167 = vcmask 130048
    %v168 = vsel %vm167, %v166, %v163
    %v171 = vsel %vm167, %v163, %v166
    %v172 = vlaneseq
    %v173 = vshrl.u32 %v172, 7
    %v174 = vsub.s32 1, %v173
    %v175 = vrot.slane %v86, %v174
    %v176 = vlaneseq
    %v177 = vshrl.u32 %v176, 7
    %v178 = vsub.s32 1, %v177
    %v179 = vrot.slane %v87, %v178
    %v180 = vmul.f32 %v175, %v171
    %v181 = vmul.f32 %v179, %v168
    %182 = vrot.lane.b32.xlu0 %v139, 15
    %v183 = vpop.permute.xlu0 %182
    %185 = vrot.lane.b32.xlu0 %v138, 15
    %v186 = vpop.permute.xlu0 %185
    %vm187 = vcmask 121856
    %v188 = vsel %vm187, %v186, %v183
    %v191 = vsel %vm187, %v183, %v186
    %v192 = vlaneseq
    %v193 = vshrl.u32 %v192, 7
    %v194 = vsub.s32 2, %v193
    %v195 = vrot.slane %v86, %v194
    %v196 = vlaneseq
    %v197 = vshrl.u32 %v196, 7
    %v198 = vsub.s32 2, %v197
    %v199 = vrot.slane %v87, %v198
    %v200 = vmul.f32 %v195, %v191
    %v201 = vmul.f32 %v199, %v188
    %202 = vrot.lane.b32.xlu0 %v139, 1
    %v203 = vpop.permute.xlu0 %202
    %205 = vrot.lane.b32.xlu0 %v138, 1
    %v206 = vpop.permute.xlu0 %205
    %vm207 = vcmask 7168
    %v208 = vsel %vm207, %v206, %v203
    %v211 = vsel %vm207, %v203, %v206
    %v212 = vlaneseq
    %v213 = vshrl.u32 %v212, 7
    %v214 = vsub.s32 3, %v213
    %v215 = vrot.slane %v86, %v214
    %v216 = vlaneseq
    %v217 = vshrl.u32 %v216, 7
    %v218 = vsub.s32 3, %v217
    %v219 = vrot.slane %v87, %v218
    %v220 = vmul.f32 %v215, %v211
    %v221 = vmul.f32 %v219, %v208
    %v222 = vlaneseq
    %v223 = vshrl.u32 %v222, 7
    %v224 = vsub.s32 4, %v223
    %v225 = vrot.slane %v86, %v224
    %v226 = vlaneseq
    %v227 = vshrl.u32 %v226, 7
    %v228 = vsub.s32 4, %v227
    %v229 = vrot.slane %v87, %v228
    %v230 = vmul.f32 %v225, %v138
    %v231 = vmul.f32 %v229, %v139
    %232 = vrot.lane.b32.xlu0 %v138, 127
    %v233 = vpop.permute.xlu0 %232
    %234 = vrot.lane.b32.xlu0 %v139, 127
    %v235 = vpop.permute.xlu0 %234
    %vm236 = vcmask 1039360
    %v237 = vsel %vm236, %v233, %v235
    %v241 = vsel %vm236, %v235, %v233
    %v242 = vlaneseq
    %v243 = vshrl.u32 %v242, 7
    %v244 = vsub.s32 5, %v243
    %v245 = vrot.slane %v86, %v244
    %v246 = vlaneseq
    %v247 = vshrl.u32 %v246, 7
    %v248 = vsub.s32 5, %v247
    %v249 = vrot.slane %v87, %v248
    %v250 = vmul.f32 %v245, %v237
    %v251 = vmul.f32 %v249, %v241
    %252 = vrot.lane.b32.xlu0 %v138, 113
    %v253 = vpop.permute.xlu0 %252
    %254 = vrot.lane.b32.xlu0 %v139, 113
    %v255 = vpop.permute.xlu0 %254
    %vm256 = vcmask 924672
    %v257 = vsel %vm256, %v253, %v255
    %v261 = vsel %vm256, %v255, %v253
    %v262 = vlaneseq
    %v263 = vshrl.u32 %v262, 7
    %v264 = vsub.s32 6, %v263
    %v265 = vrot.slane %v86, %v264
    %v266 = vlaneseq
    %v267 = vshrl.u32 %v266, 7
    %v268 = vsub.s32 6, %v267
    %v269 = vrot.slane %v87, %v268
    %v270 = vmul.f32 %v265, %v257
    %v271 = vmul.f32 %v269, %v261
    %272 = vrot.lane.b32.xlu0 %v138, 112
    %v273 = vpop.permute.xlu0 %272
    %274 = vrot.lane.b32.xlu0 %v139, 112
    %v275 = vpop.permute.xlu0 %274
    %vm276 = vcmask 916480
    %v277 = vsel %vm276, %v273, %v275
    %v281 = vsel %vm276, %v275, %v273
    %v282 = vlaneseq
    %v283 = vshrl.u32 %v282, 7
    %v284 = vsub.s32 7, %v283
    %v285 = vrot.slane %v86, %v284
    %v286 = vlaneseq
    %v287 = vshrl.u32 %v286, 7
    %v288 = vsub.s32 7, %v287
    %v289 = vrot.slane %v87, %v288
    %v290 = vmul.f32 %v285, %v277
    %v291 = vmul.f32 %v289, %v281
    %292 = vrot.lane.b32.xlu0 %v138, 111
    %v293 = vpop.permute.xlu0 %292
    %294 = vrot.lane.b32.xlu0 %v139, 111
    %v295 = vpop.permute.xlu0 %294
    %vm296 = vcmask 908288
    %v297 = vsel %vm296, %v293, %v295
    %v301 = vsel %vm296, %v295, %v293
    %v302 = vlaneseq
    %v303 = vshrl.u32 %v302, 7
    %v304 = vsub.s32 0, %v303
    %v305 = vrot.slane %v88, %v304
    %v306 = vlaneseq
    %v307 = vshrl.u32 %v306, 7
    %v308 = vsub.s32 0, %v307
    %v309 = vrot.slane %v89, %v308
    %v310 = vmul.f32 %v305, %v297
    %v311 = vmul.f32 %v309, %v301
    %vm312 = vcmask 72704
    %v314 = vsel %vm312, %v69, 0
    %vm316 = vcmask 1040384
    %v318 = vsel %vm316, %v88, 0
    %v321 = vsel %vm316, %v89, 0
    %323 = vmatprep.subr.mxu0 0.0
    %324 = vmatpush1.msra.mxu0 0.0
    %325 = vmatprep.subr.mxu0 0.0
    %326 = vmatpush1.msra.mxu0 0.0
    %327 = vmatprep.subr.mxu0 0.0
    %328 = vmatpush1.msra.mxu0 0.0
    %329 = vmatprep.subr.mxu0 0.0
    %330 = vmatpush1.msra.mxu0 0.0
    %331 = vmatprep.subr.mxu0 0.0
    %332 = vmatpush1.msra.mxu0 0.0
    %333 = vmatprep.subr.mxu0 0.0
    %334 = vmatpush1.msra.mxu0 0.0
    %335 = vmatprep.subr.mxu0 0.0
    %336 = vmatpush1.msra.mxu0 0.0
    %337 = vmatprep.subr.mxu0 0.0
    %338 = vmatpush1.msra.mxu0 0.0
    %339 = vmatprep.subr.mxu0 0.0
    %340 = vmatpush1.msra.mxu0 0.0
    %341 = vmatprep.subr.mxu0 0.0
    %342 = vmatpush1.msra.mxu0 0.0
    %343 = vmatprep.subr.mxu0 0.0
    %344 = vmatpush1.msra.mxu0 0.0
    %345 = vmatprep.subr.mxu0 0.0
    %346 = vmatpush1.msra.mxu0 0.0
    %347 = vmatprep.subr.mxu0 0.0
    %348 = vmatpush1.msra.mxu0 0.0
    %349 = vmatprep.subr.mxu0 0.0
    %350 = vmatpush1.msra.mxu0 0.0
    %351 = vmatprep.subr.mxu0 %v321
    %352 = vmatpush1.msra.mxu0 %v318
    %353 = vmatprep.subr.mxu0 %v87
    %354 = vmatpush1.msra.mxu0 %v86
    %355 = vmatprep.subr.mxu0 0.0
    %356 = vmatpush2.msra.mxu0 0.0
    %357 = vmatprep.subr.mxu0 0.0
    %358 = vmatpush2.msra.mxu0 0.0
    %359 = vmatprep.subr.mxu0 0.0
    %360 = vmatpush2.msra.mxu0 0.0
    %361 = vmatprep.subr.mxu0 0.0
    %362 = vmatpush2.msra.mxu0 0.0
    %363 = vmatprep.subr.mxu0 0.0
    %364 = vmatpush2.msra.mxu0 0.0
    %365 = vmatprep.subr.mxu0 0.0
    %366 = vmatpush2.msra.mxu0 0.0
    %367 = vmatprep.subr.mxu0 0.0
    %368 = vmatpush2.msra.mxu0 0.0
    %369 = vmatprep.subr.mxu0 0.0
    %370 = vmatpush2.msra.mxu0 0.0
    %371 = vmatprep.subr.mxu0 0.0
    %372 = vmatpush2.msra.mxu0 0.0
    %373 = vmatprep.subr.mxu0 0.0
    %374 = vmatpush2.msra.mxu0 0.0
    %375 = vmatprep.subr.mxu0 0.0
    %376 = vmatpush2.msra.mxu0 0.0
    %377 = vmatprep.subr.mxu0 0.0
    %378 = vmatpush2.msra.mxu0 0.0
    %379 = vmatprep.subr.mxu0 0.0
    %380 = vmatpush2.msra.mxu0 0.0
    %381 = vmatprep.subr.mxu0 0.0
    %382 = vmatpush2.msra.mxu0 0.0
    %383 = vmatprep.subr.mxu0 0.0
    %384 = vmatpush2.msra.mxu0 0.0
    %385 = vmatprep.subr.mxu0 0.0
    %386 = vmatpush2.msra.mxu0 0.0
    %387 = vmatprep.mubr.f32.mxu0 0.0
    %388 = vmatmul.mubr.f32.gmra.mxu0 %v314
    %v389 = vpop.f32.mrf.mxu0
    %v390 = vadd.f32 0.0, %v389
    %v391 = vpop.f32.mrf.mxu0
    %v392 = vadd.f32 0.0, %v391
    %393 = vdwg.mxu0
    %v395 = vlaneseq
    %v396 = vshrl.u32 %v395, 7
    %v397 = vsub.s32 0, %v396
    %v398 = vrot.slane %v91, %v397
    %399 = vset.pattern.permute.xlu0 0
    %400 = vperm.xlu0 %399, %v398
    %v401 = vpop.permute.xlu0 %400
    %v403 = vmul.f32 %v401, %v390
    %v404 = vmul.f32 %v401, %v392
    %406 = vset.pattern.permute.xlu0 0
    %407 = vperm.xlu0 %406, %v70
    %v408 = vpop.permute.xlu0 %407
    %v410 = vadd.f32 %v403, %v408
    %v411 = vadd.f32 %v404, %v408
    %v414 = vrot.slane %v180, 4
    %v415 = vrot.slane %v181, 4
    %v420 = vrot.slane %v220, 4
    %v421 = vrot.slane %v221, 4
    %v426 = vrot.slane %v250, 4
    %v427 = vrot.slane %v251, 4
    %v432 = vrot.slane %v290, 4
    %v433 = vrot.slane %v291, 4
    %vm436 = vcmask 1043456
    %v437 = vsel %vm436, %v160, %v414
    %v438 = vsel %vm436, %v161, %v415
    %v439 = vsel %vm436, %v200, %v420
    %v440 = vsel %vm436, %v201, %v421
    %v441 = vsel %vm436, %v230, %v426
    %v442 = vsel %vm436, %v231, %v427
    %v443 = vsel %vm436, %v270, %v432
    %v444 = vsel %vm436, %v271, %v433
    %vm445 = vcmask 293888
    %v447 = vsel %vm445, %v68, 0
    %v450 = vsel %vm436, %v310, 0
    %v453 = vsel %vm436, %v311, 0
    %455 = vmatprep.subr.mxu0 0.0
    %456 = vmatpush1.msra.mxu0 0.0
    %457 = vmatprep.subr.mxu0 0.0
    %458 = vmatpush1.msra.mxu0 0.0
    %459 = vmatprep.subr.mxu0 0.0
    %460 = vmatpush1.msra.mxu0 0.0
    %461 = vmatprep.subr.mxu0 0.0
    %462 = vmatpush1.msra.mxu0 0.0
    %463 = vmatprep.subr.mxu0 0.0
    %464 = vmatpush1.msra.mxu0 0.0
    %465 = vmatprep.subr.mxu0 0.0
    %466 = vmatpush1.msra.mxu0 0.0
    %467 = vmatprep.subr.mxu0 0.0
    %468 = vmatpush1.msra.mxu0 0.0
    %469 = vmatprep.subr.mxu0 0.0
    %470 = vmatpush1.msra.mxu0 0.0
    %471 = vmatprep.subr.mxu0 0.0
    %472 = vmatpush1.msra.mxu0 0.0
    %473 = vmatprep.subr.mxu0 0.0
    %474 = vmatpush1.msra.mxu0 0.0
    %475 = vmatprep.subr.mxu0 0.0
    %476 = vmatpush1.msra.mxu0 0.0
    %477 = vmatprep.subr.mxu0 %v453
    %478 = vmatpush1.msra.mxu0 %v450
    %479 = vmatprep.subr.mxu0 %v444
    %480 = vmatpush1.msra.mxu0 %v443
    %481 = vmatprep.subr.mxu0 %v442
    %482 = vmatpush1.msra.mxu0 %v441
    %483 = vmatprep.subr.mxu0 %v440
    %484 = vmatpush1.msra.mxu0 %v439
    %485 = vmatprep.subr.mxu0 %v438
    %486 = vmatpush1.msra.mxu0 %v437
    %487 = vmatprep.subr.mxu0 0.0
    %488 = vmatpush2.msra.mxu0 0.0
    %489 = vmatprep.subr.mxu0 0.0
    %490 = vmatpush2.msra.mxu0 0.0
    %491 = vmatprep.subr.mxu0 0.0
    %492 = vmatpush2.msra.mxu0 0.0
    %493 = vmatprep.subr.mxu0 0.0
    %494 = vmatpush2.msra.mxu0 0.0
    %495 = vmatprep.subr.mxu0 0.0
    %496 = vmatpush2.msra.mxu0 0.0
    %497 = vmatprep.subr.mxu0 0.0
    %498 = vmatpush2.msra.mxu0 0.0
    %499 = vmatprep.subr.mxu0 0.0
    %500 = vmatpush2.msra.mxu0 0.0
    %501 = vmatprep.subr.mxu0 0.0
    %502 = vmatpush2.msra.mxu0 0.0
    %503 = vmatprep.subr.mxu0 0.0
    %504 = vmatpush2.msra.mxu0 0.0
    %505 = vmatprep.subr.mxu0 0.0
    %506 = vmatpush2.msra.mxu0 0.0
    %507 = vmatprep.subr.mxu0 0.0
    %508 = vmatpush2.msra.mxu0 0.0
    %509 = vmatprep.subr.mxu0 0.0
    %510 = vmatpush2.msra.mxu0 0.0
    %511 = vmatprep.subr.mxu0 0.0
    %512 = vmatpush2.msra.mxu0 0.0
    %513 = vmatprep.subr.mxu0 0.0
    %514 = vmatpush2.msra.mxu0 0.0
    %515 = vmatprep.subr.mxu0 0.0
    %516 = vmatpush2.msra.mxu0 0.0
    %517 = vmatprep.subr.mxu0 0.0
    %518 = vmatpush2.msra.mxu0 0.0
    %519 = vmatprep.mubr.f32.mxu0 0.0
    %520 = vmatmul.mubr.f32.gmra.mxu0 %v447
    %v521 = vpop.f32.mrf.mxu0
    %v522 = vadd.f32 %v410, %v521
    %v523 = vpop.f32.mrf.mxu0
    %v524 = vadd.f32 %v411, %v523
    %525 = vdwg.mxu0
    %v528 = vrot.slane %v160, 4
    %v529 = vrot.slane %v161, 4
    %v534 = vrot.slane %v200, 4
    %v535 = vrot.slane %v201, 4
    %v540 = vrot.slane %v230, 4
    %v541 = vrot.slane %v231, 4
    %v546 = vrot.slane %v270, 4
    %v547 = vrot.slane %v271, 4
    %v550 = vrot.slane %v310, 4
    %v551 = vrot.slane %v311, 4
    %v552 = vsel %vm436, %v528, %v180
    %v553 = vsel %vm436, %v529, %v181
    %v554 = vsel %vm436, %v534, %v220
    %v555 = vsel %vm436, %v535, %v221
    %v556 = vsel %vm436, %v540, %v250
    %v557 = vsel %vm436, %v541, %v251
    %v558 = vsel %vm436, %v546, %v290
    %v559 = vsel %vm436, %v547, %v291
    %v560 = vsel %vm436, %v550, 0
    %v562 = vsel %vm436, %v551, 0
    %564 = vmatprep.subr.mxu0 0.0
    %565 = vmatpush1.msra.mxu0 0.0
    %566 = vmatprep.subr.mxu0 0.0
    %567 = vmatpush1.msra.mxu0 0.0
    %568 = vmatprep.subr.mxu0 0.0
    %569 = vmatpush1.msra.mxu0 0.0
    %570 = vmatprep.subr.mxu0 0.0
    %571 = vmatpush1.msra.mxu0 0.0
    %572 = vmatprep.subr.mxu0 0.0
    %573 = vmatpush1.msra.mxu0 0.0
    %574 = vmatprep.subr.mxu0 0.0
    %575 = vmatpush1.msra.mxu0 0.0
    %576 = vmatprep.subr.mxu0 0.0
    %577 = vmatpush1.msra.mxu0 0.0
    %578 = vmatprep.subr.mxu0 0.0
    %579 = vmatpush1.msra.mxu0 0.0
    %580 = vmatprep.subr.mxu0 0.0
    %581 = vmatpush1.msra.mxu0 0.0
    %582 = vmatprep.subr.mxu0 0.0
    %583 = vmatpush1.msra.mxu0 0.0
    %584 = vmatprep.subr.mxu0 0.0
    %585 = vmatpush1.msra.mxu0 0.0
    %586 = vmatprep.subr.mxu0 %v562
    %587 = vmatpush1.msra.mxu0 %v560
    %588 = vmatprep.subr.mxu0 %v559
    %589 = vmatpush1.msra.mxu0 %v558
    %590 = vmatprep.subr.mxu0 %v557
    %591 = vmatpush1.msra.mxu0 %v556
    %592 = vmatprep.subr.mxu0 %v555
    %593 = vmatpush1.msra.mxu0 %v554
    %594 = vmatprep.subr.mxu0 %v553
    %595 = vmatpush1.msra.mxu0 %v552
    %596 = vmatprep.subr.mxu0 0.0
    %597 = vmatpush2.msra.mxu0 0.0
    %598 = vmatprep.subr.mxu0 0.0
    %599 = vmatpush2.msra.mxu0 0.0
    %600 = vmatprep.subr.mxu0 0.0
    %601 = vmatpush2.msra.mxu0 0.0
    %602 = vmatprep.subr.mxu0 0.0
    %603 = vmatpush2.msra.mxu0 0.0
    %604 = vmatprep.subr.mxu0 0.0
    %605 = vmatpush2.msra.mxu0 0.0
    %606 = vmatprep.subr.mxu0 0.0
    %607 = vmatpush2.msra.mxu0 0.0
    %608 = vmatprep.subr.mxu0 0.0
    %609 = vmatpush2.msra.mxu0 0.0
    %610 = vmatprep.subr.mxu0 0.0
    %611 = vmatpush2.msra.mxu0 0.0
    %612 = vmatprep.subr.mxu0 0.0
    %613 = vmatpush2.msra.mxu0 0.0
    %614 = vmatprep.subr.mxu0 0.0
    %615 = vmatpush2.msra.mxu0 0.0
    %616 = vmatprep.subr.mxu0 0.0
    %617 = vmatpush2.msra.mxu0 0.0
    %618 = vmatprep.subr.mxu0 0.0
    %619 = vmatpush2.msra.mxu0 0.0
    %620 = vmatprep.subr.mxu0 0.0
    %621 = vmatpush2.msra.mxu0 0.0
    %622 = vmatprep.subr.mxu0 0.0
    %623 = vmatpush2.msra.mxu0 0.0
    %624 = vmatprep.subr.mxu0 0.0
    %625 = vmatpush2.msra.mxu0 0.0
    %626 = vmatprep.subr.mxu0 0.0
    %627 = vmatpush2.msra.mxu0 0.0
    %628 = vmatprep.mubr.f32.mxu0 0.0
    %629 = vmatmul.mubr.f32.gmra.mxu0 %v447
    %v630 = vpop.f32.mrf.mxu0
    %v631 = vadd.f32 %v410, %v630
    %v632 = vpop.f32.mrf.mxu0
    %v633 = vadd.f32 %v411, %v632
    %634 = vdwg.mxu0
    %v637 = vrot.slane %v631, 4
    %v638 = vrot.slane %v633, 4
    %v641 = vsel %vm436, %v522, %v637
    %v642 = vsel %vm436, %v524, %v638
    %v643 = vadd.f32 %v641, %v642
    %644 = vadd.xlane.f32.xlu0 %v643
    %v645 = vpop.xlane.xlu0 %644
    %v646 = vmul.f32 %v645, %v110
    %v647 = vsub.f32 %v641, %v646
    %v648 = vsub.f32 %v642, %v646
    %v649 = vmul.f32 %v647, %v647
    %v650 = vmul.f32 %v648, %v648
    %v651 = vadd.f32 %v649, %v650
    %652 = vadd.xlane.f32.xlu0 %v651
    %v653 = vpop.xlane.xlu0 %652
    %v654 = vmul.f32 %v653, %v110
    %v655 = vadd.f32 %v654, 1e-05
    %v656 = vrsqrt.pop %v655
    %v657 = vmul.f32 %v647, %v656
    %v658 = vmul.f32 %v648, %v656
    %660 = vset.pattern.permute.xlu0 0
    %661 = vperm.xlu0 %660, %v71
    %v662 = vpop.permute.xlu0 %661
    %v664 = vmul.f32 %v657, %v662
    %v665 = vmul.f32 %v658, %v662
    %667 = vset.pattern.permute.xlu0 0
    %668 = vperm.xlu0 %667, %v72
    %v669 = vpop.permute.xlu0 %668
    %v671 = vadd.f32 %v664, %v669
    %v672 = vadd.f32 %v665, %v669
    %v673 = vmax.f32 %v671, 0.0
    %v674 = vmax.f32 %v672, 0.0
    %676 = vrot.lane.b32.xlu0 %v674, 17
    %v677 = vpop.permute.xlu0 %676
    %680 = vrot.lane.b32.xlu0 %v673, 17
    %v681 = vpop.permute.xlu0 %680
    %v682 = vsel %vm147, %v681, %v677
    %v685 = vsel %vm147, %v677, %v681
    %v686 = vmul.f32 %v155, %v685
    %v687 = vmul.f32 %v159, %v682
    %688 = vrot.lane.b32.xlu0 %v674, 16
    %v689 = vpop.permute.xlu0 %688
    %691 = vrot.lane.b32.xlu0 %v673, 16
    %v692 = vpop.permute.xlu0 %691
    %v693 = vsel %vm167, %v692, %v689
    %v696 = vsel %vm167, %v689, %v692
    %v697 = vmul.f32 %v175, %v696
    %v698 = vmul.f32 %v179, %v693
    %699 = vrot.lane.b32.xlu0 %v674, 15
    %v700 = vpop.permute.xlu0 %699
    %702 = vrot.lane.b32.xlu0 %v673, 15
    %v703 = vpop.permute.xlu0 %702
    %v704 = vsel %vm187, %v703, %v700
    %v707 = vsel %vm187, %v700, %v703
    %v708 = vmul.f32 %v195, %v707
    %v709 = vmul.f32 %v199, %v704
    %710 = vrot.lane.b32.xlu0 %v674, 1
    %v711 = vpop.permute.xlu0 %710
    %713 = vrot.lane.b32.xlu0 %v673, 1
    %v714 = vpop.permute.xlu0 %713
    %v715 = vsel %vm207, %v714, %v711
    %v718 = vsel %vm207, %v711, %v714
    %v719 = vmul.f32 %v215, %v718
    %v720 = vmul.f32 %v219, %v715
    %v721 = vmul.f32 %v225, %v673
    %v722 = vmul.f32 %v229, %v674
    %723 = vrot.lane.b32.xlu0 %v673, 127
    %v724 = vpop.permute.xlu0 %723
    %725 = vrot.lane.b32.xlu0 %v674, 127
    %v726 = vpop.permute.xlu0 %725
    %v727 = vsel %vm236, %v724, %v726
    %v731 = vsel %vm236, %v726, %v724
    %v732 = vmul.f32 %v245, %v727
    %v733 = vmul.f32 %v249, %v731
    %734 = vrot.lane.b32.xlu0 %v673, 113
    %v735 = vpop.permute.xlu0 %734
    %736 = vrot.lane.b32.xlu0 %v674, 113
    %v737 = vpop.permute.xlu0 %736
    %v738 = vsel %vm256, %v735, %v737
    %v742 = vsel %vm256, %v737, %v735
    %v743 = vmul.f32 %v265, %v738
    %v744 = vmul.f32 %v269, %v742
    %745 = vrot.lane.b32.xlu0 %v673, 112
    %v746 = vpop.permute.xlu0 %745
    %747 = vrot.lane.b32.xlu0 %v674, 112
    %v748 = vpop.permute.xlu0 %747
    %v749 = vsel %vm276, %v746, %v748
    %v753 = vsel %vm276, %v748, %v746
    %v754 = vmul.f32 %v285, %v749
    %v755 = vmul.f32 %v289, %v753
    %756 = vrot.lane.b32.xlu0 %v673, 111
    %v757 = vpop.permute.xlu0 %756
    %758 = vrot.lane.b32.xlu0 %v674, 111
    %v759 = vpop.permute.xlu0 %758
    %v760 = vsel %vm296, %v757, %v759
    %v764 = vsel %vm296, %v759, %v757
    %v765 = vmul.f32 %v305, %v760
    %v766 = vmul.f32 %v309, %v764
    %v768 = vsel %vm312, %v74, 0
    %770 = vmatprep.subr.mxu0 0.0
    %771 = vmatpush1.msra.mxu0 0.0
    %772 = vmatprep.subr.mxu0 0.0
    %773 = vmatpush1.msra.mxu0 0.0
    %774 = vmatprep.subr.mxu0 0.0
    %775 = vmatpush1.msra.mxu0 0.0
    %776 = vmatprep.subr.mxu0 0.0
    %777 = vmatpush1.msra.mxu0 0.0
    %778 = vmatprep.subr.mxu0 0.0
    %779 = vmatpush1.msra.mxu0 0.0
    %780 = vmatprep.subr.mxu0 0.0
    %781 = vmatpush1.msra.mxu0 0.0
    %782 = vmatprep.subr.mxu0 0.0
    %783 = vmatpush1.msra.mxu0 0.0
    %784 = vmatprep.subr.mxu0 0.0
    %785 = vmatpush1.msra.mxu0 0.0
    %786 = vmatprep.subr.mxu0 0.0
    %787 = vmatpush1.msra.mxu0 0.0
    %788 = vmatprep.subr.mxu0 0.0
    %789 = vmatpush1.msra.mxu0 0.0
    %790 = vmatprep.subr.mxu0 0.0
    %791 = vmatpush1.msra.mxu0 0.0
    %792 = vmatprep.subr.mxu0 0.0
    %793 = vmatpush1.msra.mxu0 0.0
    %794 = vmatprep.subr.mxu0 0.0
    %795 = vmatpush1.msra.mxu0 0.0
    %796 = vmatprep.subr.mxu0 0.0
    %797 = vmatpush1.msra.mxu0 0.0
    %798 = vmatprep.subr.mxu0 %v321
    %799 = vmatpush1.msra.mxu0 %v318
    %800 = vmatprep.subr.mxu0 %v87
    %801 = vmatpush1.msra.mxu0 %v86
    %802 = vmatprep.subr.mxu0 0.0
    %803 = vmatpush2.msra.mxu0 0.0
    %804 = vmatprep.subr.mxu0 0.0
    %805 = vmatpush2.msra.mxu0 0.0
    %806 = vmatprep.subr.mxu0 0.0
    %807 = vmatpush2.msra.mxu0 0.0
    %808 = vmatprep.subr.mxu0 0.0
    %809 = vmatpush2.msra.mxu0 0.0
    %810 = vmatprep.subr.mxu0 0.0
    %811 = vmatpush2.msra.mxu0 0.0
    %812 = vmatprep.subr.mxu0 0.0
    %813 = vmatpush2.msra.mxu0 0.0
    %814 = vmatprep.subr.mxu0 0.0
    %815 = vmatpush2.msra.mxu0 0.0
    %816 = vmatprep.subr.mxu0 0.0
    %817 = vmatpush2.msra.mxu0 0.0
    %818 = vmatprep.subr.mxu0 0.0
    %819 = vmatpush2.msra.mxu0 0.0
    %820 = vmatprep.subr.mxu0 0.0
    %821 = vmatpush2.msra.mxu0 0.0
    %822 = vmatprep.subr.mxu0 0.0
    %823 = vmatpush2.msra.mxu0 0.0
    %824 = vmatprep.subr.mxu0 0.0
    %825 = vmatpush2.msra.mxu0 0.0
    %826 = vmatprep.subr.mxu0 0.0
    %827 = vmatpush2.msra.mxu0 0.0
    %828 = vmatprep.subr.mxu0 0.0
    %829 = vmatpush2.msra.mxu0 0.0
    %830 = vmatprep.subr.mxu0 0.0
    %831 = vmatpush2.msra.mxu0 0.0
    %832 = vmatprep.subr.mxu0 0.0
    %833 = vmatpush2.msra.mxu0 0.0
    %834 = vmatprep.mubr.f32.mxu0 0.0
    %835 = vmatmul.mubr.f32.gmra.mxu0 %v768
    %v836 = vpop.f32.mrf.mxu0
    %v837 = vadd.f32 0.0, %v836
    %v838 = vpop.f32.mrf.mxu0
    %v839 = vadd.f32 0.0, %v838
    %840 = vdwg.mxu0
    %v841 = vmul.f32 %v401, %v837
    %v842 = vmul.f32 %v401, %v839
    %844 = vset.pattern.permute.xlu0 0
    %845 = vperm.xlu0 %844, %v75
    %v846 = vpop.permute.xlu0 %845
    %v848 = vadd.f32 %v841, %v846
    %v849 = vadd.f32 %v842, %v846
    %v852 = vrot.slane %v697, 4
    %v853 = vrot.slane %v698, 4
    %v858 = vrot.slane %v719, 4
    %v859 = vrot.slane %v720, 4
    %v864 = vrot.slane %v732, 4
    %v865 = vrot.slane %v733, 4
    %v870 = vrot.slane %v754, 4
    %v871 = vrot.slane %v755, 4
    %v874 = vsel %vm436, %v686, %v852
    %v875 = vsel %vm436, %v687, %v853
    %v876 = vsel %vm436, %v708, %v858
    %v877 = vsel %vm436, %v709, %v859
    %v878 = vsel %vm436, %v721, %v864
    %v879 = vsel %vm436, %v722, %v865
    %v880 = vsel %vm436, %v743, %v870
    %v881 = vsel %vm436, %v744, %v871
    %v883 = vsel %vm445, %v73, 0
    %v886 = vsel %vm436, %v765, 0
    %v889 = vsel %vm436, %v766, 0
    %891 = vmatprep.subr.mxu0 0.0
    %892 = vmatpush1.msra.mxu0 0.0
    %893 = vmatprep.subr.mxu0 0.0
    %894 = vmatpush1.msra.mxu0 0.0
    %895 = vmatprep.subr.mxu0 0.0
    %896 = vmatpush1.msra.mxu0 0.0
    %897 = vmatprep.subr.mxu0 0.0
    %898 = vmatpush1.msra.mxu0 0.0
    %899 = vmatprep.subr.mxu0 0.0
    %900 = vmatpush1.msra.mxu0 0.0
    %901 = vmatprep.subr.mxu0 0.0
    %902 = vmatpush1.msra.mxu0 0.0
    %903 = vmatprep.subr.mxu0 0.0
    %904 = vmatpush1.msra.mxu0 0.0
    %905 = vmatprep.subr.mxu0 0.0
    %906 = vmatpush1.msra.mxu0 0.0
    %907 = vmatprep.subr.mxu0 0.0
    %908 = vmatpush1.msra.mxu0 0.0
    %909 = vmatprep.subr.mxu0 0.0
    %910 = vmatpush1.msra.mxu0 0.0
    %911 = vmatprep.subr.mxu0 0.0
    %912 = vmatpush1.msra.mxu0 0.0
    %913 = vmatprep.subr.mxu0 %v889
    %914 = vmatpush1.msra.mxu0 %v886
    %915 = vmatprep.subr.mxu0 %v881
    %916 = vmatpush1.msra.mxu0 %v880
    %917 = vmatprep.subr.mxu0 %v879
    %918 = vmatpush1.msra.mxu0 %v878
    %919 = vmatprep.subr.mxu0 %v877
    %920 = vmatpush1.msra.mxu0 %v876
    %921 = vmatprep.subr.mxu0 %v875
    %922 = vmatpush1.msra.mxu0 %v874
    %923 = vmatprep.subr.mxu0 0.0
    %924 = vmatpush2.msra.mxu0 0.0
    %925 = vmatprep.subr.mxu0 0.0
    %926 = vmatpush2.msra.mxu0 0.0
    %927 = vmatprep.subr.mxu0 0.0
    %928 = vmatpush2.msra.mxu0 0.0
    %929 = vmatprep.subr.mxu0 0.0
    %930 = vmatpush2.msra.mxu0 0.0
    %931 = vmatprep.subr.mxu0 0.0
    %932 = vmatpush2.msra.mxu0 0.0
    %933 = vmatprep.subr.mxu0 0.0
    %934 = vmatpush2.msra.mxu0 0.0
    %935 = vmatprep.subr.mxu0 0.0
    %936 = vmatpush2.msra.mxu0 0.0
    %937 = vmatprep.subr.mxu0 0.0
    %938 = vmatpush2.msra.mxu0 0.0
    %939 = vmatprep.subr.mxu0 0.0
    %940 = vmatpush2.msra.mxu0 0.0
    %941 = vmatprep.subr.mxu0 0.0
    %942 = vmatpush2.msra.mxu0 0.0
    %943 = vmatprep.subr.mxu0 0.0
    %944 = vmatpush2.msra.mxu0 0.0
    %945 = vmatprep.subr.mxu0 0.0
    %946 = vmatpush2.msra.mxu0 0.0
    %947 = vmatprep.subr.mxu0 0.0
    %948 = vmatpush2.msra.mxu0 0.0
    %949 = vmatprep.subr.mxu0 0.0
    %950 = vmatpush2.msra.mxu0 0.0
    %951 = vmatprep.subr.mxu0 0.0
    %952 = vmatpush2.msra.mxu0 0.0
    %953 = vmatprep.subr.mxu0 0.0
    %954 = vmatpush2.msra.mxu0 0.0
    %955 = vmatprep.mubr.f32.mxu0 0.0
    %956 = vmatmul.mubr.f32.gmra.mxu0 %v883
    %v957 = vpop.f32.mrf.mxu0
    %v958 = vadd.f32 %v848, %v957
    %v959 = vpop.f32.mrf.mxu0
    %v960 = vadd.f32 %v849, %v959
    %961 = vdwg.mxu0
    %v964 = vrot.slane %v686, 4
    %v965 = vrot.slane %v687, 4
    %v970 = vrot.slane %v708, 4
    %v971 = vrot.slane %v709, 4
    %v976 = vrot.slane %v721, 4
    %v977 = vrot.slane %v722, 4
    %v982 = vrot.slane %v743, 4
    %v983 = vrot.slane %v744, 4
    %v986 = vrot.slane %v765, 4
    %v987 = vrot.slane %v766, 4
    %v988 = vsel %vm436, %v964, %v697
    %v989 = vsel %vm436, %v965, %v698
    %v990 = vsel %vm436, %v970, %v719
    %v991 = vsel %vm436, %v971, %v720
    %v992 = vsel %vm436, %v976, %v732
    %v993 = vsel %vm436, %v977, %v733
    %v994 = vsel %vm436, %v982, %v754
    %v995 = vsel %vm436, %v983, %v755
    %v996 = vsel %vm436, %v986, 0
    %v998 = vsel %vm436, %v987, 0
    %1000 = vmatprep.subr.mxu0 0.0
    %1001 = vmatpush1.msra.mxu0 0.0
    %1002 = vmatprep.subr.mxu0 0.0
    %1003 = vmatpush1.msra.mxu0 0.0
    %1004 = vmatprep.subr.mxu0 0.0
    %1005 = vmatpush1.msra.mxu0 0.0
    %1006 = vmatprep.subr.mxu0 0.0
    %1007 = vmatpush1.msra.mxu0 0.0
    %1008 = vmatprep.subr.mxu0 0.0
    %1009 = vmatpush1.msra.mxu0 0.0
    %1010 = vmatprep.subr.mxu0 0.0
    %1011 = vmatpush1.msra.mxu0 0.0
    %1012 = vmatprep.subr.mxu0 0.0
    %1013 = vmatpush1.msra.mxu0 0.0
    %1014 = vmatprep.subr.mxu0 0.0
    %1015 = vmatpush1.msra.mxu0 0.0
    %1016 = vmatprep.subr.mxu0 0.0
    %1017 = vmatpush1.msra.mxu0 0.0
    %1018 = vmatprep.subr.mxu0 0.0
    %1019 = vmatpush1.msra.mxu0 0.0
    %1020 = vmatprep.subr.mxu0 0.0
    %1021 = vmatpush1.msra.mxu0 0.0
    %1022 = vmatprep.subr.mxu0 %v998
    %1023 = vmatpush1.msra.mxu0 %v996
    %1024 = vmatprep.subr.mxu0 %v995
    %1025 = vmatpush1.msra.mxu0 %v994
    %1026 = vmatprep.subr.mxu0 %v993
    %1027 = vmatpush1.msra.mxu0 %v992
    %1028 = vmatprep.subr.mxu0 %v991
    %1029 = vmatpush1.msra.mxu0 %v990
    %1030 = vmatprep.subr.mxu0 %v989
    %1031 = vmatpush1.msra.mxu0 %v988
    %1032 = vmatprep.subr.mxu0 0.0
    %1033 = vmatpush2.msra.mxu0 0.0
    %1034 = vmatprep.subr.mxu0 0.0
    %1035 = vmatpush2.msra.mxu0 0.0
    %1036 = vmatprep.subr.mxu0 0.0
    %1037 = vmatpush2.msra.mxu0 0.0
    %1038 = vmatprep.subr.mxu0 0.0
    %1039 = vmatpush2.msra.mxu0 0.0
    %1040 = vmatprep.subr.mxu0 0.0
    %1041 = vmatpush2.msra.mxu0 0.0
    %1042 = vmatprep.subr.mxu0 0.0
    %1043 = vmatpush2.msra.mxu0 0.0
    %1044 = vmatprep.subr.mxu0 0.0
    %1045 = vmatpush2.msra.mxu0 0.0
    %1046 = vmatprep.subr.mxu0 0.0
    %1047 = vmatpush2.msra.mxu0 0.0
    %1048 = vmatprep.subr.mxu0 0.0
    %1049 = vmatpush2.msra.mxu0 0.0
    %1050 = vmatprep.subr.mxu0 0.0
    %1051 = vmatpush2.msra.mxu0 0.0
    %1052 = vmatprep.subr.mxu0 0.0
    %1053 = vmatpush2.msra.mxu0 0.0
    %1054 = vmatprep.subr.mxu0 0.0
    %1055 = vmatpush2.msra.mxu0 0.0
    %1056 = vmatprep.subr.mxu0 0.0
    %1057 = vmatpush2.msra.mxu0 0.0
    %1058 = vmatprep.subr.mxu0 0.0
    %1059 = vmatpush2.msra.mxu0 0.0
    %1060 = vmatprep.subr.mxu0 0.0
    %1061 = vmatpush2.msra.mxu0 0.0
    %1062 = vmatprep.subr.mxu0 0.0
    %1063 = vmatpush2.msra.mxu0 0.0
    %1064 = vmatprep.mubr.f32.mxu0 0.0
    %1065 = vmatmul.mubr.f32.gmra.mxu0 %v883
    %v1066 = vpop.f32.mrf.mxu0
    %v1067 = vadd.f32 %v848, %v1066
    %v1068 = vpop.f32.mrf.mxu0
    %v1069 = vadd.f32 %v849, %v1068
    %1070 = vdwg.mxu0
    %v1073 = vrot.slane %v1067, 4
    %v1074 = vrot.slane %v1069, 4
    %v1077 = vsel %vm436, %v958, %v1073
    %v1078 = vsel %vm436, %v960, %v1074
    %v1079 = vadd.f32 %v1077, %v1078
    %1080 = vadd.xlane.f32.xlu0 %v1079
    %v1081 = vpop.xlane.xlu0 %1080
    %v1082 = vmul.f32 %v1081, %v110
    %v1083 = vsub.f32 %v1077, %v1082
    %v1084 = vsub.f32 %v1078, %v1082
    %v1085 = vmul.f32 %v1083, %v1083
    %v1086 = vmul.f32 %v1084, %v1084
    %v1087 = vadd.f32 %v1085, %v1086
    %1088 = vadd.xlane.f32.xlu0 %v1087
    %v1089 = vpop.xlane.xlu0 %1088
    %v1090 = vmul.f32 %v1089, %v110
    %v1091 = vadd.f32 %v1090, 1e-05
    %v1092 = vrsqrt.pop %v1091
    %v1093 = vmul.f32 %v1083, %v1092
    %v1094 = vmul.f32 %v1084, %v1092
    %1096 = vset.pattern.permute.xlu0 0
    %1097 = vperm.xlu0 %1096, %v76
    %v1098 = vpop.permute.xlu0 %1097
    %v1100 = vmul.f32 %v1093, %v1098
    %v1101 = vmul.f32 %v1094, %v1098
    %1103 = vset.pattern.permute.xlu0 0
    %1104 = vperm.xlu0 %1103, %v77
    %v1105 = vpop.permute.xlu0 %1104
    %v1107 = vadd.f32 %v1100, %v1105
    %v1108 = vadd.f32 %v1101, %v1105
    %v1109 = vmul.f32 %v81, 0.3
    %v1110 = vadd.f32 %v78, %v1109
    %v1111 = vmul.f32 %v84, 0.075
    %v1112 = vmul.f32 %v85, 0.075
    %v1113 = vmul.f32 %v1107, 0.225
    %v1114 = vmul.f32 %v1108, 0.225
    %v1115 = vadd.f32 %v1111, %v1113
    %v1116 = vadd.f32 %v1112, %v1114
    %v1117 = vmul.f32 %v101, %v1115
    %v1118 = vmul.f32 %v101, %v1116
    %v1119 = vadd.f32 %v82, %v1117
    %v1120 = vadd.f32 %v83, %v1118
    %v1121 = vadd.f32 %v1119, %v1120
    %1122 = vadd.xlane.f32.xlu0 %v1121
    %v1123 = vpop.xlane.xlu0 %1122
    %v1124 = vmul.f32 %v1123, %v110
    %v1125 = vsub.f32 %v1119, %v1124
    %v1126 = vsub.f32 %v1120, %v1124
    %v1127 = vmul.f32 %v1125, %v1125
    %v1128 = vmul.f32 %v1126, %v1126
    %v1129 = vadd.f32 %v1127, %v1128
    %1130 = vadd.xlane.f32.xlu0 %v1129
    %v1131 = vpop.xlane.xlu0 %1130
    %v1132 = vmul.f32 %v1131, %v110
    %v1133 = vadd.f32 %v1132, 1e-05
    %v1134 = vrsqrt.pop %v1133
    %v1135 = vmul.f32 %v1125, %v1134
    %v1136 = vmul.f32 %v1126, %v1134
    %v1137 = vmul.f32 %v1135, %v127
    %v1138 = vmul.f32 %v1136, %v127
    %v1139 = vadd.f32 %v1137, %v134
    %v1140 = vadd.f32 %v1138, %v134
    %v1141 = vmax.f32 %v1139, 0.0
    %v1142 = vmax.f32 %v1140, 0.0
    %1144 = vrot.lane.b32.xlu0 %v1142, 17
    %v1145 = vpop.permute.xlu0 %1144
    %1148 = vrot.lane.b32.xlu0 %v1141, 17
    %v1149 = vpop.permute.xlu0 %1148
    %v1150 = vsel %vm147, %v1149, %v1145
    %v1153 = vsel %vm147, %v1145, %v1149
    %v1154 = vmul.f32 %v155, %v1153
    %v1155 = vmul.f32 %v159, %v1150
    %1156 = vrot.lane.b32.xlu0 %v1142, 16
    %v1157 = vpop.permute.xlu0 %1156
    %1159 = vrot.lane.b32.xlu0 %v1141, 16
    %v1160 = vpop.permute.xlu0 %1159
    %v1161 = vsel %vm167, %v1160, %v1157
    %v1164 = vsel %vm167, %v1157, %v1160
    %v1165 = vmul.f32 %v175, %v1164
    %v1166 = vmul.f32 %v179, %v1161
    %1167 = vrot.lane.b32.xlu0 %v1142, 15
    %v1168 = vpop.permute.xlu0 %1167
    %1170 = vrot.lane.b32.xlu0 %v1141, 15
    %v1171 = vpop.permute.xlu0 %1170
    %v1172 = vsel %vm187, %v1171, %v1168
    %v1175 = vsel %vm187, %v1168, %v1171
    %v1176 = vmul.f32 %v195, %v1175
    %v1177 = vmul.f32 %v199, %v1172
    %1178 = vrot.lane.b32.xlu0 %v1142, 1
    %v1179 = vpop.permute.xlu0 %1178
    %1181 = vrot.lane.b32.xlu0 %v1141, 1
    %v1182 = vpop.permute.xlu0 %1181
    %v1183 = vsel %vm207, %v1182, %v1179
    %v1186 = vsel %vm207, %v1179, %v1182
    %v1187 = vmul.f32 %v215, %v1186
    %v1188 = vmul.f32 %v219, %v1183
    %v1189 = vmul.f32 %v225, %v1141
    %v1190 = vmul.f32 %v229, %v1142
    %1191 = vrot.lane.b32.xlu0 %v1141, 127
    %v1192 = vpop.permute.xlu0 %1191
    %1193 = vrot.lane.b32.xlu0 %v1142, 127
    %v1194 = vpop.permute.xlu0 %1193
    %v1195 = vsel %vm236, %v1192, %v1194
    %v1199 = vsel %vm236, %v1194, %v1192
    %v1200 = vmul.f32 %v245, %v1195
    %v1201 = vmul.f32 %v249, %v1199
    %1202 = vrot.lane.b32.xlu0 %v1141, 113
    %v1203 = vpop.permute.xlu0 %1202
    %1204 = vrot.lane.b32.xlu0 %v1142, 113
    %v1205 = vpop.permute.xlu0 %1204
    %v1206 = vsel %vm256, %v1203, %v1205
    %v1210 = vsel %vm256, %v1205, %v1203
    %v1211 = vmul.f32 %v265, %v1206
    %v1212 = vmul.f32 %v269, %v1210
    %1213 = vrot.lane.b32.xlu0 %v1141, 112
    %v1214 = vpop.permute.xlu0 %1213
    %1215 = vrot.lane.b32.xlu0 %v1142, 112
    %v1216 = vpop.permute.xlu0 %1215
    %v1217 = vsel %vm276, %v1214, %v1216
    %v1221 = vsel %vm276, %v1216, %v1214
    %v1222 = vmul.f32 %v285, %v1217
    %v1223 = vmul.f32 %v289, %v1221
    %1224 = vrot.lane.b32.xlu0 %v1141, 111
    %v1225 = vpop.permute.xlu0 %1224
    %1226 = vrot.lane.b32.xlu0 %v1142, 111
    %v1227 = vpop.permute.xlu0 %1226
    %v1228 = vsel %vm296, %v1225, %v1227
    %v1232 = vsel %vm296, %v1227, %v1225
    %v1233 = vmul.f32 %v305, %v1228
    %v1234 = vmul.f32 %v309, %v1232
    %v1236 = vlaneseq
    %v1237 = vshrl.u32 %v1236, 7
    %v1238 = vsub.s32 0, %v1237
    %v1239 = vrot.slane %v1110, %v1238
    %1240 = vset.pattern.permute.xlu0 0
    %1241 = vperm.xlu0 %1240, %v1239
    %v1242 = vpop.permute.xlu0 %1241
    %v1244 = vmul.f32 %v1242, %v390
    %v1245 = vmul.f32 %v1242, %v392
    %v1246 = vadd.f32 %v1244, %v408
    %v1247 = vadd.f32 %v1245, %v408
    %v1250 = vrot.slane %v1165, 4
    %v1251 = vrot.slane %v1166, 4
    %v1256 = vrot.slane %v1187, 4
    %v1257 = vrot.slane %v1188, 4
    %v1262 = vrot.slane %v1200, 4
    %v1263 = vrot.slane %v1201, 4
    %v1268 = vrot.slane %v1222, 4
    %v1269 = vrot.slane %v1223, 4
    %v1272 = vsel %vm436, %v1154, %v1250
    %v1273 = vsel %vm436, %v1155, %v1251
    %v1274 = vsel %vm436, %v1176, %v1256
    %v1275 = vsel %vm436, %v1177, %v1257
    %v1276 = vsel %vm436, %v1189, %v1262
    %v1277 = vsel %vm436, %v1190, %v1263
    %v1278 = vsel %vm436, %v1211, %v1268
    %v1279 = vsel %vm436, %v1212, %v1269
    %v1281 = vsel %vm436, %v1233, 0
    %v1284 = vsel %vm436, %v1234, 0
    %1286 = vmatprep.subr.mxu0 0.0
    %1287 = vmatpush1.msra.mxu0 0.0
    %1288 = vmatprep.subr.mxu0 0.0
    %1289 = vmatpush1.msra.mxu0 0.0
    %1290 = vmatprep.subr.mxu0 0.0
    %1291 = vmatpush1.msra.mxu0 0.0
    %1292 = vmatprep.subr.mxu0 0.0
    %1293 = vmatpush1.msra.mxu0 0.0
    %1294 = vmatprep.subr.mxu0 0.0
    %1295 = vmatpush1.msra.mxu0 0.0
    %1296 = vmatprep.subr.mxu0 0.0
    %1297 = vmatpush1.msra.mxu0 0.0
    %1298 = vmatprep.subr.mxu0 0.0
    %1299 = vmatpush1.msra.mxu0 0.0
    %1300 = vmatprep.subr.mxu0 0.0
    %1301 = vmatpush1.msra.mxu0 0.0
    %1302 = vmatprep.subr.mxu0 0.0
    %1303 = vmatpush1.msra.mxu0 0.0
    %1304 = vmatprep.subr.mxu0 0.0
    %1305 = vmatpush1.msra.mxu0 0.0
    %1306 = vmatprep.subr.mxu0 0.0
    %1307 = vmatpush1.msra.mxu0 0.0
    %1308 = vmatprep.subr.mxu0 %v1284
    %1309 = vmatpush1.msra.mxu0 %v1281
    %1310 = vmatprep.subr.mxu0 %v1279
    %1311 = vmatpush1.msra.mxu0 %v1278
    %1312 = vmatprep.subr.mxu0 %v1277
    %1313 = vmatpush1.msra.mxu0 %v1276
    %1314 = vmatprep.subr.mxu0 %v1275
    %1315 = vmatpush1.msra.mxu0 %v1274
    %1316 = vmatprep.subr.mxu0 %v1273
    %1317 = vmatpush1.msra.mxu0 %v1272
    %1318 = vmatprep.subr.mxu0 0.0
    %1319 = vmatpush2.msra.mxu0 0.0
    %1320 = vmatprep.subr.mxu0 0.0
    %1321 = vmatpush2.msra.mxu0 0.0
    %1322 = vmatprep.subr.mxu0 0.0
    %1323 = vmatpush2.msra.mxu0 0.0
    %1324 = vmatprep.subr.mxu0 0.0
    %1325 = vmatpush2.msra.mxu0 0.0
    %1326 = vmatprep.subr.mxu0 0.0
    %1327 = vmatpush2.msra.mxu0 0.0
    %1328 = vmatprep.subr.mxu0 0.0
    %1329 = vmatpush2.msra.mxu0 0.0
    %1330 = vmatprep.subr.mxu0 0.0
    %1331 = vmatpush2.msra.mxu0 0.0
    %1332 = vmatprep.subr.mxu0 0.0
    %1333 = vmatpush2.msra.mxu0 0.0
    %1334 = vmatprep.subr.mxu0 0.0
    %1335 = vmatpush2.msra.mxu0 0.0
    %1336 = vmatprep.subr.mxu0 0.0
    %1337 = vmatpush2.msra.mxu0 0.0
    %1338 = vmatprep.subr.mxu0 0.0
    %1339 = vmatpush2.msra.mxu0 0.0
    %1340 = vmatprep.subr.mxu0 0.0
    %1341 = vmatpush2.msra.mxu0 0.0
    %1342 = vmatprep.subr.mxu0 0.0
    %1343 = vmatpush2.msra.mxu0 0.0
    %1344 = vmatprep.subr.mxu0 0.0
    %1345 = vmatpush2.msra.mxu0 0.0
    %1346 = vmatprep.subr.mxu0 0.0
    %1347 = vmatpush2.msra.mxu0 0.0
    %1348 = vmatprep.subr.mxu0 0.0
    %1349 = vmatpush2.msra.mxu0 0.0
    %1350 = vmatprep.mubr.f32.mxu0 0.0
    %1351 = vmatmul.mubr.f32.gmra.mxu0 %v447
    %v1352 = vpop.f32.mrf.mxu0
    %v1353 = vadd.f32 %v1246, %v1352
    %v1354 = vpop.f32.mrf.mxu0
    %v1355 = vadd.f32 %v1247, %v1354
    %1356 = vdwg.mxu0
    %v1359 = vrot.slane %v1154, 4
    %v1360 = vrot.slane %v1155, 4
    %v1365 = vrot.slane %v1176, 4
    %v1366 = vrot.slane %v1177, 4
    %v1371 = vrot.slane %v1189, 4
    %v1372 = vrot.slane %v1190, 4
    %v1377 = vrot.slane %v1211, 4
    %v1378 = vrot.slane %v1212, 4
    %v1381 = vrot.slane %v1233, 4
    %v1382 = vrot.slane %v1234, 4
    %v1383 = vsel %vm436, %v1359, %v1165
    %v1384 = vsel %vm436, %v1360, %v1166
    %v1385 = vsel %vm436, %v1365, %v1187
    %v1386 = vsel %vm436, %v1366, %v1188
    %v1387 = vsel %vm436, %v1371, %v1200
    %v1388 = vsel %vm436, %v1372, %v1201
    %v1389 = vsel %vm436, %v1377, %v1222
    %v1390 = vsel %vm436, %v1378, %v1223
    %v1391 = vsel %vm436, %v1381, 0
    %v1393 = vsel %vm436, %v1382, 0
    %1395 = vmatprep.subr.mxu0 0.0
    %1396 = vmatpush1.msra.mxu0 0.0
    %1397 = vmatprep.subr.mxu0 0.0
    %1398 = vmatpush1.msra.mxu0 0.0
    %1399 = vmatprep.subr.mxu0 0.0
    %1400 = vmatpush1.msra.mxu0 0.0
    %1401 = vmatprep.subr.mxu0 0.0
    %1402 = vmatpush1.msra.mxu0 0.0
    %1403 = vmatprep.subr.mxu0 0.0
    %1404 = vmatpush1.msra.mxu0 0.0
    %1405 = vmatprep.subr.mxu0 0.0
    %1406 = vmatpush1.msra.mxu0 0.0
    %1407 = vmatprep.subr.mxu0 0.0
    %1408 = vmatpush1.msra.mxu0 0.0
    %1409 = vmatprep.subr.mxu0 0.0
    %1410 = vmatpush1.msra.mxu0 0.0
    %1411 = vmatprep.subr.mxu0 0.0
    %1412 = vmatpush1.msra.mxu0 0.0
    %1413 = vmatprep.subr.mxu0 0.0
    %1414 = vmatpush1.msra.mxu0 0.0
    %1415 = vmatprep.subr.mxu0 0.0
    %1416 = vmatpush1.msra.mxu0 0.0
    %1417 = vmatprep.subr.mxu0 %v1393
    %1418 = vmatpush1.msra.mxu0 %v1391
    %1419 = vmatprep.subr.mxu0 %v1390
    %1420 = vmatpush1.msra.mxu0 %v1389
    %1421 = vmatprep.subr.mxu0 %v1388
    %1422 = vmatpush1.msra.mxu0 %v1387
    %1423 = vmatprep.subr.mxu0 %v1386
    %1424 = vmatpush1.msra.mxu0 %v1385
    %1425 = vmatprep.subr.mxu0 %v1384
    %1426 = vmatpush1.msra.mxu0 %v1383
    %1427 = vmatprep.subr.mxu0 0.0
    %1428 = vmatpush2.msra.mxu0 0.0
    %1429 = vmatprep.subr.mxu0 0.0
    %1430 = vmatpush2.msra.mxu0 0.0
    %1431 = vmatprep.subr.mxu0 0.0
    %1432 = vmatpush2.msra.mxu0 0.0
    %1433 = vmatprep.subr.mxu0 0.0
    %1434 = vmatpush2.msra.mxu0 0.0
    %1435 = vmatprep.subr.mxu0 0.0
    %1436 = vmatpush2.msra.mxu0 0.0
    %1437 = vmatprep.subr.mxu0 0.0
    %1438 = vmatpush2.msra.mxu0 0.0
    %1439 = vmatprep.subr.mxu0 0.0
    %1440 = vmatpush2.msra.mxu0 0.0
    %1441 = vmatprep.subr.mxu0 0.0
    %1442 = vmatpush2.msra.mxu0 0.0
    %1443 = vmatprep.subr.mxu0 0.0
    %1444 = vmatpush2.msra.mxu0 0.0
    %1445 = vmatprep.subr.mxu0 0.0
    %1446 = vmatpush2.msra.mxu0 0.0
    %1447 = vmatprep.subr.mxu0 0.0
    %1448 = vmatpush2.msra.mxu0 0.0
    %1449 = vmatprep.subr.mxu0 0.0
    %1450 = vmatpush2.msra.mxu0 0.0
    %1451 = vmatprep.subr.mxu0 0.0
    %1452 = vmatpush2.msra.mxu0 0.0
    %1453 = vmatprep.subr.mxu0 0.0
    %1454 = vmatpush2.msra.mxu0 0.0
    %1455 = vmatprep.subr.mxu0 0.0
    %1456 = vmatpush2.msra.mxu0 0.0
    %1457 = vmatprep.subr.mxu0 0.0
    %1458 = vmatpush2.msra.mxu0 0.0
    %1459 = vmatprep.mubr.f32.mxu0 0.0
    %1460 = vmatmul.mubr.f32.gmra.mxu0 %v447
    %v1461 = vpop.f32.mrf.mxu0
    %v1462 = vadd.f32 %v1246, %v1461
    %v1463 = vpop.f32.mrf.mxu0
    %v1464 = vadd.f32 %v1247, %v1463
    %1465 = vdwg.mxu0
    %v1468 = vrot.slane %v1462, 4
    %v1469 = vrot.slane %v1464, 4
    %v1472 = vsel %vm436, %v1353, %v1468
    %v1473 = vsel %vm436, %v1355, %v1469
    %v1474 = vadd.f32 %v1472, %v1473
    %1475 = vadd.xlane.f32.xlu0 %v1474
    %v1476 = vpop.xlane.xlu0 %1475
    %v1477 = vmul.f32 %v1476, %v110
    %v1478 = vsub.f32 %v1472, %v1477
    %v1479 = vsub.f32 %v1473, %v1477
    %v1480 = vmul.f32 %v1478, %v1478
    %v1481 = vmul.f32 %v1479, %v1479
    %v1482 = vadd.f32 %v1480, %v1481
    %1483 = vadd.xlane.f32.xlu0 %v1482
    %v1484 = vpop.xlane.xlu0 %1483
    %v1485 = vmul.f32 %v1484, %v110
    %v1486 = vadd.f32 %v1485, 1e-05
    %v1487 = vrsqrt.pop %v1486
    %v1488 = vmul.f32 %v1478, %v1487
    %v1489 = vmul.f32 %v1479, %v1487
    %v1490 = vmul.f32 %v1488, %v662
    %v1491 = vmul.f32 %v1489, %v662
    %v1492 = vadd.f32 %v1490, %v669
    %v1493 = vadd.f32 %v1491, %v669
    %v1494 = vmax.f32 %v1492, 0.0
    %v1495 = vmax.f32 %v1493, 0.0
    %1497 = vrot.lane.b32.xlu0 %v1495, 17
    %v1498 = vpop.permute.xlu0 %1497
    %1501 = vrot.lane.b32.xlu0 %v1494, 17
    %v1502 = vpop.permute.xlu0 %1501
    %v1503 = vsel %vm147, %v1502, %v1498
    %v1506 = vsel %vm147, %v1498, %v1502
    %v1507 = vmul.f32 %v155, %v1506
    %v1508 = vmul.f32 %v159, %v1503
    %1509 = vrot.lane.b32.xlu0 %v1495, 16
    %v1510 = vpop.permute.xlu0 %1509
    %1512 = vrot.lane.b32.xlu0 %v1494, 16
    %v1513 = vpop.permute.xlu0 %1512
    %v1514 = vsel %vm167, %v1513, %v1510
    %v1517 = vsel %vm167, %v1510, %v1513
    %v1518 = vmul.f32 %v175, %v1517
    %v1519 = vmul.f32 %v179, %v1514
    %1520 = vrot.lane.b32.xlu0 %v1495, 15
    %v1521 = vpop.permute.xlu0 %1520
    %1523 = vrot.lane.b32.xlu0 %v1494, 15
    %v1524 = vpop.permute.xlu0 %1523
    %v1525 = vsel %vm187, %v1524, %v1521
    %v1528 = vsel %vm187, %v1521, %v1524
    %v1529 = vmul.f32 %v195, %v1528
    %v1530 = vmul.f32 %v199, %v1525
    %1531 = vrot.lane.b32.xlu0 %v1495, 1
    %v1532 = vpop.permute.xlu0 %1531
    %1534 = vrot.lane.b32.xlu0 %v1494, 1
    %v1535 = vpop.permute.xlu0 %1534
    %v1536 = vsel %vm207, %v1535, %v1532
    %v1539 = vsel %vm207, %v1532, %v1535
    %v1540 = vmul.f32 %v215, %v1539
    %v1541 = vmul.f32 %v219, %v1536
    %v1542 = vmul.f32 %v225, %v1494
    %v1543 = vmul.f32 %v229, %v1495
    %1544 = vrot.lane.b32.xlu0 %v1494, 127
    %v1545 = vpop.permute.xlu0 %1544
    %1546 = vrot.lane.b32.xlu0 %v1495, 127
    %v1547 = vpop.permute.xlu0 %1546
    %v1548 = vsel %vm236, %v1545, %v1547
    %v1552 = vsel %vm236, %v1547, %v1545
    %v1553 = vmul.f32 %v245, %v1548
    %v1554 = vmul.f32 %v249, %v1552
    %1555 = vrot.lane.b32.xlu0 %v1494, 113
    %v1556 = vpop.permute.xlu0 %1555
    %1557 = vrot.lane.b32.xlu0 %v1495, 113
    %v1558 = vpop.permute.xlu0 %1557
    %v1559 = vsel %vm256, %v1556, %v1558
    %v1563 = vsel %vm256, %v1558, %v1556
    %v1564 = vmul.f32 %v265, %v1559
    %v1565 = vmul.f32 %v269, %v1563
    %1566 = vrot.lane.b32.xlu0 %v1494, 112
    %v1567 = vpop.permute.xlu0 %1566
    %1568 = vrot.lane.b32.xlu0 %v1495, 112
    %v1569 = vpop.permute.xlu0 %1568
    %v1570 = vsel %vm276, %v1567, %v1569
    %v1574 = vsel %vm276, %v1569, %v1567
    %v1575 = vmul.f32 %v285, %v1570
    %v1576 = vmul.f32 %v289, %v1574
    %1577 = vrot.lane.b32.xlu0 %v1494, 111
    %v1578 = vpop.permute.xlu0 %1577
    %1579 = vrot.lane.b32.xlu0 %v1495, 111
    %v1580 = vpop.permute.xlu0 %1579
    %v1581 = vsel %vm296, %v1578, %v1580
    %v1585 = vsel %vm296, %v1580, %v1578
    %v1586 = vmul.f32 %v305, %v1581
    %v1587 = vmul.f32 %v309, %v1585
    %v1588 = vmul.f32 %v1242, %v837
    %v1589 = vmul.f32 %v1242, %v839
    %v1590 = vadd.f32 %v1588, %v846
    %v1591 = vadd.f32 %v1589, %v846
    %v1594 = vrot.slane %v1518, 4
    %v1595 = vrot.slane %v1519, 4
    %v1600 = vrot.slane %v1540, 4
    %v1601 = vrot.slane %v1541, 4
    %v1606 = vrot.slane %v1553, 4
    %v1607 = vrot.slane %v1554, 4
    %v1612 = vrot.slane %v1575, 4
    %v1613 = vrot.slane %v1576, 4
    %v1616 = vsel %vm436, %v1507, %v1594
    %v1617 = vsel %vm436, %v1508, %v1595
    %v1618 = vsel %vm436, %v1529, %v1600
    %v1619 = vsel %vm436, %v1530, %v1601
    %v1620 = vsel %vm436, %v1542, %v1606
    %v1621 = vsel %vm436, %v1543, %v1607
    %v1622 = vsel %vm436, %v1564, %v1612
    %v1623 = vsel %vm436, %v1565, %v1613
    %v1625 = vsel %vm436, %v1586, 0
    %v1628 = vsel %vm436, %v1587, 0
    %1630 = vmatprep.subr.mxu0 0.0
    %1631 = vmatpush1.msra.mxu0 0.0
    %1632 = vmatprep.subr.mxu0 0.0
    %1633 = vmatpush1.msra.mxu0 0.0
    %1634 = vmatprep.subr.mxu0 0.0
    %1635 = vmatpush1.msra.mxu0 0.0
    %1636 = vmatprep.subr.mxu0 0.0
    %1637 = vmatpush1.msra.mxu0 0.0
    %1638 = vmatprep.subr.mxu0 0.0
    %1639 = vmatpush1.msra.mxu0 0.0
    %1640 = vmatprep.subr.mxu0 0.0
    %1641 = vmatpush1.msra.mxu0 0.0
    %1642 = vmatprep.subr.mxu0 0.0
    %1643 = vmatpush1.msra.mxu0 0.0
    %1644 = vmatprep.subr.mxu0 0.0
    %1645 = vmatpush1.msra.mxu0 0.0
    %1646 = vmatprep.subr.mxu0 0.0
    %1647 = vmatpush1.msra.mxu0 0.0
    %1648 = vmatprep.subr.mxu0 0.0
    %1649 = vmatpush1.msra.mxu0 0.0
    %1650 = vmatprep.subr.mxu0 0.0
    %1651 = vmatpush1.msra.mxu0 0.0
    %1652 = vmatprep.subr.mxu0 %v1628
    %1653 = vmatpush1.msra.mxu0 %v1625
    %1654 = vmatprep.subr.mxu0 %v1623
    %1655 = vmatpush1.msra.mxu0 %v1622
    %1656 = vmatprep.subr.mxu0 %v1621
    %1657 = vmatpush1.msra.mxu0 %v1620
    %1658 = vmatprep.subr.mxu0 %v1619
    %1659 = vmatpush1.msra.mxu0 %v1618
    %1660 = vmatprep.subr.mxu0 %v1617
    %1661 = vmatpush1.msra.mxu0 %v1616
    %1662 = vmatprep.subr.mxu0 0.0
    %1663 = vmatpush2.msra.mxu0 0.0
    %1664 = vmatprep.subr.mxu0 0.0
    %1665 = vmatpush2.msra.mxu0 0.0
    %1666 = vmatprep.subr.mxu0 0.0
    %1667 = vmatpush2.msra.mxu0 0.0
    %1668 = vmatprep.subr.mxu0 0.0
    %1669 = vmatpush2.msra.mxu0 0.0
    %1670 = vmatprep.subr.mxu0 0.0
    %1671 = vmatpush2.msra.mxu0 0.0
    %1672 = vmatprep.subr.mxu0 0.0
    %1673 = vmatpush2.msra.mxu0 0.0
    %1674 = vmatprep.subr.mxu0 0.0
    %1675 = vmatpush2.msra.mxu0 0.0
    %1676 = vmatprep.subr.mxu0 0.0
    %1677 = vmatpush2.msra.mxu0 0.0
    %1678 = vmatprep.subr.mxu0 0.0
    %1679 = vmatpush2.msra.mxu0 0.0
    %1680 = vmatprep.subr.mxu0 0.0
    %1681 = vmatpush2.msra.mxu0 0.0
    %1682 = vmatprep.subr.mxu0 0.0
    %1683 = vmatpush2.msra.mxu0 0.0
    %1684 = vmatprep.subr.mxu0 0.0
    %1685 = vmatpush2.msra.mxu0 0.0
    %1686 = vmatprep.subr.mxu0 0.0
    %1687 = vmatpush2.msra.mxu0 0.0
    %1688 = vmatprep.subr.mxu0 0.0
    %1689 = vmatpush2.msra.mxu0 0.0
    %1690 = vmatprep.subr.mxu0 0.0
    %1691 = vmatpush2.msra.mxu0 0.0
    %1692 = vmatprep.subr.mxu0 0.0
    %1693 = vmatpush2.msra.mxu0 0.0
    %1694 = vmatprep.mubr.f32.mxu0 0.0
    %1695 = vmatmul.mubr.f32.gmra.mxu0 %v883
    %v1696 = vpop.f32.mrf.mxu0
    %v1697 = vadd.f32 %v1590, %v1696
    %v1698 = vpop.f32.mrf.mxu0
    %v1699 = vadd.f32 %v1591, %v1698
    %1700 = vdwg.mxu0
    %v1703 = vrot.slane %v1507, 4
    %v1704 = vrot.slane %v1508, 4
    %v1709 = vrot.slane %v1529, 4
    %v1710 = vrot.slane %v1530, 4
    %v1715 = vrot.slane %v1542, 4
    %v1716 = vrot.slane %v1543, 4
    %v1721 = vrot.slane %v1564, 4
    %v1722 = vrot.slane %v1565, 4
    %v1725 = vrot.slane %v1586, 4
    %v1726 = vrot.slane %v1587, 4
    %v1727 = vsel %vm436, %v1703, %v1518
    %v1728 = vsel %vm436, %v1704, %v1519
    %v1729 = vsel %vm436, %v1709, %v1540
    %v1730 = vsel %vm436, %v1710, %v1541
    %v1731 = vsel %vm436, %v1715, %v1553
    %v1732 = vsel %vm436, %v1716, %v1554
    %v1733 = vsel %vm436, %v1721, %v1575
    %v1734 = vsel %vm436, %v1722, %v1576
    %v1735 = vsel %vm436, %v1725, 0
    %v1737 = vsel %vm436, %v1726, 0
    %1739 = vmatprep.subr.mxu0 0.0
    %1740 = vmatpush1.msra.mxu0 0.0
    %1741 = vmatprep.subr.mxu0 0.0
    %1742 = vmatpush1.msra.mxu0 0.0
    %1743 = vmatprep.subr.mxu0 0.0
    %1744 = vmatpush1.msra.mxu0 0.0
    %1745 = vmatprep.subr.mxu0 0.0
    %1746 = vmatpush1.msra.mxu0 0.0
    %1747 = vmatprep.subr.mxu0 0.0
    %1748 = vmatpush1.msra.mxu0 0.0
    %1749 = vmatprep.subr.mxu0 0.0
    %1750 = vmatpush1.msra.mxu0 0.0
    %1751 = vmatprep.subr.mxu0 0.0
    %1752 = vmatpush1.msra.mxu0 0.0
    %1753 = vmatprep.subr.mxu0 0.0
    %1754 = vmatpush1.msra.mxu0 0.0
    %1755 = vmatprep.subr.mxu0 0.0
    %1756 = vmatpush1.msra.mxu0 0.0
    %1757 = vmatprep.subr.mxu0 0.0
    %1758 = vmatpush1.msra.mxu0 0.0
    %1759 = vmatprep.subr.mxu0 0.0
    %1760 = vmatpush1.msra.mxu0 0.0
    %1761 = vmatprep.subr.mxu0 %v1737
    %1762 = vmatpush1.msra.mxu0 %v1735
    %1763 = vmatprep.subr.mxu0 %v1734
    %1764 = vmatpush1.msra.mxu0 %v1733
    %1765 = vmatprep.subr.mxu0 %v1732
    %1766 = vmatpush1.msra.mxu0 %v1731
    %1767 = vmatprep.subr.mxu0 %v1730
    %1768 = vmatpush1.msra.mxu0 %v1729
    %1769 = vmatprep.subr.mxu0 %v1728
    %1770 = vmatpush1.msra.mxu0 %v1727
    %1771 = vmatprep.subr.mxu0 0.0
    %1772 = vmatpush2.msra.mxu0 0.0
    %1773 = vmatprep.subr.mxu0 0.0
    %1774 = vmatpush2.msra.mxu0 0.0
    %1775 = vmatprep.subr.mxu0 0.0
    %1776 = vmatpush2.msra.mxu0 0.0
    %1777 = vmatprep.subr.mxu0 0.0
    %1778 = vmatpush2.msra.mxu0 0.0
    %1779 = vmatprep.subr.mxu0 0.0
    %1780 = vmatpush2.msra.mxu0 0.0
    %1781 = vmatprep.subr.mxu0 0.0
    %1782 = vmatpush2.msra.mxu0 0.0
    %1783 = vmatprep.subr.mxu0 0.0
    %1784 = vmatpush2.msra.mxu0 0.0
    %1785 = vmatprep.subr.mxu0 0.0
    %1786 = vmatpush2.msra.mxu0 0.0
    %1787 = vmatprep.subr.mxu0 0.0
    %1788 = vmatpush2.msra.mxu0 0.0
    %1789 = vmatprep.subr.mxu0 0.0
    %1790 = vmatpush2.msra.mxu0 0.0
    %1791 = vmatprep.subr.mxu0 0.0
    %1792 = vmatpush2.msra.mxu0 0.0
    %1793 = vmatprep.subr.mxu0 0.0
    %1794 = vmatpush2.msra.mxu0 0.0
    %1795 = vmatprep.subr.mxu0 0.0
    %1796 = vmatpush2.msra.mxu0 0.0
    %1797 = vmatprep.subr.mxu0 0.0
    %1798 = vmatpush2.msra.mxu0 0.0
    %1799 = vmatprep.subr.mxu0 0.0
    %1800 = vmatpush2.msra.mxu0 0.0
    %1801 = vmatprep.subr.mxu0 0.0
    %1802 = vmatpush2.msra.mxu0 0.0
    %1803 = vmatprep.mubr.f32.mxu0 0.0
    %1804 = vmatmul.mubr.f32.gmra.mxu0 %v883
    %v1805 = vpop.f32.mrf.mxu0
    %v1806 = vadd.f32 %v1590, %v1805
    %v1807 = vpop.f32.mrf.mxu0
    %v1808 = vadd.f32 %v1591, %v1807
    %1809 = vdwg.mxu0
    %v1812 = vrot.slane %v1806, 4
    %v1813 = vrot.slane %v1808, 4
    %v1816 = vsel %vm436, %v1697, %v1812
    %v1817 = vsel %vm436, %v1699, %v1813
    %v1818 = vadd.f32 %v1816, %v1817
    %1819 = vadd.xlane.f32.xlu0 %v1818
    %v1820 = vpop.xlane.xlu0 %1819
    %v1821 = vmul.f32 %v1820, %v110
    %v1822 = vsub.f32 %v1816, %v1821
    %v1823 = vsub.f32 %v1817, %v1821
    %v1824 = vmul.f32 %v1822, %v1822
    %v1825 = vmul.f32 %v1823, %v1823
    %v1826 = vadd.f32 %v1824, %v1825
    %1827 = vadd.xlane.f32.xlu0 %v1826
    %v1828 = vpop.xlane.xlu0 %1827
    %v1829 = vmul.f32 %v1828, %v110
    %v1830 = vadd.f32 %v1829, 1e-05
    %v1831 = vrsqrt.pop %v1830
    %v1832 = vmul.f32 %v1822, %v1831
    %v1833 = vmul.f32 %v1823, %v1831
    %v1834 = vmul.f32 %v1832, %v1098
    %v1835 = vmul.f32 %v1833, %v1098
    %v1836 = vadd.f32 %v1834, %v1105
    %v1837 = vadd.f32 %v1835, %v1105
    %v1838 = vmul.f32 %v81, 0.8
    %v1839 = vadd.f32 %v78, %v1838
    %v1840 = vmul.f32 %v84, 0.9777778
    %v1841 = vmul.f32 %v85, 0.9777778
    %v1842 = vmul.f32 %v1107, 3.7333333
    %v1843 = vmul.f32 %v1108, 3.7333333
    %v1844 = vsub.f32 %v1840, %v1842
    %v1845 = vsub.f32 %v1841, %v1843
    %v1846 = vmul.f32 %v1836, 3.5555556
    %v1847 = vmul.f32 %v1837, 3.5555556
    %v1848 = vadd.f32 %v1844, %v1846
    %v1849 = vadd.f32 %v1845, %v1847
    %v1850 = vmul.f32 %v101, %v1848
    %v1851 = vmul.f32 %v101, %v1849
    %v1852 = vadd.f32 %v82, %v1850
    %v1853 = vadd.f32 %v83, %v1851
    %v1854 = vadd.f32 %v1852, %v1853
    %1855 = vadd.xlane.f32.xlu0 %v1854
    %v1856 = vpop.xlane.xlu0 %1855
    %v1857 = vmul.f32 %v1856, %v110
    %v1858 = vsub.f32 %v1852, %v1857
    %v1859 = vsub.f32 %v1853, %v1857
    %v1860 = vmul.f32 %v1858, %v1858
    %v1861 = vmul.f32 %v1859, %v1859
    %v1862 = vadd.f32 %v1860, %v1861
    %1863 = vadd.xlane.f32.xlu0 %v1862
    %v1864 = vpop.xlane.xlu0 %1863
    %v1865 = vmul.f32 %v1864, %v110
    %v1866 = vadd.f32 %v1865, 1e-05
    %v1867 = vrsqrt.pop %v1866
    %v1868 = vmul.f32 %v1858, %v1867
    %v1869 = vmul.f32 %v1859, %v1867
    %v1870 = vmul.f32 %v1868, %v127
    %v1871 = vmul.f32 %v1869, %v127
    %v1872 = vadd.f32 %v1870, %v134
    %v1873 = vadd.f32 %v1871, %v134
    %v1874 = vmax.f32 %v1872, 0.0
    %v1875 = vmax.f32 %v1873, 0.0
    %1877 = vrot.lane.b32.xlu0 %v1875, 17
    %v1878 = vpop.permute.xlu0 %1877
    %1881 = vrot.lane.b32.xlu0 %v1874, 17
    %v1882 = vpop.permute.xlu0 %1881
    %v1883 = vsel %vm147, %v1882, %v1878
    %v1886 = vsel %vm147, %v1878, %v1882
    %v1887 = vmul.f32 %v155, %v1886
    %v1888 = vmul.f32 %v159, %v1883
    %1889 = vrot.lane.b32.xlu0 %v1875, 16
    %v1890 = vpop.permute.xlu0 %1889
    %1892 = vrot.lane.b32.xlu0 %v1874, 16
    %v1893 = vpop.permute.xlu0 %1892
    %v1894 = vsel %vm167, %v1893, %v1890
    %v1897 = vsel %vm167, %v1890, %v1893
    %v1898 = vmul.f32 %v175, %v1897
    %v1899 = vmul.f32 %v179, %v1894
    %1900 = vrot.lane.b32.xlu0 %v1875, 15
    %v1901 = vpop.permute.xlu0 %1900
    %1903 = vrot.lane.b32.xlu0 %v1874, 15
    %v1904 = vpop.permute.xlu0 %1903
    %v1905 = vsel %vm187, %v1904, %v1901
    %v1908 = vsel %vm187, %v1901, %v1904
    %v1909 = vmul.f32 %v195, %v1908
    %v1910 = vmul.f32 %v199, %v1905
    %1911 = vrot.lane.b32.xlu0 %v1875, 1
    %v1912 = vpop.permute.xlu0 %1911
    %1914 = vrot.lane.b32.xlu0 %v1874, 1
    %v1915 = vpop.permute.xlu0 %1914
    %v1916 = vsel %vm207, %v1915, %v1912
    %v1919 = vsel %vm207, %v1912, %v1915
    %v1920 = vmul.f32 %v215, %v1919
    %v1921 = vmul.f32 %v219, %v1916
    %v1922 = vmul.f32 %v225, %v1874
    %v1923 = vmul.f32 %v229, %v1875
    %1924 = vrot.lane.b32.xlu0 %v1874, 127
    %v1925 = vpop.permute.xlu0 %1924
    %1926 = vrot.lane.b32.xlu0 %v1875, 127
    %v1927 = vpop.permute.xlu0 %1926
    %v1928 = vsel %vm236, %v1925, %v1927
    %v1932 = vsel %vm236, %v1927, %v1925
    %v1933 = vmul.f32 %v245, %v1928
    %v1934 = vmul.f32 %v249, %v1932
    %1935 = vrot.lane.b32.xlu0 %v1874, 113
    %v1936 = vpop.permute.xlu0 %1935
    %1937 = vrot.lane.b32.xlu0 %v1875, 113
    %v1938 = vpop.permute.xlu0 %1937
    %v1939 = vsel %vm256, %v1936, %v1938
    %v1943 = vsel %vm256, %v1938, %v1936
    %v1944 = vmul.f32 %v265, %v1939
    %v1945 = vmul.f32 %v269, %v1943
    %1946 = vrot.lane.b32.xlu0 %v1874, 112
    %v1947 = vpop.permute.xlu0 %1946
    %1948 = vrot.lane.b32.xlu0 %v1875, 112
    %v1949 = vpop.permute.xlu0 %1948
    %v1950 = vsel %vm276, %v1947, %v1949
    %v1954 = vsel %vm276, %v1949, %v1947
    %v1955 = vmul.f32 %v285, %v1950
    %v1956 = vmul.f32 %v289, %v1954
    %1957 = vrot.lane.b32.xlu0 %v1874, 111
    %v1958 = vpop.permute.xlu0 %1957
    %1959 = vrot.lane.b32.xlu0 %v1875, 111
    %v1960 = vpop.permute.xlu0 %1959
    %v1961 = vsel %vm296, %v1958, %v1960
    %v1965 = vsel %vm296, %v1960, %v1958
    %v1966 = vmul.f32 %v305, %v1961
    %v1967 = vmul.f32 %v309, %v1965
    %v1969 = vlaneseq
    %v1970 = vshrl.u32 %v1969, 7
    %v1971 = vsub.s32 0, %v1970
    %v1972 = vrot.slane %v1839, %v1971
    %1973 = vset.pattern.permute.xlu0 0
    %1974 = vperm.xlu0 %1973, %v1972
    %v1975 = vpop.permute.xlu0 %1974
    %v1977 = vmul.f32 %v1975, %v390
    %v1978 = vmul.f32 %v1975, %v392
    %v1979 = vadd.f32 %v1977, %v408
    %v1980 = vadd.f32 %v1978, %v408
    %v1983 = vrot.slane %v1898, 4
    %v1984 = vrot.slane %v1899, 4
    %v1989 = vrot.slane %v1920, 4
    %v1990 = vrot.slane %v1921, 4
    %v1995 = vrot.slane %v1933, 4
    %v1996 = vrot.slane %v1934, 4
    %v2001 = vrot.slane %v1955, 4
    %v2002 = vrot.slane %v1956, 4
    %v2005 = vsel %vm436, %v1887, %v1983
    %v2006 = vsel %vm436, %v1888, %v1984
    %v2007 = vsel %vm436, %v1909, %v1989
    %v2008 = vsel %vm436, %v1910, %v1990
    %v2009 = vsel %vm436, %v1922, %v1995
    %v2010 = vsel %vm436, %v1923, %v1996
    %v2011 = vsel %vm436, %v1944, %v2001
    %v2012 = vsel %vm436, %v1945, %v2002
    %v2014 = vsel %vm436, %v1966, 0
    %v2017 = vsel %vm436, %v1967, 0
    %2019 = vmatprep.subr.mxu0 0.0
    %2020 = vmatpush1.msra.mxu0 0.0
    %2021 = vmatprep.subr.mxu0 0.0
    %2022 = vmatpush1.msra.mxu0 0.0
    %2023 = vmatprep.subr.mxu0 0.0
    %2024 = vmatpush1.msra.mxu0 0.0
    %2025 = vmatprep.subr.mxu0 0.0
    %2026 = vmatpush1.msra.mxu0 0.0
    %2027 = vmatprep.subr.mxu0 0.0
    %2028 = vmatpush1.msra.mxu0 0.0
    %2029 = vmatprep.subr.mxu0 0.0
    %2030 = vmatpush1.msra.mxu0 0.0
    %2031 = vmatprep.subr.mxu0 0.0
    %2032 = vmatpush1.msra.mxu0 0.0
    %2033 = vmatprep.subr.mxu0 0.0
    %2034 = vmatpush1.msra.mxu0 0.0
    %2035 = vmatprep.subr.mxu0 0.0
    %2036 = vmatpush1.msra.mxu0 0.0
    %2037 = vmatprep.subr.mxu0 0.0
    %2038 = vmatpush1.msra.mxu0 0.0
    %2039 = vmatprep.subr.mxu0 0.0
    %2040 = vmatpush1.msra.mxu0 0.0
    %2041 = vmatprep.subr.mxu0 %v2017
    %2042 = vmatpush1.msra.mxu0 %v2014
    %2043 = vmatprep.subr.mxu0 %v2012
    %2044 = vmatpush1.msra.mxu0 %v2011
    %2045 = vmatprep.subr.mxu0 %v2010
    %2046 = vmatpush1.msra.mxu0 %v2009
    %2047 = vmatprep.subr.mxu0 %v2008
    %2048 = vmatpush1.msra.mxu0 %v2007
    %2049 = vmatprep.subr.mxu0 %v2006
    %2050 = vmatpush1.msra.mxu0 %v2005
    %2051 = vmatprep.subr.mxu0 0.0
    %2052 = vmatpush2.msra.mxu0 0.0
    %2053 = vmatprep.subr.mxu0 0.0
    %2054 = vmatpush2.msra.mxu0 0.0
    %2055 = vmatprep.subr.mxu0 0.0
    %2056 = vmatpush2.msra.mxu0 0.0
    %2057 = vmatprep.subr.mxu0 0.0
    %2058 = vmatpush2.msra.mxu0 0.0
    %2059 = vmatprep.subr.mxu0 0.0
    %2060 = vmatpush2.msra.mxu0 0.0
    %2061 = vmatprep.subr.mxu0 0.0
    %2062 = vmatpush2.msra.mxu0 0.0
    %2063 = vmatprep.subr.mxu0 0.0
    %2064 = vmatpush2.msra.mxu0 0.0
    %2065 = vmatprep.subr.mxu0 0.0
    %2066 = vmatpush2.msra.mxu0 0.0
    %2067 = vmatprep.subr.mxu0 0.0
    %2068 = vmatpush2.msra.mxu0 0.0
    %2069 = vmatprep.subr.mxu0 0.0
    %2070 = vmatpush2.msra.mxu0 0.0
    %2071 = vmatprep.subr.mxu0 0.0
    %2072 = vmatpush2.msra.mxu0 0.0
    %2073 = vmatprep.subr.mxu0 0.0
    %2074 = vmatpush2.msra.mxu0 0.0
    %2075 = vmatprep.subr.mxu0 0.0
    %2076 = vmatpush2.msra.mxu0 0.0
    %2077 = vmatprep.subr.mxu0 0.0
    %2078 = vmatpush2.msra.mxu0 0.0
    %2079 = vmatprep.subr.mxu0 0.0
    %2080 = vmatpush2.msra.mxu0 0.0
    %2081 = vmatprep.subr.mxu0 0.0
    %2082 = vmatpush2.msra.mxu0 0.0
    %2083 = vmatprep.mubr.f32.mxu0 0.0
    %2084 = vmatmul.mubr.f32.gmra.mxu0 %v447
    %v2085 = vpop.f32.mrf.mxu0
    %v2086 = vadd.f32 %v1979, %v2085
    %v2087 = vpop.f32.mrf.mxu0
    %v2088 = vadd.f32 %v1980, %v2087
    %2089 = vdwg.mxu0
    %v2092 = vrot.slane %v1887, 4
    %v2093 = vrot.slane %v1888, 4
    %v2098 = vrot.slane %v1909, 4
    %v2099 = vrot.slane %v1910, 4
    %v2104 = vrot.slane %v1922, 4
    %v2105 = vrot.slane %v1923, 4
    %v2110 = vrot.slane %v1944, 4
    %v2111 = vrot.slane %v1945, 4
    %v2114 = vrot.slane %v1966, 4
    %v2115 = vrot.slane %v1967, 4
    %v2116 = vsel %vm436, %v2092, %v1898
    %v2117 = vsel %vm436, %v2093, %v1899
    %v2118 = vsel %vm436, %v2098, %v1920
    %v2119 = vsel %vm436, %v2099, %v1921
    %v2120 = vsel %vm436, %v2104, %v1933
    %v2121 = vsel %vm436, %v2105, %v1934
    %v2122 = vsel %vm436, %v2110, %v1955
    %v2123 = vsel %vm436, %v2111, %v1956
    %v2124 = vsel %vm436, %v2114, 0
    %v2126 = vsel %vm436, %v2115, 0
    %2128 = vmatprep.subr.mxu0 0.0
    %2129 = vmatpush1.msra.mxu0 0.0
    %2130 = vmatprep.subr.mxu0 0.0
    %2131 = vmatpush1.msra.mxu0 0.0
    %2132 = vmatprep.subr.mxu0 0.0
    %2133 = vmatpush1.msra.mxu0 0.0
    %2134 = vmatprep.subr.mxu0 0.0
    %2135 = vmatpush1.msra.mxu0 0.0
    %2136 = vmatprep.subr.mxu0 0.0
    %2137 = vmatpush1.msra.mxu0 0.0
    %2138 = vmatprep.subr.mxu0 0.0
    %2139 = vmatpush1.msra.mxu0 0.0
    %2140 = vmatprep.subr.mxu0 0.0
    %2141 = vmatpush1.msra.mxu0 0.0
    %2142 = vmatprep.subr.mxu0 0.0
    %2143 = vmatpush1.msra.mxu0 0.0
    %2144 = vmatprep.subr.mxu0 0.0
    %2145 = vmatpush1.msra.mxu0 0.0
    %2146 = vmatprep.subr.mxu0 0.0
    %2147 = vmatpush1.msra.mxu0 0.0
    %2148 = vmatprep.subr.mxu0 0.0
    %2149 = vmatpush1.msra.mxu0 0.0
    %2150 = vmatprep.subr.mxu0 %v2126
    %2151 = vmatpush1.msra.mxu0 %v2124
    %2152 = vmatprep.subr.mxu0 %v2123
    %2153 = vmatpush1.msra.mxu0 %v2122
    %2154 = vmatprep.subr.mxu0 %v2121
    %2155 = vmatpush1.msra.mxu0 %v2120
    %2156 = vmatprep.subr.mxu0 %v2119
    %2157 = vmatpush1.msra.mxu0 %v2118
    %2158 = vmatprep.subr.mxu0 %v2117
    %2159 = vmatpush1.msra.mxu0 %v2116
    %2160 = vmatprep.subr.mxu0 0.0
    %2161 = vmatpush2.msra.mxu0 0.0
    %2162 = vmatprep.subr.mxu0 0.0
    %2163 = vmatpush2.msra.mxu0 0.0
    %2164 = vmatprep.subr.mxu0 0.0
    %2165 = vmatpush2.msra.mxu0 0.0
    %2166 = vmatprep.subr.mxu0 0.0
    %2167 = vmatpush2.msra.mxu0 0.0
    %2168 = vmatprep.subr.mxu0 0.0
    %2169 = vmatpush2.msra.mxu0 0.0
    %2170 = vmatprep.subr.mxu0 0.0
    %2171 = vmatpush2.msra.mxu0 0.0
    %2172 = vmatprep.subr.mxu0 0.0
    %2173 = vmatpush2.msra.mxu0 0.0
    %2174 = vmatprep.subr.mxu0 0.0
    %2175 = vmatpush2.msra.mxu0 0.0
    %2176 = vmatprep.subr.mxu0 0.0
    %2177 = vmatpush2.msra.mxu0 0.0
    %2178 = vmatprep.subr.mxu0 0.0
    %2179 = vmatpush2.msra.mxu0 0.0
    %2180 = vmatprep.subr.mxu0 0.0
    %2181 = vmatpush2.msra.mxu0 0.0
    %2182 = vmatprep.subr.mxu0 0.0
    %2183 = vmatpush2.msra.mxu0 0.0
    %2184 = vmatprep.subr.mxu0 0.0
    %2185 = vmatpush2.msra.mxu0 0.0
    %2186 = vmatprep.subr.mxu0 0.0
    %2187 = vmatpush2.msra.mxu0 0.0
    %2188 = vmatprep.subr.mxu0 0.0
    %2189 = vmatpush2.msra.mxu0 0.0
    %2190 = vmatprep.subr.mxu0 0.0
    %2191 = vmatpush2.msra.mxu0 0.0
    %2192 = vmatprep.mubr.f32.mxu0 0.0
    %2193 = vmatmul.mubr.f32.gmra.mxu0 %v447
    %v2194 = vpop.f32.mrf.mxu0
    %v2195 = vadd.f32 %v1979, %v2194
    %v2196 = vpop.f32.mrf.mxu0
    %v2197 = vadd.f32 %v1980, %v2196
    %2198 = vdwg.mxu0
    %v2201 = vrot.slane %v2195, 4
    %v2202 = vrot.slane %v2197, 4
    %v2205 = vsel %vm436, %v2086, %v2201
    %v2206 = vsel %vm436, %v2088, %v2202
    %v2207 = vadd.f32 %v2205, %v2206
    %2208 = vadd.xlane.f32.xlu0 %v2207
    %v2209 = vpop.xlane.xlu0 %2208
    %v2210 = vmul.f32 %v2209, %v110
    %v2211 = vsub.f32 %v2205, %v2210
    %v2212 = vsub.f32 %v2206, %v2210
    %v2213 = vmul.f32 %v2211, %v2211
    %v2214 = vmul.f32 %v2212, %v2212
    %v2215 = vadd.f32 %v2213, %v2214
    %2216 = vadd.xlane.f32.xlu0 %v2215
    %v2217 = vpop.xlane.xlu0 %2216
    %v2218 = vmul.f32 %v2217, %v110
    %v2219 = vadd.f32 %v2218, 1e-05
    %v2220 = vrsqrt.pop %v2219
    %v2221 = vmul.f32 %v2211, %v2220
    %v2222 = vmul.f32 %v2212, %v2220
    %v2223 = vmul.f32 %v2221, %v662
    %v2224 = vmul.f32 %v2222, %v662
    %v2225 = vadd.f32 %v2223, %v669
    %v2226 = vadd.f32 %v2224, %v669
    %v2227 = vmax.f32 %v2225, 0.0
    %v2228 = vmax.f32 %v2226, 0.0
    %2230 = vrot.lane.b32.xlu0 %v2228, 17
    %v2231 = vpop.permute.xlu0 %2230
    %2234 = vrot.lane.b32.xlu0 %v2227, 17
    %v2235 = vpop.permute.xlu0 %2234
    %v2236 = vsel %vm147, %v2235, %v2231
    %v2239 = vsel %vm147, %v2231, %v2235
    %v2240 = vmul.f32 %v155, %v2239
    %v2241 = vmul.f32 %v159, %v2236
    %2242 = vrot.lane.b32.xlu0 %v2228, 16
    %v2243 = vpop.permute.xlu0 %2242
    %2245 = vrot.lane.b32.xlu0 %v2227, 16
    %v2246 = vpop.permute.xlu0 %2245
    %v2247 = vsel %vm167, %v2246, %v2243
    %v2250 = vsel %vm167, %v2243, %v2246
    %v2251 = vmul.f32 %v175, %v2250
    %v2252 = vmul.f32 %v179, %v2247
    %2253 = vrot.lane.b32.xlu0 %v2228, 15
    %v2254 = vpop.permute.xlu0 %2253
    %2256 = vrot.lane.b32.xlu0 %v2227, 15
    %v2257 = vpop.permute.xlu0 %2256
    %v2258 = vsel %vm187, %v2257, %v2254
    %v2261 = vsel %vm187, %v2254, %v2257
    %v2262 = vmul.f32 %v195, %v2261
    %v2263 = vmul.f32 %v199, %v2258
    %2264 = vrot.lane.b32.xlu0 %v2228, 1
    %v2265 = vpop.permute.xlu0 %2264
    %2267 = vrot.lane.b32.xlu0 %v2227, 1
    %v2268 = vpop.permute.xlu0 %2267
    %v2269 = vsel %vm207, %v2268, %v2265
    %v2272 = vsel %vm207, %v2265, %v2268
    %v2273 = vmul.f32 %v215, %v2272
    %v2274 = vmul.f32 %v219, %v2269
    %v2275 = vmul.f32 %v225, %v2227
    %v2276 = vmul.f32 %v229, %v2228
    %2277 = vrot.lane.b32.xlu0 %v2227, 127
    %v2278 = vpop.permute.xlu0 %2277
    %2279 = vrot.lane.b32.xlu0 %v2228, 127
    %v2280 = vpop.permute.xlu0 %2279
    %v2281 = vsel %vm236, %v2278, %v2280
    %v2285 = vsel %vm236, %v2280, %v2278
    %v2286 = vmul.f32 %v245, %v2281
    %v2287 = vmul.f32 %v249, %v2285
    %2288 = vrot.lane.b32.xlu0 %v2227, 113
    %v2289 = vpop.permute.xlu0 %2288
    %2290 = vrot.lane.b32.xlu0 %v2228, 113
    %v2291 = vpop.permute.xlu0 %2290
    %v2292 = vsel %vm256, %v2289, %v2291
    %v2296 = vsel %vm256, %v2291, %v2289
    %v2297 = vmul.f32 %v265, %v2292
    %v2298 = vmul.f32 %v269, %v2296
    %2299 = vrot.lane.b32.xlu0 %v2227, 112
    %v2300 = vpop.permute.xlu0 %2299
    %2301 = vrot.lane.b32.xlu0 %v2228, 112
    %v2302 = vpop.permute.xlu0 %2301
    %v2303 = vsel %vm276, %v2300, %v2302
    %v2307 = vsel %vm276, %v2302, %v2300
    %v2308 = vmul.f32 %v285, %v2303
    %v2309 = vmul.f32 %v289, %v2307
    %2310 = vrot.lane.b32.xlu0 %v2227, 111
    %v2311 = vpop.permute.xlu0 %2310
    %2312 = vrot.lane.b32.xlu0 %v2228, 111
    %v2313 = vpop.permute.xlu0 %2312
    %v2314 = vsel %vm296, %v2311, %v2313
    %v2318 = vsel %vm296, %v2313, %v2311
    %v2319 = vmul.f32 %v305, %v2314
    %v2320 = vmul.f32 %v309, %v2318
    %v2321 = vmul.f32 %v1975, %v837
    %v2322 = vmul.f32 %v1975, %v839
    %v2323 = vadd.f32 %v2321, %v846
    %v2324 = vadd.f32 %v2322, %v846
    %v2327 = vrot.slane %v2251, 4
    %v2328 = vrot.slane %v2252, 4
    %v2333 = vrot.slane %v2273, 4
    %v2334 = vrot.slane %v2274, 4
    %v2339 = vrot.slane %v2286, 4
    %v2340 = vrot.slane %v2287, 4
    %v2345 = vrot.slane %v2308, 4
    %v2346 = vrot.slane %v2309, 4
    %v2349 = vsel %vm436, %v2240, %v2327
    %v2350 = vsel %vm436, %v2241, %v2328
    %v2351 = vsel %vm436, %v2262, %v2333
    %v2352 = vsel %vm436, %v2263, %v2334
    %v2353 = vsel %vm436, %v2275, %v2339
    %v2354 = vsel %vm436, %v2276, %v2340
    %v2355 = vsel %vm436, %v2297, %v2345
    %v2356 = vsel %vm436, %v2298, %v2346
    %v2358 = vsel %vm436, %v2319, 0
    %v2361 = vsel %vm436, %v2320, 0
    %2363 = vmatprep.subr.mxu0 0.0
    %2364 = vmatpush1.msra.mxu0 0.0
    %2365 = vmatprep.subr.mxu0 0.0
    %2366 = vmatpush1.msra.mxu0 0.0
    %2367 = vmatprep.subr.mxu0 0.0
    %2368 = vmatpush1.msra.mxu0 0.0
    %2369 = vmatprep.subr.mxu0 0.0
    %2370 = vmatpush1.msra.mxu0 0.0
    %2371 = vmatprep.subr.mxu0 0.0
    %2372 = vmatpush1.msra.mxu0 0.0
    %2373 = vmatprep.subr.mxu0 0.0
    %2374 = vmatpush1.msra.mxu0 0.0
    %2375 = vmatprep.subr.mxu0 0.0
    %2376 = vmatpush1.msra.mxu0 0.0
    %2377 = vmatprep.subr.mxu0 0.0
    %2378 = vmatpush1.msra.mxu0 0.0
    %2379 = vmatprep.subr.mxu0 0.0
    %2380 = vmatpush1.msra.mxu0 0.0
    %2381 = vmatprep.subr.mxu0 0.0
    %2382 = vmatpush1.msra.mxu0 0.0
    %2383 = vmatprep.subr.mxu0 0.0
    %2384 = vmatpush1.msra.mxu0 0.0
    %2385 = vmatprep.subr.mxu0 %v2361
    %2386 = vmatpush1.msra.mxu0 %v2358
    %2387 = vmatprep.subr.mxu0 %v2356
    %2388 = vmatpush1.msra.mxu0 %v2355
    %2389 = vmatprep.subr.mxu0 %v2354
    %2390 = vmatpush1.msra.mxu0 %v2353
    %2391 = vmatprep.subr.mxu0 %v2352
    %2392 = vmatpush1.msra.mxu0 %v2351
    %2393 = vmatprep.subr.mxu0 %v2350
    %2394 = vmatpush1.msra.mxu0 %v2349
    %2395 = vmatprep.subr.mxu0 0.0
    %2396 = vmatpush2.msra.mxu0 0.0
    %2397 = vmatprep.subr.mxu0 0.0
    %2398 = vmatpush2.msra.mxu0 0.0
    %2399 = vmatprep.subr.mxu0 0.0
    %2400 = vmatpush2.msra.mxu0 0.0
    %2401 = vmatprep.subr.mxu0 0.0
    %2402 = vmatpush2.msra.mxu0 0.0
    %2403 = vmatprep.subr.mxu0 0.0
    %2404 = vmatpush2.msra.mxu0 0.0
    %2405 = vmatprep.subr.mxu0 0.0
    %2406 = vmatpush2.msra.mxu0 0.0
    %2407 = vmatprep.subr.mxu0 0.0
    %2408 = vmatpush2.msra.mxu0 0.0
    %2409 = vmatprep.subr.mxu0 0.0
    %2410 = vmatpush2.msra.mxu0 0.0
    %2411 = vmatprep.subr.mxu0 0.0
    %2412 = vmatpush2.msra.mxu0 0.0
    %2413 = vmatprep.subr.mxu0 0.0
    %2414 = vmatpush2.msra.mxu0 0.0
    %2415 = vmatprep.subr.mxu0 0.0
    %2416 = vmatpush2.msra.mxu0 0.0
    %2417 = vmatprep.subr.mxu0 0.0
    %2418 = vmatpush2.msra.mxu0 0.0
    %2419 = vmatprep.subr.mxu0 0.0
    %2420 = vmatpush2.msra.mxu0 0.0
    %2421 = vmatprep.subr.mxu0 0.0
    %2422 = vmatpush2.msra.mxu0 0.0
    %2423 = vmatprep.subr.mxu0 0.0
    %2424 = vmatpush2.msra.mxu0 0.0
    %2425 = vmatprep.subr.mxu0 0.0
    %2426 = vmatpush2.msra.mxu0 0.0
    %2427 = vmatprep.mubr.f32.mxu0 0.0
    %2428 = vmatmul.mubr.f32.gmra.mxu0 %v883
    %v2429 = vpop.f32.mrf.mxu0
    %v2430 = vadd.f32 %v2323, %v2429
    %v2431 = vpop.f32.mrf.mxu0
    %v2432 = vadd.f32 %v2324, %v2431
    %2433 = vdwg.mxu0
    %v2436 = vrot.slane %v2240, 4
    %v2437 = vrot.slane %v2241, 4
    %v2442 = vrot.slane %v2262, 4
    %v2443 = vrot.slane %v2263, 4
    %v2448 = vrot.slane %v2275, 4
    %v2449 = vrot.slane %v2276, 4
    %v2454 = vrot.slane %v2297, 4
    %v2455 = vrot.slane %v2298, 4
    %v2458 = vrot.slane %v2319, 4
    %v2459 = vrot.slane %v2320, 4
    %v2460 = vsel %vm436, %v2436, %v2251
    %v2461 = vsel %vm436, %v2437, %v2252
    %v2462 = vsel %vm436, %v2442, %v2273
    %v2463 = vsel %vm436, %v2443, %v2274
    %v2464 = vsel %vm436, %v2448, %v2286
    %v2465 = vsel %vm436, %v2449, %v2287
    %v2466 = vsel %vm436, %v2454, %v2308
    %v2467 = vsel %vm436, %v2455, %v2309
    %v2468 = vsel %vm436, %v2458, 0
    %v2470 = vsel %vm436, %v2459, 0
    %2472 = vmatprep.subr.mxu0 0.0
    %2473 = vmatpush1.msra.mxu0 0.0
    %2474 = vmatprep.subr.mxu0 0.0
    %2475 = vmatpush1.msra.mxu0 0.0
    %2476 = vmatprep.subr.mxu0 0.0
    %2477 = vmatpush1.msra.mxu0 0.0
    %2478 = vmatprep.subr.mxu0 0.0
    %2479 = vmatpush1.msra.mxu0 0.0
    %2480 = vmatprep.subr.mxu0 0.0
    %2481 = vmatpush1.msra.mxu0 0.0
    %2482 = vmatprep.subr.mxu0 0.0
    %2483 = vmatpush1.msra.mxu0 0.0
    %2484 = vmatprep.subr.mxu0 0.0
    %2485 = vmatpush1.msra.mxu0 0.0
    %2486 = vmatprep.subr.mxu0 0.0
    %2487 = vmatpush1.msra.mxu0 0.0
    %2488 = vmatprep.subr.mxu0 0.0
    %2489 = vmatpush1.msra.mxu0 0.0
    %2490 = vmatprep.subr.mxu0 0.0
    %2491 = vmatpush1.msra.mxu0 0.0
    %2492 = vmatprep.subr.mxu0 0.0
    %2493 = vmatpush1.msra.mxu0 0.0
    %2494 = vmatprep.subr.mxu0 %v2470
    %2495 = vmatpush1.msra.mxu0 %v2468
    %2496 = vmatprep.subr.mxu0 %v2467
    %2497 = vmatpush1.msra.mxu0 %v2466
    %2498 = vmatprep.subr.mxu0 %v2465
    %2499 = vmatpush1.msra.mxu0 %v2464
    %2500 = vmatprep.subr.mxu0 %v2463
    %2501 = vmatpush1.msra.mxu0 %v2462
    %2502 = vmatprep.subr.mxu0 %v2461
    %2503 = vmatpush1.msra.mxu0 %v2460
    %2504 = vmatprep.subr.mxu0 0.0
    %2505 = vmatpush2.msra.mxu0 0.0
    %2506 = vmatprep.subr.mxu0 0.0
    %2507 = vmatpush2.msra.mxu0 0.0
    %2508 = vmatprep.subr.mxu0 0.0
    %2509 = vmatpush2.msra.mxu0 0.0
    %2510 = vmatprep.subr.mxu0 0.0
    %2511 = vmatpush2.msra.mxu0 0.0
    %2512 = vmatprep.subr.mxu0 0.0
    %2513 = vmatpush2.msra.mxu0 0.0
    %2514 = vmatprep.subr.mxu0 0.0
    %2515 = vmatpush2.msra.mxu0 0.0
    %2516 = vmatprep.subr.mxu0 0.0
    %2517 = vmatpush2.msra.mxu0 0.0
    %2518 = vmatprep.subr.mxu0 0.0
    %2519 = vmatpush2.msra.mxu0 0.0
    %2520 = vmatprep.subr.mxu0 0.0
    %2521 = vmatpush2.msra.mxu0 0.0
    %2522 = vmatprep.subr.mxu0 0.0
    %2523 = vmatpush2.msra.mxu0 0.0
    %2524 = vmatprep.subr.mxu0 0.0
    %2525 = vmatpush2.msra.mxu0 0.0
    %2526 = vmatprep.subr.mxu0 0.0
    %2527 = vmatpush2.msra.mxu0 0.0
    %2528 = vmatprep.subr.mxu0 0.0
    %2529 = vmatpush2.msra.mxu0 0.0
    %2530 = vmatprep.subr.mxu0 0.0
    %2531 = vmatpush2.msra.mxu0 0.0
    %2532 = vmatprep.subr.mxu0 0.0
    %2533 = vmatpush2.msra.mxu0 0.0
    %2534 = vmatprep.subr.mxu0 0.0
    %2535 = vmatpush2.msra.mxu0 0.0
    %2536 = vmatprep.mubr.f32.mxu0 0.0
    %2537 = vmatmul.mubr.f32.gmra.mxu0 %v883
    %v2538 = vpop.f32.mrf.mxu0
    %v2539 = vadd.f32 %v2323, %v2538
    %v2540 = vpop.f32.mrf.mxu0
    %v2541 = vadd.f32 %v2324, %v2540
    %2542 = vdwg.mxu0
    %v2545 = vrot.slane %v2539, 4
    %v2546 = vrot.slane %v2541, 4
    %v2549 = vsel %vm436, %v2430, %v2545
    %v2550 = vsel %vm436, %v2432, %v2546
    %v2551 = vadd.f32 %v2549, %v2550
    %2552 = vadd.xlane.f32.xlu0 %v2551
    %v2553 = vpop.xlane.xlu0 %2552
    %v2554 = vmul.f32 %v2553, %v110
    %v2555 = vsub.f32 %v2549, %v2554
    %v2556 = vsub.f32 %v2550, %v2554
    %v2557 = vmul.f32 %v2555, %v2555
    %v2558 = vmul.f32 %v2556, %v2556
    %v2559 = vadd.f32 %v2557, %v2558
    %2560 = vadd.xlane.f32.xlu0 %v2559
    %v2561 = vpop.xlane.xlu0 %2560
    %v2562 = vmul.f32 %v2561, %v110
    %v2563 = vadd.f32 %v2562, 1e-05
    %v2564 = vrsqrt.pop %v2563
    %v2565 = vmul.f32 %v2555, %v2564
    %v2566 = vmul.f32 %v2556, %v2564
    %v2567 = vmul.f32 %v2565, %v1098
    %v2568 = vmul.f32 %v2566, %v1098
    %v2569 = vadd.f32 %v2567, %v1105
    %v2570 = vadd.f32 %v2568, %v1105
    %v2571 = vmul.f32 %v81, 0.8888889
    %v2572 = vadd.f32 %v78, %v2571
    %v2573 = vmul.f32 %v84, 2.9525986
    %v2574 = vmul.f32 %v85, 2.9525986
    %v2575 = vmul.f32 %v1107, 11.595794
    %v2576 = vmul.f32 %v1108, 11.595794
    %v2577 = vsub.f32 %v2573, %v2575
    %v2578 = vsub.f32 %v2574, %v2576
    %v2579 = vmul.f32 %v1836, 9.822893
    %v2580 = vmul.f32 %v1837, 9.822893
    %v2581 = vadd.f32 %v2577, %v2579
    %v2582 = vadd.f32 %v2578, %v2580
    %v2583 = vmul.f32 %v2569, 0.29080933
    %v2584 = vmul.f32 %v2570, 0.29080933
    %v2585 = vsub.f32 %v2581, %v2583
    %v2586 = vsub.f32 %v2582, %v2584
    %v2587 = vmul.f32 %v101, %v2585
    %v2588 = vmul.f32 %v101, %v2586
    %v2589 = vadd.f32 %v82, %v2587
    %v2590 = vadd.f32 %v83, %v2588
    %v2591 = vadd.f32 %v2589, %v2590
    %2592 = vadd.xlane.f32.xlu0 %v2591
    %v2593 = vpop.xlane.xlu0 %2592
    %v2594 = vmul.f32 %v2593, %v110
    %v2595 = vsub.f32 %v2589, %v2594
    %v2596 = vsub.f32 %v2590, %v2594
    %v2597 = vmul.f32 %v2595, %v2595
    %v2598 = vmul.f32 %v2596, %v2596
    %v2599 = vadd.f32 %v2597, %v2598
    %2600 = vadd.xlane.f32.xlu0 %v2599
    %v2601 = vpop.xlane.xlu0 %2600
    %v2602 = vmul.f32 %v2601, %v110
    %v2603 = vadd.f32 %v2602, 1e-05
    %v2604 = vrsqrt.pop %v2603
    %v2605 = vmul.f32 %v2595, %v2604
    %v2606 = vmul.f32 %v2596, %v2604
    %v2607 = vmul.f32 %v2605, %v127
    %v2608 = vmul.f32 %v2606, %v127
    %v2609 = vadd.f32 %v2607, %v134
    %v2610 = vadd.f32 %v2608, %v134
    %v2611 = vmax.f32 %v2609, 0.0
    %v2612 = vmax.f32 %v2610, 0.0
    %2614 = vrot.lane.b32.xlu0 %v2612, 17
    %v2615 = vpop.permute.xlu0 %2614
    %2618 = vrot.lane.b32.xlu0 %v2611, 17
    %v2619 = vpop.permute.xlu0 %2618
    %v2620 = vsel %vm147, %v2619, %v2615
    %v2623 = vsel %vm147, %v2615, %v2619
    %v2624 = vmul.f32 %v155, %v2623
    %v2625 = vmul.f32 %v159, %v2620
    %2626 = vrot.lane.b32.xlu0 %v2612, 16
    %v2627 = vpop.permute.xlu0 %2626
    %2629 = vrot.lane.b32.xlu0 %v2611, 16
    %v2630 = vpop.permute.xlu0 %2629
    %v2631 = vsel %vm167, %v2630, %v2627
    %v2634 = vsel %vm167, %v2627, %v2630
    %v2635 = vmul.f32 %v175, %v2634
    %v2636 = vmul.f32 %v179, %v2631
    %2637 = vrot.lane.b32.xlu0 %v2612, 15
    %v2638 = vpop.permute.xlu0 %2637
    %2640 = vrot.lane.b32.xlu0 %v2611, 15
    %v2641 = vpop.permute.xlu0 %2640
    %v2642 = vsel %vm187, %v2641, %v2638
    %v2645 = vsel %vm187, %v2638, %v2641
    %v2646 = vmul.f32 %v195, %v2645
    %v2647 = vmul.f32 %v199, %v2642
    %2648 = vrot.lane.b32.xlu0 %v2612, 1
    %v2649 = vpop.permute.xlu0 %2648
    %2651 = vrot.lane.b32.xlu0 %v2611, 1
    %v2652 = vpop.permute.xlu0 %2651
    %v2653 = vsel %vm207, %v2652, %v2649
    %v2656 = vsel %vm207, %v2649, %v2652
    %v2657 = vmul.f32 %v215, %v2656
    %v2658 = vmul.f32 %v219, %v2653
    %v2659 = vmul.f32 %v225, %v2611
    %v2660 = vmul.f32 %v229, %v2612
    %2661 = vrot.lane.b32.xlu0 %v2611, 127
    %v2662 = vpop.permute.xlu0 %2661
    %2663 = vrot.lane.b32.xlu0 %v2612, 127
    %v2664 = vpop.permute.xlu0 %2663
    %v2665 = vsel %vm236, %v2662, %v2664
    %v2669 = vsel %vm236, %v2664, %v2662
    %v2670 = vmul.f32 %v245, %v2665
    %v2671 = vmul.f32 %v249, %v2669
    %2672 = vrot.lane.b32.xlu0 %v2611, 113
    %v2673 = vpop.permute.xlu0 %2672
    %2674 = vrot.lane.b32.xlu0 %v2612, 113
    %v2675 = vpop.permute.xlu0 %2674
    %v2676 = vsel %vm256, %v2673, %v2675
    %v2680 = vsel %vm256, %v2675, %v2673
    %v2681 = vmul.f32 %v265, %v2676
    %v2682 = vmul.f32 %v269, %v2680
    %2683 = vrot.lane.b32.xlu0 %v2611, 112
    %v2684 = vpop.permute.xlu0 %2683
    %2685 = vrot.lane.b32.xlu0 %v2612, 112
    %v2686 = vpop.permute.xlu0 %2685
    %v2687 = vsel %vm276, %v2684, %v2686
    %v2691 = vsel %vm276, %v2686, %v2684
    %v2692 = vmul.f32 %v285, %v2687
    %v2693 = vmul.f32 %v289, %v2691
    %2694 = vrot.lane.b32.xlu0 %v2611, 111
    %v2695 = vpop.permute.xlu0 %2694
    %2696 = vrot.lane.b32.xlu0 %v2612, 111
    %v2697 = vpop.permute.xlu0 %2696
    %v2698 = vsel %vm296, %v2695, %v2697
    %v2702 = vsel %vm296, %v2697, %v2695
    %v2703 = vmul.f32 %v305, %v2698
    %v2704 = vmul.f32 %v309, %v2702
    %v2706 = vlaneseq
    %v2707 = vshrl.u32 %v2706, 7
    %v2708 = vsub.s32 0, %v2707
    %v2709 = vrot.slane %v2572, %v2708
    %2710 = vset.pattern.permute.xlu0 0
    %2711 = vperm.xlu0 %2710, %v2709
    %v2712 = vpop.permute.xlu0 %2711
    %v2714 = vmul.f32 %v2712, %v390
    %v2715 = vmul.f32 %v2712, %v392
    %v2716 = vadd.f32 %v2714, %v408
    %v2717 = vadd.f32 %v2715, %v408
    %v2720 = vrot.slane %v2635, 4
    %v2721 = vrot.slane %v2636, 4
    %v2726 = vrot.slane %v2657, 4
    %v2727 = vrot.slane %v2658, 4
    %v2732 = vrot.slane %v2670, 4
    %v2733 = vrot.slane %v2671, 4
    %v2738 = vrot.slane %v2692, 4
    %v2739 = vrot.slane %v2693, 4
    %v2742 = vsel %vm436, %v2624, %v2720
    %v2743 = vsel %vm436, %v2625, %v2721
    %v2744 = vsel %vm436, %v2646, %v2726
    %v2745 = vsel %vm436, %v2647, %v2727
    %v2746 = vsel %vm436, %v2659, %v2732
    %v2747 = vsel %vm436, %v2660, %v2733
    %v2748 = vsel %vm436, %v2681, %v2738
    %v2749 = vsel %vm436, %v2682, %v2739
    %v2751 = vsel %vm436, %v2703, 0
    %v2754 = vsel %vm436, %v2704, 0
    %2756 = vmatprep.subr.mxu0 0.0
    %2757 = vmatpush1.msra.mxu0 0.0
    %2758 = vmatprep.subr.mxu0 0.0
    %2759 = vmatpush1.msra.mxu0 0.0
    %2760 = vmatprep.subr.mxu0 0.0
    %2761 = vmatpush1.msra.mxu0 0.0
    %2762 = vmatprep.subr.mxu0 0.0
    %2763 = vmatpush1.msra.mxu0 0.0
    %2764 = vmatprep.subr.mxu0 0.0
    %2765 = vmatpush1.msra.mxu0 0.0
    %2766 = vmatprep.subr.mxu0 0.0
    %2767 = vmatpush1.msra.mxu0 0.0
    %2768 = vmatprep.subr.mxu0 0.0
    %2769 = vmatpush1.msra.mxu0 0.0
    %2770 = vmatprep.subr.mxu0 0.0
    %2771 = vmatpush1.msra.mxu0 0.0
    %2772 = vmatprep.subr.mxu0 0.0
    %2773 = vmatpush1.msra.mxu0 0.0
    %2774 = vmatprep.subr.mxu0 0.0
    %2775 = vmatpush1.msra.mxu0 0.0
    %2776 = vmatprep.subr.mxu0 0.0
    %2777 = vmatpush1.msra.mxu0 0.0
    %2778 = vmatprep.subr.mxu0 %v2754
    %2779 = vmatpush1.msra.mxu0 %v2751
    %2780 = vmatprep.subr.mxu0 %v2749
    %2781 = vmatpush1.msra.mxu0 %v2748
    %2782 = vmatprep.subr.mxu0 %v2747
    %2783 = vmatpush1.msra.mxu0 %v2746
    %2784 = vmatprep.subr.mxu0 %v2745
    %2785 = vmatpush1.msra.mxu0 %v2744
    %2786 = vmatprep.subr.mxu0 %v2743
    %2787 = vmatpush1.msra.mxu0 %v2742
    %2788 = vmatprep.subr.mxu0 0.0
    %2789 = vmatpush2.msra.mxu0 0.0
    %2790 = vmatprep.subr.mxu0 0.0
    %2791 = vmatpush2.msra.mxu0 0.0
    %2792 = vmatprep.subr.mxu0 0.0
    %2793 = vmatpush2.msra.mxu0 0.0
    %2794 = vmatprep.subr.mxu0 0.0
    %2795 = vmatpush2.msra.mxu0 0.0
    %2796 = vmatprep.subr.mxu0 0.0
    %2797 = vmatpush2.msra.mxu0 0.0
    %2798 = vmatprep.subr.mxu0 0.0
    %2799 = vmatpush2.msra.mxu0 0.0
    %2800 = vmatprep.subr.mxu0 0.0
    %2801 = vmatpush2.msra.mxu0 0.0
    %2802 = vmatprep.subr.mxu0 0.0
    %2803 = vmatpush2.msra.mxu0 0.0
    %2804 = vmatprep.subr.mxu0 0.0
    %2805 = vmatpush2.msra.mxu0 0.0
    %2806 = vmatprep.subr.mxu0 0.0
    %2807 = vmatpush2.msra.mxu0 0.0
    %2808 = vmatprep.subr.mxu0 0.0
    %2809 = vmatpush2.msra.mxu0 0.0
    %2810 = vmatprep.subr.mxu0 0.0
    %2811 = vmatpush2.msra.mxu0 0.0
    %2812 = vmatprep.subr.mxu0 0.0
    %2813 = vmatpush2.msra.mxu0 0.0
    %2814 = vmatprep.subr.mxu0 0.0
    %2815 = vmatpush2.msra.mxu0 0.0
    %2816 = vmatprep.subr.mxu0 0.0
    %2817 = vmatpush2.msra.mxu0 0.0
    %2818 = vmatprep.subr.mxu0 0.0
    %2819 = vmatpush2.msra.mxu0 0.0
    %2820 = vmatprep.mubr.f32.mxu0 0.0
    %2821 = vmatmul.mubr.f32.gmra.mxu0 %v447
    %v2822 = vpop.f32.mrf.mxu0
    %v2823 = vadd.f32 %v2716, %v2822
    %v2824 = vpop.f32.mrf.mxu0
    %v2825 = vadd.f32 %v2717, %v2824
    %2826 = vdwg.mxu0
    %v2829 = vrot.slane %v2624, 4
    %v2830 = vrot.slane %v2625, 4
    %v2835 = vrot.slane %v2646, 4
    %v2836 = vrot.slane %v2647, 4
    %v2841 = vrot.slane %v2659, 4
    %v2842 = vrot.slane %v2660, 4
    %v2847 = vrot.slane %v2681, 4
    %v2848 = vrot.slane %v2682, 4
    %v2851 = vrot.slane %v2703, 4
    %v2852 = vrot.slane %v2704, 4
    %v2853 = vsel %vm436, %v2829, %v2635
    %v2854 = vsel %vm436, %v2830, %v2636
    %v2855 = vsel %vm436, %v2835, %v2657
    %v2856 = vsel %vm436, %v2836, %v2658
    %v2857 = vsel %vm436, %v2841, %v2670
    %v2858 = vsel %vm436, %v2842, %v2671
    %v2859 = vsel %vm436, %v2847, %v2692
    %v2860 = vsel %vm436, %v2848, %v2693
    %v2861 = vsel %vm436, %v2851, 0
    %v2863 = vsel %vm436, %v2852, 0
    %2865 = vmatprep.subr.mxu0 0.0
    %2866 = vmatpush1.msra.mxu0 0.0
    %2867 = vmatprep.subr.mxu0 0.0
    %2868 = vmatpush1.msra.mxu0 0.0
    %2869 = vmatprep.subr.mxu0 0.0
    %2870 = vmatpush1.msra.mxu0 0.0
    %2871 = vmatprep.subr.mxu0 0.0
    %2872 = vmatpush1.msra.mxu0 0.0
    %2873 = vmatprep.subr.mxu0 0.0
    %2874 = vmatpush1.msra.mxu0 0.0
    %2875 = vmatprep.subr.mxu0 0.0
    %2876 = vmatpush1.msra.mxu0 0.0
    %2877 = vmatprep.subr.mxu0 0.0
    %2878 = vmatpush1.msra.mxu0 0.0
    %2879 = vmatprep.subr.mxu0 0.0
    %2880 = vmatpush1.msra.mxu0 0.0
    %2881 = vmatprep.subr.mxu0 0.0
    %2882 = vmatpush1.msra.mxu0 0.0
    %2883 = vmatprep.subr.mxu0 0.0
    %2884 = vmatpush1.msra.mxu0 0.0
    %2885 = vmatprep.subr.mxu0 0.0
    %2886 = vmatpush1.msra.mxu0 0.0
    %2887 = vmatprep.subr.mxu0 %v2863
    %2888 = vmatpush1.msra.mxu0 %v2861
    %2889 = vmatprep.subr.mxu0 %v2860
    %2890 = vmatpush1.msra.mxu0 %v2859
    %2891 = vmatprep.subr.mxu0 %v2858
    %2892 = vmatpush1.msra.mxu0 %v2857
    %2893 = vmatprep.subr.mxu0 %v2856
    %2894 = vmatpush1.msra.mxu0 %v2855
    %2895 = vmatprep.subr.mxu0 %v2854
    %2896 = vmatpush1.msra.mxu0 %v2853
    %2897 = vmatprep.subr.mxu0 0.0
    %2898 = vmatpush2.msra.mxu0 0.0
    %2899 = vmatprep.subr.mxu0 0.0
    %2900 = vmatpush2.msra.mxu0 0.0
    %2901 = vmatprep.subr.mxu0 0.0
    %2902 = vmatpush2.msra.mxu0 0.0
    %2903 = vmatprep.subr.mxu0 0.0
    %2904 = vmatpush2.msra.mxu0 0.0
    %2905 = vmatprep.subr.mxu0 0.0
    %2906 = vmatpush2.msra.mxu0 0.0
    %2907 = vmatprep.subr.mxu0 0.0
    %2908 = vmatpush2.msra.mxu0 0.0
    %2909 = vmatprep.subr.mxu0 0.0
    %2910 = vmatpush2.msra.mxu0 0.0
    %2911 = vmatprep.subr.mxu0 0.0
    %2912 = vmatpush2.msra.mxu0 0.0
    %2913 = vmatprep.subr.mxu0 0.0
    %2914 = vmatpush2.msra.mxu0 0.0
    %2915 = vmatprep.subr.mxu0 0.0
    %2916 = vmatpush2.msra.mxu0 0.0
    %2917 = vmatprep.subr.mxu0 0.0
    %2918 = vmatpush2.msra.mxu0 0.0
    %2919 = vmatprep.subr.mxu0 0.0
    %2920 = vmatpush2.msra.mxu0 0.0
    %2921 = vmatprep.subr.mxu0 0.0
    %2922 = vmatpush2.msra.mxu0 0.0
    %2923 = vmatprep.subr.mxu0 0.0
    %2924 = vmatpush2.msra.mxu0 0.0
    %2925 = vmatprep.subr.mxu0 0.0
    %2926 = vmatpush2.msra.mxu0 0.0
    %2927 = vmatprep.subr.mxu0 0.0
    %2928 = vmatpush2.msra.mxu0 0.0
    %2929 = vmatprep.mubr.f32.mxu0 0.0
    %2930 = vmatmul.mubr.f32.gmra.mxu0 %v447
    %v2931 = vpop.f32.mrf.mxu0
    %v2932 = vadd.f32 %v2716, %v2931
    %v2933 = vpop.f32.mrf.mxu0
    %v2934 = vadd.f32 %v2717, %v2933
    %2935 = vdwg.mxu0
    %v2938 = vrot.slane %v2932, 4
    %v2939 = vrot.slane %v2934, 4
    %v2942 = vsel %vm436, %v2823, %v2938
    %v2943 = vsel %vm436, %v2825, %v2939
    %v2944 = vadd.f32 %v2942, %v2943
    %2945 = vadd.xlane.f32.xlu0 %v2944
    %v2946 = vpop.xlane.xlu0 %2945
    %v2947 = vmul.f32 %v2946, %v110
    %v2948 = vsub.f32 %v2942, %v2947
    %v2949 = vsub.f32 %v2943, %v2947
    %v2950 = vmul.f32 %v2948, %v2948
    %v2951 = vmul.f32 %v2949, %v2949
    %v2952 = vadd.f32 %v2950, %v2951
    %2953 = vadd.xlane.f32.xlu0 %v2952
    %v2954 = vpop.xlane.xlu0 %2953
    %v2955 = vmul.f32 %v2954, %v110
    %v2956 = vadd.f32 %v2955, 1e-05
    %v2957 = vrsqrt.pop %v2956
    %v2958 = vmul.f32 %v2948, %v2957
    %v2959 = vmul.f32 %v2949, %v2957
    %v2960 = vmul.f32 %v2958, %v662
    %v2961 = vmul.f32 %v2959, %v662
    %v2962 = vadd.f32 %v2960, %v669
    %v2963 = vadd.f32 %v2961, %v669
    %v2964 = vmax.f32 %v2962, 0.0
    %v2965 = vmax.f32 %v2963, 0.0
    %2967 = vrot.lane.b32.xlu0 %v2965, 17
    %v2968 = vpop.permute.xlu0 %2967
    %2971 = vrot.lane.b32.xlu0 %v2964, 17
    %v2972 = vpop.permute.xlu0 %2971
    %v2973 = vsel %vm147, %v2972, %v2968
    %v2976 = vsel %vm147, %v2968, %v2972
    %v2977 = vmul.f32 %v155, %v2976
    %v2978 = vmul.f32 %v159, %v2973
    %2979 = vrot.lane.b32.xlu0 %v2965, 16
    %v2980 = vpop.permute.xlu0 %2979
    %2982 = vrot.lane.b32.xlu0 %v2964, 16
    %v2983 = vpop.permute.xlu0 %2982
    %v2984 = vsel %vm167, %v2983, %v2980
    %v2987 = vsel %vm167, %v2980, %v2983
    %v2988 = vmul.f32 %v175, %v2987
    %v2989 = vmul.f32 %v179, %v2984
    %2990 = vrot.lane.b32.xlu0 %v2965, 15
    %v2991 = vpop.permute.xlu0 %2990
    %2993 = vrot.lane.b32.xlu0 %v2964, 15
    %v2994 = vpop.permute.xlu0 %2993
    %v2995 = vsel %vm187, %v2994, %v2991
    %v2998 = vsel %vm187, %v2991, %v2994
    %v2999 = vmul.f32 %v195, %v2998
    %v3000 = vmul.f32 %v199, %v2995
    %3001 = vrot.lane.b32.xlu0 %v2965, 1
    %v3002 = vpop.permute.xlu0 %3001
    %3004 = vrot.lane.b32.xlu0 %v2964, 1
    %v3005 = vpop.permute.xlu0 %3004
    %v3006 = vsel %vm207, %v3005, %v3002
    %v3009 = vsel %vm207, %v3002, %v3005
    %v3010 = vmul.f32 %v215, %v3009
    %v3011 = vmul.f32 %v219, %v3006
    %v3012 = vmul.f32 %v225, %v2964
    %v3013 = vmul.f32 %v229, %v2965
    %3014 = vrot.lane.b32.xlu0 %v2964, 127
    %v3015 = vpop.permute.xlu0 %3014
    %3016 = vrot.lane.b32.xlu0 %v2965, 127
    %v3017 = vpop.permute.xlu0 %3016
    %v3018 = vsel %vm236, %v3015, %v3017
    %v3022 = vsel %vm236, %v3017, %v3015
    %v3023 = vmul.f32 %v245, %v3018
    %v3024 = vmul.f32 %v249, %v3022
    %3025 = vrot.lane.b32.xlu0 %v2964, 113
    %v3026 = vpop.permute.xlu0 %3025
    %3027 = vrot.lane.b32.xlu0 %v2965, 113
    %v3028 = vpop.permute.xlu0 %3027
    %v3029 = vsel %vm256, %v3026, %v3028
    %v3033 = vsel %vm256, %v3028, %v3026
    %v3034 = vmul.f32 %v265, %v3029
    %v3035 = vmul.f32 %v269, %v3033
    %3036 = vrot.lane.b32.xlu0 %v2964, 112
    %v3037 = vpop.permute.xlu0 %3036
    %3038 = vrot.lane.b32.xlu0 %v2965, 112
    %v3039 = vpop.permute.xlu0 %3038
    %v3040 = vsel %vm276, %v3037, %v3039
    %v3044 = vsel %vm276, %v3039, %v3037
    %v3045 = vmul.f32 %v285, %v3040
    %v3046 = vmul.f32 %v289, %v3044
    %3047 = vrot.lane.b32.xlu0 %v2964, 111
    %v3048 = vpop.permute.xlu0 %3047
    %3049 = vrot.lane.b32.xlu0 %v2965, 111
    %v3050 = vpop.permute.xlu0 %3049
    %v3051 = vsel %vm296, %v3048, %v3050
    %v3055 = vsel %vm296, %v3050, %v3048
    %v3056 = vmul.f32 %v305, %v3051
    %v3057 = vmul.f32 %v309, %v3055
    %v3058 = vmul.f32 %v2712, %v837
    %v3059 = vmul.f32 %v2712, %v839
    %v3060 = vadd.f32 %v3058, %v846
    %v3061 = vadd.f32 %v3059, %v846
    %v3064 = vrot.slane %v2988, 4
    %v3065 = vrot.slane %v2989, 4
    %v3070 = vrot.slane %v3010, 4
    %v3071 = vrot.slane %v3011, 4
    %v3076 = vrot.slane %v3023, 4
    %v3077 = vrot.slane %v3024, 4
    %v3082 = vrot.slane %v3045, 4
    %v3083 = vrot.slane %v3046, 4
    %v3086 = vsel %vm436, %v2977, %v3064
    %v3087 = vsel %vm436, %v2978, %v3065
    %v3088 = vsel %vm436, %v2999, %v3070
    %v3089 = vsel %vm436, %v3000, %v3071
    %v3090 = vsel %vm436, %v3012, %v3076
    %v3091 = vsel %vm436, %v3013, %v3077
    %v3092 = vsel %vm436, %v3034, %v3082
    %v3093 = vsel %vm436, %v3035, %v3083
    %v3095 = vsel %vm436, %v3056, 0
    %v3098 = vsel %vm436, %v3057, 0
    %3100 = vmatprep.subr.mxu0 0.0
    %3101 = vmatpush1.msra.mxu0 0.0
    %3102 = vmatprep.subr.mxu0 0.0
    %3103 = vmatpush1.msra.mxu0 0.0
    %3104 = vmatprep.subr.mxu0 0.0
    %3105 = vmatpush1.msra.mxu0 0.0
    %3106 = vmatprep.subr.mxu0 0.0
    %3107 = vmatpush1.msra.mxu0 0.0
    %3108 = vmatprep.subr.mxu0 0.0
    %3109 = vmatpush1.msra.mxu0 0.0
    %3110 = vmatprep.subr.mxu0 0.0
    %3111 = vmatpush1.msra.mxu0 0.0
    %3112 = vmatprep.subr.mxu0 0.0
    %3113 = vmatpush1.msra.mxu0 0.0
    %3114 = vmatprep.subr.mxu0 0.0
    %3115 = vmatpush1.msra.mxu0 0.0
    %3116 = vmatprep.subr.mxu0 0.0
    %3117 = vmatpush1.msra.mxu0 0.0
    %3118 = vmatprep.subr.mxu0 0.0
    %3119 = vmatpush1.msra.mxu0 0.0
    %3120 = vmatprep.subr.mxu0 0.0
    %3121 = vmatpush1.msra.mxu0 0.0
    %3122 = vmatprep.subr.mxu0 %v3098
    %3123 = vmatpush1.msra.mxu0 %v3095
    %3124 = vmatprep.subr.mxu0 %v3093
    %3125 = vmatpush1.msra.mxu0 %v3092
    %3126 = vmatprep.subr.mxu0 %v3091
    %3127 = vmatpush1.msra.mxu0 %v3090
    %3128 = vmatprep.subr.mxu0 %v3089
    %3129 = vmatpush1.msra.mxu0 %v3088
    %3130 = vmatprep.subr.mxu0 %v3087
    %3131 = vmatpush1.msra.mxu0 %v3086
    %3132 = vmatprep.subr.mxu0 0.0
    %3133 = vmatpush2.msra.mxu0 0.0
    %3134 = vmatprep.subr.mxu0 0.0
    %3135 = vmatpush2.msra.mxu0 0.0
    %3136 = vmatprep.subr.mxu0 0.0
    %3137 = vmatpush2.msra.mxu0 0.0
    %3138 = vmatprep.subr.mxu0 0.0
    %3139 = vmatpush2.msra.mxu0 0.0
    %3140 = vmatprep.subr.mxu0 0.0
    %3141 = vmatpush2.msra.mxu0 0.0
    %3142 = vmatprep.subr.mxu0 0.0
    %3143 = vmatpush2.msra.mxu0 0.0
    %3144 = vmatprep.subr.mxu0 0.0
    %3145 = vmatpush2.msra.mxu0 0.0
    %3146 = vmatprep.subr.mxu0 0.0
    %3147 = vmatpush2.msra.mxu0 0.0
    %3148 = vmatprep.subr.mxu0 0.0
    %3149 = vmatpush2.msra.mxu0 0.0
    %3150 = vmatprep.subr.mxu0 0.0
    %3151 = vmatpush2.msra.mxu0 0.0
    %3152 = vmatprep.subr.mxu0 0.0
    %3153 = vmatpush2.msra.mxu0 0.0
    %3154 = vmatprep.subr.mxu0 0.0
    %3155 = vmatpush2.msra.mxu0 0.0
    %3156 = vmatprep.subr.mxu0 0.0
    %3157 = vmatpush2.msra.mxu0 0.0
    %3158 = vmatprep.subr.mxu0 0.0
    %3159 = vmatpush2.msra.mxu0 0.0
    %3160 = vmatprep.subr.mxu0 0.0
    %3161 = vmatpush2.msra.mxu0 0.0
    %3162 = vmatprep.subr.mxu0 0.0
    %3163 = vmatpush2.msra.mxu0 0.0
    %3164 = vmatprep.mubr.f32.mxu0 0.0
    %3165 = vmatmul.mubr.f32.gmra.mxu0 %v883
    %v3166 = vpop.f32.mrf.mxu0
    %v3167 = vadd.f32 %v3060, %v3166
    %v3168 = vpop.f32.mrf.mxu0
    %v3169 = vadd.f32 %v3061, %v3168
    %3170 = vdwg.mxu0
    %v3173 = vrot.slane %v2977, 4
    %v3174 = vrot.slane %v2978, 4
    %v3179 = vrot.slane %v2999, 4
    %v3180 = vrot.slane %v3000, 4
    %v3185 = vrot.slane %v3012, 4
    %v3186 = vrot.slane %v3013, 4
    %v3191 = vrot.slane %v3034, 4
    %v3192 = vrot.slane %v3035, 4
    %v3195 = vrot.slane %v3056, 4
    %v3196 = vrot.slane %v3057, 4
    %v3197 = vsel %vm436, %v3173, %v2988
    %v3198 = vsel %vm436, %v3174, %v2989
    %v3199 = vsel %vm436, %v3179, %v3010
    %v3200 = vsel %vm436, %v3180, %v3011
    %v3201 = vsel %vm436, %v3185, %v3023
    %v3202 = vsel %vm436, %v3186, %v3024
    %v3203 = vsel %vm436, %v3191, %v3045
    %v3204 = vsel %vm436, %v3192, %v3046
    %v3205 = vsel %vm436, %v3195, 0
    %v3207 = vsel %vm436, %v3196, 0
    %3209 = vmatprep.subr.mxu0 0.0
    %3210 = vmatpush1.msra.mxu0 0.0
    %3211 = vmatprep.subr.mxu0 0.0
    %3212 = vmatpush1.msra.mxu0 0.0
    %3213 = vmatprep.subr.mxu0 0.0
    %3214 = vmatpush1.msra.mxu0 0.0
    %3215 = vmatprep.subr.mxu0 0.0
    %3216 = vmatpush1.msra.mxu0 0.0
    %3217 = vmatprep.subr.mxu0 0.0
    %3218 = vmatpush1.msra.mxu0 0.0
    %3219 = vmatprep.subr.mxu0 0.0
    %3220 = vmatpush1.msra.mxu0 0.0
    %3221 = vmatprep.subr.mxu0 0.0
    %3222 = vmatpush1.msra.mxu0 0.0
    %3223 = vmatprep.subr.mxu0 0.0
    %3224 = vmatpush1.msra.mxu0 0.0
    %3225 = vmatprep.subr.mxu0 0.0
    %3226 = vmatpush1.msra.mxu0 0.0
    %3227 = vmatprep.subr.mxu0 0.0
    %3228 = vmatpush1.msra.mxu0 0.0
    %3229 = vmatprep.subr.mxu0 0.0
    %3230 = vmatpush1.msra.mxu0 0.0
    %3231 = vmatprep.subr.mxu0 %v3207
    %3232 = vmatpush1.msra.mxu0 %v3205
    %3233 = vmatprep.subr.mxu0 %v3204
    %3234 = vmatpush1.msra.mxu0 %v3203
    %3235 = vmatprep.subr.mxu0 %v3202
    %3236 = vmatpush1.msra.mxu0 %v3201
    %3237 = vmatprep.subr.mxu0 %v3200
    %3238 = vmatpush1.msra.mxu0 %v3199
    %3239 = vmatprep.subr.mxu0 %v3198
    %3240 = vmatpush1.msra.mxu0 %v3197
    %3241 = vmatprep.subr.mxu0 0.0
    %3242 = vmatpush2.msra.mxu0 0.0
    %3243 = vmatprep.subr.mxu0 0.0
    %3244 = vmatpush2.msra.mxu0 0.0
    %3245 = vmatprep.subr.mxu0 0.0
    %3246 = vmatpush2.msra.mxu0 0.0
    %3247 = vmatprep.subr.mxu0 0.0
    %3248 = vmatpush2.msra.mxu0 0.0
    %3249 = vmatprep.subr.mxu0 0.0
    %3250 = vmatpush2.msra.mxu0 0.0
    %3251 = vmatprep.subr.mxu0 0.0
    %3252 = vmatpush2.msra.mxu0 0.0
    %3253 = vmatprep.subr.mxu0 0.0
    %3254 = vmatpush2.msra.mxu0 0.0
    %3255 = vmatprep.subr.mxu0 0.0
    %3256 = vmatpush2.msra.mxu0 0.0
    %3257 = vmatprep.subr.mxu0 0.0
    %3258 = vmatpush2.msra.mxu0 0.0
    %3259 = vmatprep.subr.mxu0 0.0
    %3260 = vmatpush2.msra.mxu0 0.0
    %3261 = vmatprep.subr.mxu0 0.0
    %3262 = vmatpush2.msra.mxu0 0.0
    %3263 = vmatprep.subr.mxu0 0.0
    %3264 = vmatpush2.msra.mxu0 0.0
    %3265 = vmatprep.subr.mxu0 0.0
    %3266 = vmatpush2.msra.mxu0 0.0
    %3267 = vmatprep.subr.mxu0 0.0
    %3268 = vmatpush2.msra.mxu0 0.0
    %3269 = vmatprep.subr.mxu0 0.0
    %3270 = vmatpush2.msra.mxu0 0.0
    %3271 = vmatprep.subr.mxu0 0.0
    %3272 = vmatpush2.msra.mxu0 0.0
    %3273 = vmatprep.mubr.f32.mxu0 0.0
    %3274 = vmatmul.mubr.f32.gmra.mxu0 %v883
    %v3275 = vpop.f32.mrf.mxu0
    %v3276 = vadd.f32 %v3060, %v3275
    %v3277 = vpop.f32.mrf.mxu0
    %v3278 = vadd.f32 %v3061, %v3277
    %3279 = vdwg.mxu0
    %v3282 = vrot.slane %v3276, 4
    %v3283 = vrot.slane %v3278, 4
    %v3286 = vsel %vm436, %v3167, %v3282
    %v3287 = vsel %vm436, %v3169, %v3283
    %v3288 = vadd.f32 %v3286, %v3287
    %3289 = vadd.xlane.f32.xlu0 %v3288
    %v3290 = vpop.xlane.xlu0 %3289
    %v3291 = vmul.f32 %v3290, %v110
    %v3292 = vsub.f32 %v3286, %v3291
    %v3293 = vsub.f32 %v3287, %v3291
    %v3294 = vmul.f32 %v3292, %v3292
    %v3295 = vmul.f32 %v3293, %v3293
    %v3296 = vadd.f32 %v3294, %v3295
    %3297 = vadd.xlane.f32.xlu0 %v3296
    %v3298 = vpop.xlane.xlu0 %3297
    %v3299 = vmul.f32 %v3298, %v110
    %v3300 = vadd.f32 %v3299, 1e-05
    %v3301 = vrsqrt.pop %v3300
    %v3302 = vmul.f32 %v3292, %v3301
    %v3303 = vmul.f32 %v3293, %v3301
    %v3304 = vmul.f32 %v3302, %v1098
    %v3305 = vmul.f32 %v3303, %v1098
    %v3306 = vadd.f32 %v3304, %v1105
    %v3307 = vadd.f32 %v3305, %v1105
    %v3308 = vadd.f32 %v78, %v81
    %v3309 = vmul.f32 %v84, 2.8462753
    %v3310 = vmul.f32 %v85, 2.8462753
    %v3311 = vmul.f32 %v1107, 10.757576
    %v3312 = vmul.f32 %v1108, 10.757576
    %v3313 = vsub.f32 %v3309, %v3311
    %v3314 = vsub.f32 %v3310, %v3312
    %v3315 = vmul.f32 %v1836, 8.906423
    %v3316 = vmul.f32 %v1837, 8.906423
    %v3317 = vadd.f32 %v3313, %v3315
    %v3318 = vadd.f32 %v3314, %v3316
    %v3319 = vmul.f32 %v2569, 0.2784091
    %v3320 = vmul.f32 %v2570, 0.2784091
    %v3321 = vadd.f32 %v3317, %v3319
    %v3322 = vadd.f32 %v3318, %v3320
    %v3323 = vmul.f32 %v3306, 0.27353132
    %v3324 = vmul.f32 %v3307, 0.27353132
    %v3325 = vsub.f32 %v3321, %v3323
    %v3326 = vsub.f32 %v3322, %v3324
    %v3327 = vmul.f32 %v101, %v3325
    %v3328 = vmul.f32 %v101, %v3326
    %v3329 = vadd.f32 %v82, %v3327
    %v3330 = vadd.f32 %v83, %v3328
    %v3331 = vadd.f32 %v3329, %v3330
    %3332 = vadd.xlane.f32.xlu0 %v3331
    %v3333 = vpop.xlane.xlu0 %3332
    %v3334 = vmul.f32 %v3333, %v110
    %v3335 = vsub.f32 %v3329, %v3334
    %v3336 = vsub.f32 %v3330, %v3334
    %v3337 = vmul.f32 %v3335, %v3335
    %v3338 = vmul.f32 %v3336, %v3336
    %v3339 = vadd.f32 %v3337, %v3338
    %3340 = vadd.xlane.f32.xlu0 %v3339
    %v3341 = vpop.xlane.xlu0 %3340
    %v3342 = vmul.f32 %v3341, %v110
    %v3343 = vadd.f32 %v3342, 1e-05
    %v3344 = vrsqrt.pop %v3343
    %v3345 = vmul.f32 %v3335, %v3344
    %v3346 = vmul.f32 %v3336, %v3344
    %v3347 = vmul.f32 %v3345, %v127
    %v3348 = vmul.f32 %v3346, %v127
    %v3349 = vadd.f32 %v3347, %v134
    %v3350 = vadd.f32 %v3348, %v134
    %v3351 = vmax.f32 %v3349, 0.0
    %v3352 = vmax.f32 %v3350, 0.0
    %3354 = vrot.lane.b32.xlu0 %v3352, 17
    %v3355 = vpop.permute.xlu0 %3354
    %3358 = vrot.lane.b32.xlu0 %v3351, 17
    %v3359 = vpop.permute.xlu0 %3358
    %v3360 = vsel %vm147, %v3359, %v3355
    %v3363 = vsel %vm147, %v3355, %v3359
    %v3364 = vmul.f32 %v155, %v3363
    %v3365 = vmul.f32 %v159, %v3360
    %3366 = vrot.lane.b32.xlu0 %v3352, 16
    %v3367 = vpop.permute.xlu0 %3366
    %3369 = vrot.lane.b32.xlu0 %v3351, 16
    %v3370 = vpop.permute.xlu0 %3369
    %v3371 = vsel %vm167, %v3370, %v3367
    %v3374 = vsel %vm167, %v3367, %v3370
    %v3375 = vmul.f32 %v175, %v3374
    %v3376 = vmul.f32 %v179, %v3371
    %3377 = vrot.lane.b32.xlu0 %v3352, 15
    %v3378 = vpop.permute.xlu0 %3377
    %3380 = vrot.lane.b32.xlu0 %v3351, 15
    %v3381 = vpop.permute.xlu0 %3380
    %v3382 = vsel %vm187, %v3381, %v3378
    %v3385 = vsel %vm187, %v3378, %v3381
    %v3386 = vmul.f32 %v195, %v3385
    %v3387 = vmul.f32 %v199, %v3382
    %3388 = vrot.lane.b32.xlu0 %v3352, 1
    %v3389 = vpop.permute.xlu0 %3388
    %3391 = vrot.lane.b32.xlu0 %v3351, 1
    %v3392 = vpop.permute.xlu0 %3391
    %v3393 = vsel %vm207, %v3392, %v3389
    %v3396 = vsel %vm207, %v3389, %v3392
    %v3397 = vmul.f32 %v215, %v3396
    %v3398 = vmul.f32 %v219, %v3393
    %v3399 = vmul.f32 %v225, %v3351
    %v3400 = vmul.f32 %v229, %v3352
    %3401 = vrot.lane.b32.xlu0 %v3351, 127
    %v3402 = vpop.permute.xlu0 %3401
    %3403 = vrot.lane.b32.xlu0 %v3352, 127
    %v3404 = vpop.permute.xlu0 %3403
    %v3405 = vsel %vm236, %v3402, %v3404
    %v3409 = vsel %vm236, %v3404, %v3402
    %v3410 = vmul.f32 %v245, %v3405
    %v3411 = vmul.f32 %v249, %v3409
    %3412 = vrot.lane.b32.xlu0 %v3351, 113
    %v3413 = vpop.permute.xlu0 %3412
    %3414 = vrot.lane.b32.xlu0 %v3352, 113
    %v3415 = vpop.permute.xlu0 %3414
    %v3416 = vsel %vm256, %v3413, %v3415
    %v3420 = vsel %vm256, %v3415, %v3413
    %v3421 = vmul.f32 %v265, %v3416
    %v3422 = vmul.f32 %v269, %v3420
    %3423 = vrot.lane.b32.xlu0 %v3351, 112
    %v3424 = vpop.permute.xlu0 %3423
    %3425 = vrot.lane.b32.xlu0 %v3352, 112
    %v3426 = vpop.permute.xlu0 %3425
    %v3427 = vsel %vm276, %v3424, %v3426
    %v3431 = vsel %vm276, %v3426, %v3424
    %v3432 = vmul.f32 %v285, %v3427
    %v3433 = vmul.f32 %v289, %v3431
    %3434 = vrot.lane.b32.xlu0 %v3351, 111
    %v3435 = vpop.permute.xlu0 %3434
    %3436 = vrot.lane.b32.xlu0 %v3352, 111
    %v3437 = vpop.permute.xlu0 %3436
    %v3438 = vsel %vm296, %v3435, %v3437
    %v3442 = vsel %vm296, %v3437, %v3435
    %v3443 = vmul.f32 %v305, %v3438
    %v3444 = vmul.f32 %v309, %v3442
    %v3446 = vlaneseq
    %v3447 = vshrl.u32 %v3446, 7
    %v3448 = vsub.s32 0, %v3447
    %v3449 = vrot.slane %v3308, %v3448
    %3450 = vset.pattern.permute.xlu0 0
    %3451 = vperm.xlu0 %3450, %v3449
    %v3452 = vpop.permute.xlu0 %3451
    %v3454 = vmul.f32 %v3452, %v390
    %v3455 = vmul.f32 %v3452, %v392
    %v3456 = vadd.f32 %v3454, %v408
    %v3457 = vadd.f32 %v3455, %v408
    %v3460 = vrot.slane %v3375, 4
    %v3461 = vrot.slane %v3376, 4
    %v3466 = vrot.slane %v3397, 4
    %v3467 = vrot.slane %v3398, 4
    %v3472 = vrot.slane %v3410, 4
    %v3473 = vrot.slane %v3411, 4
    %v3478 = vrot.slane %v3432, 4
    %v3479 = vrot.slane %v3433, 4
    %v3482 = vsel %vm436, %v3364, %v3460
    %v3483 = vsel %vm436, %v3365, %v3461
    %v3484 = vsel %vm436, %v3386, %v3466
    %v3485 = vsel %vm436, %v3387, %v3467
    %v3486 = vsel %vm436, %v3399, %v3472
    %v3487 = vsel %vm436, %v3400, %v3473
    %v3488 = vsel %vm436, %v3421, %v3478
    %v3489 = vsel %vm436, %v3422, %v3479
    %v3491 = vsel %vm436, %v3443, 0
    %v3494 = vsel %vm436, %v3444, 0
    %3496 = vmatprep.subr.mxu0 0.0
    %3497 = vmatpush1.msra.mxu0 0.0
    %3498 = vmatprep.subr.mxu0 0.0
    %3499 = vmatpush1.msra.mxu0 0.0
    %3500 = vmatprep.subr.mxu0 0.0
    %3501 = vmatpush1.msra.mxu0 0.0
    %3502 = vmatprep.subr.mxu0 0.0
    %3503 = vmatpush1.msra.mxu0 0.0
    %3504 = vmatprep.subr.mxu0 0.0
    %3505 = vmatpush1.msra.mxu0 0.0
    %3506 = vmatprep.subr.mxu0 0.0
    %3507 = vmatpush1.msra.mxu0 0.0
    %3508 = vmatprep.subr.mxu0 0.0
    %3509 = vmatpush1.msra.mxu0 0.0
    %3510 = vmatprep.subr.mxu0 0.0
    %3511 = vmatpush1.msra.mxu0 0.0
    %3512 = vmatprep.subr.mxu0 0.0
    %3513 = vmatpush1.msra.mxu0 0.0
    %3514 = vmatprep.subr.mxu0 0.0
    %3515 = vmatpush1.msra.mxu0 0.0
    %3516 = vmatprep.subr.mxu0 0.0
    %3517 = vmatpush1.msra.mxu0 0.0
    %3518 = vmatprep.subr.mxu0 %v3494
    %3519 = vmatpush1.msra.mxu0 %v3491
    %3520 = vmatprep.subr.mxu0 %v3489
    %3521 = vmatpush1.msra.mxu0 %v3488
    %3522 = vmatprep.subr.mxu0 %v3487
    %3523 = vmatpush1.msra.mxu0 %v3486
    %3524 = vmatprep.subr.mxu0 %v3485
    %3525 = vmatpush1.msra.mxu0 %v3484
    %3526 = vmatprep.subr.mxu0 %v3483
    %3527 = vmatpush1.msra.mxu0 %v3482
    %3528 = vmatprep.subr.mxu0 0.0
    %3529 = vmatpush2.msra.mxu0 0.0
    %3530 = vmatprep.subr.mxu0 0.0
    %3531 = vmatpush2.msra.mxu0 0.0
    %3532 = vmatprep.subr.mxu0 0.0
    %3533 = vmatpush2.msra.mxu0 0.0
    %3534 = vmatprep.subr.mxu0 0.0
    %3535 = vmatpush2.msra.mxu0 0.0
    %3536 = vmatprep.subr.mxu0 0.0
    %3537 = vmatpush2.msra.mxu0 0.0
    %3538 = vmatprep.subr.mxu0 0.0
    %3539 = vmatpush2.msra.mxu0 0.0
    %3540 = vmatprep.subr.mxu0 0.0
    %3541 = vmatpush2.msra.mxu0 0.0
    %3542 = vmatprep.subr.mxu0 0.0
    %3543 = vmatpush2.msra.mxu0 0.0
    %3544 = vmatprep.subr.mxu0 0.0
    %3545 = vmatpush2.msra.mxu0 0.0
    %3546 = vmatprep.subr.mxu0 0.0
    %3547 = vmatpush2.msra.mxu0 0.0
    %3548 = vmatprep.subr.mxu0 0.0
    %3549 = vmatpush2.msra.mxu0 0.0
    %3550 = vmatprep.subr.mxu0 0.0
    %3551 = vmatpush2.msra.mxu0 0.0
    %3552 = vmatprep.subr.mxu0 0.0
    %3553 = vmatpush2.msra.mxu0 0.0
    %3554 = vmatprep.subr.mxu0 0.0
    %3555 = vmatpush2.msra.mxu0 0.0
    %3556 = vmatprep.subr.mxu0 0.0
    %3557 = vmatpush2.msra.mxu0 0.0
    %3558 = vmatprep.subr.mxu0 0.0
    %3559 = vmatpush2.msra.mxu0 0.0
    %3560 = vmatprep.mubr.f32.mxu0 0.0
    %3561 = vmatmul.mubr.f32.gmra.mxu0 %v447
    %v3562 = vpop.f32.mrf.mxu0
    %v3563 = vadd.f32 %v3456, %v3562
    %v3564 = vpop.f32.mrf.mxu0
    %v3565 = vadd.f32 %v3457, %v3564
    %3566 = vdwg.mxu0
    %v3569 = vrot.slane %v3364, 4
    %v3570 = vrot.slane %v3365, 4
    %v3575 = vrot.slane %v3386, 4
    %v3576 = vrot.slane %v3387, 4
    %v3581 = vrot.slane %v3399, 4
    %v3582 = vrot.slane %v3400, 4
    %v3587 = vrot.slane %v3421, 4
    %v3588 = vrot.slane %v3422, 4
    %v3591 = vrot.slane %v3443, 4
    %v3592 = vrot.slane %v3444, 4
    %v3593 = vsel %vm436, %v3569, %v3375
    %v3594 = vsel %vm436, %v3570, %v3376
    %v3595 = vsel %vm436, %v3575, %v3397
    %v3596 = vsel %vm436, %v3576, %v3398
    %v3597 = vsel %vm436, %v3581, %v3410
    %v3598 = vsel %vm436, %v3582, %v3411
    %v3599 = vsel %vm436, %v3587, %v3432
    %v3600 = vsel %vm436, %v3588, %v3433
    %v3601 = vsel %vm436, %v3591, 0
    %v3603 = vsel %vm436, %v3592, 0
    %3605 = vmatprep.subr.mxu0 0.0
    %3606 = vmatpush1.msra.mxu0 0.0
    %3607 = vmatprep.subr.mxu0 0.0
    %3608 = vmatpush1.msra.mxu0 0.0
    %3609 = vmatprep.subr.mxu0 0.0
    %3610 = vmatpush1.msra.mxu0 0.0
    %3611 = vmatprep.subr.mxu0 0.0
    %3612 = vmatpush1.msra.mxu0 0.0
    %3613 = vmatprep.subr.mxu0 0.0
    %3614 = vmatpush1.msra.mxu0 0.0
    %3615 = vmatprep.subr.mxu0 0.0
    %3616 = vmatpush1.msra.mxu0 0.0
    %3617 = vmatprep.subr.mxu0 0.0
    %3618 = vmatpush1.msra.mxu0 0.0
    %3619 = vmatprep.subr.mxu0 0.0
    %3620 = vmatpush1.msra.mxu0 0.0
    %3621 = vmatprep.subr.mxu0 0.0
    %3622 = vmatpush1.msra.mxu0 0.0
    %3623 = vmatprep.subr.mxu0 0.0
    %3624 = vmatpush1.msra.mxu0 0.0
    %3625 = vmatprep.subr.mxu0 0.0
    %3626 = vmatpush1.msra.mxu0 0.0
    %3627 = vmatprep.subr.mxu0 %v3603
    %3628 = vmatpush1.msra.mxu0 %v3601
    %3629 = vmatprep.subr.mxu0 %v3600
    %3630 = vmatpush1.msra.mxu0 %v3599
    %3631 = vmatprep.subr.mxu0 %v3598
    %3632 = vmatpush1.msra.mxu0 %v3597
    %3633 = vmatprep.subr.mxu0 %v3596
    %3634 = vmatpush1.msra.mxu0 %v3595
    %3635 = vmatprep.subr.mxu0 %v3594
    %3636 = vmatpush1.msra.mxu0 %v3593
    %3637 = vmatprep.subr.mxu0 0.0
    %3638 = vmatpush2.msra.mxu0 0.0
    %3639 = vmatprep.subr.mxu0 0.0
    %3640 = vmatpush2.msra.mxu0 0.0
    %3641 = vmatprep.subr.mxu0 0.0
    %3642 = vmatpush2.msra.mxu0 0.0
    %3643 = vmatprep.subr.mxu0 0.0
    %3644 = vmatpush2.msra.mxu0 0.0
    %3645 = vmatprep.subr.mxu0 0.0
    %3646 = vmatpush2.msra.mxu0 0.0
    %3647 = vmatprep.subr.mxu0 0.0
    %3648 = vmatpush2.msra.mxu0 0.0
    %3649 = vmatprep.subr.mxu0 0.0
    %3650 = vmatpush2.msra.mxu0 0.0
    %3651 = vmatprep.subr.mxu0 0.0
    %3652 = vmatpush2.msra.mxu0 0.0
    %3653 = vmatprep.subr.mxu0 0.0
    %3654 = vmatpush2.msra.mxu0 0.0
    %3655 = vmatprep.subr.mxu0 0.0
    %3656 = vmatpush2.msra.mxu0 0.0
    %3657 = vmatprep.subr.mxu0 0.0
    %3658 = vmatpush2.msra.mxu0 0.0
    %3659 = vmatprep.subr.mxu0 0.0
    %3660 = vmatpush2.msra.mxu0 0.0
    %3661 = vmatprep.subr.mxu0 0.0
    %3662 = vmatpush2.msra.mxu0 0.0
    %3663 = vmatprep.subr.mxu0 0.0
    %3664 = vmatpush2.msra.mxu0 0.0
    %3665 = vmatprep.subr.mxu0 0.0
    %3666 = vmatpush2.msra.mxu0 0.0
    %3667 = vmatprep.subr.mxu0 0.0
    %3668 = vmatpush2.msra.mxu0 0.0
    %3669 = vmatprep.mubr.f32.mxu0 0.0
    %3670 = vmatmul.mubr.f32.gmra.mxu0 %v447
    %v3671 = vpop.f32.mrf.mxu0
    %v3672 = vadd.f32 %v3456, %v3671
    %v3673 = vpop.f32.mrf.mxu0
    %v3674 = vadd.f32 %v3457, %v3673
    %3675 = vdwg.mxu0
    %v3678 = vrot.slane %v3672, 4
    %v3679 = vrot.slane %v3674, 4
    %v3682 = vsel %vm436, %v3563, %v3678
    %v3683 = vsel %vm436, %v3565, %v3679
    %v3684 = vadd.f32 %v3682, %v3683
    %3685 = vadd.xlane.f32.xlu0 %v3684
    %v3686 = vpop.xlane.xlu0 %3685
    %v3687 = vmul.f32 %v3686, %v110
    %v3688 = vsub.f32 %v3682, %v3687
    %v3689 = vsub.f32 %v3683, %v3687
    %v3690 = vmul.f32 %v3688, %v3688
    %v3691 = vmul.f32 %v3689, %v3689
    %v3692 = vadd.f32 %v3690, %v3691
    %3693 = vadd.xlane.f32.xlu0 %v3692
    %v3694 = vpop.xlane.xlu0 %3693
    %v3695 = vmul.f32 %v3694, %v110
    %v3696 = vadd.f32 %v3695, 1e-05
    %v3697 = vrsqrt.pop %v3696
    %v3698 = vmul.f32 %v3688, %v3697
    %v3699 = vmul.f32 %v3689, %v3697
    %v3700 = vmul.f32 %v3698, %v662
    %v3701 = vmul.f32 %v3699, %v662
    %v3702 = vadd.f32 %v3700, %v669
    %v3703 = vadd.f32 %v3701, %v669
    %v3704 = vmax.f32 %v3702, 0.0
    %v3705 = vmax.f32 %v3703, 0.0
    %3707 = vrot.lane.b32.xlu0 %v3705, 17
    %v3708 = vpop.permute.xlu0 %3707
    %3711 = vrot.lane.b32.xlu0 %v3704, 17
    %v3712 = vpop.permute.xlu0 %3711
    %v3713 = vsel %vm147, %v3712, %v3708
    %v3716 = vsel %vm147, %v3708, %v3712
    %v3717 = vmul.f32 %v155, %v3716
    %v3718 = vmul.f32 %v159, %v3713
    %3719 = vrot.lane.b32.xlu0 %v3705, 16
    %v3720 = vpop.permute.xlu0 %3719
    %3722 = vrot.lane.b32.xlu0 %v3704, 16
    %v3723 = vpop.permute.xlu0 %3722
    %v3724 = vsel %vm167, %v3723, %v3720
    %v3727 = vsel %vm167, %v3720, %v3723
    %v3728 = vmul.f32 %v175, %v3727
    %v3729 = vmul.f32 %v179, %v3724
    %3730 = vrot.lane.b32.xlu0 %v3705, 15
    %v3731 = vpop.permute.xlu0 %3730
    %3733 = vrot.lane.b32.xlu0 %v3704, 15
    %v3734 = vpop.permute.xlu0 %3733
    %v3735 = vsel %vm187, %v3734, %v3731
    %v3738 = vsel %vm187, %v3731, %v3734
    %v3739 = vmul.f32 %v195, %v3738
    %v3740 = vmul.f32 %v199, %v3735
    %3741 = vrot.lane.b32.xlu0 %v3705, 1
    %v3742 = vpop.permute.xlu0 %3741
    %3744 = vrot.lane.b32.xlu0 %v3704, 1
    %v3745 = vpop.permute.xlu0 %3744
    %v3746 = vsel %vm207, %v3745, %v3742
    %v3749 = vsel %vm207, %v3742, %v3745
    %v3750 = vmul.f32 %v215, %v3749
    %v3751 = vmul.f32 %v219, %v3746
    %v3752 = vmul.f32 %v225, %v3704
    %v3753 = vmul.f32 %v229, %v3705
    %3754 = vrot.lane.b32.xlu0 %v3704, 127
    %v3755 = vpop.permute.xlu0 %3754
    %3756 = vrot.lane.b32.xlu0 %v3705, 127
    %v3757 = vpop.permute.xlu0 %3756
    %v3758 = vsel %vm236, %v3755, %v3757
    %v3762 = vsel %vm236, %v3757, %v3755
    %v3763 = vmul.f32 %v245, %v3758
    %v3764 = vmul.f32 %v249, %v3762
    %3765 = vrot.lane.b32.xlu0 %v3704, 113
    %v3766 = vpop.permute.xlu0 %3765
    %3767 = vrot.lane.b32.xlu0 %v3705, 113
    %v3768 = vpop.permute.xlu0 %3767
    %v3769 = vsel %vm256, %v3766, %v3768
    %v3773 = vsel %vm256, %v3768, %v3766
    %v3774 = vmul.f32 %v265, %v3769
    %v3775 = vmul.f32 %v269, %v3773
    %3776 = vrot.lane.b32.xlu0 %v3704, 112
    %v3777 = vpop.permute.xlu0 %3776
    %3778 = vrot.lane.b32.xlu0 %v3705, 112
    %v3779 = vpop.permute.xlu0 %3778
    %v3780 = vsel %vm276, %v3777, %v3779
    %v3784 = vsel %vm276, %v3779, %v3777
    %v3785 = vmul.f32 %v285, %v3780
    %v3786 = vmul.f32 %v289, %v3784
    %3787 = vrot.lane.b32.xlu0 %v3704, 111
    %v3788 = vpop.permute.xlu0 %3787
    %3789 = vrot.lane.b32.xlu0 %v3705, 111
    %v3790 = vpop.permute.xlu0 %3789
    %v3791 = vsel %vm296, %v3788, %v3790
    %v3795 = vsel %vm296, %v3790, %v3788
    %v3796 = vmul.f32 %v305, %v3791
    %v3797 = vmul.f32 %v309, %v3795
    %v3798 = vmul.f32 %v3452, %v837
    %v3799 = vmul.f32 %v3452, %v839
    %v3800 = vadd.f32 %v3798, %v846
    %v3801 = vadd.f32 %v3799, %v846
    %v3804 = vrot.slane %v3728, 4
    %v3805 = vrot.slane %v3729, 4
    %v3810 = vrot.slane %v3750, 4
    %v3811 = vrot.slane %v3751, 4
    %v3816 = vrot.slane %v3763, 4
    %v3817 = vrot.slane %v3764, 4
    %v3822 = vrot.slane %v3785, 4
    %v3823 = vrot.slane %v3786, 4
    %v3826 = vsel %vm436, %v3717, %v3804
    %v3827 = vsel %vm436, %v3718, %v3805
    %v3828 = vsel %vm436, %v3739, %v3810
    %v3829 = vsel %vm436, %v3740, %v3811
    %v3830 = vsel %vm436, %v3752, %v3816
    %v3831 = vsel %vm436, %v3753, %v3817
    %v3832 = vsel %vm436, %v3774, %v3822
    %v3833 = vsel %vm436, %v3775, %v3823
    %v3835 = vsel %vm436, %v3796, 0
    %v3838 = vsel %vm436, %v3797, 0
    %3840 = vmatprep.subr.mxu0 0.0
    %3841 = vmatpush1.msra.mxu0 0.0
    %3842 = vmatprep.subr.mxu0 0.0
    %3843 = vmatpush1.msra.mxu0 0.0
    %3844 = vmatprep.subr.mxu0 0.0
    %3845 = vmatpush1.msra.mxu0 0.0
    %3846 = vmatprep.subr.mxu0 0.0
    %3847 = vmatpush1.msra.mxu0 0.0
    %3848 = vmatprep.subr.mxu0 0.0
    %3849 = vmatpush1.msra.mxu0 0.0
    %3850 = vmatprep.subr.mxu0 0.0
    %3851 = vmatpush1.msra.mxu0 0.0
    %3852 = vmatprep.subr.mxu0 0.0
    %3853 = vmatpush1.msra.mxu0 0.0
    %3854 = vmatprep.subr.mxu0 0.0
    %3855 = vmatpush1.msra.mxu0 0.0
    %3856 = vmatprep.subr.mxu0 0.0
    %3857 = vmatpush1.msra.mxu0 0.0
    %3858 = vmatprep.subr.mxu0 0.0
    %3859 = vmatpush1.msra.mxu0 0.0
    %3860 = vmatprep.subr.mxu0 0.0
    %3861 = vmatpush1.msra.mxu0 0.0
    %3862 = vmatprep.subr.mxu0 %v3838
    %3863 = vmatpush1.msra.mxu0 %v3835
    %3864 = vmatprep.subr.mxu0 %v3833
    %3865 = vmatpush1.msra.mxu0 %v3832
    %3866 = vmatprep.subr.mxu0 %v3831
    %3867 = vmatpush1.msra.mxu0 %v3830
    %3868 = vmatprep.subr.mxu0 %v3829
    %3869 = vmatpush1.msra.mxu0 %v3828
    %3870 = vmatprep.subr.mxu0 %v3827
    %3871 = vmatpush1.msra.mxu0 %v3826
    %3872 = vmatprep.subr.mxu0 0.0
    %3873 = vmatpush2.msra.mxu0 0.0
    %3874 = vmatprep.subr.mxu0 0.0
    %3875 = vmatpush2.msra.mxu0 0.0
    %3876 = vmatprep.subr.mxu0 0.0
    %3877 = vmatpush2.msra.mxu0 0.0
    %3878 = vmatprep.subr.mxu0 0.0
    %3879 = vmatpush2.msra.mxu0 0.0
    %3880 = vmatprep.subr.mxu0 0.0
    %3881 = vmatpush2.msra.mxu0 0.0
    %3882 = vmatprep.subr.mxu0 0.0
    %3883 = vmatpush2.msra.mxu0 0.0
    %3884 = vmatprep.subr.mxu0 0.0
    %3885 = vmatpush2.msra.mxu0 0.0
    %3886 = vmatprep.subr.mxu0 0.0
    %3887 = vmatpush2.msra.mxu0 0.0
    %3888 = vmatprep.subr.mxu0 0.0
    %3889 = vmatpush2.msra.mxu0 0.0
    %3890 = vmatprep.subr.mxu0 0.0
    %3891 = vmatpush2.msra.mxu0 0.0
    %3892 = vmatprep.subr.mxu0 0.0
    %3893 = vmatpush2.msra.mxu0 0.0
    %3894 = vmatprep.subr.mxu0 0.0
    %3895 = vmatpush2.msra.mxu0 0.0
    %3896 = vmatprep.subr.mxu0 0.0
    %3897 = vmatpush2.msra.mxu0 0.0
    %3898 = vmatprep.subr.mxu0 0.0
    %3899 = vmatpush2.msra.mxu0 0.0
    %3900 = vmatprep.subr.mxu0 0.0
    %3901 = vmatpush2.msra.mxu0 0.0
    %3902 = vmatprep.subr.mxu0 0.0
    %3903 = vmatpush2.msra.mxu0 0.0
    %3904 = vmatprep.mubr.f32.mxu0 0.0
    %3905 = vmatmul.mubr.f32.gmra.mxu0 %v883
    %v3906 = vpop.f32.mrf.mxu0
    %v3907 = vadd.f32 %v3800, %v3906
    %v3908 = vpop.f32.mrf.mxu0
    %v3909 = vadd.f32 %v3801, %v3908
    %3910 = vdwg.mxu0
    %v3913 = vrot.slane %v3717, 4
    %v3914 = vrot.slane %v3718, 4
    %v3919 = vrot.slane %v3739, 4
    %v3920 = vrot.slane %v3740, 4
    %v3925 = vrot.slane %v3752, 4
    %v3926 = vrot.slane %v3753, 4
    %v3931 = vrot.slane %v3774, 4
    %v3932 = vrot.slane %v3775, 4
    %v3935 = vrot.slane %v3796, 4
    %v3936 = vrot.slane %v3797, 4
    %v3937 = vsel %vm436, %v3913, %v3728
    %v3938 = vsel %vm436, %v3914, %v3729
    %v3939 = vsel %vm436, %v3919, %v3750
    %v3940 = vsel %vm436, %v3920, %v3751
    %v3941 = vsel %vm436, %v3925, %v3763
    %v3942 = vsel %vm436, %v3926, %v3764
    %v3943 = vsel %vm436, %v3931, %v3785
    %v3944 = vsel %vm436, %v3932, %v3786
    %v3945 = vsel %vm436, %v3935, 0
    %v3947 = vsel %vm436, %v3936, 0
    %3949 = vmatprep.subr.mxu0 0.0
    %3950 = vmatpush1.msra.mxu0 0.0
    %3951 = vmatprep.subr.mxu0 0.0
    %3952 = vmatpush1.msra.mxu0 0.0
    %3953 = vmatprep.subr.mxu0 0.0
    %3954 = vmatpush1.msra.mxu0 0.0
    %3955 = vmatprep.subr.mxu0 0.0
    %3956 = vmatpush1.msra.mxu0 0.0
    %3957 = vmatprep.subr.mxu0 0.0
    %3958 = vmatpush1.msra.mxu0 0.0
    %3959 = vmatprep.subr.mxu0 0.0
    %3960 = vmatpush1.msra.mxu0 0.0
    %3961 = vmatprep.subr.mxu0 0.0
    %3962 = vmatpush1.msra.mxu0 0.0
    %3963 = vmatprep.subr.mxu0 0.0
    %3964 = vmatpush1.msra.mxu0 0.0
    %3965 = vmatprep.subr.mxu0 0.0
    %3966 = vmatpush1.msra.mxu0 0.0
    %3967 = vmatprep.subr.mxu0 0.0
    %3968 = vmatpush1.msra.mxu0 0.0
    %3969 = vmatprep.subr.mxu0 0.0
    %3970 = vmatpush1.msra.mxu0 0.0
    %3971 = vmatprep.subr.mxu0 %v3947
    %3972 = vmatpush1.msra.mxu0 %v3945
    %3973 = vmatprep.subr.mxu0 %v3944
    %3974 = vmatpush1.msra.mxu0 %v3943
    %3975 = vmatprep.subr.mxu0 %v3942
    %3976 = vmatpush1.msra.mxu0 %v3941
    %3977 = vmatprep.subr.mxu0 %v3940
    %3978 = vmatpush1.msra.mxu0 %v3939
    %3979 = vmatprep.subr.mxu0 %v3938
    %3980 = vmatpush1.msra.mxu0 %v3937
    %3981 = vmatprep.subr.mxu0 0.0
    %3982 = vmatpush2.msra.mxu0 0.0
    %3983 = vmatprep.subr.mxu0 0.0
    %3984 = vmatpush2.msra.mxu0 0.0
    %3985 = vmatprep.subr.mxu0 0.0
    %3986 = vmatpush2.msra.mxu0 0.0
    %3987 = vmatprep.subr.mxu0 0.0
    %3988 = vmatpush2.msra.mxu0 0.0
    %3989 = vmatprep.subr.mxu0 0.0
    %3990 = vmatpush2.msra.mxu0 0.0
    %3991 = vmatprep.subr.mxu0 0.0
    %3992 = vmatpush2.msra.mxu0 0.0
    %3993 = vmatprep.subr.mxu0 0.0
    %3994 = vmatpush2.msra.mxu0 0.0
    %3995 = vmatprep.subr.mxu0 0.0
    %3996 = vmatpush2.msra.mxu0 0.0
    %3997 = vmatprep.subr.mxu0 0.0
    %3998 = vmatpush2.msra.mxu0 0.0
    %3999 = vmatprep.subr.mxu0 0.0
    %4000 = vmatpush2.msra.mxu0 0.0
    %4001 = vmatprep.subr.mxu0 0.0
    %4002 = vmatpush2.msra.mxu0 0.0
    %4003 = vmatprep.subr.mxu0 0.0
    %4004 = vmatpush2.msra.mxu0 0.0
    %4005 = vmatprep.subr.mxu0 0.0
    %4006 = vmatpush2.msra.mxu0 0.0
    %4007 = vmatprep.subr.mxu0 0.0
    %4008 = vmatpush2.msra.mxu0 0.0
    %4009 = vmatprep.subr.mxu0 0.0
    %4010 = vmatpush2.msra.mxu0 0.0
    %4011 = vmatprep.subr.mxu0 0.0
    %4012 = vmatpush2.msra.mxu0 0.0
    %4013 = vmatprep.mubr.f32.mxu0 0.0
    %4014 = vmatmul.mubr.f32.gmra.mxu0 %v883
    %v4015 = vpop.f32.mrf.mxu0
    %v4016 = vadd.f32 %v3800, %v4015
    %v4017 = vpop.f32.mrf.mxu0
    %v4018 = vadd.f32 %v3801, %v4017
    %4019 = vdwg.mxu0
    %v4022 = vrot.slane %v4016, 4
    %v4023 = vrot.slane %v4018, 4
    %v4026 = vsel %vm436, %v3907, %v4022
    %v4027 = vsel %vm436, %v3909, %v4023
    %v4028 = vadd.f32 %v4026, %v4027
    %4029 = vadd.xlane.f32.xlu0 %v4028
    %v4030 = vpop.xlane.xlu0 %4029
    %v4031 = vmul.f32 %v4030, %v110
    %v4032 = vsub.f32 %v4026, %v4031
    %v4033 = vsub.f32 %v4027, %v4031
    %v4034 = vmul.f32 %v4032, %v4032
    %v4035 = vmul.f32 %v4033, %v4033
    %v4036 = vadd.f32 %v4034, %v4035
    %4037 = vadd.xlane.f32.xlu0 %v4036
    %v4038 = vpop.xlane.xlu0 %4037
    %v4039 = vmul.f32 %v4038, %v110
    %v4040 = vadd.f32 %v4039, 1e-05
    %v4041 = vrsqrt.pop %v4040
    %v4042 = vmul.f32 %v4032, %v4041
    %v4043 = vmul.f32 %v4033, %v4041
    %v4044 = vmul.f32 %v4042, %v1098
    %v4045 = vmul.f32 %v4043, %v1098
    %v4046 = vadd.f32 %v4044, %v1105
    %v4047 = vadd.f32 %v4045, %v1105
    %v4048 = vmul.f32 %v84, 0.091145836
    %v4049 = vmul.f32 %v85, 0.091145836
    %v4050 = vmul.f32 %v1836, 0.4492363
    %v4051 = vmul.f32 %v1837, 0.4492363
    %v4052 = vadd.f32 %v4048, %v4050
    %v4053 = vadd.f32 %v4049, %v4051
    %v4054 = vmul.f32 %v2569, 0.6510417
    %v4055 = vmul.f32 %v2570, 0.6510417
    %v4056 = vadd.f32 %v4052, %v4054
    %v4057 = vadd.f32 %v4053, %v4055
    %v4058 = vmul.f32 %v3306, 0.3223762
    %v4059 = vmul.f32 %v3307, 0.3223762
    %v4060 = vsub.f32 %v4056, %v4058
    %v4061 = vsub.f32 %v4057, %v4059
    %v4062 = vmul.f32 %v4046, 0.13095239
    %v4063 = vmul.f32 %v4047, 0.13095239
    %v4064 = vadd.f32 %v4060, %v4062
    %v4065 = vadd.f32 %v4061, %v4063
    %v4066 = vmul.f32 %v101, %v4064
    %v4067 = vmul.f32 %v101, %v4065
    %v4068 = vadd.f32 %v82, %v4066
    %v4069 = vadd.f32 %v83, %v4067
    %v4070 = vadd.f32 %v4068, %v4069
    %4071 = vadd.xlane.f32.xlu0 %v4070
    %v4072 = vpop.xlane.xlu0 %4071
    %v4073 = vmul.f32 %v4072, %v110
    %v4074 = vsub.f32 %v4068, %v4073
    %v4075 = vsub.f32 %v4069, %v4073
    %v4076 = vmul.f32 %v4074, %v4074
    %v4077 = vmul.f32 %v4075, %v4075
    %v4078 = vadd.f32 %v4076, %v4077
    %4079 = vadd.xlane.f32.xlu0 %v4078
    %v4080 = vpop.xlane.xlu0 %4079
    %v4081 = vmul.f32 %v4080, %v110
    %v4082 = vadd.f32 %v4081, 1e-05
    %v4083 = vrsqrt.pop %v4082
    %v4084 = vmul.f32 %v4074, %v4083
    %v4085 = vmul.f32 %v4075, %v4083
    %v4086 = vmul.f32 %v4084, %v127
    %v4087 = vmul.f32 %v4085, %v127
    %v4088 = vadd.f32 %v4086, %v134
    %v4089 = vadd.f32 %v4087, %v134
    %v4090 = vmax.f32 %v4088, 0.0
    %v4091 = vmax.f32 %v4089, 0.0
    %4093 = vrot.lane.b32.xlu0 %v4091, 17
    %v4094 = vpop.permute.xlu0 %4093
    %4097 = vrot.lane.b32.xlu0 %v4090, 17
    %v4098 = vpop.permute.xlu0 %4097
    %v4099 = vsel %vm147, %v4098, %v4094
    %v4102 = vsel %vm147, %v4094, %v4098
    %v4103 = vmul.f32 %v155, %v4102
    %v4104 = vmul.f32 %v159, %v4099
    %4105 = vrot.lane.b32.xlu0 %v4091, 16
    %v4106 = vpop.permute.xlu0 %4105
    %4108 = vrot.lane.b32.xlu0 %v4090, 16
    %v4109 = vpop.permute.xlu0 %4108
    %v4110 = vsel %vm167, %v4109, %v4106
    %v4113 = vsel %vm167, %v4106, %v4109
    %v4114 = vmul.f32 %v175, %v4113
    %v4115 = vmul.f32 %v179, %v4110
    %4116 = vrot.lane.b32.xlu0 %v4091, 15
    %v4117 = vpop.permute.xlu0 %4116
    %4119 = vrot.lane.b32.xlu0 %v4090, 15
    %v4120 = vpop.permute.xlu0 %4119
    %v4121 = vsel %vm187, %v4120, %v4117
    %v4124 = vsel %vm187, %v4117, %v4120
    %v4125 = vmul.f32 %v195, %v4124
    %v4126 = vmul.f32 %v199, %v4121
    %4127 = vrot.lane.b32.xlu0 %v4091, 1
    %v4128 = vpop.permute.xlu0 %4127
    %4130 = vrot.lane.b32.xlu0 %v4090, 1
    %v4131 = vpop.permute.xlu0 %4130
    %v4132 = vsel %vm207, %v4131, %v4128
    %v4135 = vsel %vm207, %v4128, %v4131
    %v4136 = vmul.f32 %v215, %v4135
    %v4137 = vmul.f32 %v219, %v4132
    %v4138 = vmul.f32 %v225, %v4090
    %v4139 = vmul.f32 %v229, %v4091
    %4140 = vrot.lane.b32.xlu0 %v4090, 127
    %v4141 = vpop.permute.xlu0 %4140
    %4142 = vrot.lane.b32.xlu0 %v4091, 127
    %v4143 = vpop.permute.xlu0 %4142
    %v4144 = vsel %vm236, %v4141, %v4143
    %v4148 = vsel %vm236, %v4143, %v4141
    %v4149 = vmul.f32 %v245, %v4144
    %v4150 = vmul.f32 %v249, %v4148
    %4151 = vrot.lane.b32.xlu0 %v4090, 113
    %v4152 = vpop.permute.xlu0 %4151
    %4153 = vrot.lane.b32.xlu0 %v4091, 113
    %v4154 = vpop.permute.xlu0 %4153
    %v4155 = vsel %vm256, %v4152, %v4154
    %v4159 = vsel %vm256, %v4154, %v4152
    %v4160 = vmul.f32 %v265, %v4155
    %v4161 = vmul.f32 %v269, %v4159
    %4162 = vrot.lane.b32.xlu0 %v4090, 112
    %v4163 = vpop.permute.xlu0 %4162
    %4164 = vrot.lane.b32.xlu0 %v4091, 112
    %v4165 = vpop.permute.xlu0 %4164
    %v4166 = vsel %vm276, %v4163, %v4165
    %v4170 = vsel %vm276, %v4165, %v4163
    %v4171 = vmul.f32 %v285, %v4166
    %v4172 = vmul.f32 %v289, %v4170
    %4173 = vrot.lane.b32.xlu0 %v4090, 111
    %v4174 = vpop.permute.xlu0 %4173
    %4175 = vrot.lane.b32.xlu0 %v4091, 111
    %v4176 = vpop.permute.xlu0 %4175
    %v4177 = vsel %vm296, %v4174, %v4176
    %v4181 = vsel %vm296, %v4176, %v4174
    %v4182 = vmul.f32 %v305, %v4177
    %v4183 = vmul.f32 %v309, %v4181
    %v4186 = vrot.slane %v4114, 4
    %v4187 = vrot.slane %v4115, 4
    %v4192 = vrot.slane %v4136, 4
    %v4193 = vrot.slane %v4137, 4
    %v4198 = vrot.slane %v4149, 4
    %v4199 = vrot.slane %v4150, 4
    %v4204 = vrot.slane %v4171, 4
    %v4205 = vrot.slane %v4172, 4
    %v4208 = vsel %vm436, %v4103, %v4186
    %v4209 = vsel %vm436, %v4104, %v4187
    %v4210 = vsel %vm436, %v4125, %v4192
    %v4211 = vsel %vm436, %v4126, %v4193
    %v4212 = vsel %vm436, %v4138, %v4198
    %v4213 = vsel %vm436, %v4139, %v4199
    %v4214 = vsel %vm436, %v4160, %v4204
    %v4215 = vsel %vm436, %v4161, %v4205
    %v4217 = vsel %vm436, %v4182, 0
    %v4220 = vsel %vm436, %v4183, 0
    %4222 = vmatprep.subr.mxu0 0.0
    %4223 = vmatpush1.msra.mxu0 0.0
    %4224 = vmatprep.subr.mxu0 0.0
    %4225 = vmatpush1.msra.mxu0 0.0
    %4226 = vmatprep.subr.mxu0 0.0
    %4227 = vmatpush1.msra.mxu0 0.0
    %4228 = vmatprep.subr.mxu0 0.0
    %4229 = vmatpush1.msra.mxu0 0.0
    %4230 = vmatprep.subr.mxu0 0.0
    %4231 = vmatpush1.msra.mxu0 0.0
    %4232 = vmatprep.subr.mxu0 0.0
    %4233 = vmatpush1.msra.mxu0 0.0
    %4234 = vmatprep.subr.mxu0 0.0
    %4235 = vmatpush1.msra.mxu0 0.0
    %4236 = vmatprep.subr.mxu0 0.0
    %4237 = vmatpush1.msra.mxu0 0.0
    %4238 = vmatprep.subr.mxu0 0.0
    %4239 = vmatpush1.msra.mxu0 0.0
    %4240 = vmatprep.subr.mxu0 0.0
    %4241 = vmatpush1.msra.mxu0 0.0
    %4242 = vmatprep.subr.mxu0 0.0
    %4243 = vmatpush1.msra.mxu0 0.0
    %4244 = vmatprep.subr.mxu0 %v4220
    %4245 = vmatpush1.msra.mxu0 %v4217
    %4246 = vmatprep.subr.mxu0 %v4215
    %4247 = vmatpush1.msra.mxu0 %v4214
    %4248 = vmatprep.subr.mxu0 %v4213
    %4249 = vmatpush1.msra.mxu0 %v4212
    %4250 = vmatprep.subr.mxu0 %v4211
    %4251 = vmatpush1.msra.mxu0 %v4210
    %4252 = vmatprep.subr.mxu0 %v4209
    %4253 = vmatpush1.msra.mxu0 %v4208
    %4254 = vmatprep.subr.mxu0 0.0
    %4255 = vmatpush2.msra.mxu0 0.0
    %4256 = vmatprep.subr.mxu0 0.0
    %4257 = vmatpush2.msra.mxu0 0.0
    %4258 = vmatprep.subr.mxu0 0.0
    %4259 = vmatpush2.msra.mxu0 0.0
    %4260 = vmatprep.subr.mxu0 0.0
    %4261 = vmatpush2.msra.mxu0 0.0
    %4262 = vmatprep.subr.mxu0 0.0
    %4263 = vmatpush2.msra.mxu0 0.0
    %4264 = vmatprep.subr.mxu0 0.0
    %4265 = vmatpush2.msra.mxu0 0.0
    %4266 = vmatprep.subr.mxu0 0.0
    %4267 = vmatpush2.msra.mxu0 0.0
    %4268 = vmatprep.subr.mxu0 0.0
    %4269 = vmatpush2.msra.mxu0 0.0
    %4270 = vmatprep.subr.mxu0 0.0
    %4271 = vmatpush2.msra.mxu0 0.0
    %4272 = vmatprep.subr.mxu0 0.0
    %4273 = vmatpush2.msra.mxu0 0.0
    %4274 = vmatprep.subr.mxu0 0.0
    %4275 = vmatpush2.msra.mxu0 0.0
    %4276 = vmatprep.subr.mxu0 0.0
    %4277 = vmatpush2.msra.mxu0 0.0
    %4278 = vmatprep.subr.mxu0 0.0
    %4279 = vmatpush2.msra.mxu0 0.0
    %4280 = vmatprep.subr.mxu0 0.0
    %4281 = vmatpush2.msra.mxu0 0.0
    %4282 = vmatprep.subr.mxu0 0.0
    %4283 = vmatpush2.msra.mxu0 0.0
    %4284 = vmatprep.subr.mxu0 0.0
    %4285 = vmatpush2.msra.mxu0 0.0
    %4286 = vmatprep.mubr.f32.mxu0 0.0
    %4287 = vmatmul.mubr.f32.gmra.mxu0 %v447
    %v4288 = vpop.f32.mrf.mxu0
    %v4289 = vadd.f32 %v3456, %v4288
    %v4290 = vpop.f32.mrf.mxu0
    %v4291 = vadd.f32 %v3457, %v4290
    %4292 = vdwg.mxu0
    %v4295 = vrot.slane %v4103, 4
    %v4296 = vrot.slane %v4104, 4
    %v4301 = vrot.slane %v4125, 4
    %v4302 = vrot.slane %v4126, 4
    %v4307 = vrot.slane %v4138, 4
    %v4308 = vrot.slane %v4139, 4
    %v4313 = vrot.slane %v4160, 4
    %v4314 = vrot.slane %v4161, 4
    %v4317 = vrot.slane %v4182, 4
    %v4318 = vrot.slane %v4183, 4
    %v4319 = vsel %vm436, %v4295, %v4114
    %v4320 = vsel %vm436, %v4296, %v4115
    %v4321 = vsel %vm436, %v4301, %v4136
    %v4322 = vsel %vm436, %v4302, %v4137
    %v4323 = vsel %vm436, %v4307, %v4149
    %v4324 = vsel %vm436, %v4308, %v4150
    %v4325 = vsel %vm436, %v4313, %v4171
    %v4326 = vsel %vm436, %v4314, %v4172
    %v4327 = vsel %vm436, %v4317, 0
    %v4329 = vsel %vm436, %v4318, 0
    %4331 = vmatprep.subr.mxu0 0.0
    %4332 = vmatpush1.msra.mxu0 0.0
    %4333 = vmatprep.subr.mxu0 0.0
    %4334 = vmatpush1.msra.mxu0 0.0
    %4335 = vmatprep.subr.mxu0 0.0
    %4336 = vmatpush1.msra.mxu0 0.0
    %4337 = vmatprep.subr.mxu0 0.0
    %4338 = vmatpush1.msra.mxu0 0.0
    %4339 = vmatprep.subr.mxu0 0.0
    %4340 = vmatpush1.msra.mxu0 0.0
    %4341 = vmatprep.subr.mxu0 0.0
    %4342 = vmatpush1.msra.mxu0 0.0
    %4343 = vmatprep.subr.mxu0 0.0
    %4344 = vmatpush1.msra.mxu0 0.0
    %4345 = vmatprep.subr.mxu0 0.0
    %4346 = vmatpush1.msra.mxu0 0.0
    %4347 = vmatprep.subr.mxu0 0.0
    %4348 = vmatpush1.msra.mxu0 0.0
    %4349 = vmatprep.subr.mxu0 0.0
    %4350 = vmatpush1.msra.mxu0 0.0
    %4351 = vmatprep.subr.mxu0 0.0
    %4352 = vmatpush1.msra.mxu0 0.0
    %4353 = vmatprep.subr.mxu0 %v4329
    %4354 = vmatpush1.msra.mxu0 %v4327
    %4355 = vmatprep.subr.mxu0 %v4326
    %4356 = vmatpush1.msra.mxu0 %v4325
    %4357 = vmatprep.subr.mxu0 %v4324
    %4358 = vmatpush1.msra.mxu0 %v4323
    %4359 = vmatprep.subr.mxu0 %v4322
    %4360 = vmatpush1.msra.mxu0 %v4321
    %4361 = vmatprep.subr.mxu0 %v4320
    %4362 = vmatpush1.msra.mxu0 %v4319
    %4363 = vmatprep.subr.mxu0 0.0
    %4364 = vmatpush2.msra.mxu0 0.0
    %4365 = vmatprep.subr.mxu0 0.0
    %4366 = vmatpush2.msra.mxu0 0.0
    %4367 = vmatprep.subr.mxu0 0.0
    %4368 = vmatpush2.msra.mxu0 0.0
    %4369 = vmatprep.subr.mxu0 0.0
    %4370 = vmatpush2.msra.mxu0 0.0
    %4371 = vmatprep.subr.mxu0 0.0
    %4372 = vmatpush2.msra.mxu0 0.0
    %4373 = vmatprep.subr.mxu0 0.0
    %4374 = vmatpush2.msra.mxu0 0.0
    %4375 = vmatprep.subr.mxu0 0.0
    %4376 = vmatpush2.msra.mxu0 0.0
    %4377 = vmatprep.subr.mxu0 0.0
    %4378 = vmatpush2.msra.mxu0 0.0
    %4379 = vmatprep.subr.mxu0 0.0
    %4380 = vmatpush2.msra.mxu0 0.0
    %4381 = vmatprep.subr.mxu0 0.0
    %4382 = vmatpush2.msra.mxu0 0.0
    %4383 = vmatprep.subr.mxu0 0.0
    %4384 = vmatpush2.msra.mxu0 0.0
    %4385 = vmatprep.subr.mxu0 0.0
    %4386 = vmatpush2.msra.mxu0 0.0
    %4387 = vmatprep.subr.mxu0 0.0
    %4388 = vmatpush2.msra.mxu0 0.0
    %4389 = vmatprep.subr.mxu0 0.0
    %4390 = vmatpush2.msra.mxu0 0.0
    %4391 = vmatprep.subr.mxu0 0.0
    %4392 = vmatpush2.msra.mxu0 0.0
    %4393 = vmatprep.subr.mxu0 0.0
    %4394 = vmatpush2.msra.mxu0 0.0
    %4395 = vmatprep.mubr.f32.mxu0 0.0
    %4396 = vmatmul.mubr.f32.gmra.mxu0 %v447
    %v4397 = vpop.f32.mrf.mxu0
    %v4398 = vadd.f32 %v3456, %v4397
    %v4399 = vpop.f32.mrf.mxu0
    %v4400 = vadd.f32 %v3457, %v4399
    %4401 = vdwg.mxu0
    %v4404 = vrot.slane %v4398, 4
    %v4405 = vrot.slane %v4400, 4
    %v4408 = vsel %vm436, %v4289, %v4404
    %v4409 = vsel %vm436, %v4291, %v4405
    %v4410 = vadd.f32 %v4408, %v4409
    %4411 = vadd.xlane.f32.xlu0 %v4410
    %v4412 = vpop.xlane.xlu0 %4411
    %v4413 = vmul.f32 %v4412, %v110
    %v4414 = vsub.f32 %v4408, %v4413
    %v4415 = vsub.f32 %v4409, %v4413
    %v4416 = vmul.f32 %v4414, %v4414
    %v4417 = vmul.f32 %v4415, %v4415
    %v4418 = vadd.f32 %v4416, %v4417
    %4419 = vadd.xlane.f32.xlu0 %v4418
    %v4420 = vpop.xlane.xlu0 %4419
    %v4421 = vmul.f32 %v4420, %v110
    %v4422 = vadd.f32 %v4421, 1e-05
    %v4423 = vrsqrt.pop %v4422
    %v4424 = vmul.f32 %v4414, %v4423
    %v4425 = vmul.f32 %v4415, %v4423
    %v4426 = vmul.f32 %v4424, %v662
    %v4427 = vmul.f32 %v4425, %v662
    %v4428 = vadd.f32 %v4426, %v669
    %v4429 = vadd.f32 %v4427, %v669
    %v4430 = vmax.f32 %v4428, 0.0
    %v4431 = vmax.f32 %v4429, 0.0
    %4433 = vrot.lane.b32.xlu0 %v4431, 17
    %v4434 = vpop.permute.xlu0 %4433
    %4437 = vrot.lane.b32.xlu0 %v4430, 17
    %v4438 = vpop.permute.xlu0 %4437
    %v4439 = vsel %vm147, %v4438, %v4434
    %v4442 = vsel %vm147, %v4434, %v4438
    %v4443 = vmul.f32 %v155, %v4442
    %v4444 = vmul.f32 %v159, %v4439
    %4445 = vrot.lane.b32.xlu0 %v4431, 16
    %v4446 = vpop.permute.xlu0 %4445
    %4448 = vrot.lane.b32.xlu0 %v4430, 16
    %v4449 = vpop.permute.xlu0 %4448
    %v4450 = vsel %vm167, %v4449, %v4446
    %v4453 = vsel %vm167, %v4446, %v4449
    %v4454 = vmul.f32 %v175, %v4453
    %v4455 = vmul.f32 %v179, %v4450
    %4456 = vrot.lane.b32.xlu0 %v4431, 15
    %v4457 = vpop.permute.xlu0 %4456
    %4459 = vrot.lane.b32.xlu0 %v4430, 15
    %v4460 = vpop.permute.xlu0 %4459
    %v4461 = vsel %vm187, %v4460, %v4457
    %v4464 = vsel %vm187, %v4457, %v4460
    %v4465 = vmul.f32 %v195, %v4464
    %v4466 = vmul.f32 %v199, %v4461
    %4467 = vrot.lane.b32.xlu0 %v4431, 1
    %v4468 = vpop.permute.xlu0 %4467
    %4470 = vrot.lane.b32.xlu0 %v4430, 1
    %v4471 = vpop.permute.xlu0 %4470
    %v4472 = vsel %vm207, %v4471, %v4468
    %v4475 = vsel %vm207, %v4468, %v4471
    %v4476 = vmul.f32 %v215, %v4475
    %v4477 = vmul.f32 %v219, %v4472
    %v4478 = vmul.f32 %v225, %v4430
    %v4479 = vmul.f32 %v229, %v4431
    %4480 = vrot.lane.b32.xlu0 %v4430, 127
    %v4481 = vpop.permute.xlu0 %4480
    %4482 = vrot.lane.b32.xlu0 %v4431, 127
    %v4483 = vpop.permute.xlu0 %4482
    %v4484 = vsel %vm236, %v4481, %v4483
    %v4488 = vsel %vm236, %v4483, %v4481
    %v4489 = vmul.f32 %v245, %v4484
    %v4490 = vmul.f32 %v249, %v4488
    %4491 = vrot.lane.b32.xlu0 %v4430, 113
    %v4492 = vpop.permute.xlu0 %4491
    %4493 = vrot.lane.b32.xlu0 %v4431, 113
    %v4494 = vpop.permute.xlu0 %4493
    %v4495 = vsel %vm256, %v4492, %v4494
    %v4499 = vsel %vm256, %v4494, %v4492
    %v4500 = vmul.f32 %v265, %v4495
    %v4501 = vmul.f32 %v269, %v4499
    %4502 = vrot.lane.b32.xlu0 %v4430, 112
    %v4503 = vpop.permute.xlu0 %4502
    %4504 = vrot.lane.b32.xlu0 %v4431, 112
    %v4505 = vpop.permute.xlu0 %4504
    %v4506 = vsel %vm276, %v4503, %v4505
    %v4510 = vsel %vm276, %v4505, %v4503
    %v4511 = vmul.f32 %v285, %v4506
    %v4512 = vmul.f32 %v289, %v4510
    %4513 = vrot.lane.b32.xlu0 %v4430, 111
    %v4514 = vpop.permute.xlu0 %4513
    %4515 = vrot.lane.b32.xlu0 %v4431, 111
    %v4516 = vpop.permute.xlu0 %4515
    %v4517 = vsel %vm296, %v4514, %v4516
    %v4521 = vsel %vm296, %v4516, %v4514
    %v4522 = vmul.f32 %v305, %v4517
    %v4523 = vmul.f32 %v309, %v4521
    %v4526 = vrot.slane %v4454, 4
    %v4527 = vrot.slane %v4455, 4
    %v4532 = vrot.slane %v4476, 4
    %v4533 = vrot.slane %v4477, 4
    %v4538 = vrot.slane %v4489, 4
    %v4539 = vrot.slane %v4490, 4
    %v4544 = vrot.slane %v4511, 4
    %v4545 = vrot.slane %v4512, 4
    %v4548 = vsel %vm436, %v4443, %v4526
    %v4549 = vsel %vm436, %v4444, %v4527
    %v4550 = vsel %vm436, %v4465, %v4532
    %v4551 = vsel %vm436, %v4466, %v4533
    %v4552 = vsel %vm436, %v4478, %v4538
    %v4553 = vsel %vm436, %v4479, %v4539
    %v4554 = vsel %vm436, %v4500, %v4544
    %v4555 = vsel %vm436, %v4501, %v4545
    %v4557 = vsel %vm436, %v4522, 0
    %v4560 = vsel %vm436, %v4523, 0
    %4562 = vmatprep.subr.mxu0 0.0
    %4563 = vmatpush1.msra.mxu0 0.0
    %4564 = vmatprep.subr.mxu0 0.0
    %4565 = vmatpush1.msra.mxu0 0.0
    %4566 = vmatprep.subr.mxu0 0.0
    %4567 = vmatpush1.msra.mxu0 0.0
    %4568 = vmatprep.subr.mxu0 0.0
    %4569 = vmatpush1.msra.mxu0 0.0
    %4570 = vmatprep.subr.mxu0 0.0
    %4571 = vmatpush1.msra.mxu0 0.0
    %4572 = vmatprep.subr.mxu0 0.0
    %4573 = vmatpush1.msra.mxu0 0.0
    %4574 = vmatprep.subr.mxu0 0.0
    %4575 = vmatpush1.msra.mxu0 0.0
    %4576 = vmatprep.subr.mxu0 0.0
    %4577 = vmatpush1.msra.mxu0 0.0
    %4578 = vmatprep.subr.mxu0 0.0
    %4579 = vmatpush1.msra.mxu0 0.0
    %4580 = vmatprep.subr.mxu0 0.0
    %4581 = vmatpush1.msra.mxu0 0.0
    %4582 = vmatprep.subr.mxu0 0.0
    %4583 = vmatpush1.msra.mxu0 0.0
    %4584 = vmatprep.subr.mxu0 %v4560
    %4585 = vmatpush1.msra.mxu0 %v4557
    %4586 = vmatprep.subr.mxu0 %v4555
    %4587 = vmatpush1.msra.mxu0 %v4554
    %4588 = vmatprep.subr.mxu0 %v4553
    %4589 = vmatpush1.msra.mxu0 %v4552
    %4590 = vmatprep.subr.mxu0 %v4551
    %4591 = vmatpush1.msra.mxu0 %v4550
    %4592 = vmatprep.subr.mxu0 %v4549
    %4593 = vmatpush1.msra.mxu0 %v4548
    %4594 = vmatprep.subr.mxu0 0.0
    %4595 = vmatpush2.msra.mxu0 0.0
    %4596 = vmatprep.subr.mxu0 0.0
    %4597 = vmatpush2.msra.mxu0 0.0
    %4598 = vmatprep.subr.mxu0 0.0
    %4599 = vmatpush2.msra.mxu0 0.0
    %4600 = vmatprep.subr.mxu0 0.0
    %4601 = vmatpush2.msra.mxu0 0.0
    %4602 = vmatprep.subr.mxu0 0.0
    %4603 = vmatpush2.msra.mxu0 0.0
    %4604 = vmatprep.subr.mxu0 0.0
    %4605 = vmatpush2.msra.mxu0 0.0
    %4606 = vmatprep.subr.mxu0 0.0
    %4607 = vmatpush2.msra.mxu0 0.0
    %4608 = vmatprep.subr.mxu0 0.0
    %4609 = vmatpush2.msra.mxu0 0.0
    %4610 = vmatprep.subr.mxu0 0.0
    %4611 = vmatpush2.msra.mxu0 0.0
    %4612 = vmatprep.subr.mxu0 0.0
    %4613 = vmatpush2.msra.mxu0 0.0
    %4614 = vmatprep.subr.mxu0 0.0
    %4615 = vmatpush2.msra.mxu0 0.0
    %4616 = vmatprep.subr.mxu0 0.0
    %4617 = vmatpush2.msra.mxu0 0.0
    %4618 = vmatprep.subr.mxu0 0.0
    %4619 = vmatpush2.msra.mxu0 0.0
    %4620 = vmatprep.subr.mxu0 0.0
    %4621 = vmatpush2.msra.mxu0 0.0
    %4622 = vmatprep.subr.mxu0 0.0
    %4623 = vmatpush2.msra.mxu0 0.0
    %4624 = vmatprep.subr.mxu0 0.0
    %4625 = vmatpush2.msra.mxu0 0.0
    %4626 = vmatprep.mubr.f32.mxu0 0.0
    %4627 = vmatmul.mubr.f32.gmra.mxu0 %v883
    %v4628 = vpop.f32.mrf.mxu0
    %v4629 = vadd.f32 %v3800, %v4628
    %v4630 = vpop.f32.mrf.mxu0
    %v4631 = vadd.f32 %v3801, %v4630
    %4632 = vdwg.mxu0
    %v4635 = vrot.slane %v4443, 4
    %v4636 = vrot.slane %v4444, 4
    %v4641 = vrot.slane %v4465, 4
    %v4642 = vrot.slane %v4466, 4
    %v4647 = vrot.slane %v4478, 4
    %v4648 = vrot.slane %v4479, 4
    %v4653 = vrot.slane %v4500, 4
    %v4654 = vrot.slane %v4501, 4
    %v4657 = vrot.slane %v4522, 4
    %v4658 = vrot.slane %v4523, 4
    %v4659 = vsel %vm436, %v4635, %v4454
    %v4660 = vsel %vm436, %v4636, %v4455
    %v4661 = vsel %vm436, %v4641, %v4476
    %v4662 = vsel %vm436, %v4642, %v4477
    %v4663 = vsel %vm436, %v4647, %v4489
    %v4664 = vsel %vm436, %v4648, %v4490
    %v4665 = vsel %vm436, %v4653, %v4511
    %v4666 = vsel %vm436, %v4654, %v4512
    %v4667 = vsel %vm436, %v4657, 0
    %v4669 = vsel %vm436, %v4658, 0
    %4671 = vmatprep.subr.mxu0 0.0
    %4672 = vmatpush1.msra.mxu0 0.0
    %4673 = vmatprep.subr.mxu0 0.0
    %4674 = vmatpush1.msra.mxu0 0.0
    %4675 = vmatprep.subr.mxu0 0.0
    %4676 = vmatpush1.msra.mxu0 0.0
    %4677 = vmatprep.subr.mxu0 0.0
    %4678 = vmatpush1.msra.mxu0 0.0
    %4679 = vmatprep.subr.mxu0 0.0
    %4680 = vmatpush1.msra.mxu0 0.0
    %4681 = vmatprep.subr.mxu0 0.0
    %4682 = vmatpush1.msra.mxu0 0.0
    %4683 = vmatprep.subr.mxu0 0.0
    %4684 = vmatpush1.msra.mxu0 0.0
    %4685 = vmatprep.subr.mxu0 0.0
    %4686 = vmatpush1.msra.mxu0 0.0
    %4687 = vmatprep.subr.mxu0 0.0
    %4688 = vmatpush1.msra.mxu0 0.0
    %4689 = vmatprep.subr.mxu0 0.0
    %4690 = vmatpush1.msra.mxu0 0.0
    %4691 = vmatprep.subr.mxu0 0.0
    %4692 = vmatpush1.msra.mxu0 0.0
    %4693 = vmatprep.subr.mxu0 %v4669
    %4694 = vmatpush1.msra.mxu0 %v4667
    %4695 = vmatprep.subr.mxu0 %v4666
    %4696 = vmatpush1.msra.mxu0 %v4665
    %4697 = vmatprep.subr.mxu0 %v4664
    %4698 = vmatpush1.msra.mxu0 %v4663
    %4699 = vmatprep.subr.mxu0 %v4662
    %4700 = vmatpush1.msra.mxu0 %v4661
    %4701 = vmatprep.subr.mxu0 %v4660
    %4702 = vmatpush1.msra.mxu0 %v4659
    %4703 = vmatprep.subr.mxu0 0.0
    %4704 = vmatpush2.msra.mxu0 0.0
    %4705 = vmatprep.subr.mxu0 0.0
    %4706 = vmatpush2.msra.mxu0 0.0
    %4707 = vmatprep.subr.mxu0 0.0
    %4708 = vmatpush2.msra.mxu0 0.0
    %4709 = vmatprep.subr.mxu0 0.0
    %4710 = vmatpush2.msra.mxu0 0.0
    %4711 = vmatprep.subr.mxu0 0.0
    %4712 = vmatpush2.msra.mxu0 0.0
    %4713 = vmatprep.subr.mxu0 0.0
    %4714 = vmatpush2.msra.mxu0 0.0
    %4715 = vmatprep.subr.mxu0 0.0
    %4716 = vmatpush2.msra.mxu0 0.0
    %4717 = vmatprep.subr.mxu0 0.0
    %4718 = vmatpush2.msra.mxu0 0.0
    %4719 = vmatprep.subr.mxu0 0.0
    %4720 = vmatpush2.msra.mxu0 0.0
    %4721 = vmatprep.subr.mxu0 0.0
    %4722 = vmatpush2.msra.mxu0 0.0
    %4723 = vmatprep.subr.mxu0 0.0
    %4724 = vmatpush2.msra.mxu0 0.0
    %4725 = vmatprep.subr.mxu0 0.0
    %4726 = vmatpush2.msra.mxu0 0.0
    %4727 = vmatprep.subr.mxu0 0.0
    %4728 = vmatpush2.msra.mxu0 0.0
    %4729 = vmatprep.subr.mxu0 0.0
    %4730 = vmatpush2.msra.mxu0 0.0
    %4731 = vmatprep.subr.mxu0 0.0
    %4732 = vmatpush2.msra.mxu0 0.0
    %4733 = vmatprep.subr.mxu0 0.0
    %4734 = vmatpush2.msra.mxu0 0.0
    %4735 = vmatprep.mubr.f32.mxu0 0.0
    %4736 = vmatmul.mubr.f32.gmra.mxu0 %v883
    %v4737 = vpop.f32.mrf.mxu0
    %v4738 = vadd.f32 %v3800, %v4737
    %v4739 = vpop.f32.mrf.mxu0
    %v4740 = vadd.f32 %v3801, %v4739
    %4741 = vdwg.mxu0
    %v4744 = vrot.slane %v4738, 4
    %v4745 = vrot.slane %v4740, 4
    %v4748 = vsel %vm436, %v4629, %v4744
    %v4749 = vsel %vm436, %v4631, %v4745
    %v4750 = vadd.f32 %v4748, %v4749
    %4751 = vadd.xlane.f32.xlu0 %v4750
    %v4752 = vpop.xlane.xlu0 %4751
    %v4753 = vmul.f32 %v4752, %v110
    %v4754 = vsub.f32 %v4748, %v4753
    %v4755 = vsub.f32 %v4749, %v4753
    %v4756 = vmul.f32 %v4754, %v4754
    %v4757 = vmul.f32 %v4755, %v4755
    %v4758 = vadd.f32 %v4756, %v4757
    %4759 = vadd.xlane.f32.xlu0 %v4758
    %v4760 = vpop.xlane.xlu0 %4759
    %v4761 = vmul.f32 %v4760, %v110
    %v4762 = vadd.f32 %v4761, 1e-05
    %v4763 = vrsqrt.pop %v4762
    %v4764 = vmul.f32 %v4754, %v4763
    %v4765 = vmul.f32 %v4755, %v4763
    %v4766 = vmul.f32 %v4764, %v1098
    %v4767 = vmul.f32 %v4765, %v1098
    %v4768 = vadd.f32 %v4766, %v1105
    %v4769 = vadd.f32 %v4767, %v1105
    %v4770 = vmul.f32 %v84, 0.0012326388
    %v4771 = vmul.f32 %v85, 0.0012326388
    %v4772 = vmul.f32 %v1836, -0.0042527704
    %v4773 = vmul.f32 %v1837, -0.0042527704
    %v4774 = vadd.f32 %v4770, %v4772
    %v4775 = vadd.f32 %v4771, %v4773
    %v4776 = vmul.f32 %v2569, 0.036979165
    %v4777 = vmul.f32 %v2570, 0.036979165
    %v4778 = vadd.f32 %v4774, %v4776
    %v4779 = vadd.f32 %v4775, %v4777
    %v4780 = vmul.f32 %v3306, -0.0508638
    %v4781 = vmul.f32 %v3307, -0.0508638
    %v4782 = vadd.f32 %v4778, %v4780
    %v4783 = vadd.f32 %v4779, %v4781
    %v4784 = vmul.f32 %v4046, 0.041904762
    %v4785 = vmul.f32 %v4047, 0.041904762
    %v4786 = vadd.f32 %v4782, %v4784
    %v4787 = vadd.f32 %v4783, %v4785
    %v4788 = vmul.f32 %v4768, -0.025
    %v4789 = vmul.f32 %v4769, -0.025
    %v4790 = vadd.f32 %v4786, %v4788
    %v4791 = vadd.f32 %v4787, %v4789
    %v4792 = vmul.f32 %v101, %v4790
    %v4793 = vmul.f32 %v101, %v4791
    %v4794 = vand.u32 2147483647, %v82
    %v4795 = vand.u32 2147483647, %v83
    %v4796 = vand.u32 2147483647, %v4068
    %v4797 = vand.u32 2147483647, %v4069
    %v4798 = vmax.f32 %v4794, %v4796
    %v4799 = vmax.f32 %v4795, %v4797
    %v4800 = vmul.f32 %v4798, 0.001
    %v4801 = vmul.f32 %v4799, 0.001
    %v4802 = vadd.f32 %v4800, 0.001
    %v4803 = vadd.f32 %v4801, 0.001
    %v4804 = vrcp.pop %v4802
    %v4805 = vmul.f32 %v4792, %v4804
    %v4806 = vrcp.pop %v4803
    %v4807 = vmul.f32 %v4793, %v4806
    %v4808 = vmul.f32 %v4805, %v4805
    %v4809 = vmul.f32 %v4807, %v4807
    %v4810 = vadd.f32 %v4808, %v4809
    %4811 = vadd.xlane.f32.xlu0 %v4810
    %v4812 = vpop.xlane.xlu0 %4811
    %v4813 = vmul.f32 %v4812, %v110
    %v4814 = vrot.slane %v4813, 4
    %v4815 = vadd.f32 %v4813, %v4814
    %v4816 = vrot.slane %v4815, 2
    %v4817 = vadd.f32 %v4815, %v4816
    %v4818 = vrot.slane %v4817, 1
    %v4819 = vadd.f32 %v4817, %v4818
    %v4820 = vrcp.pop 8.0
    %v4821 = vmul.f32 %v4819, %v4820
    %v4822 = vrsqrt.pop %v4821
    %v4823 = vmul.f32 %v4821, %v4822
    %vm4824 = vcmp.eq.f32.partialorder %v4821, inf
    %v4825 = vsel %vm4824, %v4821, %v4823
    %vm4826 = vcmp.eq.f32.partialorder %v4821, 0.0
    %v4827 = vand.u32 %v4821, 2147483648
    %v4828 = vsel %vm4826, %v4827, %v4825
    %vm4829 = vcmp.le.f32.partialorder %v4828, 1.0
    %v4830 = vsel %vm4829, 1, 0
    %v4831 = vcvt.s32.f32 %v4830
    %v4832 = vmax.f32 %v4828, 1e-08
    %v4833 = vlog2.pop %v4832
    %v4834 = vmul.f32 %v4833, 0.6931472
    %v4835 = vmul.f32 %v4834, -0.2
    %v4836 = vmul.f32 %v4835, 1.442695
    %v4837 = vpow.pop %v4836
    %v4838 = vmul.f32 %v4837, 0.9
    %v4839 = vmax.f32 %v4838, 0.2
    %v4840 = vmin.f32 %v4839, 10.0
    %v4841 = vmul.f32 %v4831, %v4068
    %v4842 = vmul.f32 %v4831, %v4069
    %v4843 = vsub.f32 1.0, %v4831
    %v4844 = vmul.f32 %v4843, %v82
    %v4845 = vmul.f32 %v4843, %v83
    %v4846 = vadd.f32 %v4841, %v4844
    %v4847 = vadd.f32 %v4842, %v4845
    %4848 = vst [vmem:[%s17] sm:$0xff] %v4846
    %4849 = vst [vmem:[%s17 + $0x8] sm:$0xff] %v4847
    %v4850 = vmul.f32 %v4831, %v4768
    %v4851 = vmul.f32 %v4831, %v4769
    %v4852 = vmul.f32 %v4843, %v84
    %v4853 = vmul.f32 %v4843, %v85
    %v4854 = vadd.f32 %v4850, %v4852
    %v4855 = vadd.f32 %v4851, %v4853
    %4856 = vst [vmem:[%s18] sm:$0xff] %v4854
    %4857 = vst [vmem:[%s18 + $0x8] sm:$0xff] %v4855
    %v4858 = vmul.f32 %v4831, %v81
    %v4859 = vadd.f32 %v78, %v4858
    %vm4860 = vcmask 0
    %4861 = vst.msk [vmem:[#allocation4] sm:$0x1] %vm4860, %v4859
    %v4862 = vmul.f32 %v81, %v4840
    %v4863 = vmax.f32 %v4862, 1e-05
    %4864 = vst.msk [vmem:[#allocation6] sm:$0x1] %vm4860, %v4863
    // Predicated region
    $region70: #{body.3} parent=1 // pred_check
      _
    $region71: #{body.3} parent=1 // pred_check_branch
      %4866 = sbr.rel (0) target = $region73
    $region72: #{body.3} parent=1 // pred_region
      _
    $region73: #{body.3} parent=1 // pred_fallthru
      _
    // Predicated region
    $region74: #{body.3} parent=1 // pred_check
      _
    $region75: #{body.3} parent=1 // pred_check_branch
      %4868 = sbr.rel (0) target = $region77
    $region76: #{body.3} parent=1 // pred_region
      _
    $region77: #{body.3} parent=1 // pred_fallthru
      _
    // Predicated region
    $region78: #{body.3} parent=1 // pred_check
      _
    $region79: #{body.3} parent=1 // pred_check_branch
      %4870 = sbr.rel (0) target = $region81
    $region80: #{body.3} parent=1 // pred_region
      %s4872 = ssub.s32 16, 16
      %4873 = vsyncadd [#allocation5], %s4872
      %s4875 = sshll.u32 [#allocation4], 4
      %s4876 = int_to_ptr.vmem [resolvable:$true] %s4875
      %4878 = dma.vmem_to_hbm [thread:$0]  %s4876, 16, %s19, [#allocation5]
    $region81: #{body.3} parent=1 // pred_fallthru
      _
    // Predicated region
    $region82: #{body.3} parent=1 // pred_check
      _
    $region83: #{body.3} parent=1 // pred_check_branch
      %4880 = sbr.rel (0) target = $region85
    $region84: #{body.3} parent=1 // pred_region
      %s4882 = ssub.s32 16, 16
      %4883 = vsyncadd [#allocation7], %s4882
      %s4885 = sshll.u32 [#allocation6], 4
      %s4886 = int_to_ptr.vmem [resolvable:$true] %s4885
      %4888 = dma.vmem_to_hbm [thread:$0]  %s4886, 16, %s20, [#allocation7]
    $region85: #{body.3} parent=1 // pred_fallthru
      _
    // Predicated region
    $region86: #{body.3} parent=1 // pred_check
      _
    $region87: #{body.3} parent=1 // pred_check_branch
      %4890 = sbr.rel (0) target = $region89
    $region88: #{body.3} parent=1 // pred_region
      _
    $region89: #{body.3} parent=1 // pred_fallthru
      _
    // Predicated region
    $region90: #{body.3} parent=1 // pred_check
      _
    $region91: #{body.3} parent=1 // pred_check_branch
      %4892 = sbr.rel (0) target = $region93
    $region92: #{body.3} parent=1 // pred_region
      _
    $region93: #{body.3} parent=1 // pred_fallthru
      _
    // Predicated region
    $region94: #{body.3} parent=1 // pred_check
      _
    $region95: #{body.3} parent=1 // pred_check_branch
      %4894 = sbr.rel (0) target = $region97
    $region96: #{body.3} parent=1 // pred_region
      %4895 = dma.done [#allocation5], 16
    $region97: #{body.3} parent=1 // pred_fallthru
      _
    // Predicated region
    $region98: #{body.3} parent=1 // pred_check
      _
    $region99: #{body.3} parent=1 // pred_check_branch
      %4897 = sbr.rel (0) target = $region101
    $region100: #{body.3} parent=1 // pred_region
      %4898 = dma.done [#allocation7], 16
    $region101: #{body.3} parent=1 // pred_fallthru
      _
    %4899 = vsyncpa [#allocation5], 1
    %4900 = vsyncpa [#allocation7], 1

</llo_original>
